<compile_context>
chip_gen: v7x
topology: tpu7x:2x2x1
jax: 0.10.0
libtpu: 0.0.40
codegen_flags: <defaults>
</compile_context>

<pallas_src>
import functools

import jax
import jax.numpy as jnp
import numpy as np
from jax import lax
from jax.experimental import pallas as pl
from jax.experimental.pallas import tpu as pltpu


# ------------------------------ fused kernel --------------------------------


def _cnn_fused_kernel(xt_ref, w1_ref, b1_ref, w2_ref, b2_ref,
                      w3_ref, b3_ref, w4_ref, b4_ref,
                      out_ref, p1_ref, *, bt):
    """One batch tile (bt samples) of the full CNN forward.

    xt_ref : (12, 12*bt)      input tile, xt[h, w*bt + n] = x[n, 0, h, w]
    w1_ref : (10, 25)         conv1 weight, col = kw*5 + kh
    b1_ref : (10, 1)
    w2_ref : (25, 20, 10)     conv2 weight, w2[kh*5+kw, co, ci]
    b2_ref : (20, 1)
    w3_ref : (16, H, 20)      fc1 weight, w3[s, j, co] = fc1_w[j, co*16 + s]
    b3_ref : (H, 1)
    w4_ref : (H, O)           fc2 weight transposed
    b4_ref : (1, O)
    out_ref: (bt, O)
    p1_ref : VMEM (25, 64*bt) conv1 im2col scratch
    """
    f32 = jnp.float32
    hidden = w3_ref.shape[1]

    # ---- conv1 im2col, batched across the whole tile -----------------------
    # P1[kw*5+kh, (oh*8+ow)*bt + n] = x[n, oh+kh, ow+kw]
    # Image loaded once; 40 block stores total (not per sample).
    xv = xt_ref[...]
    for kw in range(5):
        for oh in range(8):
            p1_ref[kw * 5:(kw + 1) * 5, oh * 8 * bt:(oh + 1) * 8 * bt] = (
                xv[oh:oh + 5, kw * bt:(kw + 8) * bt])

    # conv1 + bias + ReLU: ONE matmul for the whole tile -> (10, 64*bt),
    # column = (oh*8+ow)*bt + n.
    y1 = jnp.maximum(
        jnp.dot(w1_ref[...], p1_ref[...], preferred_element_type=f32)
        + b1_ref[...], 0.0)

    # ---- conv2: 25 shifted accumulating matmuls (no im2col, no scatter) ----
    # For each (kh, kw) the needed columns of y1 form one contiguous lane
    # slice of width 28*bt (covers all valid 4x4 outputs); columns
    # (oh2*8+ow2)*bt + n with oh2,ow2 < 4 hold the valid results, the rest is
    # junk that is never read.
    span = 28 * bt
    acc = jnp.zeros((20, span), f32)
    for kh in range(5):
        for kw in range(5):
            d = (kh * 8 + kw) * bt
            acc = acc + jnp.dot(w2_ref[kh * 5 + kw], y1[:, d:d + span],
                                preferred_element_type=f32)
    y2 = jnp.maximum(acc + b2_ref[...], 0.0)          # (20, 28*bt)

    # ---- fc1: NCHW .view(-1, 320) folded into the pre-permuted weight ------
    # h^T[j, n] = sum_{s, co} fc1_w[j, co*16+s] * y2[co, (oh2*8+ow2)*bt + n]
    # -> 16 small matmuls against lane slices of y2; no (batch, 320)
    # intermediate, no flatten scatter stores.
    ht = jnp.zeros((hidden, bt), f32)
    for oh2 in range(4):
        for ow2 in range(4):
            s = oh2 * 4 + ow2
            col = (oh2 * 8 + ow2) * bt
            ht = ht + jnp.dot(w3_ref[s], y2[:, col:col + bt],
                              preferred_element_type=f32)
    ht = jnp.maximum(ht + b3_ref[...], 0.0)           # (H, bt)

    # ---- fc2: contract over H (sublane axis of ht) -> (bt, O) directly -----
    out = lax.dot_general(ht, w4_ref[...],
                          dimension_numbers=(((0,), (0,)), ((), ())),
                          preferred_element_type=f32) + b4_ref[...]
    out_ref[...] = out.astype(out_ref.dtype)


def cnn_forward(x_nchw, kp, *, block_batch=8):
    """x_nchw: (batch, 1, 12, 12) float32; kp: prepare_params() output."""
    b = x_nchw.shape[0]
    assert x_nchw.shape[1:] == (1, 12, 12), x_nchw.shape
    out_dim = kp["w4"].shape[1]
    bt = block_batch
    t = pl.cdiv(b, bt)
    bp = t * bt

    x = x_nchw
    if bp != b:                       # pad batch to a whole number of tiles
        x = jnp.pad(x, ((0, bp - b), (0, 0), (0, 0), (0, 0)))

    # Layout plumbing (tiny one-off XLA transpose): fold batch into the lane
    # dim: xt[t, h, w*bt + n] = x[t*bt + n, 0, h, w].
    xt = jnp.transpose(x[:, 0].reshape(t, bt, 12, 12),
                       (0, 2, 3, 1)).reshape(t, 12, 12 * bt)

    kernel = functools.partial(_cnn_fused_kernel, bt=bt)

    def full(a):
        nd = a.ndim
        return pl.BlockSpec(a.shape, lambda i, nd=nd: (0,) * nd)

    out = pl.pallas_call(
        kernel,
        out_shape=jax.ShapeDtypeStruct((bp, out_dim), jnp.float32),
        grid_spec=pltpu.PrefetchScalarGridSpec(
            num_scalar_prefetch=0,
            grid=(t,),                       # one step per batch tile
            in_specs=[
                pl.BlockSpec((None, 12, 12 * bt), lambda i: (i, 0, 0)),
                full(kp["w1"]), full(kp["b1"]),
                full(kp["w2"]), full(kp["b2"]),
                full(kp["w3"]), full(kp["b3"]),
                full(kp["w4"]), full(kp["b4"]),
            ],
            out_specs=pl.BlockSpec((bt, out_dim), lambda i: (i, 0)),
            scratch_shapes=[pltpu.VMEM((25, 64 * bt), jnp.float32)],
        ),
        # Batch tiles are independent -> shardable across TensorCores (v7x).
        compiler_params=pltpu.CompilerParams(
            dimension_semantics=("parallel",)),
    )(xt, kp["w1"], kp["b1"], kp["w2"], kp["b2"],
      kp["w3"], kp["b3"], kp["w4"], kp["b4"])
    return out[:b]


# --------------------------- params & reference -----------------------------


def init_params(key, hidden_dim, output_dim):
    """Parameters in the original PyTorch layouts."""
    ks = jax.random.split(key, 8)

    def u(k, shape, fan_in):
        bound = 1.0 / float(np.sqrt(fan_in))
        return jax.random.uniform(k, shape, jnp.float32, -bound, bound)

    return {
        "conv1_w": u(ks[0], (10, 1, 5, 5), 1 * 25),
        "conv1_b": u(ks[1], (10,), 1 * 25),
        "conv2_w": u(ks[2], (20, 10, 5, 5), 10 * 25),
        "conv2_b": u(ks[3], (20,), 10 * 25),
        "fc1_w": u(ks[4], (hidden_dim, 320), 320),
        "fc1_b": u(ks[5], (hidden_dim,), 320),
        "fc2_w": u(ks[6], (output_dim, hidden_dim), hidden_dim),
        "fc2_b": u(ks[7], (output_dim,), hidden_dim),
    }


def prepare_params(p):
    """One-time reshape/permute of PyTorch-layout params into the layouts the
    fused kernel consumes (hoisted out of the per-call path)."""
    hidden = p["fc1_w"].shape[0]
    out_dim = p["fc2_w"].shape[0]
    return {
        # conv1 (O=10, I=1, kh, kw) -> (10, 25), column index = kw*5 + kh
        "w1": jnp.transpose(p["conv1_w"][:, 0], (0, 2, 1)).reshape(10, 25),
        "b1": p["conv1_b"].reshape(10, 1),
        # conv2 (O=20, I=10, kh, kw) -> (25, 20, 10), index = kh*5 + kw
        "w2": jnp.transpose(p["conv2_w"], (2, 3, 0, 1)).reshape(25, 20, 10),
        "b2": p["conv2_b"].reshape(20, 1),
        # fc1 (H, 320) -> (16, H, 20): w3[s, j, co] = fc1_w[j, co*16 + s]
        # (this folds the NCHW .view(-1, 320) into the weight layout)
        "w3": jnp.transpose(p["fc1_w"].reshape(hidden, 20, 16), (2, 0, 1)),
        "b3": p["fc1_b"].reshape(hidden, 1),
        # PyTorch Linear: y = x @ W^T + b  ->  store W^T directly
        "w4": p["fc2_w"].T,                    # (hidden, out)
        "b4": p["fc2_b"].reshape(1, out_dim),
    }


def reference_forward(x, p):
    def conv(z, w, b):
        y = lax.conv_general_dilated(
            z, w, (1, 1), "VALID", dimension_numbers=("NCHW", "OIHW", "NCHW"))
        return y + b.reshape(1, -1, 1, 1)

    y = jax.nn.relu(conv(x, p["conv1_w"], p["conv1_b"]))
    y = jax.nn.relu(conv(y, p["conv2_w"], p["conv2_b"]))
    y = y.reshape(-1, 320)
    y = jax.nn.relu(y @ p["fc1_w"].T + p["fc1_b"])
    return y @ p["fc2_w"].T + p["fc2_b"]


if __name__ == "__main__":
    key = jax.random.PRNGKey(0)
    kx, kparam = jax.random.split(key)
    hidden_dim, output_dim = 32, 10
    batch = 12                                   # -> 2 batch tiles of 8 (padded)
    x = jax.random.normal(kx, (batch, 1, 12, 12), jnp.float32)
    params = init_params(kparam, hidden_dim, output_dim)
    kernel_params = prepare_params(params)       # done once, not per forward

    fwd = jax.jit(cnn_forward)
    out = jax.block_until_ready(fwd(x, kernel_params))
    ref = jax.block_until_ready(reference_forward(x, params))
    assert out.shape == (batch, output_dim), out.shape
    np.testing.assert_allclose(np.asarray(out), np.asarray(ref),
                               rtol=1e-4, atol=1e-4)
    print("KERNEL_OK")
</pallas_src>

<mosaic_0001>
module attributes {stable_mosaic.version = 11 : i64} {
  func.func @_cnn_fused_kernel(%arg0: i32, %arg1: memref<1x12x96xf32, #tpu.memory_space<vmem>>, %arg2: memref<10x25xf32, #tpu.memory_space<vmem>>, %arg3: memref<10x1xf32, #tpu.memory_space<vmem>>, %arg4: memref<25x20x10xf32, #tpu.memory_space<vmem>>, %arg5: memref<20x1xf32, #tpu.memory_space<vmem>>, %arg6: memref<16x32x20xf32, #tpu.memory_space<vmem>>, %arg7: memref<32x1xf32, #tpu.memory_space<vmem>>, %arg8: memref<32x10xf32, #tpu.memory_space<vmem>>, %arg9: memref<1x10xf32, #tpu.memory_space<vmem>>, %arg10: memref<8x10xf32, #tpu.memory_space<vmem>>, %arg11: memref<25x512xf32, #tpu.memory_space<vmem>>) attributes {dimension_semantics = [#tpu.dimension_semantics<parallel>], iteration_bounds = array<i64: 2>, scalar_prefetch = 0 : i64, scratch_operands = 1 : i64, tpu.core_type = #tpu.core_type<tc>, window_params = [{transform_indices = @transform_0, window_bounds = array<i64: 1, 12, 96>}, {pipeline_mode = #tpu.pipeline_mode<synchronous>, transform_indices = @transform_1, window_bounds = array<i64: 10, 25>}, {pipeline_mode = #tpu.pipeline_mode<synchronous>, transform_indices = @transform_2, window_bounds = array<i64: 10, 1>}, {pipeline_mode = #tpu.pipeline_mode<synchronous>, transform_indices = @transform_3, window_bounds = array<i64: 25, 20, 10>}, {pipeline_mode = #tpu.pipeline_mode<synchronous>, transform_indices = @transform_4, window_bounds = array<i64: 20, 1>}, {pipeline_mode = #tpu.pipeline_mode<synchronous>, transform_indices = @transform_5, window_bounds = array<i64: 16, 32, 20>}, {pipeline_mode = #tpu.pipeline_mode<synchronous>, transform_indices = @transform_6, window_bounds = array<i64: 32, 1>}, {pipeline_mode = #tpu.pipeline_mode<synchronous>, transform_indices = @transform_7, window_bounds = array<i64: 32, 10>}, {pipeline_mode = #tpu.pipeline_mode<synchronous>, transform_indices = @transform_8, window_bounds = array<i64: 1, 10>}, {transform_indices = @transform_9, window_bounds = array<i64: 8, 10>}]} {
    %c0 = arith.constant 0 : index
    %c0_0 = arith.constant 0 : index
    %c0_1 = arith.constant 0 : index
    %0 = vector.load %arg1[%c0, %c0_0, %c0_1] : memref<1x12x96xf32, #tpu.memory_space<vmem>>, vector<1x12x96xf32>
    %1 = vector.shape_cast %0 : vector<1x12x96xf32> to vector<12x96xf32>
    %2 = vector.extract_strided_slice %1 {offsets = [0, 0], sizes = [5, 64], strides = [1, 1]} : vector<12x96xf32> to vector<5x64xf32>
    %c0_2 = arith.constant 0 : index
    %c0_3 = arith.constant 0 : index
    %3 = vector.load %arg11[%c0_2, %c0_3] : memref<25x512xf32, #tpu.memory_space<vmem>>, vector<5x64xf32>
    tpu.vector_store %arg11[%c0_2, %c0_3], %2 {strides = array<i32>} : memref<25x512xf32, #tpu.memory_space<vmem>>, vector<5x64xf32>,
    %4 = vector.extract_strided_slice %1 {offsets = [1, 0], sizes = [5, 64], strides = [1, 1]} : vector<12x96xf32> to vector<5x64xf32>
    %c0_4 = arith.constant 0 : index
    %c64 = arith.constant 64 : index
    %5 = vector.load %arg11[%c0_4, %c64] : memref<25x512xf32, #tpu.memory_space<vmem>>, vector<5x64xf32>
    tpu.vector_store %arg11[%c0_4, %c64], %4 {strides = array<i32>} : memref<25x512xf32, #tpu.memory_space<vmem>>, vector<5x64xf32>,
    %6 = vector.extract_strided_slice %1 {offsets = [2, 0], sizes = [5, 64], strides = [1, 1]} : vector<12x96xf32> to vector<5x64xf32>
    %c0_5 = arith.constant 0 : index
    %c128 = arith.constant 128 : index
    %7 = vector.load %arg11[%c0_5, %c128] : memref<25x512xf32, #tpu.memory_space<vmem>>, vector<5x64xf32>
    tpu.vector_store %arg11[%c0_5, %c128], %6 {strides = array<i32>} : memref<25x512xf32, #tpu.memory_space<vmem>>, vector<5x64xf32>,
    %8 = vector.extract_strided_slice %1 {offsets = [3, 0], sizes = [5, 64], strides = [1, 1]} : vector<12x96xf32> to vector<5x64xf32>
    %c0_6 = arith.constant 0 : index
    %c192 = arith.constant 192 : index
    %9 = vector.load %arg11[%c0_6, %c192] : memref<25x512xf32, #tpu.memory_space<vmem>>, vector<5x64xf32>
    tpu.vector_store %arg11[%c0_6, %c192], %8 {strides = array<i32>} : memref<25x512xf32, #tpu.memory_space<vmem>>, vector<5x64xf32>,
    %10 = vector.extract_strided_slice %1 {offsets = [4, 0], sizes = [5, 64], strides = [1, 1]} : vector<12x96xf32> to vector<5x64xf32>
    %c0_7 = arith.constant 0 : index
    %c256 = arith.constant 256 : index
    %11 = vector.load %arg11[%c0_7, %c256] : memref<25x512xf32, #tpu.memory_space<vmem>>, vector<5x64xf32>
    tpu.vector_store %arg11[%c0_7, %c256], %10 {strides = array<i32>} : memref<25x512xf32, #tpu.memory_space<vmem>>, vector<5x64xf32>,
    %12 = vector.extract_strided_slice %1 {offsets = [5, 0], sizes = [5, 64], strides = [1, 1]} : vector<12x96xf32> to vector<5x64xf32>
    %c0_8 = arith.constant 0 : index
    %c320 = arith.constant 320 : index
    %13 = vector.load %arg11[%c0_8, %c320] : memref<25x512xf32, #tpu.memory_space<vmem>>, vector<5x64xf32>
    tpu.vector_store %arg11[%c0_8, %c320], %12 {strides = array<i32>} : memref<25x512xf32, #tpu.memory_space<vmem>>, vector<5x64xf32>,
    %14 = vector.extract_strided_slice %1 {offsets = [6, 0], sizes = [5, 64], strides = [1, 1]} : vector<12x96xf32> to vector<5x64xf32>
    %c0_9 = arith.constant 0 : index
    %c384 = arith.constant 384 : index
    %15 = vector.load %arg11[%c0_9, %c384] : memref<25x512xf32, #tpu.memory_space<vmem>>, vector<5x64xf32>
    tpu.vector_store %arg11[%c0_9, %c384], %14 {strides = array<i32>} : memref<25x512xf32, #tpu.memory_space<vmem>>, vector<5x64xf32>,
    %16 = vector.extract_strided_slice %1 {offsets = [7, 0], sizes = [5, 64], strides = [1, 1]} : vector<12x96xf32> to vector<5x64xf32>
    %c0_10 = arith.constant 0 : index
    %c448 = arith.constant 448 : index
    %17 = vector.load %arg11[%c0_10, %c448] : memref<25x512xf32, #tpu.memory_space<vmem>>, vector<5x64xf32>
    tpu.vector_store %arg11[%c0_10, %c448], %16 {strides = array<i32>} : memref<25x512xf32, #tpu.memory_space<vmem>>, vector<5x64xf32>,
    %18 = vector.extract_strided_slice %1 {offsets = [0, 8], sizes = [5, 64], strides = [1, 1]} : vector<12x96xf32> to vector<5x64xf32>
    %c5 = arith.constant 5 : index
    %c0_11 = arith.constant 0 : index
    %19 = vector.load %arg11[%c5, %c0_11] : memref<25x512xf32, #tpu.memory_space<vmem>>, vector<5x64xf32>
    tpu.vector_store %arg11[%c5, %c0_11], %18 {strides = array<i32>} : memref<25x512xf32, #tpu.memory_space<vmem>>, vector<5x64xf32>,
    %20 = vector.extract_strided_slice %1 {offsets = [1, 8], sizes = [5, 64], strides = [1, 1]} : vector<12x96xf32> to vector<5x64xf32>
    %c5_12 = arith.constant 5 : index
    %c64_13 = arith.constant 64 : index
    %21 = vector.load %arg11[%c5_12, %c64_13] : memref<25x512xf32, #tpu.memory_space<vmem>>, vector<5x64xf32>
    tpu.vector_store %arg11[%c5_12, %c64_13], %20 {strides = array<i32>} : memref<25x512xf32, #tpu.memory_space<vmem>>, vector<5x64xf32>,
    %22 = vector.extract_strided_slice %1 {offsets = [2, 8], sizes = [5, 64], strides = [1, 1]} : vector<12x96xf32> to vector<5x64xf32>
    %c5_14 = arith.constant 5 : index
    %c128_15 = arith.constant 128 : index
    %23 = vector.load %arg11[%c5_14, %c128_15] : memref<25x512xf32, #tpu.memory_space<vmem>>, vector<5x64xf32>
    tpu.vector_store %arg11[%c5_14, %c128_15], %22 {strides = array<i32>} : memref<25x512xf32, #tpu.memory_space<vmem>>, vector<5x64xf32>,
    %24 = vector.extract_strided_slice %1 {offsets = [3, 8], sizes = [5, 64], strides = [1, 1]} : vector<12x96xf32> to vector<5x64xf32>
    %c5_16 = arith.constant 5 : index
    %c192_17 = arith.constant 192 : index
    %25 = vector.load %arg11[%c5_16, %c192_17] : memref<25x512xf32, #tpu.memory_space<vmem>>, vector<5x64xf32>
    tpu.vector_store %arg11[%c5_16, %c192_17], %24 {strides = array<i32>} : memref<25x512xf32, #tpu.memory_space<vmem>>, vector<5x64xf32>,
    %26 = vector.extract_strided_slice %1 {offsets = [4, 8], sizes = [5, 64], strides = [1, 1]} : vector<12x96xf32> to vector<5x64xf32>
    %c5_18 = arith.constant 5 : index
    %c256_19 = arith.constant 256 : index
    %27 = vector.load %arg11[%c5_18, %c256_19] : memref<25x512xf32, #tpu.memory_space<vmem>>, vector<5x64xf32>
    tpu.vector_store %arg11[%c5_18, %c256_19], %26 {strides = array<i32>} : memref<25x512xf32, #tpu.memory_space<vmem>>, vector<5x64xf32>,
    %28 = vector.extract_strided_slice %1 {offsets = [5, 8], sizes = [5, 64], strides = [1, 1]} : vector<12x96xf32> to vector<5x64xf32>
    %c5_20 = arith.constant 5 : index
    %c320_21 = arith.constant 320 : index
    %29 = vector.load %arg11[%c5_20, %c320_21] : memref<25x512xf32, #tpu.memory_space<vmem>>, vector<5x64xf32>
    tpu.vector_store %arg11[%c5_20, %c320_21], %28 {strides = array<i32>} : memref<25x512xf32, #tpu.memory_space<vmem>>, vector<5x64xf32>,
    %30 = vector.extract_strided_slice %1 {offsets = [6, 8], sizes = [5, 64], strides = [1, 1]} : vector<12x96xf32> to vector<5x64xf32>
    %c5_22 = arith.constant 5 : index
    %c384_23 = arith.constant 384 : index
    %31 = vector.load %arg11[%c5_22, %c384_23] : memref<25x512xf32, #tpu.memory_space<vmem>>, vector<5x64xf32>
    tpu.vector_store %arg11[%c5_22, %c384_23], %30 {strides = array<i32>} : memref<25x512xf32, #tpu.memory_space<vmem>>, vector<5x64xf32>,
    %32 = vector.extract_strided_slice %1 {offsets = [7, 8], sizes = [5, 64], strides = [1, 1]} : vector<12x96xf32> to vector<5x64xf32>
    %c5_24 = arith.constant 5 : index
    %c448_25 = arith.constant 448 : index
    %33 = vector.load %arg11[%c5_24, %c448_25] : memref<25x512xf32, #tpu.memory_space<vmem>>, vector<5x64xf32>
    tpu.vector_store %arg11[%c5_24, %c448_25], %32 {strides = array<i32>} : memref<25x512xf32, #tpu.memory_space<vmem>>, vector<5x64xf32>,
    %34 = vector.extract_strided_slice %1 {offsets = [0, 16], sizes = [5, 64], strides = [1, 1]} : vector<12x96xf32> to vector<5x64xf32>
    %c10 = arith.constant 10 : index
    %c0_26 = arith.constant 0 : index
    %35 = vector.load %arg11[%c10, %c0_26] : memref<25x512xf32, #tpu.memory_space<vmem>>, vector<5x64xf32>
    tpu.vector_store %arg11[%c10, %c0_26], %34 {strides = array<i32>} : memref<25x512xf32, #tpu.memory_space<vmem>>, vector<5x64xf32>,
    %36 = vector.extract_strided_slice %1 {offsets = [1, 16], sizes = [5, 64], strides = [1, 1]} : vector<12x96xf32> to vector<5x64xf32>
    %c10_27 = arith.constant 10 : index
    %c64_28 = arith.constant 64 : index
    %37 = vector.load %arg11[%c10_27, %c64_28] : memref<25x512xf32, #tpu.memory_space<vmem>>, vector<5x64xf32>
    tpu.vector_store %arg11[%c10_27, %c64_28], %36 {strides = array<i32>} : memref<25x512xf32, #tpu.memory_space<vmem>>, vector<5x64xf32>,
    %38 = vector.extract_strided_slice %1 {offsets = [2, 16], sizes = [5, 64], strides = [1, 1]} : vector<12x96xf32> to vector<5x64xf32>
    %c10_29 = arith.constant 10 : index
    %c128_30 = arith.constant 128 : index
    %39 = vector.load %arg11[%c10_29, %c128_30] : memref<25x512xf32, #tpu.memory_space<vmem>>, vector<5x64xf32>
    tpu.vector_store %arg11[%c10_29, %c128_30], %38 {strides = array<i32>} : memref<25x512xf32, #tpu.memory_space<vmem>>, vector<5x64xf32>,
    %40 = vector.extract_strided_slice %1 {offsets = [3, 16], sizes = [5, 64], strides = [1, 1]} : vector<12x96xf32> to vector<5x64xf32>
    %c10_31 = arith.constant 10 : index
    %c192_32 = arith.constant 192 : index
    %41 = vector.load %arg11[%c10_31, %c192_32] : memref<25x512xf32, #tpu.memory_space<vmem>>, vector<5x64xf32>
    tpu.vector_store %arg11[%c10_31, %c192_32], %40 {strides = array<i32>} : memref<25x512xf32, #tpu.memory_space<vmem>>, vector<5x64xf32>,
    %42 = vector.extract_strided_slice %1 {offsets = [4, 16], sizes = [5, 64], strides = [1, 1]} : vector<12x96xf32> to vector<5x64xf32>
    %c10_33 = arith.constant 10 : index
    %c256_34 = arith.constant 256 : index
    %43 = vector.load %arg11[%c10_33, %c256_34] : memref<25x512xf32, #tpu.memory_space<vmem>>, vector<5x64xf32>
    tpu.vector_store %arg11[%c10_33, %c256_34], %42 {strides = array<i32>} : memref<25x512xf32, #tpu.memory_space<vmem>>, vector<5x64xf32>,
    %44 = vector.extract_strided_slice %1 {offsets = [5, 16], sizes = [5, 64], strides = [1, 1]} : vector<12x96xf32> to vector<5x64xf32>
    %c10_35 = arith.constant 10 : index
    %c320_36 = arith.constant 320 : index
    %45 = vector.load %arg11[%c10_35, %c320_36] : memref<25x512xf32, #tpu.memory_space<vmem>>, vector<5x64xf32>
    tpu.vector_store %arg11[%c10_35, %c320_36], %44 {strides = array<i32>} : memref<25x512xf32, #tpu.memory_space<vmem>>, vector<5x64xf32>,
    %46 = vector.extract_strided_slice %1 {offsets = [6, 16], sizes = [5, 64], strides = [1, 1]} : vector<12x96xf32> to vector<5x64xf32>
    %c10_37 = arith.constant 10 : index
    %c384_38 = arith.constant 384 : index
    %47 = vector.load %arg11[%c10_37, %c384_38] : memref<25x512xf32, #tpu.memory_space<vmem>>, vector<5x64xf32>
    tpu.vector_store %arg11[%c10_37, %c384_38], %46 {strides = array<i32>} : memref<25x512xf32, #tpu.memory_space<vmem>>, vector<5x64xf32>,
    %48 = vector.extract_strided_slice %1 {offsets = [7, 16], sizes = [5, 64], strides = [1, 1]} : vector<12x96xf32> to vector<5x64xf32>
    %c10_39 = arith.constant 10 : index
    %c448_40 = arith.constant 448 : index
    %49 = vector.load %arg11[%c10_39, %c448_40] : memref<25x512xf32, #tpu.memory_space<vmem>>, vector<5x64xf32>
    tpu.vector_store %arg11[%c10_39, %c448_40], %48 {strides = array<i32>} : memref<25x512xf32, #tpu.memory_space<vmem>>, vector<5x64xf32>,
    %50 = vector.extract_strided_slice %1 {offsets = [0, 24], sizes = [5, 64], strides = [1, 1]} : vector<12x96xf32> to vector<5x64xf32>
    %c15 = arith.constant 15 : index
    %c0_41 = arith.constant 0 : index
    %51 = vector.load %arg11[%c15, %c0_41] : memref<25x512xf32, #tpu.memory_space<vmem>>, vector<5x64xf32>
    tpu.vector_store %arg11[%c15, %c0_41], %50 {strides = array<i32>} : memref<25x512xf32, #tpu.memory_space<vmem>>, vector<5x64xf32>,
    %52 = vector.extract_strided_slice %1 {offsets = [1, 24], sizes = [5, 64], strides = [1, 1]} : vector<12x96xf32> to vector<5x64xf32>
    %c15_42 = arith.constant 15 : index
    %c64_43 = arith.constant 64 : index
    %53 = vector.load %arg11[%c15_42, %c64_43] : memref<25x512xf32, #tpu.memory_space<vmem>>, vector<5x64xf32>
    tpu.vector_store %arg11[%c15_42, %c64_43], %52 {strides = array<i32>} : memref<25x512xf32, #tpu.memory_space<vmem>>, vector<5x64xf32>,
    %54 = vector.extract_strided_slice %1 {offsets = [2, 24], sizes = [5, 64], strides = [1, 1]} : vector<12x96xf32> to vector<5x64xf32>
    %c15_44 = arith.constant 15 : index
    %c128_45 = arith.constant 128 : index
    %55 = vector.load %arg11[%c15_44, %c128_45] : memref<25x512xf32, #tpu.memory_space<vmem>>, vector<5x64xf32>
    tpu.vector_store %arg11[%c15_44, %c128_45], %54 {strides = array<i32>} : memref<25x512xf32, #tpu.memory_space<vmem>>, vector<5x64xf32>,
    %56 = vector.extract_strided_slice %1 {offsets = [3, 24], sizes = [5, 64], strides = [1, 1]} : vector<12x96xf32> to vector<5x64xf32>
    %c15_46 = arith.constant 15 : index
    %c192_47 = arith.constant 192 : index
    %57 = vector.load %arg11[%c15_46, %c192_47] : memref<25x512xf32, #tpu.memory_space<vmem>>, vector<5x64xf32>
    tpu.vector_store %arg11[%c15_46, %c192_47], %56 {strides = array<i32>} : memref<25x512xf32, #tpu.memory_space<vmem>>, vector<5x64xf32>,
    %58 = vector.extract_strided_slice %1 {offsets = [4, 24], sizes = [5, 64], strides = [1, 1]} : vector<12x96xf32> to vector<5x64xf32>
    %c15_48 = arith.constant 15 : index
    %c256_49 = arith.constant 256 : index
    %59 = vector.load %arg11[%c15_48, %c256_49] : memref<25x512xf32, #tpu.memory_space<vmem>>, vector<5x64xf32>
    tpu.vector_store %arg11[%c15_48, %c256_49], %58 {strides = array<i32>} : memref<25x512xf32, #tpu.memory_space<vmem>>, vector<5x64xf32>,
    %60 = vector.extract_strided_slice %1 {offsets = [5, 24], sizes = [5, 64], strides = [1, 1]} : vector<12x96xf32> to vector<5x64xf32>
    %c15_50 = arith.constant 15 : index
    %c320_51 = arith.constant 320 : index
    %61 = vector.load %arg11[%c15_50, %c320_51] : memref<25x512xf32, #tpu.memory_space<vmem>>, vector<5x64xf32>
    tpu.vector_store %arg11[%c15_50, %c320_51], %60 {strides = array<i32>} : memref<25x512xf32, #tpu.memory_space<vmem>>, vector<5x64xf32>,
    %62 = vector.extract_strided_slice %1 {offsets = [6, 24], sizes = [5, 64], strides = [1, 1]} : vector<12x96xf32> to vector<5x64xf32>
    %c15_52 = arith.constant 15 : index
    %c384_53 = arith.constant 384 : index
    %63 = vector.load %arg11[%c15_52, %c384_53] : memref<25x512xf32, #tpu.memory_space<vmem>>, vector<5x64xf32>
    tpu.vector_store %arg11[%c15_52, %c384_53], %62 {strides = array<i32>} : memref<25x512xf32, #tpu.memory_space<vmem>>, vector<5x64xf32>,
    %64 = vector.extract_strided_slice %1 {offsets = [7, 24], sizes = [5, 64], strides = [1, 1]} : vector<12x96xf32> to vector<5x64xf32>
    %c15_54 = arith.constant 15 : index
    %c448_55 = arith.constant 448 : index
    %65 = vector.load %arg11[%c15_54, %c448_55] : memref<25x512xf32, #tpu.memory_space<vmem>>, vector<5x64xf32>
    tpu.vector_store %arg11[%c15_54, %c448_55], %64 {strides = array<i32>} : memref<25x512xf32, #tpu.memory_space<vmem>>, vector<5x64xf32>,
    %66 = vector.extract_strided_slice %1 {offsets = [0, 32], sizes = [5, 64], strides = [1, 1]} : vector<12x96xf32> to vector<5x64xf32>
    %c20 = arith.constant 20 : index
    %c0_56 = arith.constant 0 : index
    %67 = vector.load %arg11[%c20, %c0_56] : memref<25x512xf32, #tpu.memory_space<vmem>>, vector<5x64xf32>
    tpu.vector_store %arg11[%c20, %c0_56], %66 {strides = array<i32>} : memref<25x512xf32, #tpu.memory_space<vmem>>, vector<5x64xf32>,
    %68 = vector.extract_strided_slice %1 {offsets = [1, 32], sizes = [5, 64], strides = [1, 1]} : vector<12x96xf32> to vector<5x64xf32>
    %c20_57 = arith.constant 20 : index
    %c64_58 = arith.constant 64 : index
    %69 = vector.load %arg11[%c20_57, %c64_58] : memref<25x512xf32, #tpu.memory_space<vmem>>, vector<5x64xf32>
    tpu.vector_store %arg11[%c20_57, %c64_58], %68 {strides = array<i32>} : memref<25x512xf32, #tpu.memory_space<vmem>>, vector<5x64xf32>,
    %70 = vector.extract_strided_slice %1 {offsets = [2, 32], sizes = [5, 64], strides = [1, 1]} : vector<12x96xf32> to vector<5x64xf32>
    %c20_59 = arith.constant 20 : index
    %c128_60 = arith.constant 128 : index
    %71 = vector.load %arg11[%c20_59, %c128_60] : memref<25x512xf32, #tpu.memory_space<vmem>>, vector<5x64xf32>
    tpu.vector_store %arg11[%c20_59, %c128_60], %70 {strides = array<i32>} : memref<25x512xf32, #tpu.memory_space<vmem>>, vector<5x64xf32>,
    %72 = vector.extract_strided_slice %1 {offsets = [3, 32], sizes = [5, 64], strides = [1, 1]} : vector<12x96xf32> to vector<5x64xf32>
    %c20_61 = arith.constant 20 : index
    %c192_62 = arith.constant 192 : index
    %73 = vector.load %arg11[%c20_61, %c192_62] : memref<25x512xf32, #tpu.memory_space<vmem>>, vector<5x64xf32>
    tpu.vector_store %arg11[%c20_61, %c192_62], %72 {strides = array<i32>} : memref<25x512xf32, #tpu.memory_space<vmem>>, vector<5x64xf32>,
    %74 = vector.extract_strided_slice %1 {offsets = [4, 32], sizes = [5, 64], strides = [1, 1]} : vector<12x96xf32> to vector<5x64xf32>
    %c20_63 = arith.constant 20 : index
    %c256_64 = arith.constant 256 : index
    %75 = vector.load %arg11[%c20_63, %c256_64] : memref<25x512xf32, #tpu.memory_space<vmem>>, vector<5x64xf32>
    tpu.vector_store %arg11[%c20_63, %c256_64], %74 {strides = array<i32>} : memref<25x512xf32, #tpu.memory_space<vmem>>, vector<5x64xf32>,
    %76 = vector.extract_strided_slice %1 {offsets = [5, 32], sizes = [5, 64], strides = [1, 1]} : vector<12x96xf32> to vector<5x64xf32>
    %c20_65 = arith.constant 20 : index
    %c320_66 = arith.constant 320 : index
    %77 = vector.load %arg11[%c20_65, %c320_66] : memref<25x512xf32, #tpu.memory_space<vmem>>, vector<5x64xf32>
    tpu.vector_store %arg11[%c20_65, %c320_66], %76 {strides = array<i32>} : memref<25x512xf32, #tpu.memory_space<vmem>>, vector<5x64xf32>,
    %78 = vector.extract_strided_slice %1 {offsets = [6, 32], sizes = [5, 64], strides = [1, 1]} : vector<12x96xf32> to vector<5x64xf32>
    %c20_67 = arith.constant 20 : index
    %c384_68 = arith.constant 384 : index
    %79 = vector.load %arg11[%c20_67, %c384_68] : memref<25x512xf32, #tpu.memory_space<vmem>>, vector<5x64xf32>
    tpu.vector_store %arg11[%c20_67, %c384_68], %78 {strides = array<i32>} : memref<25x512xf32, #tpu.memory_space<vmem>>, vector<5x64xf32>,
    %80 = vector.extract_strided_slice %1 {offsets = [7, 32], sizes = [5, 64], strides = [1, 1]} : vector<12x96xf32> to vector<5x64xf32>
    %c20_69 = arith.constant 20 : index
    %c448_70 = arith.constant 448 : index
    %81 = vector.load %arg11[%c20_69, %c448_70] : memref<25x512xf32, #tpu.memory_space<vmem>>, vector<5x64xf32>
    tpu.vector_store %arg11[%c20_69, %c448_70], %80 {strides = array<i32>} : memref<25x512xf32, #tpu.memory_space<vmem>>, vector<5x64xf32>,
    %c0_71 = arith.constant 0 : index
    %c0_72 = arith.constant 0 : index
    %82 = vector.load %arg2[%c0_71, %c0_72] : memref<10x25xf32, #tpu.memory_space<vmem>>, vector<10x25xf32>
    %c0_73 = arith.constant 0 : index
    %c0_74 = arith.constant 0 : index
    %83 = vector.load %arg11[%c0_73, %c0_74] : memref<25x512xf32, #tpu.memory_space<vmem>>, vector<25x512xf32>
    %cst = arith.constant dense<0.000000e+00> : vector<10x512xf32>
    %84 = tpu.matmul %82, %83, %cst {dimension_numbers = #tpu.dot_dimension_numbers<[1], [0], [0], [1], [0, 0, 1, 1], [], []>} : vector<10x25xf32>, vector<25x512xf32>, vector<10x512xf32> -> vector<10x512xf32>
    %c0_75 = arith.constant 0 : index
    %c0_76 = arith.constant 0 : index
    %85 = vector.load %arg3[%c0_75, %c0_76] : memref<10x1xf32, #tpu.memory_space<vmem>>, vector<10x1xf32>
    %86 = vector.broadcast %85 : vector<10x1xf32> to vector<10x512xf32>
    %87 = arith.addf %84, %86 : vector<10x512xf32>
    %cst_77 = arith.constant 0.000000e+00 : f32
    %88 = vector.broadcast %cst_77 : f32 to vector<10x512xf32>
    %89 = arith.maximumf %87, %88 : vector<10x512xf32>
    %cst_78 = arith.constant 0.000000e+00 : f32
    %90 = vector.broadcast %cst_78 : f32 to vector<20x224xf32>
    %c0_79 = arith.constant 0 : index
    %c0_80 = arith.constant 0 : index
    %c0_81 = arith.constant 0 : index
    %91 = vector.load %arg4[%c0_79, %c0_80, %c0_81] : memref<25x20x10xf32, #tpu.memory_space<vmem>>, vector<1x20x10xf32>
    %92 = vector.shape_cast %91 : vector<1x20x10xf32> to vector<20x10xf32>
    %93 = vector.extract_strided_slice %89 {offsets = [0, 0], sizes = [10, 224], strides = [1, 1]} : vector<10x512xf32> to vector<10x224xf32>
    %cst_82 = arith.constant dense<0.000000e+00> : vector<20x224xf32>
    %94 = tpu.matmul %92, %93, %cst_82 {dimension_numbers = #tpu.dot_dimension_numbers<[1], [0], [0], [1], [0, 0, 1, 1], [], []>} : vector<20x10xf32>, vector<10x224xf32>, vector<20x224xf32> -> vector<20x224xf32>
    %95 = arith.addf %90, %94 : vector<20x224xf32>
    %c1 = arith.constant 1 : index
    %c0_83 = arith.constant 0 : index
    %c0_84 = arith.constant 0 : index
    %96 = vector.load %arg4[%c1, %c0_83, %c0_84] : memref<25x20x10xf32, #tpu.memory_space<vmem>>, vector<1x20x10xf32>
    %97 = vector.shape_cast %96 : vector<1x20x10xf32> to vector<20x10xf32>
    %98 = vector.extract_strided_slice %89 {offsets = [0, 8], sizes = [10, 224], strides = [1, 1]} : vector<10x512xf32> to vector<10x224xf32>
    %cst_85 = arith.constant dense<0.000000e+00> : vector<20x224xf32>
    %99 = tpu.matmul %97, %98, %cst_85 {dimension_numbers = #tpu.dot_dimension_numbers<[1], [0], [0], [1], [0, 0, 1, 1], [], []>} : vector<20x10xf32>, vector<10x224xf32>, vector<20x224xf32> -> vector<20x224xf32>
    %100 = arith.addf %95, %99 : vector<20x224xf32>
    %c2 = arith.constant 2 : index
    %c0_86 = arith.constant 0 : index
    %c0_87 = arith.constant 0 : index
    %101 = vector.load %arg4[%c2, %c0_86, %c0_87] : memref<25x20x10xf32, #tpu.memory_space<vmem>>, vector<1x20x10xf32>
    %102 = vector.shape_cast %101 : vector<1x20x10xf32> to vector<20x10xf32>
    %103 = vector.extract_strided_slice %89 {offsets = [0, 16], sizes = [10, 224], strides = [1, 1]} : vector<10x512xf32> to vector<10x224xf32>
    %cst_88 = arith.constant dense<0.000000e+00> : vector<20x224xf32>
    %104 = tpu.matmul %102, %103, %cst_88 {dimension_numbers = #tpu.dot_dimension_numbers<[1], [0], [0], [1], [0, 0, 1, 1], [], []>} : vector<20x10xf32>, vector<10x224xf32>, vector<20x224xf32> -> vector<20x224xf32>
    %105 = arith.addf %100, %104 : vector<20x224xf32>
    %c3 = arith.constant 3 : index
    %c0_89 = arith.constant 0 : index
    %c0_90 = arith.constant 0 : index
    %106 = vector.load %arg4[%c3, %c0_89, %c0_90] : memref<25x20x10xf32, #tpu.memory_space<vmem>>, vector<1x20x10xf32>
    %107 = vector.shape_cast %106 : vector<1x20x10xf32> to vector<20x10xf32>
    %108 = vector.extract_strided_slice %89 {offsets = [0, 24], sizes = [10, 224], strides = [1, 1]} : vector<10x512xf32> to vector<10x224xf32>
    %cst_91 = arith.constant dense<0.000000e+00> : vector<20x224xf32>
    %109 = tpu.matmul %107, %108, %cst_91 {dimension_numbers = #tpu.dot_dimension_numbers<[1], [0], [0], [1], [0, 0, 1, 1], [], []>} : vector<20x10xf32>, vector<10x224xf32>, vector<20x224xf32> -> vector<20x224xf32>
    %110 = arith.addf %105, %109 : vector<20x224xf32>
    %c4 = arith.constant 4 : index
    %c0_92 = arith.constant 0 : index
    %c0_93 = arith.constant 0 : index
    %111 = vector.load %arg4[%c4, %c0_92, %c0_93] : memref<25x20x10xf32, #tpu.memory_space<vmem>>, vector<1x20x10xf32>
    %112 = vector.shape_cast %111 : vector<1x20x10xf32> to vector<20x10xf32>
    %113 = vector.extract_strided_slice %89 {offsets = [0, 32], sizes = [10, 224], strides = [1, 1]} : vector<10x512xf32> to vector<10x224xf32>
    %cst_94 = arith.constant dense<0.000000e+00> : vector<20x224xf32>
    %114 = tpu.matmul %112, %113, %cst_94 {dimension_numbers = #tpu.dot_dimension_numbers<[1], [0], [0], [1], [0, 0, 1, 1], [], []>} : vector<20x10xf32>, vector<10x224xf32>, vector<20x224xf32> -> vector<20x224xf32>
    %115 = arith.addf %110, %114 : vector<20x224xf32>
    %c5_95 = arith.constant 5 : index
    %c0_96 = arith.constant 0 : index
    %c0_97 = arith.constant 0 : index
    %116 = vector.load %arg4[%c5_95, %c0_96, %c0_97] : memref<25x20x10xf32, #tpu.memory_space<vmem>>, vector<1x20x10xf32>
    %117 = vector.shape_cast %116 : vector<1x20x10xf32> to vector<20x10xf32>
    %118 = vector.extract_strided_slice %89 {offsets = [0, 64], sizes = [10, 224], strides = [1, 1]} : vector<10x512xf32> to vector<10x224xf32>
    %cst_98 = arith.constant dense<0.000000e+00> : vector<20x224xf32>
    %119 = tpu.matmul %117, %118, %cst_98 {dimension_numbers = #tpu.dot_dimension_numbers<[1], [0], [0], [1], [0, 0, 1, 1], [], []>} : vector<20x10xf32>, vector<10x224xf32>, vector<20x224xf32> -> vector<20x224xf32>
    %120 = arith.addf %115, %119 : vector<20x224xf32>
    %c6 = arith.constant 6 : index
    %c0_99 = arith.constant 0 : index
    %c0_100 = arith.constant 0 : index
    %121 = vector.load %arg4[%c6, %c0_99, %c0_100] : memref<25x20x10xf32, #tpu.memory_space<vmem>>, vector<1x20x10xf32>
    %122 = vector.shape_cast %121 : vector<1x20x10xf32> to vector<20x10xf32>
    %123 = vector.extract_strided_slice %89 {offsets = [0, 72], sizes = [10, 224], strides = [1, 1]} : vector<10x512xf32> to vector<10x224xf32>
    %cst_101 = arith.constant dense<0.000000e+00> : vector<20x224xf32>
    %124 = tpu.matmul %122, %123, %cst_101 {dimension_numbers = #tpu.dot_dimension_numbers<[1], [0], [0], [1], [0, 0, 1, 1], [], []>} : vector<20x10xf32>, vector<10x224xf32>, vector<20x224xf32> -> vector<20x224xf32>
    %125 = arith.addf %120, %124 : vector<20x224xf32>
    %c7 = arith.constant 7 : index
    %c0_102 = arith.constant 0 : index
    %c0_103 = arith.constant 0 : index
    %126 = vector.load %arg4[%c7, %c0_102, %c0_103] : memref<25x20x10xf32, #tpu.memory_space<vmem>>, vector<1x20x10xf32>
    %127 = vector.shape_cast %126 : vector<1x20x10xf32> to vector<20x10xf32>
    %128 = vector.extract_strided_slice %89 {offsets = [0, 80], sizes = [10, 224], strides = [1, 1]} : vector<10x512xf32> to vector<10x224xf32>
    %cst_104 = arith.constant dense<0.000000e+00> : vector<20x224xf32>
    %129 = tpu.matmul %127, %128, %cst_104 {dimension_numbers = #tpu.dot_dimension_numbers<[1], [0], [0], [1], [0, 0, 1, 1], [], []>} : vector<20x10xf32>, vector<10x224xf32>, vector<20x224xf32> -> vector<20x224xf32>
    %130 = arith.addf %125, %129 : vector<20x224xf32>
    %c8 = arith.constant 8 : index
    %c0_105 = arith.constant 0 : index
    %c0_106 = arith.constant 0 : index
    %131 = vector.load %arg4[%c8, %c0_105, %c0_106] : memref<25x20x10xf32, #tpu.memory_space<vmem>>, vector<1x20x10xf32>
    %132 = vector.shape_cast %131 : vector<1x20x10xf32> to vector<20x10xf32>
    %133 = vector.extract_strided_slice %89 {offsets = [0, 88], sizes = [10, 224], strides = [1, 1]} : vector<10x512xf32> to vector<10x224xf32>
    %cst_107 = arith.constant dense<0.000000e+00> : vector<20x224xf32>
    %134 = tpu.matmul %132, %133, %cst_107 {dimension_numbers = #tpu.dot_dimension_numbers<[1], [0], [0], [1], [0, 0, 1, 1], [], []>} : vector<20x10xf32>, vector<10x224xf32>, vector<20x224xf32> -> vector<20x224xf32>
    %135 = arith.addf %130, %134 : vector<20x224xf32>
    %c9 = arith.constant 9 : index
    %c0_108 = arith.constant 0 : index
    %c0_109 = arith.constant 0 : index
    %136 = vector.load %arg4[%c9, %c0_108, %c0_109] : memref<25x20x10xf32, #tpu.memory_space<vmem>>, vector<1x20x10xf32>
    %137 = vector.shape_cast %136 : vector<1x20x10xf32> to vector<20x10xf32>
    %138 = vector.extract_strided_slice %89 {offsets = [0, 96], sizes = [10, 224], strides = [1, 1]} : vector<10x512xf32> to vector<10x224xf32>
    %cst_110 = arith.constant dense<0.000000e+00> : vector<20x224xf32>
    %139 = tpu.matmul %137, %138, %cst_110 {dimension_numbers = #tpu.dot_dimension_numbers<[1], [0], [0], [1], [0, 0, 1, 1], [], []>} : vector<20x10xf32>, vector<10x224xf32>, vector<20x224xf32> -> vector<20x224xf32>
    %140 = arith.addf %135, %139 : vector<20x224xf32>
    %c10_111 = arith.constant 10 : index
    %c0_112 = arith.constant 0 : index
    %c0_113 = arith.constant 0 : index
    %141 = vector.load %arg4[%c10_111, %c0_112, %c0_113] : memref<25x20x10xf32, #tpu.memory_space<vmem>>, vector<1x20x10xf32>
    %142 = vector.shape_cast %141 : vector<1x20x10xf32> to vector<20x10xf32>
    %143 = vector.extract_strided_slice %89 {offsets = [0, 128], sizes = [10, 224], strides = [1, 1]} : vector<10x512xf32> to vector<10x224xf32>
    %cst_114 = arith.constant dense<0.000000e+00> : vector<20x224xf32>
    %144 = tpu.matmul %142, %143, %cst_114 {dimension_numbers = #tpu.dot_dimension_numbers<[1], [0], [0], [1], [0, 0, 1, 1], [], []>} : vector<20x10xf32>, vector<10x224xf32>, vector<20x224xf32> -> vector<20x224xf32>
    %145 = arith.addf %140, %144 : vector<20x224xf32>
    %c11 = arith.constant 11 : index
    %c0_115 = arith.constant 0 : index
    %c0_116 = arith.constant 0 : index
    %146 = vector.load %arg4[%c11, %c0_115, %c0_116] : memref<25x20x10xf32, #tpu.memory_space<vmem>>, vector<1x20x10xf32>
    %147 = vector.shape_cast %146 : vector<1x20x10xf32> to vector<20x10xf32>
    %148 = vector.extract_strided_slice %89 {offsets = [0, 136], sizes = [10, 224], strides = [1, 1]} : vector<10x512xf32> to vector<10x224xf32>
    %cst_117 = arith.constant dense<0.000000e+00> : vector<20x224xf32>
    %149 = tpu.matmul %147, %148, %cst_117 {dimension_numbers = #tpu.dot_dimension_numbers<[1], [0], [0], [1], [0, 0, 1, 1], [], []>} : vector<20x10xf32>, vector<10x224xf32>, vector<20x224xf32> -> vector<20x224xf32>
    %150 = arith.addf %145, %149 : vector<20x224xf32>
    %c12 = arith.constant 12 : index
    %c0_118 = arith.constant 0 : index
    %c0_119 = arith.constant 0 : index
    %151 = vector.load %arg4[%c12, %c0_118, %c0_119] : memref<25x20x10xf32, #tpu.memory_space<vmem>>, vector<1x20x10xf32>
    %152 = vector.shape_cast %151 : vector<1x20x10xf32> to vector<20x10xf32>
    %153 = vector.extract_strided_slice %89 {offsets = [0, 144], sizes = [10, 224], strides = [1, 1]} : vector<10x512xf32> to vector<10x224xf32>
    %cst_120 = arith.constant dense<0.000000e+00> : vector<20x224xf32>
    %154 = tpu.matmul %152, %153, %cst_120 {dimension_numbers = #tpu.dot_dimension_numbers<[1], [0], [0], [1], [0, 0, 1, 1], [], []>} : vector<20x10xf32>, vector<10x224xf32>, vector<20x224xf32> -> vector<20x224xf32>
    %155 = arith.addf %150, %154 : vector<20x224xf32>
    %c13 = arith.constant 13 : index
    %c0_121 = arith.constant 0 : index
    %c0_122 = arith.constant 0 : index
    %156 = vector.load %arg4[%c13, %c0_121, %c0_122] : memref<25x20x10xf32, #tpu.memory_space<vmem>>, vector<1x20x10xf32>
    %157 = vector.shape_cast %156 : vector<1x20x10xf32> to vector<20x10xf32>
    %158 = vector.extract_strided_slice %89 {offsets = [0, 152], sizes = [10, 224], strides = [1, 1]} : vector<10x512xf32> to vector<10x224xf32>
    %cst_123 = arith.constant dense<0.000000e+00> : vector<20x224xf32>
    %159 = tpu.matmul %157, %158, %cst_123 {dimension_numbers = #tpu.dot_dimension_numbers<[1], [0], [0], [1], [0, 0, 1, 1], [], []>} : vector<20x10xf32>, vector<10x224xf32>, vector<20x224xf32> -> vector<20x224xf32>
    %160 = arith.addf %155, %159 : vector<20x224xf32>
    %c14 = arith.constant 14 : index
    %c0_124 = arith.constant 0 : index
    %c0_125 = arith.constant 0 : index
    %161 = vector.load %arg4[%c14, %c0_124, %c0_125] : memref<25x20x10xf32, #tpu.memory_space<vmem>>, vector<1x20x10xf32>
    %162 = vector.shape_cast %161 : vector<1x20x10xf32> to vector<20x10xf32>
    %163 = vector.extract_strided_slice %89 {offsets = [0, 160], sizes = [10, 224], strides = [1, 1]} : vector<10x512xf32> to vector<10x224xf32>
    %cst_126 = arith.constant dense<0.000000e+00> : vector<20x224xf32>
    %164 = tpu.matmul %162, %163, %cst_126 {dimension_numbers = #tpu.dot_dimension_numbers<[1], [0], [0], [1], [0, 0, 1, 1], [], []>} : vector<20x10xf32>, vector<10x224xf32>, vector<20x224xf32> -> vector<20x224xf32>
    %165 = arith.addf %160, %164 : vector<20x224xf32>
    %c15_127 = arith.constant 15 : index
    %c0_128 = arith.constant 0 : index
    %c0_129 = arith.constant 0 : index
    %166 = vector.load %arg4[%c15_127, %c0_128, %c0_129] : memref<25x20x10xf32, #tpu.memory_space<vmem>>, vector<1x20x10xf32>
    %167 = vector.shape_cast %166 : vector<1x20x10xf32> to vector<20x10xf32>
    %168 = vector.extract_strided_slice %89 {offsets = [0, 192], sizes = [10, 224], strides = [1, 1]} : vector<10x512xf32> to vector<10x224xf32>
    %cst_130 = arith.constant dense<0.000000e+00> : vector<20x224xf32>
    %169 = tpu.matmul %167, %168, %cst_130 {dimension_numbers = #tpu.dot_dimension_numbers<[1], [0], [0], [1], [0, 0, 1, 1], [], []>} : vector<20x10xf32>, vector<10x224xf32>, vector<20x224xf32> -> vector<20x224xf32>
    %170 = arith.addf %165, %169 : vector<20x224xf32>
    %c16 = arith.constant 16 : index
    %c0_131 = arith.constant 0 : index
    %c0_132 = arith.constant 0 : index
    %171 = vector.load %arg4[%c16, %c0_131, %c0_132] : memref<25x20x10xf32, #tpu.memory_space<vmem>>, vector<1x20x10xf32>
    %172 = vector.shape_cast %171 : vector<1x20x10xf32> to vector<20x10xf32>
    %173 = vector.extract_strided_slice %89 {offsets = [0, 200], sizes = [10, 224], strides = [1, 1]} : vector<10x512xf32> to vector<10x224xf32>
    %cst_133 = arith.constant dense<0.000000e+00> : vector<20x224xf32>
    %174 = tpu.matmul %172, %173, %cst_133 {dimension_numbers = #tpu.dot_dimension_numbers<[1], [0], [0], [1], [0, 0, 1, 1], [], []>} : vector<20x10xf32>, vector<10x224xf32>, vector<20x224xf32> -> vector<20x224xf32>
    %175 = arith.addf %170, %174 : vector<20x224xf32>
    %c17 = arith.constant 17 : index
    %c0_134 = arith.constant 0 : index
    %c0_135 = arith.constant 0 : index
    %176 = vector.load %arg4[%c17, %c0_134, %c0_135] : memref<25x20x10xf32, #tpu.memory_space<vmem>>, vector<1x20x10xf32>
    %177 = vector.shape_cast %176 : vector<1x20x10xf32> to vector<20x10xf32>
    %178 = vector.extract_strided_slice %89 {offsets = [0, 208], sizes = [10, 224], strides = [1, 1]} : vector<10x512xf32> to vector<10x224xf32>
    %cst_136 = arith.constant dense<0.000000e+00> : vector<20x224xf32>
    %179 = tpu.matmul %177, %178, %cst_136 {dimension_numbers = #tpu.dot_dimension_numbers<[1], [0], [0], [1], [0, 0, 1, 1], [], []>} : vector<20x10xf32>, vector<10x224xf32>, vector<20x224xf32> -> vector<20x224xf32>
    %180 = arith.addf %175, %179 : vector<20x224xf32>
    %c18 = arith.constant 18 : index
    %c0_137 = arith.constant 0 : index
    %c0_138 = arith.constant 0 : index
    %181 = vector.load %arg4[%c18, %c0_137, %c0_138] : memref<25x20x10xf32, #tpu.memory_space<vmem>>, vector<1x20x10xf32>
    %182 = vector.shape_cast %181 : vector<1x20x10xf32> to vector<20x10xf32>
    %183 = vector.extract_strided_slice %89 {offsets = [0, 216], sizes = [10, 224], strides = [1, 1]} : vector<10x512xf32> to vector<10x224xf32>
    %cst_139 = arith.constant dense<0.000000e+00> : vector<20x224xf32>
    %184 = tpu.matmul %182, %183, %cst_139 {dimension_numbers = #tpu.dot_dimension_numbers<[1], [0], [0], [1], [0, 0, 1, 1], [], []>} : vector<20x10xf32>, vector<10x224xf32>, vector<20x224xf32> -> vector<20x224xf32>
    %185 = arith.addf %180, %184 : vector<20x224xf32>
    %c19 = arith.constant 19 : index
    %c0_140 = arith.constant 0 : index
    %c0_141 = arith.constant 0 : index
    %186 = vector.load %arg4[%c19, %c0_140, %c0_141] : memref<25x20x10xf32, #tpu.memory_space<vmem>>, vector<1x20x10xf32>
    %187 = vector.shape_cast %186 : vector<1x20x10xf32> to vector<20x10xf32>
    %188 = vector.extract_strided_slice %89 {offsets = [0, 224], sizes = [10, 224], strides = [1, 1]} : vector<10x512xf32> to vector<10x224xf32>
    %cst_142 = arith.constant dense<0.000000e+00> : vector<20x224xf32>
    %189 = tpu.matmul %187, %188, %cst_142 {dimension_numbers = #tpu.dot_dimension_numbers<[1], [0], [0], [1], [0, 0, 1, 1], [], []>} : vector<20x10xf32>, vector<10x224xf32>, vector<20x224xf32> -> vector<20x224xf32>
    %190 = arith.addf %185, %189 : vector<20x224xf32>
    %c20_143 = arith.constant 20 : index
    %c0_144 = arith.constant 0 : index
    %c0_145 = arith.constant 0 : index
    %191 = vector.load %arg4[%c20_143, %c0_144, %c0_145] : memref<25x20x10xf32, #tpu.memory_space<vmem>>, vector<1x20x10xf32>
    %192 = vector.shape_cast %191 : vector<1x20x10xf32> to vector<20x10xf32>
    %193 = vector.extract_strided_slice %89 {offsets = [0, 256], sizes = [10, 224], strides = [1, 1]} : vector<10x512xf32> to vector<10x224xf32>
    %cst_146 = arith.constant dense<0.000000e+00> : vector<20x224xf32>
    %194 = tpu.matmul %192, %193, %cst_146 {dimension_numbers = #tpu.dot_dimension_numbers<[1], [0], [0], [1], [0, 0, 1, 1], [], []>} : vector<20x10xf32>, vector<10x224xf32>, vector<20x224xf32> -> vector<20x224xf32>
    %195 = arith.addf %190, %194 : vector<20x224xf32>
    %c21 = arith.constant 21 : index
    %c0_147 = arith.constant 0 : index
    %c0_148 = arith.constant 0 : index
    %196 = vector.load %arg4[%c21, %c0_147, %c0_148] : memref<25x20x10xf32, #tpu.memory_space<vmem>>, vector<1x20x10xf32>
    %197 = vector.shape_cast %196 : vector<1x20x10xf32> to vector<20x10xf32>
    %198 = vector.extract_strided_slice %89 {offsets = [0, 264], sizes = [10, 224], strides = [1, 1]} : vector<10x512xf32> to vector<10x224xf32>
    %cst_149 = arith.constant dense<0.000000e+00> : vector<20x224xf32>
    %199 = tpu.matmul %197, %198, %cst_149 {dimension_numbers = #tpu.dot_dimension_numbers<[1], [0], [0], [1], [0, 0, 1, 1], [], []>} : vector<20x10xf32>, vector<10x224xf32>, vector<20x224xf32> -> vector<20x224xf32>
    %200 = arith.addf %195, %199 : vector<20x224xf32>
    %c22 = arith.constant 22 : index
    %c0_150 = arith.constant 0 : index
    %c0_151 = arith.constant 0 : index
    %201 = vector.load %arg4[%c22, %c0_150, %c0_151] : memref<25x20x10xf32, #tpu.memory_space<vmem>>, vector<1x20x10xf32>
    %202 = vector.shape_cast %201 : vector<1x20x10xf32> to vector<20x10xf32>
    %203 = vector.extract_strided_slice %89 {offsets = [0, 272], sizes = [10, 224], strides = [1, 1]} : vector<10x512xf32> to vector<10x224xf32>
    %cst_152 = arith.constant dense<0.000000e+00> : vector<20x224xf32>
    %204 = tpu.matmul %202, %203, %cst_152 {dimension_numbers = #tpu.dot_dimension_numbers<[1], [0], [0], [1], [0, 0, 1, 1], [], []>} : vector<20x10xf32>, vector<10x224xf32>, vector<20x224xf32> -> vector<20x224xf32>
    %205 = arith.addf %200, %204 : vector<20x224xf32>
    %c23 = arith.constant 23 : index
    %c0_153 = arith.constant 0 : index
    %c0_154 = arith.constant 0 : index
    %206 = vector.load %arg4[%c23, %c0_153, %c0_154] : memref<25x20x10xf32, #tpu.memory_space<vmem>>, vector<1x20x10xf32>
    %207 = vector.shape_cast %206 : vector<1x20x10xf32> to vector<20x10xf32>
    %208 = vector.extract_strided_slice %89 {offsets = [0, 280], sizes = [10, 224], strides = [1, 1]} : vector<10x512xf32> to vector<10x224xf32>
    %cst_155 = arith.constant dense<0.000000e+00> : vector<20x224xf32>
    %209 = tpu.matmul %207, %208, %cst_155 {dimension_numbers = #tpu.dot_dimension_numbers<[1], [0], [0], [1], [0, 0, 1, 1], [], []>} : vector<20x10xf32>, vector<10x224xf32>, vector<20x224xf32> -> vector<20x224xf32>
    %210 = arith.addf %205, %209 : vector<20x224xf32>
    %c24 = arith.constant 24 : index
    %c0_156 = arith.constant 0 : index
    %c0_157 = arith.constant 0 : index
    %211 = vector.load %arg4[%c24, %c0_156, %c0_157] : memref<25x20x10xf32, #tpu.memory_space<vmem>>, vector<1x20x10xf32>
    %212 = vector.shape_cast %211 : vector<1x20x10xf32> to vector<20x10xf32>
    %213 = vector.extract_strided_slice %89 {offsets = [0, 288], sizes = [10, 224], strides = [1, 1]} : vector<10x512xf32> to vector<10x224xf32>
    %cst_158 = arith.constant dense<0.000000e+00> : vector<20x224xf32>
    %214 = tpu.matmul %212, %213, %cst_158 {dimension_numbers = #tpu.dot_dimension_numbers<[1], [0], [0], [1], [0, 0, 1, 1], [], []>} : vector<20x10xf32>, vector<10x224xf32>, vector<20x224xf32> -> vector<20x224xf32>
    %215 = arith.addf %210, %214 : vector<20x224xf32>
    %c0_159 = arith.constant 0 : index
    %c0_160 = arith.constant 0 : index
    %216 = vector.load %arg5[%c0_159, %c0_160] : memref<20x1xf32, #tpu.memory_space<vmem>>, vector<20x1xf32>
    %217 = vector.broadcast %216 : vector<20x1xf32> to vector<20x224xf32>
    %218 = arith.addf %215, %217 : vector<20x224xf32>
    %cst_161 = arith.constant 0.000000e+00 : f32
    %219 = vector.broadcast %cst_161 : f32 to vector<20x224xf32>
    %220 = arith.maximumf %218, %219 : vector<20x224xf32>
    %cst_162 = arith.constant 0.000000e+00 : f32
    %221 = vector.broadcast %cst_162 : f32 to vector<32x8xf32>
    %c0_163 = arith.constant 0 : index
    %c0_164 = arith.constant 0 : index
    %c0_165 = arith.constant 0 : index
    %222 = vector.load %arg6[%c0_163, %c0_164, %c0_165] : memref<16x32x20xf32, #tpu.memory_space<vmem>>, vector<1x32x20xf32>
    %223 = vector.shape_cast %222 : vector<1x32x20xf32> to vector<32x20xf32>
    %224 = vector.extract_strided_slice %220 {offsets = [0, 0], sizes = [20, 8], strides = [1, 1]} : vector<20x224xf32> to vector<20x8xf32>
    %cst_166 = arith.constant dense<0.000000e+00> : vector<32x8xf32>
    %225 = tpu.matmul %223, %224, %cst_166 {dimension_numbers = #tpu.dot_dimension_numbers<[1], [0], [0], [1], [0, 0, 1, 1], [], []>} : vector<32x20xf32>, vector<20x8xf32>, vector<32x8xf32> -> vector<32x8xf32>
    %226 = arith.addf %221, %225 : vector<32x8xf32>
    %c1_167 = arith.constant 1 : index
    %c0_168 = arith.constant 0 : index
    %c0_169 = arith.constant 0 : index
    %227 = vector.load %arg6[%c1_167, %c0_168, %c0_169] : memref<16x32x20xf32, #tpu.memory_space<vmem>>, vector<1x32x20xf32>
    %228 = vector.shape_cast %227 : vector<1x32x20xf32> to vector<32x20xf32>
    %229 = vector.extract_strided_slice %220 {offsets = [0, 8], sizes = [20, 8], strides = [1, 1]} : vector<20x224xf32> to vector<20x8xf32>
    %cst_170 = arith.constant dense<0.000000e+00> : vector<32x8xf32>
    %230 = tpu.matmul %228, %229, %cst_170 {dimension_numbers = #tpu.dot_dimension_numbers<[1], [0], [0], [1], [0, 0, 1, 1], [], []>} : vector<32x20xf32>, vector<20x8xf32>, vector<32x8xf32> -> vector<32x8xf32>
    %231 = arith.addf %226, %230 : vector<32x8xf32>
    %c2_171 = arith.constant 2 : index
    %c0_172 = arith.constant 0 : index
    %c0_173 = arith.constant 0 : index
    %232 = vector.load %arg6[%c2_171, %c0_172, %c0_173] : memref<16x32x20xf32, #tpu.memory_space<vmem>>, vector<1x32x20xf32>
    %233 = vector.shape_cast %232 : vector<1x32x20xf32> to vector<32x20xf32>
    %234 = vector.extract_strided_slice %220 {offsets = [0, 16], sizes = [20, 8], strides = [1, 1]} : vector<20x224xf32> to vector<20x8xf32>
    %cst_174 = arith.constant dense<0.000000e+00> : vector<32x8xf32>
    %235 = tpu.matmul %233, %234, %cst_174 {dimension_numbers = #tpu.dot_dimension_numbers<[1], [0], [0], [1], [0, 0, 1, 1], [], []>} : vector<32x20xf32>, vector<20x8xf32>, vector<32x8xf32> -> vector<32x8xf32>
    %236 = arith.addf %231, %235 : vector<32x8xf32>
    %c3_175 = arith.constant 3 : index
    %c0_176 = arith.constant 0 : index
    %c0_177 = arith.constant 0 : index
    %237 = vector.load %arg6[%c3_175, %c0_176, %c0_177] : memref<16x32x20xf32, #tpu.memory_space<vmem>>, vector<1x32x20xf32>
    %238 = vector.shape_cast %237 : vector<1x32x20xf32> to vector<32x20xf32>
    %239 = vector.extract_strided_slice %220 {offsets = [0, 24], sizes = [20, 8], strides = [1, 1]} : vector<20x224xf32> to vector<20x8xf32>
    %cst_178 = arith.constant dense<0.000000e+00> : vector<32x8xf32>
    %240 = tpu.matmul %238, %239, %cst_178 {dimension_numbers = #tpu.dot_dimension_numbers<[1], [0], [0], [1], [0, 0, 1, 1], [], []>} : vector<32x20xf32>, vector<20x8xf32>, vector<32x8xf32> -> vector<32x8xf32>
    %241 = arith.addf %236, %240 : vector<32x8xf32>
    %c4_179 = arith.constant 4 : index
    %c0_180 = arith.constant 0 : index
    %c0_181 = arith.constant 0 : index
    %242 = vector.load %arg6[%c4_179, %c0_180, %c0_181] : memref<16x32x20xf32, #tpu.memory_space<vmem>>, vector<1x32x20xf32>
    %243 = vector.shape_cast %242 : vector<1x32x20xf32> to vector<32x20xf32>
    %244 = vector.extract_strided_slice %220 {offsets = [0, 64], sizes = [20, 8], strides = [1, 1]} : vector<20x224xf32> to vector<20x8xf32>
    %cst_182 = arith.constant dense<0.000000e+00> : vector<32x8xf32>
    %245 = tpu.matmul %243, %244, %cst_182 {dimension_numbers = #tpu.dot_dimension_numbers<[1], [0], [0], [1], [0, 0, 1, 1], [], []>} : vector<32x20xf32>, vector<20x8xf32>, vector<32x8xf32> -> vector<32x8xf32>
    %246 = arith.addf %241, %245 : vector<32x8xf32>
    %c5_183 = arith.constant 5 : index
    %c0_184 = arith.constant 0 : index
    %c0_185 = arith.constant 0 : index
    %247 = vector.load %arg6[%c5_183, %c0_184, %c0_185] : memref<16x32x20xf32, #tpu.memory_space<vmem>>, vector<1x32x20xf32>
    %248 = vector.shape_cast %247 : vector<1x32x20xf32> to vector<32x20xf32>
    %249 = vector.extract_strided_slice %220 {offsets = [0, 72], sizes = [20, 8], strides = [1, 1]} : vector<20x224xf32> to vector<20x8xf32>
    %cst_186 = arith.constant dense<0.000000e+00> : vector<32x8xf32>
    %250 = tpu.matmul %248, %249, %cst_186 {dimension_numbers = #tpu.dot_dimension_numbers<[1], [0], [0], [1], [0, 0, 1, 1], [], []>} : vector<32x20xf32>, vector<20x8xf32>, vector<32x8xf32> -> vector<32x8xf32>
    %251 = arith.addf %246, %250 : vector<32x8xf32>
    %c6_187 = arith.constant 6 : index
    %c0_188 = arith.constant 0 : index
    %c0_189 = arith.constant 0 : index
    %252 = vector.load %arg6[%c6_187, %c0_188, %c0_189] : memref<16x32x20xf32, #tpu.memory_space<vmem>>, vector<1x32x20xf32>
    %253 = vector.shape_cast %252 : vector<1x32x20xf32> to vector<32x20xf32>
    %254 = vector.extract_strided_slice %220 {offsets = [0, 80], sizes = [20, 8], strides = [1, 1]} : vector<20x224xf32> to vector<20x8xf32>
    %cst_190 = arith.constant dense<0.000000e+00> : vector<32x8xf32>
    %255 = tpu.matmul %253, %254, %cst_190 {dimension_numbers = #tpu.dot_dimension_numbers<[1], [0], [0], [1], [0, 0, 1, 1], [], []>} : vector<32x20xf32>, vector<20x8xf32>, vector<32x8xf32> -> vector<32x8xf32>
    %256 = arith.addf %251, %255 : vector<32x8xf32>
    %c7_191 = arith.constant 7 : index
    %c0_192 = arith.constant 0 : index
    %c0_193 = arith.constant 0 : index
    %257 = vector.load %arg6[%c7_191, %c0_192, %c0_193] : memref<16x32x20xf32, #tpu.memory_space<vmem>>, vector<1x32x20xf32>
    %258 = vector.shape_cast %257 : vector<1x32x20xf32> to vector<32x20xf32>
    %259 = vector.extract_strided_slice %220 {offsets = [0, 88], sizes = [20, 8], strides = [1, 1]} : vector<20x224xf32> to vector<20x8xf32>
    %cst_194 = arith.constant dense<0.000000e+00> : vector<32x8xf32>
    %260 = tpu.matmul %258, %259, %cst_194 {dimension_numbers = #tpu.dot_dimension_numbers<[1], [0], [0], [1], [0, 0, 1, 1], [], []>} : vector<32x20xf32>, vector<20x8xf32>, vector<32x8xf32> -> vector<32x8xf32>
    %261 = arith.addf %256, %260 : vector<32x8xf32>
    %c8_195 = arith.constant 8 : index
    %c0_196 = arith.constant 0 : index
    %c0_197 = arith.constant 0 : index
    %262 = vector.load %arg6[%c8_195, %c0_196, %c0_197] : memref<16x32x20xf32, #tpu.memory_space<vmem>>, vector<1x32x20xf32>
    %263 = vector.shape_cast %262 : vector<1x32x20xf32> to vector<32x20xf32>
    %264 = vector.extract_strided_slice %220 {offsets = [0, 128], sizes = [20, 8], strides = [1, 1]} : vector<20x224xf32> to vector<20x8xf32>
    %cst_198 = arith.constant dense<0.000000e+00> : vector<32x8xf32>
    %265 = tpu.matmul %263, %264, %cst_198 {dimension_numbers = #tpu.dot_dimension_numbers<[1], [0], [0], [1], [0, 0, 1, 1], [], []>} : vector<32x20xf32>, vector<20x8xf32>, vector<32x8xf32> -> vector<32x8xf32>
    %266 = arith.addf %261, %265 : vector<32x8xf32>
    %c9_199 = arith.constant 9 : index
    %c0_200 = arith.constant 0 : index
    %c0_201 = arith.constant 0 : index
    %267 = vector.load %arg6[%c9_199, %c0_200, %c0_201] : memref<16x32x20xf32, #tpu.memory_space<vmem>>, vector<1x32x20xf32>
    %268 = vector.shape_cast %267 : vector<1x32x20xf32> to vector<32x20xf32>
    %269 = vector.extract_strided_slice %220 {offsets = [0, 136], sizes = [20, 8], strides = [1, 1]} : vector<20x224xf32> to vector<20x8xf32>
    %cst_202 = arith.constant dense<0.000000e+00> : vector<32x8xf32>
    %270 = tpu.matmul %268, %269, %cst_202 {dimension_numbers = #tpu.dot_dimension_numbers<[1], [0], [0], [1], [0, 0, 1, 1], [], []>} : vector<32x20xf32>, vector<20x8xf32>, vector<32x8xf32> -> vector<32x8xf32>
    %271 = arith.addf %266, %270 : vector<32x8xf32>
    %c10_203 = arith.constant 10 : index
    %c0_204 = arith.constant 0 : index
    %c0_205 = arith.constant 0 : index
    %272 = vector.load %arg6[%c10_203, %c0_204, %c0_205] : memref<16x32x20xf32, #tpu.memory_space<vmem>>, vector<1x32x20xf32>
    %273 = vector.shape_cast %272 : vector<1x32x20xf32> to vector<32x20xf32>
    %274 = vector.extract_strided_slice %220 {offsets = [0, 144], sizes = [20, 8], strides = [1, 1]} : vector<20x224xf32> to vector<20x8xf32>
    %cst_206 = arith.constant dense<0.000000e+00> : vector<32x8xf32>
    %275 = tpu.matmul %273, %274, %cst_206 {dimension_numbers = #tpu.dot_dimension_numbers<[1], [0], [0], [1], [0, 0, 1, 1], [], []>} : vector<32x20xf32>, vector<20x8xf32>, vector<32x8xf32> -> vector<32x8xf32>
    %276 = arith.addf %271, %275 : vector<32x8xf32>
    %c11_207 = arith.constant 11 : index
    %c0_208 = arith.constant 0 : index
    %c0_209 = arith.constant 0 : index
    %277 = vector.load %arg6[%c11_207, %c0_208, %c0_209] : memref<16x32x20xf32, #tpu.memory_space<vmem>>, vector<1x32x20xf32>
    %278 = vector.shape_cast %277 : vector<1x32x20xf32> to vector<32x20xf32>
    %279 = vector.extract_strided_slice %220 {offsets = [0, 152], sizes = [20, 8], strides = [1, 1]} : vector<20x224xf32> to vector<20x8xf32>
    %cst_210 = arith.constant dense<0.000000e+00> : vector<32x8xf32>
    %280 = tpu.matmul %278, %279, %cst_210 {dimension_numbers = #tpu.dot_dimension_numbers<[1], [0], [0], [1], [0, 0, 1, 1], [], []>} : vector<32x20xf32>, vector<20x8xf32>, vector<32x8xf32> -> vector<32x8xf32>
    %281 = arith.addf %276, %280 : vector<32x8xf32>
    %c12_211 = arith.constant 12 : index
    %c0_212 = arith.constant 0 : index
    %c0_213 = arith.constant 0 : index
    %282 = vector.load %arg6[%c12_211, %c0_212, %c0_213] : memref<16x32x20xf32, #tpu.memory_space<vmem>>, vector<1x32x20xf32>
    %283 = vector.shape_cast %282 : vector<1x32x20xf32> to vector<32x20xf32>
    %284 = vector.extract_strided_slice %220 {offsets = [0, 192], sizes = [20, 8], strides = [1, 1]} : vector<20x224xf32> to vector<20x8xf32>
    %cst_214 = arith.constant dense<0.000000e+00> : vector<32x8xf32>
    %285 = tpu.matmul %283, %284, %cst_214 {dimension_numbers = #tpu.dot_dimension_numbers<[1], [0], [0], [1], [0, 0, 1, 1], [], []>} : vector<32x20xf32>, vector<20x8xf32>, vector<32x8xf32> -> vector<32x8xf32>
    %286 = arith.addf %281, %285 : vector<32x8xf32>
    %c13_215 = arith.constant 13 : index
    %c0_216 = arith.constant 0 : index
    %c0_217 = arith.constant 0 : index
    %287 = vector.load %arg6[%c13_215, %c0_216, %c0_217] : memref<16x32x20xf32, #tpu.memory_space<vmem>>, vector<1x32x20xf32>
    %288 = vector.shape_cast %287 : vector<1x32x20xf32> to vector<32x20xf32>
    %289 = vector.extract_strided_slice %220 {offsets = [0, 200], sizes = [20, 8], strides = [1, 1]} : vector<20x224xf32> to vector<20x8xf32>
    %cst_218 = arith.constant dense<0.000000e+00> : vector<32x8xf32>
    %290 = tpu.matmul %288, %289, %cst_218 {dimension_numbers = #tpu.dot_dimension_numbers<[1], [0], [0], [1], [0, 0, 1, 1], [], []>} : vector<32x20xf32>, vector<20x8xf32>, vector<32x8xf32> -> vector<32x8xf32>
    %291 = arith.addf %286, %290 : vector<32x8xf32>
    %c14_219 = arith.constant 14 : index
    %c0_220 = arith.constant 0 : index
    %c0_221 = arith.constant 0 : index
    %292 = vector.load %arg6[%c14_219, %c0_220, %c0_221] : memref<16x32x20xf32, #tpu.memory_space<vmem>>, vector<1x32x20xf32>
    %293 = vector.shape_cast %292 : vector<1x32x20xf32> to vector<32x20xf32>
    %294 = vector.extract_strided_slice %220 {offsets = [0, 208], sizes = [20, 8], strides = [1, 1]} : vector<20x224xf32> to vector<20x8xf32>
    %cst_222 = arith.constant dense<0.000000e+00> : vector<32x8xf32>
    %295 = tpu.matmul %293, %294, %cst_222 {dimension_numbers = #tpu.dot_dimension_numbers<[1], [0], [0], [1], [0, 0, 1, 1], [], []>} : vector<32x20xf32>, vector<20x8xf32>, vector<32x8xf32> -> vector<32x8xf32>
    %296 = arith.addf %291, %295 : vector<32x8xf32>
    %c15_223 = arith.constant 15 : index
    %c0_224 = arith.constant 0 : index
    %c0_225 = arith.constant 0 : index
    %297 = vector.load %arg6[%c15_223, %c0_224, %c0_225] : memref<16x32x20xf32, #tpu.memory_space<vmem>>, vector<1x32x20xf32>
    %298 = vector.shape_cast %297 : vector<1x32x20xf32> to vector<32x20xf32>
    %299 = vector.extract_strided_slice %220 {offsets = [0, 216], sizes = [20, 8], strides = [1, 1]} : vector<20x224xf32> to vector<20x8xf32>
    %cst_226 = arith.constant dense<0.000000e+00> : vector<32x8xf32>
    %300 = tpu.matmul %298, %299, %cst_226 {dimension_numbers = #tpu.dot_dimension_numbers<[1], [0], [0], [1], [0, 0, 1, 1], [], []>} : vector<32x20xf32>, vector<20x8xf32>, vector<32x8xf32> -> vector<32x8xf32>
    %301 = arith.addf %296, %300 : vector<32x8xf32>
    %c0_227 = arith.constant 0 : index
    %c0_228 = arith.constant 0 : index
    %302 = vector.load %arg7[%c0_227, %c0_228] : memref<32x1xf32, #tpu.memory_space<vmem>>, vector<32x1xf32>
    %303 = vector.broadcast %302 : vector<32x1xf32> to vector<32x8xf32>
    %304 = arith.addf %301, %303 : vector<32x8xf32>
    %cst_229 = arith.constant 0.000000e+00 : f32
    %305 = vector.broadcast %cst_229 : f32 to vector<32x8xf32>
    %306 = arith.maximumf %304, %305 : vector<32x8xf32>
    %c0_230 = arith.constant 0 : index
    %c0_231 = arith.constant 0 : index
    %307 = vector.load %arg8[%c0_230, %c0_231] : memref<32x10xf32, #tpu.memory_space<vmem>>, vector<32x10xf32>
    %cst_232 = arith.constant dense<0.000000e+00> : vector<8x10xf32>
    %308 = tpu.matmul %306, %307, %cst_232 {dimension_numbers = #tpu.dot_dimension_numbers<[0], [0], [1], [1], [0, 1, 1, 1], [], []>} : vector<32x8xf32>, vector<32x10xf32>, vector<8x10xf32> -> vector<8x10xf32>
    %c0_233 = arith.constant 0 : index
    %c0_234 = arith.constant 0 : index
    %309 = vector.load %arg9[%c0_233, %c0_234] : memref<1x10xf32, #tpu.memory_space<vmem>>, vector<1x10xf32>
    %310 = vector.broadcast %309 : vector<1x10xf32> to vector<8x10xf32>
    %311 = arith.addf %308, %310 : vector<8x10xf32>
    %c0_235 = arith.constant 0 : index
    %c0_236 = arith.constant 0 : index
    %312 = vector.load %arg10[%c0_235, %c0_236] : memref<8x10xf32, #tpu.memory_space<vmem>>, vector<8x10xf32>
    tpu.vector_store %arg10[%c0_235, %c0_236], %311 {strides = array<i32>} : memref<8x10xf32, #tpu.memory_space<vmem>>, vector<8x10xf32>,
    return
  }
  func.func @transform_0(%arg0: i32) -> (i32, i32, i32) {
    %c0_i32 = arith.constant 0 : i32
    %c0_i32_0 = arith.constant 0 : i32
    %c0_i32_1 = arith.constant 0 : i32
    return %arg0, %c0_i32, %c0_i32_0 : i32, i32, i32
  }
  func.func @transform_1(%arg0: i32) -> (i32, i32) {
    %c0_i32 = arith.constant 0 : i32
    %c0_i32_0 = arith.constant 0 : i32
    %c0_i32_1 = arith.constant 0 : i32
    return %c0_i32, %c0_i32_0 : i32, i32
  }
  func.func @transform_2(%arg0: i32) -> (i32, i32) {
    %c0_i32 = arith.constant 0 : i32
    %c0_i32_0 = arith.constant 0 : i32
    %c0_i32_1 = arith.constant 0 : i32
    return %c0_i32, %c0_i32_0 : i32, i32
  }
  func.func @transform_3(%arg0: i32) -> (i32, i32, i32) {
    %c0_i32 = arith.constant 0 : i32
    %c0_i32_0 = arith.constant 0 : i32
    %c0_i32_1 = arith.constant 0 : i32
    %c0_i32_2 = arith.constant 0 : i32
    return %c0_i32, %c0_i32_0, %c0_i32_1 : i32, i32, i32
  }
  func.func @transform_4(%arg0: i32) -> (i32, i32) {
    %c0_i32 = arith.constant 0 : i32
    %c0_i32_0 = arith.constant 0 : i32
    %c0_i32_1 = arith.constant 0 : i32
    return %c0_i32, %c0_i32_0 : i32, i32
  }
  func.func @transform_5(%arg0: i32) -> (i32, i32, i32) {
    %c0_i32 = arith.constant 0 : i32
    %c0_i32_0 = arith.constant 0 : i32
    %c0_i32_1 = arith.constant 0 : i32
    %c0_i32_2 = arith.constant 0 : i32
    return %c0_i32, %c0_i32_0, %c0_i32_1 : i32, i32, i32
  }
  func.func @transform_6(%arg0: i32) -> (i32, i32) {
    %c0_i32 = arith.constant 0 : i32
    %c0_i32_0 = arith.constant 0 : i32
    %c0_i32_1 = arith.constant 0 : i32
    return %c0_i32, %c0_i32_0 : i32, i32
  }
  func.func @transform_7(%arg0: i32) -> (i32, i32) {
    %c0_i32 = arith.constant 0 : i32
    %c0_i32_0 = arith.constant 0 : i32
    %c0_i32_1 = arith.constant 0 : i32
    return %c0_i32, %c0_i32_0 : i32, i32
  }
  func.func @transform_8(%arg0: i32) -> (i32, i32) {
    %c0_i32 = arith.constant 0 : i32
    %c0_i32_0 = arith.constant 0 : i32
    %c0_i32_1 = arith.constant 0 : i32
    return %c0_i32, %c0_i32_0 : i32, i32
  }
  func.func @transform_9(%arg0: i32) -> (i32, i32) {
    %c0_i32 = arith.constant 0 : i32
    %c0_i32_0 = arith.constant 0 : i32
    return %arg0, %c0_i32 : i32, i32
  }
}

</mosaic_0001>

<llo_original>
// kernel: cnn_forward.1
$region0: #{cnn_forward.1}
  #allocation0 [shape = 'u32[]', space=smem, size = 0x4, offset = 0x4, fixed_abs, tag = 'smem constant byte address 0x4 - core index']
  #allocation1 [shape = 'u32[144,128]{1,0:T(1,128)}', space=vmem, size = 0x12000, scoped, tag = 'internal scratch']
  #allocation2 [shape = 'f32[25,512]{1,0:T(8,128)}', space=vmem, size = 0x10000, scoped, tag = 'scratch operand']
  %s0 = inlined_call_operand.vmem [shape: f32[2,12,96], index: 0, kind: input, shape index: {}]
  %s1 = inlined_call_operand.vmem [shape: f32[10,25], index: 1, kind: input, shape index: {}]
  %s2 = inlined_call_operand.vmem [shape: f32[10,1], index: 2, kind: input, shape index: {}]
  %s3 = inlined_call_operand.vmem [shape: f32[25,20,10], index: 3, kind: input, shape index: {}]
  %s4 = inlined_call_operand.vmem [shape: f32[20,1], index: 4, kind: input, shape index: {}]
  %s5 = inlined_call_operand.vmem [shape: f32[16,32,20], index: 5, kind: input, shape index: {}]
  %s6 = inlined_call_operand.vmem [shape: f32[32,1], index: 6, kind: input, shape index: {}]
  %s7 = inlined_call_operand.vmem [shape: f32[32,10], index: 7, kind: input, shape index: {}]
  %s8 = inlined_call_operand.vmem [shape: f32[1,10], index: 8, kind: input, shape index: {}]
  %s9 = inlined_call_operand.hbm [shape: f32[16,10], index: 9, kind: output, shape index: {}]
  %s10 = sld [smem:[#allocation0]]
  $region69: #{cnn_forward.1} parent=0
    _
  %s12 = ssub.s32 1, %s10
  %s13 = scalar_select 0, %s12, %s10
  $region1: #{cnn_forward.1} parent=0
    #allocation3 [shape = 'u8[8192]{0}', space=vmem, size = 0x2000, scoped, tag = 'output window, operand 0']
    #allocation4 [shape = 's32[2]{0}', space=sflag, size = 0x8, scoped, tag = 'scoped memory for cnn_forward.1']
    %14 = vsyncpa [#allocation4], 0
    %s15 = scalar_lea.sflag [#allocation4], 1
    %16 = vsyncpa %s15, 0
    loop: start=0, step=1, limit=4
    $region2: #{cnn_forward.1} parent=1 // loop_pre_header
      _
    $region3: #{cnn_forward.1} parent=1 // loop_header
      %s18 = sphi 0, %s22
      %p19 = scmp.ge.s32.totalorder %s18, 4
      %s28 = sphi 0, %s30
      %s31 = sphi 0, %s28
      %s32 = sphi 0, %s31
      %s48 = sphi 0, %s32
      %s52 = sphi 0, %s52
      %s54 = sphi 0, %s52
      %s55 = sphi 0, %s54
      %s69 = sphi 0, %s55
      %s73 = sphi 0, %s73
      %s75 = sphi 0, %s73
      %s76 = sphi 0, %s75
      %s90 = sphi 0, %s76
      %s94 = sphi 0, %s94
      %s96 = sphi 0, %s94
      %s97 = sphi 0, %s96
      %s111 = sphi 0, %s97
      %s115 = sphi 0, %s115
      %s117 = sphi 0, %s115
      %s118 = sphi 0, %s117
      %s132 = sphi 0, %s118
      %s136 = sphi 0, %s136
      %s138 = sphi 0, %s136
      %s139 = sphi 0, %s138
      %s153 = sphi 0, %s139
      %s157 = sphi 0, %s157
      %s159 = sphi 0, %s157
      %s160 = sphi 0, %s159
      %s174 = sphi 0, %s160
      %s178 = sphi 0, %s178
      %s180 = sphi 0, %s178
      %s181 = sphi 0, %s180
      %s195 = sphi 0, %s181
      %s199 = sphi 0, %s199
      %s201 = sphi 0, %s199
      %s202 = sphi 0, %s201
      %s216 = sphi 0, %s202
      %s222 = sphi 0, %s224
      %s225 = sphi 0, %s222
      %s226 = sphi 0, %s225
      %s242 = sphi 0, %s226
    $region4: #{cnn_forward.1} parent=1 // loop_header_branch
      %21 = sbr.rel (%p19) target = $region8
    $region5: #{cnn_forward.1} parent=1 // loop_body
      %s23 = ssub.s32 %s18, 1
      %s24 = ssub.s32 %s18, 2
      %s25 = sadd.s32 %s18, 1
      %s26 = ssub.s32 %s18, %s25
      %p27 = scmp.eq.s32.totalorder %s26, 0
      %s29 = sadd.s32 %s28, 1
      %s30 = scalar_select %p27, %s28, %s29
      %p33 = pneg %p27
      %p34 = scmp.eq.s32.totalorder %s18, 1
      %p35 = por %p33, %p34
      %p36 = scmp.ne.s32.totalorder %s28, %s31
      %p37 = scmp.eq.s32.totalorder %s18, 0
      %p38 = por %p36, %p37
      %p39 = scmp.ne.s32.totalorder %s28, %s31
      %p40 = scmp.eq.s32.totalorder %s23, 1
      %p41 = por %p39, %p40
      %p42 = scmp.ne.s32.totalorder %s31, %s32
      %p43 = scmp.eq.s32.totalorder %s23, 0
      %p44 = por %p42, %p43
      %p45 = scmp.ne.s32.totalorder %s31, %s32
      %p46 = scmp.eq.s32.totalorder %s24, 1
      %p47 = por %p45, %p46
      %p49 = scmp.ne.s32.totalorder %s32, %s48
      %p50 = scmp.eq.s32.totalorder %s24, 0
      %p51 = por %p49, %p50
      %s53 = sadd.s32 %s52, 1
      %p56 = scmp.eq.s32.totalorder %s18, 1
      %p57 = scmp.ne.s32.totalorder %s52, %s54
      %p58 = scmp.eq.s32.totalorder %s18, 0
      %p59 = por %p57, %p58
      %p60 = scmp.ne.s32.totalorder %s52, %s54
      %p61 = scmp.eq.s32.totalorder %s23, 1
      %p62 = por %p60, %p61
      %p63 = scmp.ne.s32.totalorder %s54, %s55
      %p64 = scmp.eq.s32.totalorder %s23, 0
      %p65 = por %p63, %p64
      %p66 = scmp.ne.s32.totalorder %s54, %s55
      %p67 = scmp.eq.s32.totalorder %s24, 1
      %p68 = por %p66, %p67
      %p70 = scmp.ne.s32.totalorder %s55, %s69
      %p71 = scmp.eq.s32.totalorder %s24, 0
      %p72 = por %p70, %p71
      %s74 = sadd.s32 %s73, 1
      %p77 = scmp.eq.s32.totalorder %s18, 1
      %p78 = scmp.ne.s32.totalorder %s73, %s75
      %p79 = scmp.eq.s32.totalorder %s18, 0
      %p80 = por %p78, %p79
      %p81 = scmp.ne.s32.totalorder %s73, %s75
      %p82 = scmp.eq.s32.totalorder %s23, 1
      %p83 = por %p81, %p82
      %p84 = scmp.ne.s32.totalorder %s75, %s76
      %p85 = scmp.eq.s32.totalorder %s23, 0
      %p86 = por %p84, %p85
      %p87 = scmp.ne.s32.totalorder %s75, %s76
      %p88 = scmp.eq.s32.totalorder %s24, 1
      %p89 = por %p87, %p88
      %p91 = scmp.ne.s32.totalorder %s76, %s90
      %p92 = scmp.eq.s32.totalorder %s24, 0
      %p93 = por %p91, %p92
      %s95 = sadd.s32 %s94, 1
      %p98 = scmp.eq.s32.totalorder %s18, 1
      %p99 = scmp.ne.s32.totalorder %s94, %s96
      %p100 = scmp.eq.s32.totalorder %s18, 0
      %p101 = por %p99, %p100
      %p102 = scmp.ne.s32.totalorder %s94, %s96
      %p103 = scmp.eq.s32.totalorder %s23, 1
      %p104 = por %p102, %p103
      %p105 = scmp.ne.s32.totalorder %s96, %s97
      %p106 = scmp.eq.s32.totalorder %s23, 0
      %p107 = por %p105, %p106
      %p108 = scmp.ne.s32.totalorder %s96, %s97
      %p109 = scmp.eq.s32.totalorder %s24, 1
      %p110 = por %p108, %p109
      %p112 = scmp.ne.s32.totalorder %s97, %s111
      %p113 = scmp.eq.s32.totalorder %s24, 0
      %p114 = por %p112, %p113
      %s116 = sadd.s32 %s115, 1
      %p119 = scmp.eq.s32.totalorder %s18, 1
      %p120 = scmp.ne.s32.totalorder %s115, %s117
      %p121 = scmp.eq.s32.totalorder %s18, 0
      %p122 = por %p120, %p121
      %p123 = scmp.ne.s32.totalorder %s115, %s117
      %p124 = scmp.eq.s32.totalorder %s23, 1
      %p125 = por %p123, %p124
      %p126 = scmp.ne.s32.totalorder %s117, %s118
      %p127 = scmp.eq.s32.totalorder %s23, 0
      %p128 = por %p126, %p127
      %p129 = scmp.ne.s32.totalorder %s117, %s118
      %p130 = scmp.eq.s32.totalorder %s24, 1
      %p131 = por %p129, %p130
      %p133 = scmp.ne.s32.totalorder %s118, %s132
      %p134 = scmp.eq.s32.totalorder %s24, 0
      %p135 = por %p133, %p134
      %s137 = sadd.s32 %s136, 1
      %p140 = scmp.eq.s32.totalorder %s18, 1
      %p141 = scmp.ne.s32.totalorder %s136, %s138
      %p142 = scmp.eq.s32.totalorder %s18, 0
      %p143 = por %p141, %p142
      %p144 = scmp.ne.s32.totalorder %s136, %s138
      %p145 = scmp.eq.s32.totalorder %s23, 1
      %p146 = por %p144, %p145
      %p147 = scmp.ne.s32.totalorder %s138, %s139
      %p148 = scmp.eq.s32.totalorder %s23, 0
      %p149 = por %p147, %p148
      %p150 = scmp.ne.s32.totalorder %s138, %s139
      %p151 = scmp.eq.s32.totalorder %s24, 1
      %p152 = por %p150, %p151
      %p154 = scmp.ne.s32.totalorder %s139, %s153
      %p155 = scmp.eq.s32.totalorder %s24, 0
      %p156 = por %p154, %p155
      %s158 = sadd.s32 %s157, 1
      %p161 = scmp.eq.s32.totalorder %s18, 1
      %p162 = scmp.ne.s32.totalorder %s157, %s159
      %p163 = scmp.eq.s32.totalorder %s18, 0
      %p164 = por %p162, %p163
      %p165 = scmp.ne.s32.totalorder %s157, %s159
      %p166 = scmp.eq.s32.totalorder %s23, 1
      %p167 = por %p165, %p166
      %p168 = scmp.ne.s32.totalorder %s159, %s160
      %p169 = scmp.eq.s32.totalorder %s23, 0
      %p170 = por %p168, %p169
      %p171 = scmp.ne.s32.totalorder %s159, %s160
      %p172 = scmp.eq.s32.totalorder %s24, 1
      %p173 = por %p171, %p172
      %p175 = scmp.ne.s32.totalorder %s160, %s174
      %p176 = scmp.eq.s32.totalorder %s24, 0
      %p177 = por %p175, %p176
      %s179 = sadd.s32 %s178, 1
      %p182 = scmp.eq.s32.totalorder %s18, 1
      %p183 = scmp.ne.s32.totalorder %s178, %s180
      %p184 = scmp.eq.s32.totalorder %s18, 0
      %p185 = por %p183, %p184
      %p186 = scmp.ne.s32.totalorder %s178, %s180
      %p187 = scmp.eq.s32.totalorder %s23, 1
      %p188 = por %p186, %p187
      %p189 = scmp.ne.s32.totalorder %s180, %s181
      %p190 = scmp.eq.s32.totalorder %s23, 0
      %p191 = por %p189, %p190
      %p192 = scmp.ne.s32.totalorder %s180, %s181
      %p193 = scmp.eq.s32.totalorder %s24, 1
      %p194 = por %p192, %p193
      %p196 = scmp.ne.s32.totalorder %s181, %s195
      %p197 = scmp.eq.s32.totalorder %s24, 0
      %p198 = por %p196, %p197
      %s200 = sadd.s32 %s199, 1
      %p203 = scmp.eq.s32.totalorder %s18, 1
      %p204 = scmp.ne.s32.totalorder %s199, %s201
      %p205 = scmp.eq.s32.totalorder %s18, 0
      %p206 = por %p204, %p205
      %p207 = scmp.ne.s32.totalorder %s199, %s201
      %p208 = scmp.eq.s32.totalorder %s23, 1
      %p209 = por %p207, %p208
      %p210 = scmp.ne.s32.totalorder %s201, %s202
      %p211 = scmp.eq.s32.totalorder %s23, 0
      %p212 = por %p210, %p211
      %p213 = scmp.ne.s32.totalorder %s201, %s202
      %p214 = scmp.eq.s32.totalorder %s24, 1
      %p215 = por %p213, %p214
      %p217 = scmp.ne.s32.totalorder %s202, %s216
      %p218 = scmp.eq.s32.totalorder %s24, 0
      %p219 = por %p217, %p218
      %s220 = ssub.s32 %s18, %s25
      %p221 = scmp.eq.s32.totalorder %s220, 0
      %s223 = sadd.s32 %s222, 1
      %s224 = scalar_select %p221, %s222, %s223
      %p227 = pneg %p221
      %p228 = scmp.eq.s32.totalorder %s18, 1
      %p229 = por %p227, %p228
      %p230 = scmp.ne.s32.totalorder %s222, %s225
      %p231 = scmp.eq.s32.totalorder %s18, 0
      %p232 = por %p230, %p231
      %p233 = scmp.ne.s32.totalorder %s222, %s225
      %p234 = scmp.eq.s32.totalorder %s23, 1
      %p235 = por %p233, %p234
      %p236 = scmp.ne.s32.totalorder %s225, %s226
      %p237 = scmp.eq.s32.totalorder %s23, 0
      %p238 = por %p236, %p237
      %p239 = scmp.ne.s32.totalorder %s225, %s226
      %p240 = scmp.eq.s32.totalorder %s24, 1
      %p241 = por %p239, %p240
      %p243 = scmp.ne.s32.totalorder %s226, %s242
      %p244 = scmp.eq.s32.totalorder %s24, 0
      %p245 = por %p243, %p244
      %p246 = scmp.le.s32.totalorder 1, %s18
      %p247 = scmp.lt.s32.totalorder %s18, 3
      %p248 = pnand %p246, %p247
      %p249 = pneg %p248
      // Predicated region
      $region9: #{cnn_forward.1} parent=5 // pred_check
        _
      $region10: #{cnn_forward.1} parent=5 // pred_check_branch
        %251 = sbr.rel (%p248) target = $region12
      $region11: #{cnn_forward.1} parent=5 // pred_region
        %s252 = ssub.s32 %s18, 1
        // Predicated region
        $region13: #{cnn_forward.1} parent=11 // pred_check
          %p253 = pneg %p65
        $region14: #{cnn_forward.1} parent=11 // pred_check_branch
          %255 = sbr.rel (%p253) target = $region16
        $region15: #{cnn_forward.1} parent=11 // pred_region
          _
        $region16: #{cnn_forward.1} parent=11 // pred_fallthru
          _
        // Predicated region
        $region17: #{cnn_forward.1} parent=11 // pred_check
          %p256 = pneg %p86
        $region18: #{cnn_forward.1} parent=11 // pred_check_branch
          %258 = sbr.rel (%p256) target = $region20
        $region19: #{cnn_forward.1} parent=11 // pred_region
          _
        $region20: #{cnn_forward.1} parent=11 // pred_fallthru
          _
        // Predicated region
        $region21: #{cnn_forward.1} parent=11 // pred_check
          %p259 = pneg %p107
        $region22: #{cnn_forward.1} parent=11 // pred_check_branch
          %261 = sbr.rel (%p259) target = $region24
        $region23: #{cnn_forward.1} parent=11 // pred_region
          _
        $region24: #{cnn_forward.1} parent=11 // pred_fallthru
          _
        // Predicated region
        $region25: #{cnn_forward.1} parent=11 // pred_check
          %p262 = pneg %p128
        $region26: #{cnn_forward.1} parent=11 // pred_check_branch
          %264 = sbr.rel (%p262) target = $region28
        $region27: #{cnn_forward.1} parent=11 // pred_region
          _
        $region28: #{cnn_forward.1} parent=11 // pred_fallthru
          _
        // Predicated region
        $region29: #{cnn_forward.1} parent=11 // pred_check
          %p265 = pneg %p149
        $region30: #{cnn_forward.1} parent=11 // pred_check_branch
          %267 = sbr.rel (%p265) target = $region32
        $region31: #{cnn_forward.1} parent=11 // pred_region
          _
        $region32: #{cnn_forward.1} parent=11 // pred_fallthru
          _
        // Predicated region
        $region33: #{cnn_forward.1} parent=11 // pred_check
          %p268 = pneg %p170
        $region34: #{cnn_forward.1} parent=11 // pred_check_branch
          %270 = sbr.rel (%p268) target = $region36
        $region35: #{cnn_forward.1} parent=11 // pred_region
          _
        $region36: #{cnn_forward.1} parent=11 // pred_fallthru
          _
        // Predicated region
        $region37: #{cnn_forward.1} parent=11 // pred_check
          %p271 = pneg %p191
        $region38: #{cnn_forward.1} parent=11 // pred_check_branch
          %273 = sbr.rel (%p271) target = $region40
        $region39: #{cnn_forward.1} parent=11 // pred_region
          _
        $region40: #{cnn_forward.1} parent=11 // pred_fallthru
          _
        // Predicated region
        $region41: #{cnn_forward.1} parent=11 // pred_check
          %p274 = pneg %p212
        $region42: #{cnn_forward.1} parent=11 // pred_check_branch
          %276 = sbr.rel (%p274) target = $region44
        $region43: #{cnn_forward.1} parent=11 // pred_region
          _
        $region44: #{cnn_forward.1} parent=11 // pred_fallthru
          _
      $region12: #{cnn_forward.1} parent=5 // pred_fallthru
        _
      %p277 = scmp.lt.s32.totalorder %s18, 2
      // Predicated region
      $region45: #{cnn_forward.1} parent=5 // pred_check
        %p278 = pneg %p277
      $region46: #{cnn_forward.1} parent=5 // pred_check_branch
        %280 = sbr.rel (%p278) target = $region48
      $region47: #{cnn_forward.1} parent=5 // pred_region
        // Predicated region
        $region49: #{cnn_forward.1} parent=47 // pred_check
          %p281 = pneg %p38
        $region50: #{cnn_forward.1} parent=47 // pred_check_branch
          %283 = sbr.rel (%p281) target = $region52
        $region51: #{cnn_forward.1} parent=47 // pred_region
          %p284 = scmp.lt.s32.totalorder %s18, 1
          %s285 = scalar_select %p284, %s18, 1
          %s286 = smul.addr %s285, 2
          %s287 = smul.addr %s286, 8
          %s288 = scalar_lea.vmem %s0, %s287
        $region52: #{cnn_forward.1} parent=47 // pred_fallthru
          _
      $region48: #{cnn_forward.1} parent=5 // pred_fallthru
        _
      %p289 = scmp.le.s32.totalorder 1, %s18
      %p290 = scmp.lt.s32.totalorder %s18, 3
      %p291 = pnand %p289, %p290
      %p292 = pneg %p291
      // Predicated region
      $region53: #{cnn_forward.1} parent=5 // pred_check
        _
      $region54: #{cnn_forward.1} parent=5 // pred_check_branch
        %294 = sbr.rel (%p291) target = $region56
      $region55: #{cnn_forward.1} parent=5 // pred_region
        %s295 = ssub.s32 %s18, 1
        %p296 = scmp.lt.s32.totalorder %s23, 1
        %s297 = scalar_select %p296, %s23, 1
        %s298 = smul.addr %s297, 2
        %s299 = smul.addr %s298, 8
        %s300 = scalar_lea.vmem %s0, %s299
        %p301 = pneg %p44
        %p302 = pneg %p41
        %p303 = pneg %p65
        %p304 = pneg %p62
        %p305 = pneg %p86
        %p306 = pneg %p83
        %p307 = pneg %p107
        %p308 = pneg %p104
        %p309 = pneg %p128
        %p310 = pneg %p125
        %p311 = pneg %p149
        %p312 = pneg %p146
        %p313 = pneg %p170
        %p314 = pneg %p167
        %p315 = pneg %p191
        %p316 = pneg %p188
        %p317 = pneg %p212
        %p318 = pneg %p209
        %p319 = pneg %p238
        %p320 = pneg %p235
        %s321 = sand.u32 %s225, 1
        %s322 = scalar_lea.sflag [#allocation4], %s321
        %s323 = sand.u32 %s225, 1
        %s324 = smul.addr %s323, 8
        %s325 = scalar_lea.vmem [#allocation3], %s324
        %p326 = scmp.lt.s32.totalorder %s23, 1
        %s327 = scalar_select %p326, %s23, 1
        %s328 = smul.addr %s327, 2
        %s329 = smul.addr %s328, 8
        %s330 = scalar_lea.vmem %s0, %s329
        %v331 = vld [vmem:[%s330] sm:$0xff]
        %v332 = vld [vmem:[%s330 + $0x8] sm:$0xf]
        %vm333 = vcmask 520192
        %334 = vst.msk [vmem:[#allocation2] sm:$0x1f] %vm333, %v331
        %v336 = vrot.slane %v331, 1
        %337 = vrot.lane.b32.xlu0 %v336, 64
        %v338 = vpop.permute.xlu0 %337
        %vm340 = vcmask 1044992
        %341 = vst.msk [vmem:[#allocation2] sm:$0x1f] %vm340, %v338
        %v342 = vrot.slane %v331, 2
        %344 = vst.msk [vmem:[#allocation2 + $0x8] sm:$0x1f] %vm333, %v342
        %v345 = vrot.slane %v331, 3
        %346 = vrot.lane.b32.xlu0 %v345, 64
        %v347 = vpop.permute.xlu0 %346
        %349 = vst.msk [vmem:[#allocation2 + $0x8] sm:$0x1f] %vm340, %v347
        %vm351 = vcmask 1043456
        %v352 = vrot.slane %v331, 4
        %v353 = vrot.slane %v332, 4
        %v354 = vsel %vm351, %v352, %v353
        %356 = vst.msk [vmem:[#allocation2 + $0x10] sm:$0x1f] %vm333, %v354
        %vm357 = vcmask 1042432
        %v358 = vrot.slane %v331, 5
        %v359 = vrot.slane %v332, 5
        %v360 = vsel %vm357, %v358, %v359
        %361 = vrot.lane.b32.xlu0 %v360, 64
        %v362 = vpop.permute.xlu0 %361
        %364 = vst.msk [vmem:[#allocation2 + $0x10] sm:$0x1f] %vm340, %v362
        %vm365 = vcmask 1041408
        %v366 = vrot.slane %v331, 6
        %v367 = vrot.slane %v332, 6
        %v368 = vsel %vm365, %v366, %v367
        %370 = vst.msk [vmem:[#allocation2 + $0x18] sm:$0x1f] %vm333, %v368
        %vm371 = vcmask 1040384
        %v372 = vrot.slane %v331, 7
        %v373 = vrot.slane %v332, 7
        %v374 = vsel %vm371, %v372, %v373
        %375 = vrot.lane.b32.xlu0 %v374, 64
        %v376 = vpop.permute.xlu0 %375
        %378 = vst.msk [vmem:[#allocation2 + $0x18] sm:$0x1f] %vm340, %v376
        %379 = vrot.lane.b32.xlu0 %v345, 120
        %v380 = vpop.permute.xlu0 %379
        %vm382 = vcmask 523269
        %383 = vst.msk [vmem:[#allocation2] sm:$0xe0] %vm382, %v380
        %vm384 = vcmask 517120
        %385 = vst.msk [vmem:[#allocation2 + $0x20] sm:$0x3] %vm384, %v380
        %386 = vrot.lane.b32.xlu0 %v352, 56
        %v387 = vpop.permute.xlu0 %386
        %vm389 = vcmask 1048069
        %390 = vst.msk [vmem:[#allocation2] sm:$0xe0] %vm389, %v387
        %vm391 = vcmask 1041920
        %392 = vst.msk [vmem:[#allocation2 + $0x20] sm:$0x3] %vm391, %v387
        %393 = vrot.lane.b32.xlu0 %v358, 120
        %v394 = vpop.permute.xlu0 %393
        %396 = vst.msk [vmem:[#allocation2 + $0x8] sm:$0xe0] %vm382, %v394
        %397 = vst.msk [vmem:[#allocation2 + $0x28] sm:$0x3] %vm384, %v394
        %398 = vrot.lane.b32.xlu0 %v366, 56
        %v399 = vpop.permute.xlu0 %398
        %401 = vst.msk [vmem:[#allocation2 + $0x8] sm:$0xe0] %vm389, %v399
        %402 = vst.msk [vmem:[#allocation2 + $0x28] sm:$0x3] %vm391, %v399
        %403 = vrot.lane.b32.xlu0 %v372, 120
        %v404 = vpop.permute.xlu0 %403
        %405 = vrot.lane.b32.xlu0 %v374, 120
        %v406 = vpop.permute.xlu0 %405
        %409 = vst.msk [vmem:[#allocation2 + $0x10] sm:$0xe0] %vm382, %v404
        %410 = vst.msk [vmem:[#allocation2 + $0x30] sm:$0x3] %vm384, %v406
        %411 = vrot.lane.b32.xlu0 %v331, 56
        %v412 = vpop.permute.xlu0 %411
        %413 = vrot.lane.b32.xlu0 %v332, 56
        %v414 = vpop.permute.xlu0 %413
        %417 = vst.msk [vmem:[#allocation2 + $0x10] sm:$0xe0] %vm389, %v412
        %418 = vst.msk [vmem:[#allocation2 + $0x30] sm:$0x3] %vm391, %v414
        %vm419 = vcmask 1046528
        %v420 = vrot.slane %v332, 1
        %v421 = vsel %vm419, %v336, %v420
        %422 = vrot.lane.b32.xlu0 %v421, 120
        %v423 = vpop.permute.xlu0 %422
        %424 = vrot.lane.b32.xlu0 %v420, 120
        %v425 = vpop.permute.xlu0 %424
        %428 = vst.msk [vmem:[#allocation2 + $0x18] sm:$0xe0] %vm382, %v423
        %429 = vst.msk [vmem:[#allocation2 + $0x38] sm:$0x3] %vm384, %v425
        %vm430 = vcmask 1045504
        %v431 = vrot.slane %v332, 2
        %v432 = vsel %vm430, %v342, %v431
        %433 = vrot.lane.b32.xlu0 %v432, 56
        %v434 = vpop.permute.xlu0 %433
        %435 = vrot.lane.b32.xlu0 %v431, 56
        %v436 = vpop.permute.xlu0 %435
        %439 = vst.msk [vmem:[#allocation2 + $0x18] sm:$0xe0] %vm389, %v434
        %440 = vst.msk [vmem:[#allocation2 + $0x38] sm:$0x3] %vm391, %v436
        %441 = vrot.lane.b32.xlu0 %v366, 112
        %v442 = vpop.permute.xlu0 %441
        %vm444 = vcmask 522242
        %445 = vst.msk [vmem:[#allocation2 + $0x20] sm:$0x7c] %vm444, %v442
        %446 = vrot.lane.b32.xlu0 %v372, 48
        %v447 = vpop.permute.xlu0 %446
        %vm449 = vcmask 1047042
        %450 = vst.msk [vmem:[#allocation2 + $0x20] sm:$0x7c] %vm449, %v447
        %451 = vrot.lane.b32.xlu0 %v331, 112
        %v452 = vpop.permute.xlu0 %451
        %454 = vst.msk [vmem:[#allocation2 + $0x28] sm:$0x7c] %vm444, %v452
        %455 = vrot.lane.b32.xlu0 %v336, 48
        %v456 = vpop.permute.xlu0 %455
        %458 = vst.msk [vmem:[#allocation2 + $0x28] sm:$0x7c] %vm449, %v456
        %459 = vrot.lane.b32.xlu0 %v432, 112
        %v460 = vpop.permute.xlu0 %459
        %462 = vst.msk [vmem:[#allocation2 + $0x30] sm:$0x7c] %vm444, %v460
        %vm463 = vcmask 1044480
        %v464 = vrot.slane %v332, 3
        %v465 = vsel %vm463, %v345, %v464
        %466 = vrot.lane.b32.xlu0 %v465, 48
        %v467 = vpop.permute.xlu0 %466
        %469 = vst.msk [vmem:[#allocation2 + $0x30] sm:$0x7c] %vm449, %v467
        %470 = vrot.lane.b32.xlu0 %v354, 112
        %v471 = vpop.permute.xlu0 %470
        %473 = vst.msk [vmem:[#allocation2 + $0x38] sm:$0x7c] %vm444, %v471
        %474 = vrot.lane.b32.xlu0 %v360, 48
        %v475 = vpop.permute.xlu0 %474
        %477 = vst.msk [vmem:[#allocation2 + $0x38] sm:$0x7c] %vm449, %v475
        %478 = vrot.lane.b32.xlu0 %v336, 104
        %v479 = vpop.permute.xlu0 %478
        %vm481 = vcmask 523271
        %482 = vst.msk [vmem:[#allocation2 + $0x20] sm:$0x80] %vm481, %v479
        %vm483 = vcmask 519168
        %484 = vst.msk [vmem:[#allocation2 + $0x40] sm:$0xf] %vm483, %v479
        %485 = vrot.lane.b32.xlu0 %v342, 40
        %v486 = vpop.permute.xlu0 %485
        %vm488 = vcmask 1048071
        %489 = vst.msk [vmem:[#allocation2 + $0x20] sm:$0x80] %vm488, %v486
        %vm490 = vcmask 1043968
        %491 = vst.msk [vmem:[#allocation2 + $0x40] sm:$0xf] %vm490, %v486
        %492 = vrot.lane.b32.xlu0 %v345, 104
        %v493 = vpop.permute.xlu0 %492
        %495 = vst.msk [vmem:[#allocation2 + $0x28] sm:$0x80] %vm481, %v493
        %496 = vst.msk [vmem:[#allocation2 + $0x48] sm:$0xf] %vm483, %v493
        %497 = vrot.lane.b32.xlu0 %v352, 40
        %v498 = vpop.permute.xlu0 %497
        %500 = vst.msk [vmem:[#allocation2 + $0x28] sm:$0x80] %vm488, %v498
        %501 = vst.msk [vmem:[#allocation2 + $0x48] sm:$0xf] %vm490, %v498
        %502 = vrot.lane.b32.xlu0 %v358, 104
        %v503 = vpop.permute.xlu0 %502
        %504 = vrot.lane.b32.xlu0 %v360, 104
        %v505 = vpop.permute.xlu0 %504
        %508 = vst.msk [vmem:[#allocation2 + $0x30] sm:$0x80] %vm481, %v503
        %509 = vst.msk [vmem:[#allocation2 + $0x50] sm:$0xf] %vm483, %v505
        %510 = vrot.lane.b32.xlu0 %v366, 40
        %v511 = vpop.permute.xlu0 %510
        %512 = vrot.lane.b32.xlu0 %v368, 40
        %v513 = vpop.permute.xlu0 %512
        %516 = vst.msk [vmem:[#allocation2 + $0x30] sm:$0x80] %vm488, %v511
        %517 = vst.msk [vmem:[#allocation2 + $0x50] sm:$0xf] %vm490, %v513
        %518 = vrot.lane.b32.xlu0 %v372, 104
        %v519 = vpop.permute.xlu0 %518
        %520 = vrot.lane.b32.xlu0 %v374, 104
        %v521 = vpop.permute.xlu0 %520
        %524 = vst.msk [vmem:[#allocation2 + $0x38] sm:$0x80] %vm481, %v519
        %525 = vst.msk [vmem:[#allocation2 + $0x58] sm:$0xf] %vm483, %v521
        %526 = vrot.lane.b32.xlu0 %v331, 40
        %v527 = vpop.permute.xlu0 %526
        %528 = vrot.lane.b32.xlu0 %v332, 40
        %v529 = vpop.permute.xlu0 %528
        %532 = vst.msk [vmem:[#allocation2 + $0x38] sm:$0x80] %vm488, %v527
        %533 = vst.msk [vmem:[#allocation2 + $0x58] sm:$0xf] %vm490, %v529
        %534 = vrot.lane.b32.xlu0 %v352, 96
        %v535 = vpop.permute.xlu0 %534
        %vm537 = vcmask 523268
        %538 = vst.msk [vmem:[#allocation2 + $0x40] sm:$0xf0] %vm537, %v535
        %vm539 = vcmask 516096
        %540 = vst.msk [vmem:[#allocation2 + $0x60] sm:$0x1] %vm539, %v535
        %541 = vrot.lane.b32.xlu0 %v358, 32
        %v542 = vpop.permute.xlu0 %541
        %vm544 = vcmask 1048068
        %545 = vst.msk [vmem:[#allocation2 + $0x40] sm:$0xf0] %vm544, %v542
        %vm546 = vcmask 1040896
        %547 = vst.msk [vmem:[#allocation2 + $0x60] sm:$0x1] %vm546, %v542
        %548 = vrot.lane.b32.xlu0 %v366, 96
        %v549 = vpop.permute.xlu0 %548
        %551 = vst.msk [vmem:[#allocation2 + $0x48] sm:$0xf0] %vm537, %v549
        %552 = vst.msk [vmem:[#allocation2 + $0x68] sm:$0x1] %vm539, %v549
        %553 = vrot.lane.b32.xlu0 %v372, 32
        %v554 = vpop.permute.xlu0 %553
        %556 = vst.msk [vmem:[#allocation2 + $0x48] sm:$0xf0] %vm544, %v554
        %557 = vst.msk [vmem:[#allocation2 + $0x68] sm:$0x1] %vm546, %v554
        %558 = vrot.lane.b32.xlu0 %v331, 96
        %v559 = vpop.permute.xlu0 %558
        %560 = vrot.lane.b32.xlu0 %v332, 96
        %v561 = vpop.permute.xlu0 %560
        %564 = vst.msk [vmem:[#allocation2 + $0x50] sm:$0xf0] %vm537, %v559
        %565 = vst.msk [vmem:[#allocation2 + $0x70] sm:$0x1] %vm539, %v561
        %566 = vrot.lane.b32.xlu0 %v421, 32
        %v567 = vpop.permute.xlu0 %566
        %568 = vrot.lane.b32.xlu0 %v420, 32
        %v569 = vpop.permute.xlu0 %568
        %572 = vst.msk [vmem:[#allocation2 + $0x50] sm:$0xf0] %vm544, %v567
        %573 = vst.msk [vmem:[#allocation2 + $0x70] sm:$0x1] %vm546, %v569
        %574 = vrot.lane.b32.xlu0 %v432, 96
        %v575 = vpop.permute.xlu0 %574
        %576 = vrot.lane.b32.xlu0 %v431, 96
        %v577 = vpop.permute.xlu0 %576
        %580 = vst.msk [vmem:[#allocation2 + $0x58] sm:$0xf0] %vm537, %v575
        %581 = vst.msk [vmem:[#allocation2 + $0x78] sm:$0x1] %vm539, %v577
        %582 = vrot.lane.b32.xlu0 %v465, 32
        %v583 = vpop.permute.xlu0 %582
        %584 = vrot.lane.b32.xlu0 %v464, 32
        %v585 = vpop.permute.xlu0 %584
        %588 = vst.msk [vmem:[#allocation2 + $0x58] sm:$0xf0] %vm544, %v583
        %589 = vst.msk [vmem:[#allocation2 + $0x78] sm:$0x1] %vm546, %v585
        %v590 = vld [vmem:[%s1] sm:$0xff]
        %v591 = vld [vmem:[%s1 + $0x8] sm:$0x3]
        %v592 = vld [vmem:[#allocation2] sm:$0xff]
        %v593 = vld [vmem:[#allocation2 + $0x8] sm:$0xff]
        %v594 = vld [vmem:[#allocation2 + $0x10] sm:$0xff]
        %v595 = vld [vmem:[#allocation2 + $0x18] sm:$0xff]
        %v596 = vld [vmem:[#allocation2 + $0x20] sm:$0xff]
        %v597 = vld [vmem:[#allocation2 + $0x28] sm:$0xff]
        %v598 = vld [vmem:[#allocation2 + $0x30] sm:$0xff]
        %v599 = vld [vmem:[#allocation2 + $0x38] sm:$0xff]
        %v600 = vld [vmem:[#allocation2 + $0x40] sm:$0xff]
        %v601 = vld [vmem:[#allocation2 + $0x48] sm:$0xff]
        %v602 = vld [vmem:[#allocation2 + $0x50] sm:$0xff]
        %v603 = vld [vmem:[#allocation2 + $0x58] sm:$0xff]
        %v604 = vld [vmem:[#allocation2 + $0x60] sm:$0x1]
        %v605 = vld [vmem:[#allocation2 + $0x68] sm:$0x1]
        %v606 = vld [vmem:[#allocation2 + $0x70] sm:$0x1]
        %v607 = vld [vmem:[#allocation2 + $0x78] sm:$0x1]
        %v608 = vld [vmem:[%s2] sm:$0xff]
        %v609 = vld [vmem:[%s2 + $0x8] sm:$0x3]
        %611 = vset.pattern.permute.xlu0 0
        %612 = vperm.xlu0 %611, %v608
        %v613 = vpop.permute.xlu0 %612
        %616 = vset.pattern.permute.xlu0 0
        %617 = vperm.xlu0 %616, %v609
        %v618 = vpop.permute.xlu0 %617
        %vm620 = vcmask 203776
        %v622 = vsel %vm620, %v590, 0
        %v625 = vsel %vm620, %v591, 0
        %v628 = vsel %vm371, %v604, 0
        %v631 = vsel %vm371, %v605, 0
        %v634 = vsel %vm371, %v606, 0
        %v637 = vsel %vm371, %v607, 0
        %639 = vmatprep.subr.mxu0 %v593
        %640 = vmatpush1.msra.mxu0 %v592
        %641 = vmatprep.subr.mxu0 %v597
        %642 = vmatpush1.msra.mxu0 %v596
        %643 = vmatprep.subr.mxu0 %v601
        %644 = vmatpush1.msra.mxu0 %v600
        %645 = vmatprep.subr.mxu0 %v631
        %646 = vmatpush1.msra.mxu0 %v628
        %647 = vmatprep.subr.mxu0 0.0
        %648 = vmatpush1.msra.mxu0 0.0
        %649 = vmatprep.subr.mxu0 0.0
        %650 = vmatpush1.msra.mxu0 0.0
        %651 = vmatprep.subr.mxu0 0.0
        %652 = vmatpush1.msra.mxu0 0.0
        %653 = vmatprep.subr.mxu0 0.0
        %654 = vmatpush1.msra.mxu0 0.0
        %655 = vmatprep.subr.mxu0 0.0
        %656 = vmatpush1.msra.mxu0 0.0
        %657 = vmatprep.subr.mxu0 0.0
        %658 = vmatpush1.msra.mxu0 0.0
        %659 = vmatprep.subr.mxu0 0.0
        %660 = vmatpush1.msra.mxu0 0.0
        %661 = vmatprep.subr.mxu0 0.0
        %662 = vmatpush1.msra.mxu0 0.0
        %663 = vmatprep.subr.mxu0 0.0
        %664 = vmatpush1.msra.mxu0 0.0
        %665 = vmatprep.subr.mxu0 0.0
        %666 = vmatpush1.msra.mxu0 0.0
        %667 = vmatprep.subr.mxu0 0.0
        %668 = vmatpush1.msra.mxu0 0.0
        %669 = vmatprep.subr.mxu0 0.0
        %670 = vmatpush1.msra.mxu0 0.0
        %671 = vmatprep.subr.mxu0 0.0
        %672 = vmatpush1.msra.mxu0 0.0
        %673 = vmatprep.subr.mxu0 0.0
        %674 = vmatpush1.msra.mxu0 0.0
        %675 = vmatprep.subr.mxu0 0.0
        %676 = vmatpush1.msra.mxu0 0.0
        %677 = vmatprep.subr.mxu0 0.0
        %678 = vmatpush1.msra.mxu0 0.0
        %679 = vmatprep.subr.mxu0 0.0
        %680 = vmatpush1.msra.mxu0 0.0
        %681 = vmatprep.subr.mxu0 0.0
        %682 = vmatpush1.msra.mxu0 0.0
        %683 = vmatprep.subr.mxu0 0.0
        %684 = vmatpush1.msra.mxu0 0.0
        %685 = vmatprep.subr.mxu0 0.0
        %686 = vmatpush1.msra.mxu0 0.0
        %687 = vmatprep.subr.mxu0 0.0
        %688 = vmatpush1.msra.mxu0 0.0
        %689 = vmatprep.subr.mxu0 0.0
        %690 = vmatpush1.msra.mxu0 0.0
        %691 = vmatprep.subr.mxu0 0.0
        %692 = vmatpush1.msra.mxu0 0.0
        %693 = vmatprep.subr.mxu0 0.0
        %694 = vmatpush1.msra.mxu0 0.0
        %695 = vmatprep.subr.mxu0 0.0
        %696 = vmatpush1.msra.mxu0 0.0
        %697 = vmatprep.subr.mxu0 0.0
        %698 = vmatpush1.msra.mxu0 0.0
        %699 = vmatprep.subr.mxu0 0.0
        %700 = vmatpush1.msra.mxu0 0.0
        %701 = vmatprep.subr.mxu0 0.0
        %702 = vmatpush1.msra.mxu0 0.0
        %703 = vmatprep.mubr.f32.mxu0 0.0
        %704 = vmatmul.mubr.f32.gmra.mrb[0].mxu0 %v622
        %v705 = vpop.f32.mrb[0].mxu0
        %v706 = vadd.f32 %v613, %v705
        %v707 = vpop.f32.mrb[0].mxu0
        %v708 = vadd.f32 %v613, %v707
        %709 = vmatprep.mubr.f32.mxu0 0.0
        %710 = vmatmul.mubr.f32.gmra.mrb[0].mxu0 %v625
        %v711 = vpop.f32.mrb[0].mxu0
        %v712 = vadd.f32 %v618, %v711
        %v713 = vpop.f32.mrb[0].mxu0
        %v714 = vadd.f32 %v618, %v713
        %715 = vdwg.mxu0
        %716 = vmatprep.subr.mxu0 %v595
        %717 = vmatpush1.msra.mxu0 %v594
        %718 = vmatprep.subr.mxu0 %v599
        %719 = vmatpush1.msra.mxu0 %v598
        %720 = vmatprep.subr.mxu0 %v603
        %721 = vmatpush1.msra.mxu0 %v602
        %722 = vmatprep.subr.mxu0 %v637
        %723 = vmatpush1.msra.mxu0 %v634
        %724 = vmatprep.subr.mxu0 0.0
        %725 = vmatpush1.msra.mxu0 0.0
        %726 = vmatprep.subr.mxu0 0.0
        %727 = vmatpush1.msra.mxu0 0.0
        %728 = vmatprep.subr.mxu0 0.0
        %729 = vmatpush1.msra.mxu0 0.0
        %730 = vmatprep.subr.mxu0 0.0
        %731 = vmatpush1.msra.mxu0 0.0
        %732 = vmatprep.subr.mxu0 0.0
        %733 = vmatpush1.msra.mxu0 0.0
        %734 = vmatprep.subr.mxu0 0.0
        %735 = vmatpush1.msra.mxu0 0.0
        %736 = vmatprep.subr.mxu0 0.0
        %737 = vmatpush1.msra.mxu0 0.0
        %738 = vmatprep.subr.mxu0 0.0
        %739 = vmatpush1.msra.mxu0 0.0
        %740 = vmatprep.subr.mxu0 0.0
        %741 = vmatpush1.msra.mxu0 0.0
        %742 = vmatprep.subr.mxu0 0.0
        %743 = vmatpush1.msra.mxu0 0.0
        %744 = vmatprep.subr.mxu0 0.0
        %745 = vmatpush1.msra.mxu0 0.0
        %746 = vmatprep.subr.mxu0 0.0
        %747 = vmatpush1.msra.mxu0 0.0
        %748 = vmatprep.subr.mxu0 0.0
        %749 = vmatpush1.msra.mxu0 0.0
        %750 = vmatprep.subr.mxu0 0.0
        %751 = vmatpush1.msra.mxu0 0.0
        %752 = vmatprep.subr.mxu0 0.0
        %753 = vmatpush1.msra.mxu0 0.0
        %754 = vmatprep.subr.mxu0 0.0
        %755 = vmatpush1.msra.mxu0 0.0
        %756 = vmatprep.subr.mxu0 0.0
        %757 = vmatpush1.msra.mxu0 0.0
        %758 = vmatprep.subr.mxu0 0.0
        %759 = vmatpush1.msra.mxu0 0.0
        %760 = vmatprep.subr.mxu0 0.0
        %761 = vmatpush1.msra.mxu0 0.0
        %762 = vmatprep.subr.mxu0 0.0
        %763 = vmatpush1.msra.mxu0 0.0
        %764 = vmatprep.subr.mxu0 0.0
        %765 = vmatpush1.msra.mxu0 0.0
        %766 = vmatprep.subr.mxu0 0.0
        %767 = vmatpush1.msra.mxu0 0.0
        %768 = vmatprep.subr.mxu0 0.0
        %769 = vmatpush1.msra.mxu0 0.0
        %770 = vmatprep.subr.mxu0 0.0
        %771 = vmatpush1.msra.mxu0 0.0
        %772 = vmatprep.subr.mxu0 0.0
        %773 = vmatpush1.msra.mxu0 0.0
        %774 = vmatprep.subr.mxu0 0.0
        %775 = vmatpush1.msra.mxu0 0.0
        %776 = vmatprep.subr.mxu0 0.0
        %777 = vmatpush1.msra.mxu0 0.0
        %778 = vmatprep.subr.mxu0 0.0
        %779 = vmatpush1.msra.mxu0 0.0
        %780 = vmatprep.mubr.f32.mxu0 0.0
        %781 = vmatmul.mubr.f32.gmra.mrb[0].mxu0 %v622
        %v782 = vpop.f32.mrb[0].mxu0
        %v783 = vadd.f32 %v613, %v782
        %v784 = vpop.f32.mrb[0].mxu0
        %v785 = vadd.f32 %v613, %v784
        %786 = vmatprep.mubr.f32.mxu0 0.0
        %787 = vmatmul.mubr.f32.gmra.mrb[0].mxu0 %v625
        %v788 = vpop.f32.mrb[0].mxu0
        %v789 = vadd.f32 %v618, %v788
        %v790 = vpop.f32.mrb[0].mxu0
        %v791 = vadd.f32 %v618, %v790
        %792 = vdwg.mxu0
        %v793 = vmax.f32 %v706, 0.0
        %v794 = vmax.f32 %v708, 0.0
        %v795 = vmax.f32 %v783, 0.0
        %v796 = vmax.f32 %v785, 0.0
        %v797 = vmax.f32 %v712, 0.0
        %v798 = vmax.f32 %v714, 0.0
        %v799 = vmax.f32 %v789, 0.0
        %v800 = vmax.f32 %v791, 0.0
        %v801 = vld [vmem:[%s3] sm:$0xff]
        %v802 = vld [vmem:[%s3 + $0x8] sm:$0xff]
        %v803 = vld [vmem:[%s3 + $0x10] sm:$0xf]
        %s804 = scalar_lea.vmem %s3, 24
        %v805 = vld [vmem:[%s804] sm:$0xff]
        %v806 = vld [vmem:[%s804 + $0x8] sm:$0xff]
        %v807 = vld [vmem:[%s804 + $0x10] sm:$0xf]
        %812 = vrot.lane.b32.xlu0 %v793, 120
        %v813 = vpop.permute.xlu0 %812
        %814 = vrot.lane.b32.xlu0 %v794, 120
        %v815 = vpop.permute.xlu0 %814
        %816 = vrot.lane.b32.xlu0 %v797, 120
        %v817 = vpop.permute.xlu0 %816
        %818 = vrot.lane.b32.xlu0 %v798, 120
        %v819 = vpop.permute.xlu0 %818
        %vm820 = vcmask 982016
        %v821 = vsel %vm820, %v813, %v815
        %v822 = vsel %vm820, %v817, %v819
        %vm825 = vcmask 80896
        %v827 = vsel %vm825, %v805, 0
        %v830 = vsel %vm825, %v806, 0
        %v833 = vsel %vm825, %v807, 0
        %v835 = vsel %vm365, %v822, 0
        %v837 = vsel %vm365, %v819, 0
        %839 = vmatprep.subr.mxu0 %v815
        %840 = vmatpush1.msra.mxu0 %v821
        %841 = vmatprep.subr.mxu0 %v837
        %842 = vmatpush1.msra.mxu0 %v835
        %843 = vmatprep.subr.mxu0 0.0
        %844 = vmatpush1.msra.mxu0 0.0
        %845 = vmatprep.subr.mxu0 0.0
        %846 = vmatpush1.msra.mxu0 0.0
        %847 = vmatprep.subr.mxu0 0.0
        %848 = vmatpush1.msra.mxu0 0.0
        %849 = vmatprep.subr.mxu0 0.0
        %850 = vmatpush1.msra.mxu0 0.0
        %851 = vmatprep.subr.mxu0 0.0
        %852 = vmatpush1.msra.mxu0 0.0
        %853 = vmatprep.subr.mxu0 0.0
        %854 = vmatpush1.msra.mxu0 0.0
        %855 = vmatprep.subr.mxu0 0.0
        %856 = vmatpush1.msra.mxu0 0.0
        %857 = vmatprep.subr.mxu0 0.0
        %858 = vmatpush1.msra.mxu0 0.0
        %859 = vmatprep.subr.mxu0 0.0
        %860 = vmatpush1.msra.mxu0 0.0
        %861 = vmatprep.subr.mxu0 0.0
        %862 = vmatpush1.msra.mxu0 0.0
        %863 = vmatprep.subr.mxu0 0.0
        %864 = vmatpush1.msra.mxu0 0.0
        %865 = vmatprep.subr.mxu0 0.0
        %866 = vmatpush1.msra.mxu0 0.0
        %867 = vmatprep.subr.mxu0 0.0
        %868 = vmatpush1.msra.mxu0 0.0
        %869 = vmatprep.subr.mxu0 0.0
        %870 = vmatpush1.msra.mxu0 0.0
        %871 = vmatprep.subr.mxu0 0.0
        %872 = vmatpush1.msra.mxu0 0.0
        %873 = vmatprep.subr.mxu0 0.0
        %874 = vmatpush1.msra.mxu0 0.0
        %875 = vmatprep.subr.mxu0 0.0
        %876 = vmatpush1.msra.mxu0 0.0
        %877 = vmatprep.subr.mxu0 0.0
        %878 = vmatpush1.msra.mxu0 0.0
        %879 = vmatprep.subr.mxu0 0.0
        %880 = vmatpush1.msra.mxu0 0.0
        %881 = vmatprep.subr.mxu0 0.0
        %882 = vmatpush1.msra.mxu0 0.0
        %883 = vmatprep.subr.mxu0 0.0
        %884 = vmatpush1.msra.mxu0 0.0
        %885 = vmatprep.subr.mxu0 0.0
        %886 = vmatpush1.msra.mxu0 0.0
        %887 = vmatprep.subr.mxu0 0.0
        %888 = vmatpush1.msra.mxu0 0.0
        %889 = vmatprep.subr.mxu0 0.0
        %890 = vmatpush1.msra.mxu0 0.0
        %891 = vmatprep.subr.mxu0 0.0
        %892 = vmatpush1.msra.mxu0 0.0
        %893 = vmatprep.subr.mxu0 0.0
        %894 = vmatpush1.msra.mxu0 0.0
        %895 = vmatprep.subr.mxu0 0.0
        %896 = vmatpush1.msra.mxu0 0.0
        %897 = vmatprep.subr.mxu0 0.0
        %898 = vmatpush1.msra.mxu0 0.0
        %899 = vmatprep.subr.mxu0 0.0
        %900 = vmatpush1.msra.mxu0 0.0
        %901 = vmatprep.subr.mxu0 0.0
        %902 = vmatpush1.msra.mxu0 0.0
        %903 = vmatprep.mubr.f32.mxu0 0.0
        %904 = vmatmul.mubr.f32.gmra.mrb[0].mxu0 %v827
        %v905 = vpop.f32.mrb[0].mxu0
        %v906 = vadd.f32 0.0, %v905
        %v907 = vpop.f32.mrb[0].mxu0
        %v908 = vadd.f32 0.0, %v907
        %909 = vmatprep.mubr.f32.mxu0 0.0
        %910 = vmatmul.mubr.f32.gmra.mrb[0].mxu0 %v830
        %v911 = vpop.f32.mrb[0].mxu0
        %v912 = vadd.f32 0.0, %v911
        %v913 = vpop.f32.mrb[0].mxu0
        %v914 = vadd.f32 0.0, %v913
        %915 = vmatprep.mubr.f32.mxu0 0.0
        %916 = vmatmul.mubr.f32.gmra.mrb[0].mxu0 %v833
        %v917 = vpop.f32.mrb[0].mxu0
        %v918 = vadd.f32 0.0, %v917
        %v919 = vpop.f32.mrb[0].mxu0
        %v920 = vadd.f32 0.0, %v919
        %921 = vdwg.mxu0
        %v923 = vsel %vm825, %v801, 0
        %v926 = vsel %vm825, %v802, 0
        %v929 = vsel %vm825, %v803, 0
        %v931 = vsel %vm365, %v797, 0
        %v933 = vsel %vm365, %v798, 0
        %935 = vmatprep.subr.mxu0 %v794
        %936 = vmatpush1.msra.mxu0 %v793
        %937 = vmatprep.subr.mxu0 %v933
        %938 = vmatpush1.msra.mxu0 %v931
        %939 = vmatprep.subr.mxu0 0.0
        %940 = vmatpush1.msra.mxu0 0.0
        %941 = vmatprep.subr.mxu0 0.0
        %942 = vmatpush1.msra.mxu0 0.0
        %943 = vmatprep.subr.mxu0 0.0
        %944 = vmatpush1.msra.mxu0 0.0
        %945 = vmatprep.subr.mxu0 0.0
        %946 = vmatpush1.msra.mxu0 0.0
        %947 = vmatprep.subr.mxu0 0.0
        %948 = vmatpush1.msra.mxu0 0.0
        %949 = vmatprep.subr.mxu0 0.0
        %950 = vmatpush1.msra.mxu0 0.0
        %951 = vmatprep.subr.mxu0 0.0
        %952 = vmatpush1.msra.mxu0 0.0
        %953 = vmatprep.subr.mxu0 0.0
        %954 = vmatpush1.msra.mxu0 0.0
        %955 = vmatprep.subr.mxu0 0.0
        %956 = vmatpush1.msra.mxu0 0.0
        %957 = vmatprep.subr.mxu0 0.0
        %958 = vmatpush1.msra.mxu0 0.0
        %959 = vmatprep.subr.mxu0 0.0
        %960 = vmatpush1.msra.mxu0 0.0
        %961 = vmatprep.subr.mxu0 0.0
        %962 = vmatpush1.msra.mxu0 0.0
        %963 = vmatprep.subr.mxu0 0.0
        %964 = vmatpush1.msra.mxu0 0.0
        %965 = vmatprep.subr.mxu0 0.0
        %966 = vmatpush1.msra.mxu0 0.0
        %967 = vmatprep.subr.mxu0 0.0
        %968 = vmatpush1.msra.mxu0 0.0
        %969 = vmatprep.subr.mxu0 0.0
        %970 = vmatpush1.msra.mxu0 0.0
        %971 = vmatprep.subr.mxu0 0.0
        %972 = vmatpush1.msra.mxu0 0.0
        %973 = vmatprep.subr.mxu0 0.0
        %974 = vmatpush1.msra.mxu0 0.0
        %975 = vmatprep.subr.mxu0 0.0
        %976 = vmatpush1.msra.mxu0 0.0
        %977 = vmatprep.subr.mxu0 0.0
        %978 = vmatpush1.msra.mxu0 0.0
        %979 = vmatprep.subr.mxu0 0.0
        %980 = vmatpush1.msra.mxu0 0.0
        %981 = vmatprep.subr.mxu0 0.0
        %982 = vmatpush1.msra.mxu0 0.0
        %983 = vmatprep.subr.mxu0 0.0
        %984 = vmatpush1.msra.mxu0 0.0
        %985 = vmatprep.subr.mxu0 0.0
        %986 = vmatpush1.msra.mxu0 0.0
        %987 = vmatprep.subr.mxu0 0.0
        %988 = vmatpush1.msra.mxu0 0.0
        %989 = vmatprep.subr.mxu0 0.0
        %990 = vmatpush1.msra.mxu0 0.0
        %991 = vmatprep.subr.mxu0 0.0
        %992 = vmatpush1.msra.mxu0 0.0
        %993 = vmatprep.subr.mxu0 0.0
        %994 = vmatpush1.msra.mxu0 0.0
        %995 = vmatprep.subr.mxu0 0.0
        %996 = vmatpush1.msra.mxu0 0.0
        %997 = vmatprep.subr.mxu0 0.0
        %998 = vmatpush1.msra.mxu0 0.0
        %999 = vmatprep.mubr.f32.mxu0 0.0
        %1000 = vmatmul.mubr.f32.gmra.mrb[0].mxu0 %v923
        %v1001 = vpop.f32.mrb[0].mxu0
        %v1002 = vadd.f32 %v906, %v1001
        %v1003 = vpop.f32.mrb[0].mxu0
        %v1004 = vadd.f32 %v908, %v1003
        %1005 = vmatprep.mubr.f32.mxu0 0.0
        %1006 = vmatmul.mubr.f32.gmra.mrb[0].mxu0 %v926
        %v1007 = vpop.f32.mrb[0].mxu0
        %v1008 = vadd.f32 %v912, %v1007
        %v1009 = vpop.f32.mrb[0].mxu0
        %v1010 = vadd.f32 %v914, %v1009
        %1011 = vmatprep.mubr.f32.mxu0 0.0
        %1012 = vmatmul.mubr.f32.gmra.mrb[0].mxu0 %v929
        %v1013 = vpop.f32.mrb[0].mxu0
        %v1014 = vadd.f32 %v918, %v1013
        %v1015 = vpop.f32.mrb[0].mxu0
        %v1016 = vadd.f32 %v920, %v1015
        %1017 = vdwg.mxu0
        %s1018 = scalar_lea.vmem %s3, 48
        %v1019 = vld [vmem:[%s1018] sm:$0xff]
        %v1020 = vld [vmem:[%s1018 + $0x8] sm:$0xff]
        %v1021 = vld [vmem:[%s1018 + $0x10] sm:$0xf]
        %1022 = vrot.lane.b32.xlu0 %v793, 112
        %v1023 = vpop.permute.xlu0 %1022
        %1024 = vrot.lane.b32.xlu0 %v794, 112
        %v1025 = vpop.permute.xlu0 %1024
        %1026 = vrot.lane.b32.xlu0 %v797, 112
        %v1027 = vpop.permute.xlu0 %1026
        %1028 = vrot.lane.b32.xlu0 %v798, 112
        %v1029 = vpop.permute.xlu0 %1028
        %vm1030 = vcmask 916480
        %v1031 = vsel %vm1030, %v1023, %v1025
        %v1032 = vsel %vm1030, %v1027, %v1029
        %v1036 = vsel %vm825, %v1019, 0
        %v1039 = vsel %vm825, %v1020, 0
        %v1042 = vsel %vm825, %v1021, 0
        %v1044 = vsel %vm365, %v1032, 0
        %v1046 = vsel %vm365, %v1029, 0
        %1048 = vmatprep.subr.mxu0 %v1025
        %1049 = vmatpush1.msra.mxu0 %v1031
        %1050 = vmatprep.subr.mxu0 %v1046
        %1051 = vmatpush1.msra.mxu0 %v1044
        %1052 = vmatprep.subr.mxu0 0.0
        %1053 = vmatpush1.msra.mxu0 0.0
        %1054 = vmatprep.subr.mxu0 0.0
        %1055 = vmatpush1.msra.mxu0 0.0
        %1056 = vmatprep.subr.mxu0 0.0
        %1057 = vmatpush1.msra.mxu0 0.0
        %1058 = vmatprep.subr.mxu0 0.0
        %1059 = vmatpush1.msra.mxu0 0.0
        %1060 = vmatprep.subr.mxu0 0.0
        %1061 = vmatpush1.msra.mxu0 0.0
        %1062 = vmatprep.subr.mxu0 0.0
        %1063 = vmatpush1.msra.mxu0 0.0
        %1064 = vmatprep.subr.mxu0 0.0
        %1065 = vmatpush1.msra.mxu0 0.0
        %1066 = vmatprep.subr.mxu0 0.0
        %1067 = vmatpush1.msra.mxu0 0.0
        %1068 = vmatprep.subr.mxu0 0.0
        %1069 = vmatpush1.msra.mxu0 0.0
        %1070 = vmatprep.subr.mxu0 0.0
        %1071 = vmatpush1.msra.mxu0 0.0
        %1072 = vmatprep.subr.mxu0 0.0
        %1073 = vmatpush1.msra.mxu0 0.0
        %1074 = vmatprep.subr.mxu0 0.0
        %1075 = vmatpush1.msra.mxu0 0.0
        %1076 = vmatprep.subr.mxu0 0.0
        %1077 = vmatpush1.msra.mxu0 0.0
        %1078 = vmatprep.subr.mxu0 0.0
        %1079 = vmatpush1.msra.mxu0 0.0
        %1080 = vmatprep.subr.mxu0 0.0
        %1081 = vmatpush1.msra.mxu0 0.0
        %1082 = vmatprep.subr.mxu0 0.0
        %1083 = vmatpush1.msra.mxu0 0.0
        %1084 = vmatprep.subr.mxu0 0.0
        %1085 = vmatpush1.msra.mxu0 0.0
        %1086 = vmatprep.subr.mxu0 0.0
        %1087 = vmatpush1.msra.mxu0 0.0
        %1088 = vmatprep.subr.mxu0 0.0
        %1089 = vmatpush1.msra.mxu0 0.0
        %1090 = vmatprep.subr.mxu0 0.0
        %1091 = vmatpush1.msra.mxu0 0.0
        %1092 = vmatprep.subr.mxu0 0.0
        %1093 = vmatpush1.msra.mxu0 0.0
        %1094 = vmatprep.subr.mxu0 0.0
        %1095 = vmatpush1.msra.mxu0 0.0
        %1096 = vmatprep.subr.mxu0 0.0
        %1097 = vmatpush1.msra.mxu0 0.0
        %1098 = vmatprep.subr.mxu0 0.0
        %1099 = vmatpush1.msra.mxu0 0.0
        %1100 = vmatprep.subr.mxu0 0.0
        %1101 = vmatpush1.msra.mxu0 0.0
        %1102 = vmatprep.subr.mxu0 0.0
        %1103 = vmatpush1.msra.mxu0 0.0
        %1104 = vmatprep.subr.mxu0 0.0
        %1105 = vmatpush1.msra.mxu0 0.0
        %1106 = vmatprep.subr.mxu0 0.0
        %1107 = vmatpush1.msra.mxu0 0.0
        %1108 = vmatprep.subr.mxu0 0.0
        %1109 = vmatpush1.msra.mxu0 0.0
        %1110 = vmatprep.subr.mxu0 0.0
        %1111 = vmatpush1.msra.mxu0 0.0
        %1112 = vmatprep.mubr.f32.mxu0 0.0
        %1113 = vmatmul.mubr.f32.gmra.mrb[0].mxu0 %v1036
        %v1114 = vpop.f32.mrb[0].mxu0
        %v1115 = vadd.f32 0.0, %v1114
        %v1116 = vpop.f32.mrb[0].mxu0
        %v1117 = vadd.f32 0.0, %v1116
        %1118 = vmatprep.mubr.f32.mxu0 0.0
        %1119 = vmatmul.mubr.f32.gmra.mrb[0].mxu0 %v1039
        %v1120 = vpop.f32.mrb[0].mxu0
        %v1121 = vadd.f32 0.0, %v1120
        %v1122 = vpop.f32.mrb[0].mxu0
        %v1123 = vadd.f32 0.0, %v1122
        %1124 = vmatprep.mubr.f32.mxu0 0.0
        %1125 = vmatmul.mubr.f32.gmra.mrb[0].mxu0 %v1042
        %v1126 = vpop.f32.mrb[0].mxu0
        %v1127 = vadd.f32 0.0, %v1126
        %v1128 = vpop.f32.mrb[0].mxu0
        %v1129 = vadd.f32 0.0, %v1128
        %1130 = vdwg.mxu0
        %v1131 = vadd.f32 %v1002, %v1115
        %v1132 = vadd.f32 %v1004, %v1117
        %v1133 = vadd.f32 %v1008, %v1121
        %v1134 = vadd.f32 %v1010, %v1123
        %v1135 = vadd.f32 %v1014, %v1127
        %v1136 = vadd.f32 %v1016, %v1129
        %s1137 = scalar_lea.vmem %s3, 72
        %v1138 = vld [vmem:[%s1137] sm:$0xff]
        %v1139 = vld [vmem:[%s1137 + $0x8] sm:$0xff]
        %v1140 = vld [vmem:[%s1137 + $0x10] sm:$0xf]
        %1141 = vrot.lane.b32.xlu0 %v793, 104
        %v1142 = vpop.permute.xlu0 %1141
        %1143 = vrot.lane.b32.xlu0 %v794, 104
        %v1144 = vpop.permute.xlu0 %1143
        %1145 = vrot.lane.b32.xlu0 %v797, 104
        %v1146 = vpop.permute.xlu0 %1145
        %1147 = vrot.lane.b32.xlu0 %v798, 104
        %v1148 = vpop.permute.xlu0 %1147
        %vm1149 = vcmask 850944
        %v1150 = vsel %vm1149, %v1142, %v1144
        %v1151 = vsel %vm1149, %v1146, %v1148
        %v1155 = vsel %vm825, %v1138, 0
        %v1158 = vsel %vm825, %v1139, 0
        %v1161 = vsel %vm825, %v1140, 0
        %v1163 = vsel %vm365, %v1151, 0
        %v1165 = vsel %vm365, %v1148, 0
        %1167 = vmatprep.subr.mxu0 %v1144
        %1168 = vmatpush1.msra.mxu0 %v1150
        %1169 = vmatprep.subr.mxu0 %v1165
        %1170 = vmatpush1.msra.mxu0 %v1163
        %1171 = vmatprep.subr.mxu0 0.0
        %1172 = vmatpush1.msra.mxu0 0.0
        %1173 = vmatprep.subr.mxu0 0.0
        %1174 = vmatpush1.msra.mxu0 0.0
        %1175 = vmatprep.subr.mxu0 0.0
        %1176 = vmatpush1.msra.mxu0 0.0
        %1177 = vmatprep.subr.mxu0 0.0
        %1178 = vmatpush1.msra.mxu0 0.0
        %1179 = vmatprep.subr.mxu0 0.0
        %1180 = vmatpush1.msra.mxu0 0.0
        %1181 = vmatprep.subr.mxu0 0.0
        %1182 = vmatpush1.msra.mxu0 0.0
        %1183 = vmatprep.subr.mxu0 0.0
        %1184 = vmatpush1.msra.mxu0 0.0
        %1185 = vmatprep.subr.mxu0 0.0
        %1186 = vmatpush1.msra.mxu0 0.0
        %1187 = vmatprep.subr.mxu0 0.0
        %1188 = vmatpush1.msra.mxu0 0.0
        %1189 = vmatprep.subr.mxu0 0.0
        %1190 = vmatpush1.msra.mxu0 0.0
        %1191 = vmatprep.subr.mxu0 0.0
        %1192 = vmatpush1.msra.mxu0 0.0
        %1193 = vmatprep.subr.mxu0 0.0
        %1194 = vmatpush1.msra.mxu0 0.0
        %1195 = vmatprep.subr.mxu0 0.0
        %1196 = vmatpush1.msra.mxu0 0.0
        %1197 = vmatprep.subr.mxu0 0.0
        %1198 = vmatpush1.msra.mxu0 0.0
        %1199 = vmatprep.subr.mxu0 0.0
        %1200 = vmatpush1.msra.mxu0 0.0
        %1201 = vmatprep.subr.mxu0 0.0
        %1202 = vmatpush1.msra.mxu0 0.0
        %1203 = vmatprep.subr.mxu0 0.0
        %1204 = vmatpush1.msra.mxu0 0.0
        %1205 = vmatprep.subr.mxu0 0.0
        %1206 = vmatpush1.msra.mxu0 0.0
        %1207 = vmatprep.subr.mxu0 0.0
        %1208 = vmatpush1.msra.mxu0 0.0
        %1209 = vmatprep.subr.mxu0 0.0
        %1210 = vmatpush1.msra.mxu0 0.0
        %1211 = vmatprep.subr.mxu0 0.0
        %1212 = vmatpush1.msra.mxu0 0.0
        %1213 = vmatprep.subr.mxu0 0.0
        %1214 = vmatpush1.msra.mxu0 0.0
        %1215 = vmatprep.subr.mxu0 0.0
        %1216 = vmatpush1.msra.mxu0 0.0
        %1217 = vmatprep.subr.mxu0 0.0
        %1218 = vmatpush1.msra.mxu0 0.0
        %1219 = vmatprep.subr.mxu0 0.0
        %1220 = vmatpush1.msra.mxu0 0.0
        %1221 = vmatprep.subr.mxu0 0.0
        %1222 = vmatpush1.msra.mxu0 0.0
        %1223 = vmatprep.subr.mxu0 0.0
        %1224 = vmatpush1.msra.mxu0 0.0
        %1225 = vmatprep.subr.mxu0 0.0
        %1226 = vmatpush1.msra.mxu0 0.0
        %1227 = vmatprep.subr.mxu0 0.0
        %1228 = vmatpush1.msra.mxu0 0.0
        %1229 = vmatprep.subr.mxu0 0.0
        %1230 = vmatpush1.msra.mxu0 0.0
        %1231 = vmatprep.mubr.f32.mxu0 0.0
        %1232 = vmatmul.mubr.f32.gmra.mrb[0].mxu0 %v1155
        %v1233 = vpop.f32.mrb[0].mxu0
        %v1234 = vadd.f32 0.0, %v1233
        %v1235 = vpop.f32.mrb[0].mxu0
        %v1236 = vadd.f32 0.0, %v1235
        %1237 = vmatprep.mubr.f32.mxu0 0.0
        %1238 = vmatmul.mubr.f32.gmra.mrb[0].mxu0 %v1158
        %v1239 = vpop.f32.mrb[0].mxu0
        %v1240 = vadd.f32 0.0, %v1239
        %v1241 = vpop.f32.mrb[0].mxu0
        %v1242 = vadd.f32 0.0, %v1241
        %1243 = vmatprep.mubr.f32.mxu0 0.0
        %1244 = vmatmul.mubr.f32.gmra.mrb[0].mxu0 %v1161
        %v1245 = vpop.f32.mrb[0].mxu0
        %v1246 = vadd.f32 0.0, %v1245
        %v1247 = vpop.f32.mrb[0].mxu0
        %v1248 = vadd.f32 0.0, %v1247
        %1249 = vdwg.mxu0
        %v1250 = vadd.f32 %v1131, %v1234
        %v1251 = vadd.f32 %v1132, %v1236
        %v1252 = vadd.f32 %v1133, %v1240
        %v1253 = vadd.f32 %v1134, %v1242
        %v1254 = vadd.f32 %v1135, %v1246
        %v1255 = vadd.f32 %v1136, %v1248
        %s1256 = scalar_lea.vmem %s3, 96
        %v1257 = vld [vmem:[%s1256] sm:$0xff]
        %v1258 = vld [vmem:[%s1256 + $0x8] sm:$0xff]
        %v1259 = vld [vmem:[%s1256 + $0x10] sm:$0xf]
        %1260 = vrot.lane.b32.xlu0 %v793, 96
        %v1261 = vpop.permute.xlu0 %1260
        %1262 = vrot.lane.b32.xlu0 %v794, 96
        %v1263 = vpop.permute.xlu0 %1262
        %1264 = vrot.lane.b32.xlu0 %v797, 96
        %v1265 = vpop.permute.xlu0 %1264
        %1266 = vrot.lane.b32.xlu0 %v798, 96
        %v1267 = vpop.permute.xlu0 %1266
        %vm1268 = vcmask 785408
        %v1269 = vsel %vm1268, %v1261, %v1263
        %v1270 = vsel %vm1268, %v1265, %v1267
        %v1274 = vsel %vm825, %v1257, 0
        %v1277 = vsel %vm825, %v1258, 0
        %v1280 = vsel %vm825, %v1259, 0
        %v1282 = vsel %vm365, %v1270, 0
        %v1284 = vsel %vm365, %v1267, 0
        %1286 = vmatprep.subr.mxu0 %v1263
        %1287 = vmatpush1.msra.mxu0 %v1269
        %1288 = vmatprep.subr.mxu0 %v1284
        %1289 = vmatpush1.msra.mxu0 %v1282
        %1290 = vmatprep.subr.mxu0 0.0
        %1291 = vmatpush1.msra.mxu0 0.0
        %1292 = vmatprep.subr.mxu0 0.0
        %1293 = vmatpush1.msra.mxu0 0.0
        %1294 = vmatprep.subr.mxu0 0.0
        %1295 = vmatpush1.msra.mxu0 0.0
        %1296 = vmatprep.subr.mxu0 0.0
        %1297 = vmatpush1.msra.mxu0 0.0
        %1298 = vmatprep.subr.mxu0 0.0
        %1299 = vmatpush1.msra.mxu0 0.0
        %1300 = vmatprep.subr.mxu0 0.0
        %1301 = vmatpush1.msra.mxu0 0.0
        %1302 = vmatprep.subr.mxu0 0.0
        %1303 = vmatpush1.msra.mxu0 0.0
        %1304 = vmatprep.subr.mxu0 0.0
        %1305 = vmatpush1.msra.mxu0 0.0
        %1306 = vmatprep.subr.mxu0 0.0
        %1307 = vmatpush1.msra.mxu0 0.0
        %1308 = vmatprep.subr.mxu0 0.0
        %1309 = vmatpush1.msra.mxu0 0.0
        %1310 = vmatprep.subr.mxu0 0.0
        %1311 = vmatpush1.msra.mxu0 0.0
        %1312 = vmatprep.subr.mxu0 0.0
        %1313 = vmatpush1.msra.mxu0 0.0
        %1314 = vmatprep.subr.mxu0 0.0
        %1315 = vmatpush1.msra.mxu0 0.0
        %1316 = vmatprep.subr.mxu0 0.0
        %1317 = vmatpush1.msra.mxu0 0.0
        %1318 = vmatprep.subr.mxu0 0.0
        %1319 = vmatpush1.msra.mxu0 0.0
        %1320 = vmatprep.subr.mxu0 0.0
        %1321 = vmatpush1.msra.mxu0 0.0
        %1322 = vmatprep.subr.mxu0 0.0
        %1323 = vmatpush1.msra.mxu0 0.0
        %1324 = vmatprep.subr.mxu0 0.0
        %1325 = vmatpush1.msra.mxu0 0.0
        %1326 = vmatprep.subr.mxu0 0.0
        %1327 = vmatpush1.msra.mxu0 0.0
        %1328 = vmatprep.subr.mxu0 0.0
        %1329 = vmatpush1.msra.mxu0 0.0
        %1330 = vmatprep.subr.mxu0 0.0
        %1331 = vmatpush1.msra.mxu0 0.0
        %1332 = vmatprep.subr.mxu0 0.0
        %1333 = vmatpush1.msra.mxu0 0.0
        %1334 = vmatprep.subr.mxu0 0.0
        %1335 = vmatpush1.msra.mxu0 0.0
        %1336 = vmatprep.subr.mxu0 0.0
        %1337 = vmatpush1.msra.mxu0 0.0
        %1338 = vmatprep.subr.mxu0 0.0
        %1339 = vmatpush1.msra.mxu0 0.0
        %1340 = vmatprep.subr.mxu0 0.0
        %1341 = vmatpush1.msra.mxu0 0.0
        %1342 = vmatprep.subr.mxu0 0.0
        %1343 = vmatpush1.msra.mxu0 0.0
        %1344 = vmatprep.subr.mxu0 0.0
        %1345 = vmatpush1.msra.mxu0 0.0
        %1346 = vmatprep.subr.mxu0 0.0
        %1347 = vmatpush1.msra.mxu0 0.0
        %1348 = vmatprep.subr.mxu0 0.0
        %1349 = vmatpush1.msra.mxu0 0.0
        %1350 = vmatprep.mubr.f32.mxu0 0.0
        %1351 = vmatmul.mubr.f32.gmra.mrb[0].mxu0 %v1274
        %v1352 = vpop.f32.mrb[0].mxu0
        %v1353 = vadd.f32 0.0, %v1352
        %v1354 = vpop.f32.mrb[0].mxu0
        %v1355 = vadd.f32 0.0, %v1354
        %1356 = vmatprep.mubr.f32.mxu0 0.0
        %1357 = vmatmul.mubr.f32.gmra.mrb[0].mxu0 %v1277
        %v1358 = vpop.f32.mrb[0].mxu0
        %v1359 = vadd.f32 0.0, %v1358
        %v1360 = vpop.f32.mrb[0].mxu0
        %v1361 = vadd.f32 0.0, %v1360
        %1362 = vmatprep.mubr.f32.mxu0 0.0
        %1363 = vmatmul.mubr.f32.gmra.mrb[0].mxu0 %v1280
        %v1364 = vpop.f32.mrb[0].mxu0
        %v1365 = vadd.f32 0.0, %v1364
        %v1366 = vpop.f32.mrb[0].mxu0
        %v1367 = vadd.f32 0.0, %v1366
        %1368 = vdwg.mxu0
        %v1369 = vadd.f32 %v1250, %v1353
        %v1370 = vadd.f32 %v1251, %v1355
        %v1371 = vadd.f32 %v1252, %v1359
        %v1372 = vadd.f32 %v1253, %v1361
        %v1373 = vadd.f32 %v1254, %v1365
        %v1374 = vadd.f32 %v1255, %v1367
        %s1375 = scalar_lea.vmem %s3, 120
        %v1376 = vld [vmem:[%s1375] sm:$0xff]
        %v1377 = vld [vmem:[%s1375 + $0x8] sm:$0xff]
        %v1378 = vld [vmem:[%s1375 + $0x10] sm:$0xf]
        %1381 = vrot.lane.b32.xlu0 %v793, 64
        %v1382 = vpop.permute.xlu0 %1381
        %1383 = vrot.lane.b32.xlu0 %v794, 64
        %v1384 = vpop.permute.xlu0 %1383
        %1385 = vrot.lane.b32.xlu0 %v795, 64
        %v1386 = vpop.permute.xlu0 %1385
        %1387 = vrot.lane.b32.xlu0 %v797, 64
        %v1388 = vpop.permute.xlu0 %1387
        %1389 = vrot.lane.b32.xlu0 %v798, 64
        %v1390 = vpop.permute.xlu0 %1389
        %1391 = vrot.lane.b32.xlu0 %v799, 64
        %v1392 = vpop.permute.xlu0 %1391
        %vm1393 = vcmask 523264
        %v1394 = vsel %vm1393, %v1382, %v1384
        %v1395 = vsel %vm1393, %v1384, %v1386
        %v1396 = vsel %vm1393, %v1388, %v1390
        %v1397 = vsel %vm1393, %v1390, %v1392
        %v1401 = vsel %vm825, %v1376, 0
        %v1404 = vsel %vm825, %v1377, 0
        %v1407 = vsel %vm825, %v1378, 0
        %v1409 = vsel %vm365, %v1396, 0
        %v1411 = vsel %vm365, %v1397, 0
        %1413 = vmatprep.subr.mxu0 %v1395
        %1414 = vmatpush1.msra.mxu0 %v1394
        %1415 = vmatprep.subr.mxu0 %v1411
        %1416 = vmatpush1.msra.mxu0 %v1409
        %1417 = vmatprep.subr.mxu0 0.0
        %1418 = vmatpush1.msra.mxu0 0.0
        %1419 = vmatprep.subr.mxu0 0.0
        %1420 = vmatpush1.msra.mxu0 0.0
        %1421 = vmatprep.subr.mxu0 0.0
        %1422 = vmatpush1.msra.mxu0 0.0
        %1423 = vmatprep.subr.mxu0 0.0
        %1424 = vmatpush1.msra.mxu0 0.0
        %1425 = vmatprep.subr.mxu0 0.0
        %1426 = vmatpush1.msra.mxu0 0.0
        %1427 = vmatprep.subr.mxu0 0.0
        %1428 = vmatpush1.msra.mxu0 0.0
        %1429 = vmatprep.subr.mxu0 0.0
        %1430 = vmatpush1.msra.mxu0 0.0
        %1431 = vmatprep.subr.mxu0 0.0
        %1432 = vmatpush1.msra.mxu0 0.0
        %1433 = vmatprep.subr.mxu0 0.0
        %1434 = vmatpush1.msra.mxu0 0.0
        %1435 = vmatprep.subr.mxu0 0.0
        %1436 = vmatpush1.msra.mxu0 0.0
        %1437 = vmatprep.subr.mxu0 0.0
        %1438 = vmatpush1.msra.mxu0 0.0
        %1439 = vmatprep.subr.mxu0 0.0
        %1440 = vmatpush1.msra.mxu0 0.0
        %1441 = vmatprep.subr.mxu0 0.0
        %1442 = vmatpush1.msra.mxu0 0.0
        %1443 = vmatprep.subr.mxu0 0.0
        %1444 = vmatpush1.msra.mxu0 0.0
        %1445 = vmatprep.subr.mxu0 0.0
        %1446 = vmatpush1.msra.mxu0 0.0
        %1447 = vmatprep.subr.mxu0 0.0
        %1448 = vmatpush1.msra.mxu0 0.0
        %1449 = vmatprep.subr.mxu0 0.0
        %1450 = vmatpush1.msra.mxu0 0.0
        %1451 = vmatprep.subr.mxu0 0.0
        %1452 = vmatpush1.msra.mxu0 0.0
        %1453 = vmatprep.subr.mxu0 0.0
        %1454 = vmatpush1.msra.mxu0 0.0
        %1455 = vmatprep.subr.mxu0 0.0
        %1456 = vmatpush1.msra.mxu0 0.0
        %1457 = vmatprep.subr.mxu0 0.0
        %1458 = vmatpush1.msra.mxu0 0.0
        %1459 = vmatprep.subr.mxu0 0.0
        %1460 = vmatpush1.msra.mxu0 0.0
        %1461 = vmatprep.subr.mxu0 0.0
        %1462 = vmatpush1.msra.mxu0 0.0
        %1463 = vmatprep.subr.mxu0 0.0
        %1464 = vmatpush1.msra.mxu0 0.0
        %1465 = vmatprep.subr.mxu0 0.0
        %1466 = vmatpush1.msra.mxu0 0.0
        %1467 = vmatprep.subr.mxu0 0.0
        %1468 = vmatpush1.msra.mxu0 0.0
        %1469 = vmatprep.subr.mxu0 0.0
        %1470 = vmatpush1.msra.mxu0 0.0
        %1471 = vmatprep.subr.mxu0 0.0
        %1472 = vmatpush1.msra.mxu0 0.0
        %1473 = vmatprep.subr.mxu0 0.0
        %1474 = vmatpush1.msra.mxu0 0.0
        %1475 = vmatprep.subr.mxu0 0.0
        %1476 = vmatpush1.msra.mxu0 0.0
        %1477 = vmatprep.mubr.f32.mxu0 0.0
        %1478 = vmatmul.mubr.f32.gmra.mrb[0].mxu0 %v1401
        %v1479 = vpop.f32.mrb[0].mxu0
        %v1480 = vadd.f32 0.0, %v1479
        %v1481 = vpop.f32.mrb[0].mxu0
        %v1482 = vadd.f32 0.0, %v1481
        %1483 = vmatprep.mubr.f32.mxu0 0.0
        %1484 = vmatmul.mubr.f32.gmra.mrb[0].mxu0 %v1404
        %v1485 = vpop.f32.mrb[0].mxu0
        %v1486 = vadd.f32 0.0, %v1485
        %v1487 = vpop.f32.mrb[0].mxu0
        %v1488 = vadd.f32 0.0, %v1487
        %1489 = vmatprep.mubr.f32.mxu0 0.0
        %1490 = vmatmul.mubr.f32.gmra.mrb[0].mxu0 %v1407
        %v1491 = vpop.f32.mrb[0].mxu0
        %v1492 = vadd.f32 0.0, %v1491
        %v1493 = vpop.f32.mrb[0].mxu0
        %v1494 = vadd.f32 0.0, %v1493
        %1495 = vdwg.mxu0
        %v1496 = vadd.f32 %v1369, %v1480
        %v1497 = vadd.f32 %v1370, %v1482
        %v1498 = vadd.f32 %v1371, %v1486
        %v1499 = vadd.f32 %v1372, %v1488
        %v1500 = vadd.f32 %v1373, %v1492
        %v1501 = vadd.f32 %v1374, %v1494
        %s1502 = scalar_lea.vmem %s3, 144
        %v1503 = vld [vmem:[%s1502] sm:$0xff]
        %v1504 = vld [vmem:[%s1502 + $0x8] sm:$0xff]
        %v1505 = vld [vmem:[%s1502 + $0x10] sm:$0xf]
        %1506 = vrot.lane.b32.xlu0 %v793, 56
        %v1507 = vpop.permute.xlu0 %1506
        %1508 = vrot.lane.b32.xlu0 %v794, 56
        %v1509 = vpop.permute.xlu0 %1508
        %1510 = vrot.lane.b32.xlu0 %v795, 56
        %v1511 = vpop.permute.xlu0 %1510
        %1512 = vrot.lane.b32.xlu0 %v797, 56
        %v1513 = vpop.permute.xlu0 %1512
        %1514 = vrot.lane.b32.xlu0 %v798, 56
        %v1515 = vpop.permute.xlu0 %1514
        %1516 = vrot.lane.b32.xlu0 %v799, 56
        %v1517 = vpop.permute.xlu0 %1516
        %vm1518 = vcmask 457728
        %v1519 = vsel %vm1518, %v1507, %v1509
        %v1520 = vsel %vm1518, %v1509, %v1511
        %v1521 = vsel %vm1518, %v1513, %v1515
        %v1522 = vsel %vm1518, %v1515, %v1517
        %v1526 = vsel %vm825, %v1503, 0
        %v1529 = vsel %vm825, %v1504, 0
        %v1532 = vsel %vm825, %v1505, 0
        %v1534 = vsel %vm365, %v1521, 0
        %v1536 = vsel %vm365, %v1522, 0
        %1538 = vmatprep.subr.mxu0 %v1520
        %1539 = vmatpush1.msra.mxu0 %v1519
        %1540 = vmatprep.subr.mxu0 %v1536
        %1541 = vmatpush1.msra.mxu0 %v1534
        %1542 = vmatprep.subr.mxu0 0.0
        %1543 = vmatpush1.msra.mxu0 0.0
        %1544 = vmatprep.subr.mxu0 0.0
        %1545 = vmatpush1.msra.mxu0 0.0
        %1546 = vmatprep.subr.mxu0 0.0
        %1547 = vmatpush1.msra.mxu0 0.0
        %1548 = vmatprep.subr.mxu0 0.0
        %1549 = vmatpush1.msra.mxu0 0.0
        %1550 = vmatprep.subr.mxu0 0.0
        %1551 = vmatpush1.msra.mxu0 0.0
        %1552 = vmatprep.subr.mxu0 0.0
        %1553 = vmatpush1.msra.mxu0 0.0
        %1554 = vmatprep.subr.mxu0 0.0
        %1555 = vmatpush1.msra.mxu0 0.0
        %1556 = vmatprep.subr.mxu0 0.0
        %1557 = vmatpush1.msra.mxu0 0.0
        %1558 = vmatprep.subr.mxu0 0.0
        %1559 = vmatpush1.msra.mxu0 0.0
        %1560 = vmatprep.subr.mxu0 0.0
        %1561 = vmatpush1.msra.mxu0 0.0
        %1562 = vmatprep.subr.mxu0 0.0
        %1563 = vmatpush1.msra.mxu0 0.0
        %1564 = vmatprep.subr.mxu0 0.0
        %1565 = vmatpush1.msra.mxu0 0.0
        %1566 = vmatprep.subr.mxu0 0.0
        %1567 = vmatpush1.msra.mxu0 0.0
        %1568 = vmatprep.subr.mxu0 0.0
        %1569 = vmatpush1.msra.mxu0 0.0
        %1570 = vmatprep.subr.mxu0 0.0
        %1571 = vmatpush1.msra.mxu0 0.0
        %1572 = vmatprep.subr.mxu0 0.0
        %1573 = vmatpush1.msra.mxu0 0.0
        %1574 = vmatprep.subr.mxu0 0.0
        %1575 = vmatpush1.msra.mxu0 0.0
        %1576 = vmatprep.subr.mxu0 0.0
        %1577 = vmatpush1.msra.mxu0 0.0
        %1578 = vmatprep.subr.mxu0 0.0
        %1579 = vmatpush1.msra.mxu0 0.0
        %1580 = vmatprep.subr.mxu0 0.0
        %1581 = vmatpush1.msra.mxu0 0.0
        %1582 = vmatprep.subr.mxu0 0.0
        %1583 = vmatpush1.msra.mxu0 0.0
        %1584 = vmatprep.subr.mxu0 0.0
        %1585 = vmatpush1.msra.mxu0 0.0
        %1586 = vmatprep.subr.mxu0 0.0
        %1587 = vmatpush1.msra.mxu0 0.0
        %1588 = vmatprep.subr.mxu0 0.0
        %1589 = vmatpush1.msra.mxu0 0.0
        %1590 = vmatprep.subr.mxu0 0.0
        %1591 = vmatpush1.msra.mxu0 0.0
        %1592 = vmatprep.subr.mxu0 0.0
        %1593 = vmatpush1.msra.mxu0 0.0
        %1594 = vmatprep.subr.mxu0 0.0
        %1595 = vmatpush1.msra.mxu0 0.0
        %1596 = vmatprep.subr.mxu0 0.0
        %1597 = vmatpush1.msra.mxu0 0.0
        %1598 = vmatprep.subr.mxu0 0.0
        %1599 = vmatpush1.msra.mxu0 0.0
        %1600 = vmatprep.subr.mxu0 0.0
        %1601 = vmatpush1.msra.mxu0 0.0
        %1602 = vmatprep.mubr.f32.mxu0 0.0
        %1603 = vmatmul.mubr.f32.gmra.mrb[0].mxu0 %v1526
        %v1604 = vpop.f32.mrb[0].mxu0
        %v1605 = vadd.f32 0.0, %v1604
        %v1606 = vpop.f32.mrb[0].mxu0
        %v1607 = vadd.f32 0.0, %v1606
        %1608 = vmatprep.mubr.f32.mxu0 0.0
        %1609 = vmatmul.mubr.f32.gmra.mrb[0].mxu0 %v1529
        %v1610 = vpop.f32.mrb[0].mxu0
        %v1611 = vadd.f32 0.0, %v1610
        %v1612 = vpop.f32.mrb[0].mxu0
        %v1613 = vadd.f32 0.0, %v1612
        %1614 = vmatprep.mubr.f32.mxu0 0.0
        %1615 = vmatmul.mubr.f32.gmra.mrb[0].mxu0 %v1532
        %v1616 = vpop.f32.mrb[0].mxu0
        %v1617 = vadd.f32 0.0, %v1616
        %v1618 = vpop.f32.mrb[0].mxu0
        %v1619 = vadd.f32 0.0, %v1618
        %1620 = vdwg.mxu0
        %v1621 = vadd.f32 %v1496, %v1605
        %v1622 = vadd.f32 %v1497, %v1607
        %v1623 = vadd.f32 %v1498, %v1611
        %v1624 = vadd.f32 %v1499, %v1613
        %v1625 = vadd.f32 %v1500, %v1617
        %v1626 = vadd.f32 %v1501, %v1619
        %s1627 = scalar_lea.vmem %s3, 168
        %v1628 = vld [vmem:[%s1627] sm:$0xff]
        %v1629 = vld [vmem:[%s1627 + $0x8] sm:$0xff]
        %v1630 = vld [vmem:[%s1627 + $0x10] sm:$0xf]
        %1631 = vrot.lane.b32.xlu0 %v793, 48
        %v1632 = vpop.permute.xlu0 %1631
        %1633 = vrot.lane.b32.xlu0 %v794, 48
        %v1634 = vpop.permute.xlu0 %1633
        %1635 = vrot.lane.b32.xlu0 %v795, 48
        %v1636 = vpop.permute.xlu0 %1635
        %1637 = vrot.lane.b32.xlu0 %v797, 48
        %v1638 = vpop.permute.xlu0 %1637
        %1639 = vrot.lane.b32.xlu0 %v798, 48
        %v1640 = vpop.permute.xlu0 %1639
        %1641 = vrot.lane.b32.xlu0 %v799, 48
        %v1642 = vpop.permute.xlu0 %1641
        %vm1643 = vcmask 392192
        %v1644 = vsel %vm1643, %v1632, %v1634
        %v1645 = vsel %vm1643, %v1634, %v1636
        %v1646 = vsel %vm1643, %v1638, %v1640
        %v1647 = vsel %vm1643, %v1640, %v1642
        %v1651 = vsel %vm825, %v1628, 0
        %v1654 = vsel %vm825, %v1629, 0
        %v1657 = vsel %vm825, %v1630, 0
        %v1659 = vsel %vm365, %v1646, 0
        %v1661 = vsel %vm365, %v1647, 0
        %1663 = vmatprep.subr.mxu0 %v1645
        %1664 = vmatpush1.msra.mxu0 %v1644
        %1665 = vmatprep.subr.mxu0 %v1661
        %1666 = vmatpush1.msra.mxu0 %v1659
        %1667 = vmatprep.subr.mxu0 0.0
        %1668 = vmatpush1.msra.mxu0 0.0
        %1669 = vmatprep.subr.mxu0 0.0
        %1670 = vmatpush1.msra.mxu0 0.0
        %1671 = vmatprep.subr.mxu0 0.0
        %1672 = vmatpush1.msra.mxu0 0.0
        %1673 = vmatprep.subr.mxu0 0.0
        %1674 = vmatpush1.msra.mxu0 0.0
        %1675 = vmatprep.subr.mxu0 0.0
        %1676 = vmatpush1.msra.mxu0 0.0
        %1677 = vmatprep.subr.mxu0 0.0
        %1678 = vmatpush1.msra.mxu0 0.0
        %1679 = vmatprep.subr.mxu0 0.0
        %1680 = vmatpush1.msra.mxu0 0.0
        %1681 = vmatprep.subr.mxu0 0.0
        %1682 = vmatpush1.msra.mxu0 0.0
        %1683 = vmatprep.subr.mxu0 0.0
        %1684 = vmatpush1.msra.mxu0 0.0
        %1685 = vmatprep.subr.mxu0 0.0
        %1686 = vmatpush1.msra.mxu0 0.0
        %1687 = vmatprep.subr.mxu0 0.0
        %1688 = vmatpush1.msra.mxu0 0.0
        %1689 = vmatprep.subr.mxu0 0.0
        %1690 = vmatpush1.msra.mxu0 0.0
        %1691 = vmatprep.subr.mxu0 0.0
        %1692 = vmatpush1.msra.mxu0 0.0
        %1693 = vmatprep.subr.mxu0 0.0
        %1694 = vmatpush1.msra.mxu0 0.0
        %1695 = vmatprep.subr.mxu0 0.0
        %1696 = vmatpush1.msra.mxu0 0.0
        %1697 = vmatprep.subr.mxu0 0.0
        %1698 = vmatpush1.msra.mxu0 0.0
        %1699 = vmatprep.subr.mxu0 0.0
        %1700 = vmatpush1.msra.mxu0 0.0
        %1701 = vmatprep.subr.mxu0 0.0
        %1702 = vmatpush1.msra.mxu0 0.0
        %1703 = vmatprep.subr.mxu0 0.0
        %1704 = vmatpush1.msra.mxu0 0.0
        %1705 = vmatprep.subr.mxu0 0.0
        %1706 = vmatpush1.msra.mxu0 0.0
        %1707 = vmatprep.subr.mxu0 0.0
        %1708 = vmatpush1.msra.mxu0 0.0
        %1709 = vmatprep.subr.mxu0 0.0
        %1710 = vmatpush1.msra.mxu0 0.0
        %1711 = vmatprep.subr.mxu0 0.0
        %1712 = vmatpush1.msra.mxu0 0.0
        %1713 = vmatprep.subr.mxu0 0.0
        %1714 = vmatpush1.msra.mxu0 0.0
        %1715 = vmatprep.subr.mxu0 0.0
        %1716 = vmatpush1.msra.mxu0 0.0
        %1717 = vmatprep.subr.mxu0 0.0
        %1718 = vmatpush1.msra.mxu0 0.0
        %1719 = vmatprep.subr.mxu0 0.0
        %1720 = vmatpush1.msra.mxu0 0.0
        %1721 = vmatprep.subr.mxu0 0.0
        %1722 = vmatpush1.msra.mxu0 0.0
        %1723 = vmatprep.subr.mxu0 0.0
        %1724 = vmatpush1.msra.mxu0 0.0
        %1725 = vmatprep.subr.mxu0 0.0
        %1726 = vmatpush1.msra.mxu0 0.0
        %1727 = vmatprep.mubr.f32.mxu0 0.0
        %1728 = vmatmul.mubr.f32.gmra.mrb[0].mxu0 %v1651
        %v1729 = vpop.f32.mrb[0].mxu0
        %v1730 = vadd.f32 0.0, %v1729
        %v1731 = vpop.f32.mrb[0].mxu0
        %v1732 = vadd.f32 0.0, %v1731
        %1733 = vmatprep.mubr.f32.mxu0 0.0
        %1734 = vmatmul.mubr.f32.gmra.mrb[0].mxu0 %v1654
        %v1735 = vpop.f32.mrb[0].mxu0
        %v1736 = vadd.f32 0.0, %v1735
        %v1737 = vpop.f32.mrb[0].mxu0
        %v1738 = vadd.f32 0.0, %v1737
        %1739 = vmatprep.mubr.f32.mxu0 0.0
        %1740 = vmatmul.mubr.f32.gmra.mrb[0].mxu0 %v1657
        %v1741 = vpop.f32.mrb[0].mxu0
        %v1742 = vadd.f32 0.0, %v1741
        %v1743 = vpop.f32.mrb[0].mxu0
        %v1744 = vadd.f32 0.0, %v1743
        %1745 = vdwg.mxu0
        %v1746 = vadd.f32 %v1621, %v1730
        %v1747 = vadd.f32 %v1622, %v1732
        %v1748 = vadd.f32 %v1623, %v1736
        %v1749 = vadd.f32 %v1624, %v1738
        %v1750 = vadd.f32 %v1625, %v1742
        %v1751 = vadd.f32 %v1626, %v1744
        %s1752 = scalar_lea.vmem %s3, 192
        %v1753 = vld [vmem:[%s1752] sm:$0xff]
        %v1754 = vld [vmem:[%s1752 + $0x8] sm:$0xff]
        %v1755 = vld [vmem:[%s1752 + $0x10] sm:$0xf]
        %1756 = vrot.lane.b32.xlu0 %v793, 40
        %v1757 = vpop.permute.xlu0 %1756
        %1758 = vrot.lane.b32.xlu0 %v794, 40
        %v1759 = vpop.permute.xlu0 %1758
        %1760 = vrot.lane.b32.xlu0 %v795, 40
        %v1761 = vpop.permute.xlu0 %1760
        %1762 = vrot.lane.b32.xlu0 %v797, 40
        %v1763 = vpop.permute.xlu0 %1762
        %1764 = vrot.lane.b32.xlu0 %v798, 40
        %v1765 = vpop.permute.xlu0 %1764
        %1766 = vrot.lane.b32.xlu0 %v799, 40
        %v1767 = vpop.permute.xlu0 %1766
        %vm1768 = vcmask 326656
        %v1769 = vsel %vm1768, %v1757, %v1759
        %v1770 = vsel %vm1768, %v1759, %v1761
        %v1771 = vsel %vm1768, %v1763, %v1765
        %v1772 = vsel %vm1768, %v1765, %v1767
        %v1776 = vsel %vm825, %v1753, 0
        %v1779 = vsel %vm825, %v1754, 0
        %v1782 = vsel %vm825, %v1755, 0
        %v1784 = vsel %vm365, %v1771, 0
        %v1786 = vsel %vm365, %v1772, 0
        %1788 = vmatprep.subr.mxu0 %v1770
        %1789 = vmatpush1.msra.mxu0 %v1769
        %1790 = vmatprep.subr.mxu0 %v1786
        %1791 = vmatpush1.msra.mxu0 %v1784
        %1792 = vmatprep.subr.mxu0 0.0
        %1793 = vmatpush1.msra.mxu0 0.0
        %1794 = vmatprep.subr.mxu0 0.0
        %1795 = vmatpush1.msra.mxu0 0.0
        %1796 = vmatprep.subr.mxu0 0.0
        %1797 = vmatpush1.msra.mxu0 0.0
        %1798 = vmatprep.subr.mxu0 0.0
        %1799 = vmatpush1.msra.mxu0 0.0
        %1800 = vmatprep.subr.mxu0 0.0
        %1801 = vmatpush1.msra.mxu0 0.0
        %1802 = vmatprep.subr.mxu0 0.0
        %1803 = vmatpush1.msra.mxu0 0.0
        %1804 = vmatprep.subr.mxu0 0.0
        %1805 = vmatpush1.msra.mxu0 0.0
        %1806 = vmatprep.subr.mxu0 0.0
        %1807 = vmatpush1.msra.mxu0 0.0
        %1808 = vmatprep.subr.mxu0 0.0
        %1809 = vmatpush1.msra.mxu0 0.0
        %1810 = vmatprep.subr.mxu0 0.0
        %1811 = vmatpush1.msra.mxu0 0.0
        %1812 = vmatprep.subr.mxu0 0.0
        %1813 = vmatpush1.msra.mxu0 0.0
        %1814 = vmatprep.subr.mxu0 0.0
        %1815 = vmatpush1.msra.mxu0 0.0
        %1816 = vmatprep.subr.mxu0 0.0
        %1817 = vmatpush1.msra.mxu0 0.0
        %1818 = vmatprep.subr.mxu0 0.0
        %1819 = vmatpush1.msra.mxu0 0.0
        %1820 = vmatprep.subr.mxu0 0.0
        %1821 = vmatpush1.msra.mxu0 0.0
        %1822 = vmatprep.subr.mxu0 0.0
        %1823 = vmatpush1.msra.mxu0 0.0
        %1824 = vmatprep.subr.mxu0 0.0
        %1825 = vmatpush1.msra.mxu0 0.0
        %1826 = vmatprep.subr.mxu0 0.0
        %1827 = vmatpush1.msra.mxu0 0.0
        %1828 = vmatprep.subr.mxu0 0.0
        %1829 = vmatpush1.msra.mxu0 0.0
        %1830 = vmatprep.subr.mxu0 0.0
        %1831 = vmatpush1.msra.mxu0 0.0
        %1832 = vmatprep.subr.mxu0 0.0
        %1833 = vmatpush1.msra.mxu0 0.0
        %1834 = vmatprep.subr.mxu0 0.0
        %1835 = vmatpush1.msra.mxu0 0.0
        %1836 = vmatprep.subr.mxu0 0.0
        %1837 = vmatpush1.msra.mxu0 0.0
        %1838 = vmatprep.subr.mxu0 0.0
        %1839 = vmatpush1.msra.mxu0 0.0
        %1840 = vmatprep.subr.mxu0 0.0
        %1841 = vmatpush1.msra.mxu0 0.0
        %1842 = vmatprep.subr.mxu0 0.0
        %1843 = vmatpush1.msra.mxu0 0.0
        %1844 = vmatprep.subr.mxu0 0.0
        %1845 = vmatpush1.msra.mxu0 0.0
        %1846 = vmatprep.subr.mxu0 0.0
        %1847 = vmatpush1.msra.mxu0 0.0
        %1848 = vmatprep.subr.mxu0 0.0
        %1849 = vmatpush1.msra.mxu0 0.0
        %1850 = vmatprep.subr.mxu0 0.0
        %1851 = vmatpush1.msra.mxu0 0.0
        %1852 = vmatprep.mubr.f32.mxu0 0.0
        %1853 = vmatmul.mubr.f32.gmra.mrb[0].mxu0 %v1776
        %v1854 = vpop.f32.mrb[0].mxu0
        %v1855 = vadd.f32 0.0, %v1854
        %v1856 = vpop.f32.mrb[0].mxu0
        %v1857 = vadd.f32 0.0, %v1856
        %1858 = vmatprep.mubr.f32.mxu0 0.0
        %1859 = vmatmul.mubr.f32.gmra.mrb[0].mxu0 %v1779
        %v1860 = vpop.f32.mrb[0].mxu0
        %v1861 = vadd.f32 0.0, %v1860
        %v1862 = vpop.f32.mrb[0].mxu0
        %v1863 = vadd.f32 0.0, %v1862
        %1864 = vmatprep.mubr.f32.mxu0 0.0
        %1865 = vmatmul.mubr.f32.gmra.mrb[0].mxu0 %v1782
        %v1866 = vpop.f32.mrb[0].mxu0
        %v1867 = vadd.f32 0.0, %v1866
        %v1868 = vpop.f32.mrb[0].mxu0
        %v1869 = vadd.f32 0.0, %v1868
        %1870 = vdwg.mxu0
        %v1871 = vadd.f32 %v1746, %v1855
        %v1872 = vadd.f32 %v1747, %v1857
        %v1873 = vadd.f32 %v1748, %v1861
        %v1874 = vadd.f32 %v1749, %v1863
        %v1875 = vadd.f32 %v1750, %v1867
        %v1876 = vadd.f32 %v1751, %v1869
        %s1877 = scalar_lea.vmem %s3, 216
        %v1878 = vld [vmem:[%s1877] sm:$0xff]
        %v1879 = vld [vmem:[%s1877 + $0x8] sm:$0xff]
        %v1880 = vld [vmem:[%s1877 + $0x10] sm:$0xf]
        %1881 = vrot.lane.b32.xlu0 %v793, 32
        %v1882 = vpop.permute.xlu0 %1881
        %1883 = vrot.lane.b32.xlu0 %v794, 32
        %v1884 = vpop.permute.xlu0 %1883
        %1885 = vrot.lane.b32.xlu0 %v795, 32
        %v1886 = vpop.permute.xlu0 %1885
        %1887 = vrot.lane.b32.xlu0 %v797, 32
        %v1888 = vpop.permute.xlu0 %1887
        %1889 = vrot.lane.b32.xlu0 %v798, 32
        %v1890 = vpop.permute.xlu0 %1889
        %1891 = vrot.lane.b32.xlu0 %v799, 32
        %v1892 = vpop.permute.xlu0 %1891
        %vm1893 = vcmask 261120
        %v1894 = vsel %vm1893, %v1882, %v1884
        %v1895 = vsel %vm1893, %v1884, %v1886
        %v1896 = vsel %vm1893, %v1888, %v1890
        %v1897 = vsel %vm1893, %v1890, %v1892
        %v1901 = vsel %vm825, %v1878, 0
        %v1904 = vsel %vm825, %v1879, 0
        %v1907 = vsel %vm825, %v1880, 0
        %v1909 = vsel %vm365, %v1896, 0
        %v1911 = vsel %vm365, %v1897, 0
        %1913 = vmatprep.subr.mxu0 %v1895
        %1914 = vmatpush1.msra.mxu0 %v1894
        %1915 = vmatprep.subr.mxu0 %v1911
        %1916 = vmatpush1.msra.mxu0 %v1909
        %1917 = vmatprep.subr.mxu0 0.0
        %1918 = vmatpush1.msra.mxu0 0.0
        %1919 = vmatprep.subr.mxu0 0.0
        %1920 = vmatpush1.msra.mxu0 0.0
        %1921 = vmatprep.subr.mxu0 0.0
        %1922 = vmatpush1.msra.mxu0 0.0
        %1923 = vmatprep.subr.mxu0 0.0
        %1924 = vmatpush1.msra.mxu0 0.0
        %1925 = vmatprep.subr.mxu0 0.0
        %1926 = vmatpush1.msra.mxu0 0.0
        %1927 = vmatprep.subr.mxu0 0.0
        %1928 = vmatpush1.msra.mxu0 0.0
        %1929 = vmatprep.subr.mxu0 0.0
        %1930 = vmatpush1.msra.mxu0 0.0
        %1931 = vmatprep.subr.mxu0 0.0
        %1932 = vmatpush1.msra.mxu0 0.0
        %1933 = vmatprep.subr.mxu0 0.0
        %1934 = vmatpush1.msra.mxu0 0.0
        %1935 = vmatprep.subr.mxu0 0.0
        %1936 = vmatpush1.msra.mxu0 0.0
        %1937 = vmatprep.subr.mxu0 0.0
        %1938 = vmatpush1.msra.mxu0 0.0
        %1939 = vmatprep.subr.mxu0 0.0
        %1940 = vmatpush1.msra.mxu0 0.0
        %1941 = vmatprep.subr.mxu0 0.0
        %1942 = vmatpush1.msra.mxu0 0.0
        %1943 = vmatprep.subr.mxu0 0.0
        %1944 = vmatpush1.msra.mxu0 0.0
        %1945 = vmatprep.subr.mxu0 0.0
        %1946 = vmatpush1.msra.mxu0 0.0
        %1947 = vmatprep.subr.mxu0 0.0
        %1948 = vmatpush1.msra.mxu0 0.0
        %1949 = vmatprep.subr.mxu0 0.0
        %1950 = vmatpush1.msra.mxu0 0.0
        %1951 = vmatprep.subr.mxu0 0.0
        %1952 = vmatpush1.msra.mxu0 0.0
        %1953 = vmatprep.subr.mxu0 0.0
        %1954 = vmatpush1.msra.mxu0 0.0
        %1955 = vmatprep.subr.mxu0 0.0
        %1956 = vmatpush1.msra.mxu0 0.0
        %1957 = vmatprep.subr.mxu0 0.0
        %1958 = vmatpush1.msra.mxu0 0.0
        %1959 = vmatprep.subr.mxu0 0.0
        %1960 = vmatpush1.msra.mxu0 0.0
        %1961 = vmatprep.subr.mxu0 0.0
        %1962 = vmatpush1.msra.mxu0 0.0
        %1963 = vmatprep.subr.mxu0 0.0
        %1964 = vmatpush1.msra.mxu0 0.0
        %1965 = vmatprep.subr.mxu0 0.0
        %1966 = vmatpush1.msra.mxu0 0.0
        %1967 = vmatprep.subr.mxu0 0.0
        %1968 = vmatpush1.msra.mxu0 0.0
        %1969 = vmatprep.subr.mxu0 0.0
        %1970 = vmatpush1.msra.mxu0 0.0
        %1971 = vmatprep.subr.mxu0 0.0
        %1972 = vmatpush1.msra.mxu0 0.0
        %1973 = vmatprep.subr.mxu0 0.0
        %1974 = vmatpush1.msra.mxu0 0.0
        %1975 = vmatprep.subr.mxu0 0.0
        %1976 = vmatpush1.msra.mxu0 0.0
        %1977 = vmatprep.mubr.f32.mxu0 0.0
        %1978 = vmatmul.mubr.f32.gmra.mrb[0].mxu0 %v1901
        %v1979 = vpop.f32.mrb[0].mxu0
        %v1980 = vadd.f32 0.0, %v1979
        %v1981 = vpop.f32.mrb[0].mxu0
        %v1982 = vadd.f32 0.0, %v1981
        %1983 = vmatprep.mubr.f32.mxu0 0.0
        %1984 = vmatmul.mubr.f32.gmra.mrb[0].mxu0 %v1904
        %v1985 = vpop.f32.mrb[0].mxu0
        %v1986 = vadd.f32 0.0, %v1985
        %v1987 = vpop.f32.mrb[0].mxu0
        %v1988 = vadd.f32 0.0, %v1987
        %1989 = vmatprep.mubr.f32.mxu0 0.0
        %1990 = vmatmul.mubr.f32.gmra.mrb[0].mxu0 %v1907
        %v1991 = vpop.f32.mrb[0].mxu0
        %v1992 = vadd.f32 0.0, %v1991
        %v1993 = vpop.f32.mrb[0].mxu0
        %v1994 = vadd.f32 0.0, %v1993
        %1995 = vdwg.mxu0
        %v1996 = vadd.f32 %v1871, %v1980
        %v1997 = vadd.f32 %v1872, %v1982
        %v1998 = vadd.f32 %v1873, %v1986
        %v1999 = vadd.f32 %v1874, %v1988
        %v2000 = vadd.f32 %v1875, %v1992
        %v2001 = vadd.f32 %v1876, %v1994
        %s2002 = scalar_lea.vmem %s3, 240
        %v2003 = vld [vmem:[%s2002] sm:$0xff]
        %v2004 = vld [vmem:[%s2002 + $0x8] sm:$0xff]
        %v2005 = vld [vmem:[%s2002 + $0x10] sm:$0xf]
        %v2007 = vsel %vm825, %v2003, 0
        %v2010 = vsel %vm825, %v2004, 0
        %v2013 = vsel %vm825, %v2005, 0
        %v2015 = vsel %vm365, %v799, 0
        %2017 = vmatprep.subr.mxu0 %v795
        %2018 = vmatpush1.msra.mxu0 %v794
        %2019 = vmatprep.subr.mxu0 %v2015
        %2020 = vmatpush1.msra.mxu0 %v933
        %2021 = vmatprep.subr.mxu0 0.0
        %2022 = vmatpush1.msra.mxu0 0.0
        %2023 = vmatprep.subr.mxu0 0.0
        %2024 = vmatpush1.msra.mxu0 0.0
        %2025 = vmatprep.subr.mxu0 0.0
        %2026 = vmatpush1.msra.mxu0 0.0
        %2027 = vmatprep.subr.mxu0 0.0
        %2028 = vmatpush1.msra.mxu0 0.0
        %2029 = vmatprep.subr.mxu0 0.0
        %2030 = vmatpush1.msra.mxu0 0.0
        %2031 = vmatprep.subr.mxu0 0.0
        %2032 = vmatpush1.msra.mxu0 0.0
        %2033 = vmatprep.subr.mxu0 0.0
        %2034 = vmatpush1.msra.mxu0 0.0
        %2035 = vmatprep.subr.mxu0 0.0
        %2036 = vmatpush1.msra.mxu0 0.0
        %2037 = vmatprep.subr.mxu0 0.0
        %2038 = vmatpush1.msra.mxu0 0.0
        %2039 = vmatprep.subr.mxu0 0.0
        %2040 = vmatpush1.msra.mxu0 0.0
        %2041 = vmatprep.subr.mxu0 0.0
        %2042 = vmatpush1.msra.mxu0 0.0
        %2043 = vmatprep.subr.mxu0 0.0
        %2044 = vmatpush1.msra.mxu0 0.0
        %2045 = vmatprep.subr.mxu0 0.0
        %2046 = vmatpush1.msra.mxu0 0.0
        %2047 = vmatprep.subr.mxu0 0.0
        %2048 = vmatpush1.msra.mxu0 0.0
        %2049 = vmatprep.subr.mxu0 0.0
        %2050 = vmatpush1.msra.mxu0 0.0
        %2051 = vmatprep.subr.mxu0 0.0
        %2052 = vmatpush1.msra.mxu0 0.0
        %2053 = vmatprep.subr.mxu0 0.0
        %2054 = vmatpush1.msra.mxu0 0.0
        %2055 = vmatprep.subr.mxu0 0.0
        %2056 = vmatpush1.msra.mxu0 0.0
        %2057 = vmatprep.subr.mxu0 0.0
        %2058 = vmatpush1.msra.mxu0 0.0
        %2059 = vmatprep.subr.mxu0 0.0
        %2060 = vmatpush1.msra.mxu0 0.0
        %2061 = vmatprep.subr.mxu0 0.0
        %2062 = vmatpush1.msra.mxu0 0.0
        %2063 = vmatprep.subr.mxu0 0.0
        %2064 = vmatpush1.msra.mxu0 0.0
        %2065 = vmatprep.subr.mxu0 0.0
        %2066 = vmatpush1.msra.mxu0 0.0
        %2067 = vmatprep.subr.mxu0 0.0
        %2068 = vmatpush1.msra.mxu0 0.0
        %2069 = vmatprep.subr.mxu0 0.0
        %2070 = vmatpush1.msra.mxu0 0.0
        %2071 = vmatprep.subr.mxu0 0.0
        %2072 = vmatpush1.msra.mxu0 0.0
        %2073 = vmatprep.subr.mxu0 0.0
        %2074 = vmatpush1.msra.mxu0 0.0
        %2075 = vmatprep.subr.mxu0 0.0
        %2076 = vmatpush1.msra.mxu0 0.0
        %2077 = vmatprep.subr.mxu0 0.0
        %2078 = vmatpush1.msra.mxu0 0.0
        %2079 = vmatprep.subr.mxu0 0.0
        %2080 = vmatpush1.msra.mxu0 0.0
        %2081 = vmatprep.mubr.f32.mxu0 0.0
        %2082 = vmatmul.mubr.f32.gmra.mrb[0].mxu0 %v2007
        %v2083 = vpop.f32.mrb[0].mxu0
        %v2084 = vadd.f32 0.0, %v2083
        %v2085 = vpop.f32.mrb[0].mxu0
        %v2086 = vadd.f32 0.0, %v2085
        %2087 = vmatprep.mubr.f32.mxu0 0.0
        %2088 = vmatmul.mubr.f32.gmra.mrb[0].mxu0 %v2010
        %v2089 = vpop.f32.mrb[0].mxu0
        %v2090 = vadd.f32 0.0, %v2089
        %v2091 = vpop.f32.mrb[0].mxu0
        %v2092 = vadd.f32 0.0, %v2091
        %2093 = vmatprep.mubr.f32.mxu0 0.0
        %2094 = vmatmul.mubr.f32.gmra.mrb[0].mxu0 %v2013
        %v2095 = vpop.f32.mrb[0].mxu0
        %v2096 = vadd.f32 0.0, %v2095
        %v2097 = vpop.f32.mrb[0].mxu0
        %v2098 = vadd.f32 0.0, %v2097
        %2099 = vdwg.mxu0
        %v2100 = vadd.f32 %v1996, %v2084
        %v2101 = vadd.f32 %v1997, %v2086
        %v2102 = vadd.f32 %v1998, %v2090
        %v2103 = vadd.f32 %v1999, %v2092
        %v2104 = vadd.f32 %v2000, %v2096
        %v2105 = vadd.f32 %v2001, %v2098
        %s2106 = scalar_lea.vmem %s3, 264
        %v2107 = vld [vmem:[%s2106] sm:$0xff]
        %v2108 = vld [vmem:[%s2106 + $0x8] sm:$0xff]
        %v2109 = vld [vmem:[%s2106 + $0x10] sm:$0xf]
        %2110 = vrot.lane.b32.xlu0 %v795, 120
        %v2111 = vpop.permute.xlu0 %2110
        %2112 = vrot.lane.b32.xlu0 %v799, 120
        %v2113 = vpop.permute.xlu0 %2112
        %v2114 = vsel %vm820, %v815, %v2111
        %v2115 = vsel %vm820, %v819, %v2113
        %v2119 = vsel %vm825, %v2107, 0
        %v2122 = vsel %vm825, %v2108, 0
        %v2125 = vsel %vm825, %v2109, 0
        %v2127 = vsel %vm365, %v2115, 0
        %v2129 = vsel %vm365, %v2113, 0
        %2131 = vmatprep.subr.mxu0 %v2111
        %2132 = vmatpush1.msra.mxu0 %v2114
        %2133 = vmatprep.subr.mxu0 %v2129
        %2134 = vmatpush1.msra.mxu0 %v2127
        %2135 = vmatprep.subr.mxu0 0.0
        %2136 = vmatpush1.msra.mxu0 0.0
        %2137 = vmatprep.subr.mxu0 0.0
        %2138 = vmatpush1.msra.mxu0 0.0
        %2139 = vmatprep.subr.mxu0 0.0
        %2140 = vmatpush1.msra.mxu0 0.0
        %2141 = vmatprep.subr.mxu0 0.0
        %2142 = vmatpush1.msra.mxu0 0.0
        %2143 = vmatprep.subr.mxu0 0.0
        %2144 = vmatpush1.msra.mxu0 0.0
        %2145 = vmatprep.subr.mxu0 0.0
        %2146 = vmatpush1.msra.mxu0 0.0
        %2147 = vmatprep.subr.mxu0 0.0
        %2148 = vmatpush1.msra.mxu0 0.0
        %2149 = vmatprep.subr.mxu0 0.0
        %2150 = vmatpush1.msra.mxu0 0.0
        %2151 = vmatprep.subr.mxu0 0.0
        %2152 = vmatpush1.msra.mxu0 0.0
        %2153 = vmatprep.subr.mxu0 0.0
        %2154 = vmatpush1.msra.mxu0 0.0
        %2155 = vmatprep.subr.mxu0 0.0
        %2156 = vmatpush1.msra.mxu0 0.0
        %2157 = vmatprep.subr.mxu0 0.0
        %2158 = vmatpush1.msra.mxu0 0.0
        %2159 = vmatprep.subr.mxu0 0.0
        %2160 = vmatpush1.msra.mxu0 0.0
        %2161 = vmatprep.subr.mxu0 0.0
        %2162 = vmatpush1.msra.mxu0 0.0
        %2163 = vmatprep.subr.mxu0 0.0
        %2164 = vmatpush1.msra.mxu0 0.0
        %2165 = vmatprep.subr.mxu0 0.0
        %2166 = vmatpush1.msra.mxu0 0.0
        %2167 = vmatprep.subr.mxu0 0.0
        %2168 = vmatpush1.msra.mxu0 0.0
        %2169 = vmatprep.subr.mxu0 0.0
        %2170 = vmatpush1.msra.mxu0 0.0
        %2171 = vmatprep.subr.mxu0 0.0
        %2172 = vmatpush1.msra.mxu0 0.0
        %2173 = vmatprep.subr.mxu0 0.0
        %2174 = vmatpush1.msra.mxu0 0.0
        %2175 = vmatprep.subr.mxu0 0.0
        %2176 = vmatpush1.msra.mxu0 0.0
        %2177 = vmatprep.subr.mxu0 0.0
        %2178 = vmatpush1.msra.mxu0 0.0
        %2179 = vmatprep.subr.mxu0 0.0
        %2180 = vmatpush1.msra.mxu0 0.0
        %2181 = vmatprep.subr.mxu0 0.0
        %2182 = vmatpush1.msra.mxu0 0.0
        %2183 = vmatprep.subr.mxu0 0.0
        %2184 = vmatpush1.msra.mxu0 0.0
        %2185 = vmatprep.subr.mxu0 0.0
        %2186 = vmatpush1.msra.mxu0 0.0
        %2187 = vmatprep.subr.mxu0 0.0
        %2188 = vmatpush1.msra.mxu0 0.0
        %2189 = vmatprep.subr.mxu0 0.0
        %2190 = vmatpush1.msra.mxu0 0.0
        %2191 = vmatprep.subr.mxu0 0.0
        %2192 = vmatpush1.msra.mxu0 0.0
        %2193 = vmatprep.subr.mxu0 0.0
        %2194 = vmatpush1.msra.mxu0 0.0
        %2195 = vmatprep.mubr.f32.mxu0 0.0
        %2196 = vmatmul.mubr.f32.gmra.mrb[0].mxu0 %v2119
        %v2197 = vpop.f32.mrb[0].mxu0
        %v2198 = vadd.f32 0.0, %v2197
        %v2199 = vpop.f32.mrb[0].mxu0
        %v2200 = vadd.f32 0.0, %v2199
        %2201 = vmatprep.mubr.f32.mxu0 0.0
        %2202 = vmatmul.mubr.f32.gmra.mrb[0].mxu0 %v2122
        %v2203 = vpop.f32.mrb[0].mxu0
        %v2204 = vadd.f32 0.0, %v2203
        %v2205 = vpop.f32.mrb[0].mxu0
        %v2206 = vadd.f32 0.0, %v2205
        %2207 = vmatprep.mubr.f32.mxu0 0.0
        %2208 = vmatmul.mubr.f32.gmra.mrb[0].mxu0 %v2125
        %v2209 = vpop.f32.mrb[0].mxu0
        %v2210 = vadd.f32 0.0, %v2209
        %v2211 = vpop.f32.mrb[0].mxu0
        %v2212 = vadd.f32 0.0, %v2211
        %2213 = vdwg.mxu0
        %v2214 = vadd.f32 %v2100, %v2198
        %v2215 = vadd.f32 %v2101, %v2200
        %v2216 = vadd.f32 %v2102, %v2204
        %v2217 = vadd.f32 %v2103, %v2206
        %v2218 = vadd.f32 %v2104, %v2210
        %v2219 = vadd.f32 %v2105, %v2212
        %s2220 = scalar_lea.vmem %s3, 288
        %v2221 = vld [vmem:[%s2220] sm:$0xff]
        %v2222 = vld [vmem:[%s2220 + $0x8] sm:$0xff]
        %v2223 = vld [vmem:[%s2220 + $0x10] sm:$0xf]
        %2224 = vrot.lane.b32.xlu0 %v795, 112
        %v2225 = vpop.permute.xlu0 %2224
        %2226 = vrot.lane.b32.xlu0 %v799, 112
        %v2227 = vpop.permute.xlu0 %2226
        %v2228 = vsel %vm1030, %v1025, %v2225
        %v2229 = vsel %vm1030, %v1029, %v2227
        %v2233 = vsel %vm825, %v2221, 0
        %v2236 = vsel %vm825, %v2222, 0
        %v2239 = vsel %vm825, %v2223, 0
        %v2241 = vsel %vm365, %v2229, 0
        %v2243 = vsel %vm365, %v2227, 0
        %2245 = vmatprep.subr.mxu0 %v2225
        %2246 = vmatpush1.msra.mxu0 %v2228
        %2247 = vmatprep.subr.mxu0 %v2243
        %2248 = vmatpush1.msra.mxu0 %v2241
        %2249 = vmatprep.subr.mxu0 0.0
        %2250 = vmatpush1.msra.mxu0 0.0
        %2251 = vmatprep.subr.mxu0 0.0
        %2252 = vmatpush1.msra.mxu0 0.0
        %2253 = vmatprep.subr.mxu0 0.0
        %2254 = vmatpush1.msra.mxu0 0.0
        %2255 = vmatprep.subr.mxu0 0.0
        %2256 = vmatpush1.msra.mxu0 0.0
        %2257 = vmatprep.subr.mxu0 0.0
        %2258 = vmatpush1.msra.mxu0 0.0
        %2259 = vmatprep.subr.mxu0 0.0
        %2260 = vmatpush1.msra.mxu0 0.0
        %2261 = vmatprep.subr.mxu0 0.0
        %2262 = vmatpush1.msra.mxu0 0.0
        %2263 = vmatprep.subr.mxu0 0.0
        %2264 = vmatpush1.msra.mxu0 0.0
        %2265 = vmatprep.subr.mxu0 0.0
        %2266 = vmatpush1.msra.mxu0 0.0
        %2267 = vmatprep.subr.mxu0 0.0
        %2268 = vmatpush1.msra.mxu0 0.0
        %2269 = vmatprep.subr.mxu0 0.0
        %2270 = vmatpush1.msra.mxu0 0.0
        %2271 = vmatprep.subr.mxu0 0.0
        %2272 = vmatpush1.msra.mxu0 0.0
        %2273 = vmatprep.subr.mxu0 0.0
        %2274 = vmatpush1.msra.mxu0 0.0
        %2275 = vmatprep.subr.mxu0 0.0
        %2276 = vmatpush1.msra.mxu0 0.0
        %2277 = vmatprep.subr.mxu0 0.0
        %2278 = vmatpush1.msra.mxu0 0.0
        %2279 = vmatprep.subr.mxu0 0.0
        %2280 = vmatpush1.msra.mxu0 0.0
        %2281 = vmatprep.subr.mxu0 0.0
        %2282 = vmatpush1.msra.mxu0 0.0
        %2283 = vmatprep.subr.mxu0 0.0
        %2284 = vmatpush1.msra.mxu0 0.0
        %2285 = vmatprep.subr.mxu0 0.0
        %2286 = vmatpush1.msra.mxu0 0.0
        %2287 = vmatprep.subr.mxu0 0.0
        %2288 = vmatpush1.msra.mxu0 0.0
        %2289 = vmatprep.subr.mxu0 0.0
        %2290 = vmatpush1.msra.mxu0 0.0
        %2291 = vmatprep.subr.mxu0 0.0
        %2292 = vmatpush1.msra.mxu0 0.0
        %2293 = vmatprep.subr.mxu0 0.0
        %2294 = vmatpush1.msra.mxu0 0.0
        %2295 = vmatprep.subr.mxu0 0.0
        %2296 = vmatpush1.msra.mxu0 0.0
        %2297 = vmatprep.subr.mxu0 0.0
        %2298 = vmatpush1.msra.mxu0 0.0
        %2299 = vmatprep.subr.mxu0 0.0
        %2300 = vmatpush1.msra.mxu0 0.0
        %2301 = vmatprep.subr.mxu0 0.0
        %2302 = vmatpush1.msra.mxu0 0.0
        %2303 = vmatprep.subr.mxu0 0.0
        %2304 = vmatpush1.msra.mxu0 0.0
        %2305 = vmatprep.subr.mxu0 0.0
        %2306 = vmatpush1.msra.mxu0 0.0
        %2307 = vmatprep.subr.mxu0 0.0
        %2308 = vmatpush1.msra.mxu0 0.0
        %2309 = vmatprep.mubr.f32.mxu0 0.0
        %2310 = vmatmul.mubr.f32.gmra.mrb[0].mxu0 %v2233
        %v2311 = vpop.f32.mrb[0].mxu0
        %v2312 = vadd.f32 0.0, %v2311
        %v2313 = vpop.f32.mrb[0].mxu0
        %v2314 = vadd.f32 0.0, %v2313
        %2315 = vmatprep.mubr.f32.mxu0 0.0
        %2316 = vmatmul.mubr.f32.gmra.mrb[0].mxu0 %v2236
        %v2317 = vpop.f32.mrb[0].mxu0
        %v2318 = vadd.f32 0.0, %v2317
        %v2319 = vpop.f32.mrb[0].mxu0
        %v2320 = vadd.f32 0.0, %v2319
        %2321 = vmatprep.mubr.f32.mxu0 0.0
        %2322 = vmatmul.mubr.f32.gmra.mrb[0].mxu0 %v2239
        %v2323 = vpop.f32.mrb[0].mxu0
        %v2324 = vadd.f32 0.0, %v2323
        %v2325 = vpop.f32.mrb[0].mxu0
        %v2326 = vadd.f32 0.0, %v2325
        %2327 = vdwg.mxu0
        %v2328 = vadd.f32 %v2214, %v2312
        %v2329 = vadd.f32 %v2215, %v2314
        %v2330 = vadd.f32 %v2216, %v2318
        %v2331 = vadd.f32 %v2217, %v2320
        %v2332 = vadd.f32 %v2218, %v2324
        %v2333 = vadd.f32 %v2219, %v2326
        %s2334 = scalar_lea.vmem %s3, 312
        %v2335 = vld [vmem:[%s2334] sm:$0xff]
        %v2336 = vld [vmem:[%s2334 + $0x8] sm:$0xff]
        %v2337 = vld [vmem:[%s2334 + $0x10] sm:$0xf]
        %2338 = vrot.lane.b32.xlu0 %v795, 104
        %v2339 = vpop.permute.xlu0 %2338
        %2340 = vrot.lane.b32.xlu0 %v799, 104
        %v2341 = vpop.permute.xlu0 %2340
        %v2342 = vsel %vm1149, %v1144, %v2339
        %v2343 = vsel %vm1149, %v1148, %v2341
        %v2347 = vsel %vm825, %v2335, 0
        %v2350 = vsel %vm825, %v2336, 0
        %v2353 = vsel %vm825, %v2337, 0
        %v2355 = vsel %vm365, %v2343, 0
        %v2357 = vsel %vm365, %v2341, 0
        %2359 = vmatprep.subr.mxu0 %v2339
        %2360 = vmatpush1.msra.mxu0 %v2342
        %2361 = vmatprep.subr.mxu0 %v2357
        %2362 = vmatpush1.msra.mxu0 %v2355
        %2363 = vmatprep.subr.mxu0 0.0
        %2364 = vmatpush1.msra.mxu0 0.0
        %2365 = vmatprep.subr.mxu0 0.0
        %2366 = vmatpush1.msra.mxu0 0.0
        %2367 = vmatprep.subr.mxu0 0.0
        %2368 = vmatpush1.msra.mxu0 0.0
        %2369 = vmatprep.subr.mxu0 0.0
        %2370 = vmatpush1.msra.mxu0 0.0
        %2371 = vmatprep.subr.mxu0 0.0
        %2372 = vmatpush1.msra.mxu0 0.0
        %2373 = vmatprep.subr.mxu0 0.0
        %2374 = vmatpush1.msra.mxu0 0.0
        %2375 = vmatprep.subr.mxu0 0.0
        %2376 = vmatpush1.msra.mxu0 0.0
        %2377 = vmatprep.subr.mxu0 0.0
        %2378 = vmatpush1.msra.mxu0 0.0
        %2379 = vmatprep.subr.mxu0 0.0
        %2380 = vmatpush1.msra.mxu0 0.0
        %2381 = vmatprep.subr.mxu0 0.0
        %2382 = vmatpush1.msra.mxu0 0.0
        %2383 = vmatprep.subr.mxu0 0.0
        %2384 = vmatpush1.msra.mxu0 0.0
        %2385 = vmatprep.subr.mxu0 0.0
        %2386 = vmatpush1.msra.mxu0 0.0
        %2387 = vmatprep.subr.mxu0 0.0
        %2388 = vmatpush1.msra.mxu0 0.0
        %2389 = vmatprep.subr.mxu0 0.0
        %2390 = vmatpush1.msra.mxu0 0.0
        %2391 = vmatprep.subr.mxu0 0.0
        %2392 = vmatpush1.msra.mxu0 0.0
        %2393 = vmatprep.subr.mxu0 0.0
        %2394 = vmatpush1.msra.mxu0 0.0
        %2395 = vmatprep.subr.mxu0 0.0
        %2396 = vmatpush1.msra.mxu0 0.0
        %2397 = vmatprep.subr.mxu0 0.0
        %2398 = vmatpush1.msra.mxu0 0.0
        %2399 = vmatprep.subr.mxu0 0.0
        %2400 = vmatpush1.msra.mxu0 0.0
        %2401 = vmatprep.subr.mxu0 0.0
        %2402 = vmatpush1.msra.mxu0 0.0
        %2403 = vmatprep.subr.mxu0 0.0
        %2404 = vmatpush1.msra.mxu0 0.0
        %2405 = vmatprep.subr.mxu0 0.0
        %2406 = vmatpush1.msra.mxu0 0.0
        %2407 = vmatprep.subr.mxu0 0.0
        %2408 = vmatpush1.msra.mxu0 0.0
        %2409 = vmatprep.subr.mxu0 0.0
        %2410 = vmatpush1.msra.mxu0 0.0
        %2411 = vmatprep.subr.mxu0 0.0
        %2412 = vmatpush1.msra.mxu0 0.0
        %2413 = vmatprep.subr.mxu0 0.0
        %2414 = vmatpush1.msra.mxu0 0.0
        %2415 = vmatprep.subr.mxu0 0.0
        %2416 = vmatpush1.msra.mxu0 0.0
        %2417 = vmatprep.subr.mxu0 0.0
        %2418 = vmatpush1.msra.mxu0 0.0
        %2419 = vmatprep.subr.mxu0 0.0
        %2420 = vmatpush1.msra.mxu0 0.0
        %2421 = vmatprep.subr.mxu0 0.0
        %2422 = vmatpush1.msra.mxu0 0.0
        %2423 = vmatprep.mubr.f32.mxu0 0.0
        %2424 = vmatmul.mubr.f32.gmra.mrb[0].mxu0 %v2347
        %v2425 = vpop.f32.mrb[0].mxu0
        %v2426 = vadd.f32 0.0, %v2425
        %v2427 = vpop.f32.mrb[0].mxu0
        %v2428 = vadd.f32 0.0, %v2427
        %2429 = vmatprep.mubr.f32.mxu0 0.0
        %2430 = vmatmul.mubr.f32.gmra.mrb[0].mxu0 %v2350
        %v2431 = vpop.f32.mrb[0].mxu0
        %v2432 = vadd.f32 0.0, %v2431
        %v2433 = vpop.f32.mrb[0].mxu0
        %v2434 = vadd.f32 0.0, %v2433
        %2435 = vmatprep.mubr.f32.mxu0 0.0
        %2436 = vmatmul.mubr.f32.gmra.mrb[0].mxu0 %v2353
        %v2437 = vpop.f32.mrb[0].mxu0
        %v2438 = vadd.f32 0.0, %v2437
        %v2439 = vpop.f32.mrb[0].mxu0
        %v2440 = vadd.f32 0.0, %v2439
        %2441 = vdwg.mxu0
        %v2442 = vadd.f32 %v2328, %v2426
        %v2443 = vadd.f32 %v2329, %v2428
        %v2444 = vadd.f32 %v2330, %v2432
        %v2445 = vadd.f32 %v2331, %v2434
        %v2446 = vadd.f32 %v2332, %v2438
        %v2447 = vadd.f32 %v2333, %v2440
        %s2448 = scalar_lea.vmem %s3, 336
        %v2449 = vld [vmem:[%s2448] sm:$0xff]
        %v2450 = vld [vmem:[%s2448 + $0x8] sm:$0xff]
        %v2451 = vld [vmem:[%s2448 + $0x10] sm:$0xf]
        %2452 = vrot.lane.b32.xlu0 %v795, 96
        %v2453 = vpop.permute.xlu0 %2452
        %2454 = vrot.lane.b32.xlu0 %v799, 96
        %v2455 = vpop.permute.xlu0 %2454
        %v2456 = vsel %vm1268, %v1263, %v2453
        %v2457 = vsel %vm1268, %v1267, %v2455
        %v2461 = vsel %vm825, %v2449, 0
        %v2464 = vsel %vm825, %v2450, 0
        %v2467 = vsel %vm825, %v2451, 0
        %v2469 = vsel %vm365, %v2457, 0
        %v2471 = vsel %vm365, %v2455, 0
        %2473 = vmatprep.subr.mxu0 %v2453
        %2474 = vmatpush1.msra.mxu0 %v2456
        %2475 = vmatprep.subr.mxu0 %v2471
        %2476 = vmatpush1.msra.mxu0 %v2469
        %2477 = vmatprep.subr.mxu0 0.0
        %2478 = vmatpush1.msra.mxu0 0.0
        %2479 = vmatprep.subr.mxu0 0.0
        %2480 = vmatpush1.msra.mxu0 0.0
        %2481 = vmatprep.subr.mxu0 0.0
        %2482 = vmatpush1.msra.mxu0 0.0
        %2483 = vmatprep.subr.mxu0 0.0
        %2484 = vmatpush1.msra.mxu0 0.0
        %2485 = vmatprep.subr.mxu0 0.0
        %2486 = vmatpush1.msra.mxu0 0.0
        %2487 = vmatprep.subr.mxu0 0.0
        %2488 = vmatpush1.msra.mxu0 0.0
        %2489 = vmatprep.subr.mxu0 0.0
        %2490 = vmatpush1.msra.mxu0 0.0
        %2491 = vmatprep.subr.mxu0 0.0
        %2492 = vmatpush1.msra.mxu0 0.0
        %2493 = vmatprep.subr.mxu0 0.0
        %2494 = vmatpush1.msra.mxu0 0.0
        %2495 = vmatprep.subr.mxu0 0.0
        %2496 = vmatpush1.msra.mxu0 0.0
        %2497 = vmatprep.subr.mxu0 0.0
        %2498 = vmatpush1.msra.mxu0 0.0
        %2499 = vmatprep.subr.mxu0 0.0
        %2500 = vmatpush1.msra.mxu0 0.0
        %2501 = vmatprep.subr.mxu0 0.0
        %2502 = vmatpush1.msra.mxu0 0.0
        %2503 = vmatprep.subr.mxu0 0.0
        %2504 = vmatpush1.msra.mxu0 0.0
        %2505 = vmatprep.subr.mxu0 0.0
        %2506 = vmatpush1.msra.mxu0 0.0
        %2507 = vmatprep.subr.mxu0 0.0
        %2508 = vmatpush1.msra.mxu0 0.0
        %2509 = vmatprep.subr.mxu0 0.0
        %2510 = vmatpush1.msra.mxu0 0.0
        %2511 = vmatprep.subr.mxu0 0.0
        %2512 = vmatpush1.msra.mxu0 0.0
        %2513 = vmatprep.subr.mxu0 0.0
        %2514 = vmatpush1.msra.mxu0 0.0
        %2515 = vmatprep.subr.mxu0 0.0
        %2516 = vmatpush1.msra.mxu0 0.0
        %2517 = vmatprep.subr.mxu0 0.0
        %2518 = vmatpush1.msra.mxu0 0.0
        %2519 = vmatprep.subr.mxu0 0.0
        %2520 = vmatpush1.msra.mxu0 0.0
        %2521 = vmatprep.subr.mxu0 0.0
        %2522 = vmatpush1.msra.mxu0 0.0
        %2523 = vmatprep.subr.mxu0 0.0
        %2524 = vmatpush1.msra.mxu0 0.0
        %2525 = vmatprep.subr.mxu0 0.0
        %2526 = vmatpush1.msra.mxu0 0.0
        %2527 = vmatprep.subr.mxu0 0.0
        %2528 = vmatpush1.msra.mxu0 0.0
        %2529 = vmatprep.subr.mxu0 0.0
        %2530 = vmatpush1.msra.mxu0 0.0
        %2531 = vmatprep.subr.mxu0 0.0
        %2532 = vmatpush1.msra.mxu0 0.0
        %2533 = vmatprep.subr.mxu0 0.0
        %2534 = vmatpush1.msra.mxu0 0.0
        %2535 = vmatprep.subr.mxu0 0.0
        %2536 = vmatpush1.msra.mxu0 0.0
        %2537 = vmatprep.mubr.f32.mxu0 0.0
        %2538 = vmatmul.mubr.f32.gmra.mrb[0].mxu0 %v2461
        %v2539 = vpop.f32.mrb[0].mxu0
        %v2540 = vadd.f32 0.0, %v2539
        %v2541 = vpop.f32.mrb[0].mxu0
        %v2542 = vadd.f32 0.0, %v2541
        %2543 = vmatprep.mubr.f32.mxu0 0.0
        %2544 = vmatmul.mubr.f32.gmra.mrb[0].mxu0 %v2464
        %v2545 = vpop.f32.mrb[0].mxu0
        %v2546 = vadd.f32 0.0, %v2545
        %v2547 = vpop.f32.mrb[0].mxu0
        %v2548 = vadd.f32 0.0, %v2547
        %2549 = vmatprep.mubr.f32.mxu0 0.0
        %2550 = vmatmul.mubr.f32.gmra.mrb[0].mxu0 %v2467
        %v2551 = vpop.f32.mrb[0].mxu0
        %v2552 = vadd.f32 0.0, %v2551
        %v2553 = vpop.f32.mrb[0].mxu0
        %v2554 = vadd.f32 0.0, %v2553
        %2555 = vdwg.mxu0
        %v2556 = vadd.f32 %v2442, %v2540
        %v2557 = vadd.f32 %v2443, %v2542
        %v2558 = vadd.f32 %v2444, %v2546
        %v2559 = vadd.f32 %v2445, %v2548
        %v2560 = vadd.f32 %v2446, %v2552
        %v2561 = vadd.f32 %v2447, %v2554
        %s2562 = scalar_lea.vmem %s3, 360
        %v2563 = vld [vmem:[%s2562] sm:$0xff]
        %v2564 = vld [vmem:[%s2562 + $0x8] sm:$0xff]
        %v2565 = vld [vmem:[%s2562 + $0x10] sm:$0xf]
        %2568 = vrot.lane.b32.xlu0 %v796, 64
        %v2569 = vpop.permute.xlu0 %2568
        %2570 = vrot.lane.b32.xlu0 %v800, 64
        %v2571 = vpop.permute.xlu0 %2570
        %v2572 = vsel %vm1393, %v1386, %v2569
        %v2573 = vsel %vm1393, %v1392, %v2571
        %v2576 = vsel %vm825, %v2563, 0
        %v2579 = vsel %vm825, %v2564, 0
        %v2582 = vsel %vm825, %v2565, 0
        %v2584 = vsel %vm365, %v2573, 0
        %2586 = vmatprep.subr.mxu0 %v2572
        %2587 = vmatpush1.msra.mxu0 %v1395
        %2588 = vmatprep.subr.mxu0 %v2584
        %2589 = vmatpush1.msra.mxu0 %v1411
        %2590 = vmatprep.subr.mxu0 0.0
        %2591 = vmatpush1.msra.mxu0 0.0
        %2592 = vmatprep.subr.mxu0 0.0
        %2593 = vmatpush1.msra.mxu0 0.0
        %2594 = vmatprep.subr.mxu0 0.0
        %2595 = vmatpush1.msra.mxu0 0.0
        %2596 = vmatprep.subr.mxu0 0.0
        %2597 = vmatpush1.msra.mxu0 0.0
        %2598 = vmatprep.subr.mxu0 0.0
        %2599 = vmatpush1.msra.mxu0 0.0
        %2600 = vmatprep.subr.mxu0 0.0
        %2601 = vmatpush1.msra.mxu0 0.0
        %2602 = vmatprep.subr.mxu0 0.0
        %2603 = vmatpush1.msra.mxu0 0.0
        %2604 = vmatprep.subr.mxu0 0.0
        %2605 = vmatpush1.msra.mxu0 0.0
        %2606 = vmatprep.subr.mxu0 0.0
        %2607 = vmatpush1.msra.mxu0 0.0
        %2608 = vmatprep.subr.mxu0 0.0
        %2609 = vmatpush1.msra.mxu0 0.0
        %2610 = vmatprep.subr.mxu0 0.0
        %2611 = vmatpush1.msra.mxu0 0.0
        %2612 = vmatprep.subr.mxu0 0.0
        %2613 = vmatpush1.msra.mxu0 0.0
        %2614 = vmatprep.subr.mxu0 0.0
        %2615 = vmatpush1.msra.mxu0 0.0
        %2616 = vmatprep.subr.mxu0 0.0
        %2617 = vmatpush1.msra.mxu0 0.0
        %2618 = vmatprep.subr.mxu0 0.0
        %2619 = vmatpush1.msra.mxu0 0.0
        %2620 = vmatprep.subr.mxu0 0.0
        %2621 = vmatpush1.msra.mxu0 0.0
        %2622 = vmatprep.subr.mxu0 0.0
        %2623 = vmatpush1.msra.mxu0 0.0
        %2624 = vmatprep.subr.mxu0 0.0
        %2625 = vmatpush1.msra.mxu0 0.0
        %2626 = vmatprep.subr.mxu0 0.0
        %2627 = vmatpush1.msra.mxu0 0.0
        %2628 = vmatprep.subr.mxu0 0.0
        %2629 = vmatpush1.msra.mxu0 0.0
        %2630 = vmatprep.subr.mxu0 0.0
        %2631 = vmatpush1.msra.mxu0 0.0
        %2632 = vmatprep.subr.mxu0 0.0
        %2633 = vmatpush1.msra.mxu0 0.0
        %2634 = vmatprep.subr.mxu0 0.0
        %2635 = vmatpush1.msra.mxu0 0.0
        %2636 = vmatprep.subr.mxu0 0.0
        %2637 = vmatpush1.msra.mxu0 0.0
        %2638 = vmatprep.subr.mxu0 0.0
        %2639 = vmatpush1.msra.mxu0 0.0
        %2640 = vmatprep.subr.mxu0 0.0
        %2641 = vmatpush1.msra.mxu0 0.0
        %2642 = vmatprep.subr.mxu0 0.0
        %2643 = vmatpush1.msra.mxu0 0.0
        %2644 = vmatprep.subr.mxu0 0.0
        %2645 = vmatpush1.msra.mxu0 0.0
        %2646 = vmatprep.subr.mxu0 0.0
        %2647 = vmatpush1.msra.mxu0 0.0
        %2648 = vmatprep.subr.mxu0 0.0
        %2649 = vmatpush1.msra.mxu0 0.0
        %2650 = vmatprep.mubr.f32.mxu0 0.0
        %2651 = vmatmul.mubr.f32.gmra.mrb[0].mxu0 %v2576
        %v2652 = vpop.f32.mrb[0].mxu0
        %v2653 = vadd.f32 0.0, %v2652
        %v2654 = vpop.f32.mrb[0].mxu0
        %v2655 = vadd.f32 0.0, %v2654
        %2656 = vmatprep.mubr.f32.mxu0 0.0
        %2657 = vmatmul.mubr.f32.gmra.mrb[0].mxu0 %v2579
        %v2658 = vpop.f32.mrb[0].mxu0
        %v2659 = vadd.f32 0.0, %v2658
        %v2660 = vpop.f32.mrb[0].mxu0
        %v2661 = vadd.f32 0.0, %v2660
        %2662 = vmatprep.mubr.f32.mxu0 0.0
        %2663 = vmatmul.mubr.f32.gmra.mrb[0].mxu0 %v2582
        %v2664 = vpop.f32.mrb[0].mxu0
        %v2665 = vadd.f32 0.0, %v2664
        %v2666 = vpop.f32.mrb[0].mxu0
        %v2667 = vadd.f32 0.0, %v2666
        %2668 = vdwg.mxu0
        %v2669 = vadd.f32 %v2556, %v2653
        %v2670 = vadd.f32 %v2557, %v2655
        %v2671 = vadd.f32 %v2558, %v2659
        %v2672 = vadd.f32 %v2559, %v2661
        %v2673 = vadd.f32 %v2560, %v2665
        %v2674 = vadd.f32 %v2561, %v2667
        %s2675 = scalar_lea.vmem %s3, 384
        %v2676 = vld [vmem:[%s2675] sm:$0xff]
        %v2677 = vld [vmem:[%s2675 + $0x8] sm:$0xff]
        %v2678 = vld [vmem:[%s2675 + $0x10] sm:$0xf]
        %2679 = vrot.lane.b32.xlu0 %v796, 56
        %v2680 = vpop.permute.xlu0 %2679
        %2681 = vrot.lane.b32.xlu0 %v800, 56
        %v2682 = vpop.permute.xlu0 %2681
        %v2683 = vsel %vm1518, %v1511, %v2680
        %v2684 = vsel %vm1518, %v1517, %v2682
        %v2687 = vsel %vm825, %v2676, 0
        %v2690 = vsel %vm825, %v2677, 0
        %v2693 = vsel %vm825, %v2678, 0
        %v2695 = vsel %vm365, %v2684, 0
        %2697 = vmatprep.subr.mxu0 %v2683
        %2698 = vmatpush1.msra.mxu0 %v1520
        %2699 = vmatprep.subr.mxu0 %v2695
        %2700 = vmatpush1.msra.mxu0 %v1536
        %2701 = vmatprep.subr.mxu0 0.0
        %2702 = vmatpush1.msra.mxu0 0.0
        %2703 = vmatprep.subr.mxu0 0.0
        %2704 = vmatpush1.msra.mxu0 0.0
        %2705 = vmatprep.subr.mxu0 0.0
        %2706 = vmatpush1.msra.mxu0 0.0
        %2707 = vmatprep.subr.mxu0 0.0
        %2708 = vmatpush1.msra.mxu0 0.0
        %2709 = vmatprep.subr.mxu0 0.0
        %2710 = vmatpush1.msra.mxu0 0.0
        %2711 = vmatprep.subr.mxu0 0.0
        %2712 = vmatpush1.msra.mxu0 0.0
        %2713 = vmatprep.subr.mxu0 0.0
        %2714 = vmatpush1.msra.mxu0 0.0
        %2715 = vmatprep.subr.mxu0 0.0
        %2716 = vmatpush1.msra.mxu0 0.0
        %2717 = vmatprep.subr.mxu0 0.0
        %2718 = vmatpush1.msra.mxu0 0.0
        %2719 = vmatprep.subr.mxu0 0.0
        %2720 = vmatpush1.msra.mxu0 0.0
        %2721 = vmatprep.subr.mxu0 0.0
        %2722 = vmatpush1.msra.mxu0 0.0
        %2723 = vmatprep.subr.mxu0 0.0
        %2724 = vmatpush1.msra.mxu0 0.0
        %2725 = vmatprep.subr.mxu0 0.0
        %2726 = vmatpush1.msra.mxu0 0.0
        %2727 = vmatprep.subr.mxu0 0.0
        %2728 = vmatpush1.msra.mxu0 0.0
        %2729 = vmatprep.subr.mxu0 0.0
        %2730 = vmatpush1.msra.mxu0 0.0
        %2731 = vmatprep.subr.mxu0 0.0
        %2732 = vmatpush1.msra.mxu0 0.0
        %2733 = vmatprep.subr.mxu0 0.0
        %2734 = vmatpush1.msra.mxu0 0.0
        %2735 = vmatprep.subr.mxu0 0.0
        %2736 = vmatpush1.msra.mxu0 0.0
        %2737 = vmatprep.subr.mxu0 0.0
        %2738 = vmatpush1.msra.mxu0 0.0
        %2739 = vmatprep.subr.mxu0 0.0
        %2740 = vmatpush1.msra.mxu0 0.0
        %2741 = vmatprep.subr.mxu0 0.0
        %2742 = vmatpush1.msra.mxu0 0.0
        %2743 = vmatprep.subr.mxu0 0.0
        %2744 = vmatpush1.msra.mxu0 0.0
        %2745 = vmatprep.subr.mxu0 0.0
        %2746 = vmatpush1.msra.mxu0 0.0
        %2747 = vmatprep.subr.mxu0 0.0
        %2748 = vmatpush1.msra.mxu0 0.0
        %2749 = vmatprep.subr.mxu0 0.0
        %2750 = vmatpush1.msra.mxu0 0.0
        %2751 = vmatprep.subr.mxu0 0.0
        %2752 = vmatpush1.msra.mxu0 0.0
        %2753 = vmatprep.subr.mxu0 0.0
        %2754 = vmatpush1.msra.mxu0 0.0
        %2755 = vmatprep.subr.mxu0 0.0
        %2756 = vmatpush1.msra.mxu0 0.0
        %2757 = vmatprep.subr.mxu0 0.0
        %2758 = vmatpush1.msra.mxu0 0.0
        %2759 = vmatprep.subr.mxu0 0.0
        %2760 = vmatpush1.msra.mxu0 0.0
        %2761 = vmatprep.mubr.f32.mxu0 0.0
        %2762 = vmatmul.mubr.f32.gmra.mrb[0].mxu0 %v2687
        %v2763 = vpop.f32.mrb[0].mxu0
        %v2764 = vadd.f32 0.0, %v2763
        %v2765 = vpop.f32.mrb[0].mxu0
        %v2766 = vadd.f32 0.0, %v2765
        %2767 = vmatprep.mubr.f32.mxu0 0.0
        %2768 = vmatmul.mubr.f32.gmra.mrb[0].mxu0 %v2690
        %v2769 = vpop.f32.mrb[0].mxu0
        %v2770 = vadd.f32 0.0, %v2769
        %v2771 = vpop.f32.mrb[0].mxu0
        %v2772 = vadd.f32 0.0, %v2771
        %2773 = vmatprep.mubr.f32.mxu0 0.0
        %2774 = vmatmul.mubr.f32.gmra.mrb[0].mxu0 %v2693
        %v2775 = vpop.f32.mrb[0].mxu0
        %v2776 = vadd.f32 0.0, %v2775
        %v2777 = vpop.f32.mrb[0].mxu0
        %v2778 = vadd.f32 0.0, %v2777
        %2779 = vdwg.mxu0
        %v2780 = vadd.f32 %v2669, %v2764
        %v2781 = vadd.f32 %v2670, %v2766
        %v2782 = vadd.f32 %v2671, %v2770
        %v2783 = vadd.f32 %v2672, %v2772
        %v2784 = vadd.f32 %v2673, %v2776
        %v2785 = vadd.f32 %v2674, %v2778
        %s2786 = scalar_lea.vmem %s3, 408
        %v2787 = vld [vmem:[%s2786] sm:$0xff]
        %v2788 = vld [vmem:[%s2786 + $0x8] sm:$0xff]
        %v2789 = vld [vmem:[%s2786 + $0x10] sm:$0xf]
        %2790 = vrot.lane.b32.xlu0 %v796, 48
        %v2791 = vpop.permute.xlu0 %2790
        %2792 = vrot.lane.b32.xlu0 %v800, 48
        %v2793 = vpop.permute.xlu0 %2792
        %v2794 = vsel %vm1643, %v1636, %v2791
        %v2795 = vsel %vm1643, %v1642, %v2793
        %v2798 = vsel %vm825, %v2787, 0
        %v2801 = vsel %vm825, %v2788, 0
        %v2804 = vsel %vm825, %v2789, 0
        %v2806 = vsel %vm365, %v2795, 0
        %2808 = vmatprep.subr.mxu0 %v2794
        %2809 = vmatpush1.msra.mxu0 %v1645
        %2810 = vmatprep.subr.mxu0 %v2806
        %2811 = vmatpush1.msra.mxu0 %v1661
        %2812 = vmatprep.subr.mxu0 0.0
        %2813 = vmatpush1.msra.mxu0 0.0
        %2814 = vmatprep.subr.mxu0 0.0
        %2815 = vmatpush1.msra.mxu0 0.0
        %2816 = vmatprep.subr.mxu0 0.0
        %2817 = vmatpush1.msra.mxu0 0.0
        %2818 = vmatprep.subr.mxu0 0.0
        %2819 = vmatpush1.msra.mxu0 0.0
        %2820 = vmatprep.subr.mxu0 0.0
        %2821 = vmatpush1.msra.mxu0 0.0
        %2822 = vmatprep.subr.mxu0 0.0
        %2823 = vmatpush1.msra.mxu0 0.0
        %2824 = vmatprep.subr.mxu0 0.0
        %2825 = vmatpush1.msra.mxu0 0.0
        %2826 = vmatprep.subr.mxu0 0.0
        %2827 = vmatpush1.msra.mxu0 0.0
        %2828 = vmatprep.subr.mxu0 0.0
        %2829 = vmatpush1.msra.mxu0 0.0
        %2830 = vmatprep.subr.mxu0 0.0
        %2831 = vmatpush1.msra.mxu0 0.0
        %2832 = vmatprep.subr.mxu0 0.0
        %2833 = vmatpush1.msra.mxu0 0.0
        %2834 = vmatprep.subr.mxu0 0.0
        %2835 = vmatpush1.msra.mxu0 0.0
        %2836 = vmatprep.subr.mxu0 0.0
        %2837 = vmatpush1.msra.mxu0 0.0
        %2838 = vmatprep.subr.mxu0 0.0
        %2839 = vmatpush1.msra.mxu0 0.0
        %2840 = vmatprep.subr.mxu0 0.0
        %2841 = vmatpush1.msra.mxu0 0.0
        %2842 = vmatprep.subr.mxu0 0.0
        %2843 = vmatpush1.msra.mxu0 0.0
        %2844 = vmatprep.subr.mxu0 0.0
        %2845 = vmatpush1.msra.mxu0 0.0
        %2846 = vmatprep.subr.mxu0 0.0
        %2847 = vmatpush1.msra.mxu0 0.0
        %2848 = vmatprep.subr.mxu0 0.0
        %2849 = vmatpush1.msra.mxu0 0.0
        %2850 = vmatprep.subr.mxu0 0.0
        %2851 = vmatpush1.msra.mxu0 0.0
        %2852 = vmatprep.subr.mxu0 0.0
        %2853 = vmatpush1.msra.mxu0 0.0
        %2854 = vmatprep.subr.mxu0 0.0
        %2855 = vmatpush1.msra.mxu0 0.0
        %2856 = vmatprep.subr.mxu0 0.0
        %2857 = vmatpush1.msra.mxu0 0.0
        %2858 = vmatprep.subr.mxu0 0.0
        %2859 = vmatpush1.msra.mxu0 0.0
        %2860 = vmatprep.subr.mxu0 0.0
        %2861 = vmatpush1.msra.mxu0 0.0
        %2862 = vmatprep.subr.mxu0 0.0
        %2863 = vmatpush1.msra.mxu0 0.0
        %2864 = vmatprep.subr.mxu0 0.0
        %2865 = vmatpush1.msra.mxu0 0.0
        %2866 = vmatprep.subr.mxu0 0.0
        %2867 = vmatpush1.msra.mxu0 0.0
        %2868 = vmatprep.subr.mxu0 0.0
        %2869 = vmatpush1.msra.mxu0 0.0
        %2870 = vmatprep.subr.mxu0 0.0
        %2871 = vmatpush1.msra.mxu0 0.0
        %2872 = vmatprep.mubr.f32.mxu0 0.0
        %2873 = vmatmul.mubr.f32.gmra.mrb[0].mxu0 %v2798
        %v2874 = vpop.f32.mrb[0].mxu0
        %v2875 = vadd.f32 0.0, %v2874
        %v2876 = vpop.f32.mrb[0].mxu0
        %v2877 = vadd.f32 0.0, %v2876
        %2878 = vmatprep.mubr.f32.mxu0 0.0
        %2879 = vmatmul.mubr.f32.gmra.mrb[0].mxu0 %v2801
        %v2880 = vpop.f32.mrb[0].mxu0
        %v2881 = vadd.f32 0.0, %v2880
        %v2882 = vpop.f32.mrb[0].mxu0
        %v2883 = vadd.f32 0.0, %v2882
        %2884 = vmatprep.mubr.f32.mxu0 0.0
        %2885 = vmatmul.mubr.f32.gmra.mrb[0].mxu0 %v2804
        %v2886 = vpop.f32.mrb[0].mxu0
        %v2887 = vadd.f32 0.0, %v2886
        %v2888 = vpop.f32.mrb[0].mxu0
        %v2889 = vadd.f32 0.0, %v2888
        %2890 = vdwg.mxu0
        %v2891 = vadd.f32 %v2780, %v2875
        %v2892 = vadd.f32 %v2781, %v2877
        %v2893 = vadd.f32 %v2782, %v2881
        %v2894 = vadd.f32 %v2783, %v2883
        %v2895 = vadd.f32 %v2784, %v2887
        %v2896 = vadd.f32 %v2785, %v2889
        %s2897 = scalar_lea.vmem %s3, 432
        %v2898 = vld [vmem:[%s2897] sm:$0xff]
        %v2899 = vld [vmem:[%s2897 + $0x8] sm:$0xff]
        %v2900 = vld [vmem:[%s2897 + $0x10] sm:$0xf]
        %2901 = vrot.lane.b32.xlu0 %v796, 40
        %v2902 = vpop.permute.xlu0 %2901
        %2903 = vrot.lane.b32.xlu0 %v800, 40
        %v2904 = vpop.permute.xlu0 %2903
        %v2905 = vsel %vm1768, %v1761, %v2902
        %v2906 = vsel %vm1768, %v1767, %v2904
        %v2909 = vsel %vm825, %v2898, 0
        %v2912 = vsel %vm825, %v2899, 0
        %v2915 = vsel %vm825, %v2900, 0
        %v2917 = vsel %vm365, %v2906, 0
        %2919 = vmatprep.subr.mxu0 %v2905
        %2920 = vmatpush1.msra.mxu0 %v1770
        %2921 = vmatprep.subr.mxu0 %v2917
        %2922 = vmatpush1.msra.mxu0 %v1786
        %2923 = vmatprep.subr.mxu0 0.0
        %2924 = vmatpush1.msra.mxu0 0.0
        %2925 = vmatprep.subr.mxu0 0.0
        %2926 = vmatpush1.msra.mxu0 0.0
        %2927 = vmatprep.subr.mxu0 0.0
        %2928 = vmatpush1.msra.mxu0 0.0
        %2929 = vmatprep.subr.mxu0 0.0
        %2930 = vmatpush1.msra.mxu0 0.0
        %2931 = vmatprep.subr.mxu0 0.0
        %2932 = vmatpush1.msra.mxu0 0.0
        %2933 = vmatprep.subr.mxu0 0.0
        %2934 = vmatpush1.msra.mxu0 0.0
        %2935 = vmatprep.subr.mxu0 0.0
        %2936 = vmatpush1.msra.mxu0 0.0
        %2937 = vmatprep.subr.mxu0 0.0
        %2938 = vmatpush1.msra.mxu0 0.0
        %2939 = vmatprep.subr.mxu0 0.0
        %2940 = vmatpush1.msra.mxu0 0.0
        %2941 = vmatprep.subr.mxu0 0.0
        %2942 = vmatpush1.msra.mxu0 0.0
        %2943 = vmatprep.subr.mxu0 0.0
        %2944 = vmatpush1.msra.mxu0 0.0
        %2945 = vmatprep.subr.mxu0 0.0
        %2946 = vmatpush1.msra.mxu0 0.0
        %2947 = vmatprep.subr.mxu0 0.0
        %2948 = vmatpush1.msra.mxu0 0.0
        %2949 = vmatprep.subr.mxu0 0.0
        %2950 = vmatpush1.msra.mxu0 0.0
        %2951 = vmatprep.subr.mxu0 0.0
        %2952 = vmatpush1.msra.mxu0 0.0
        %2953 = vmatprep.subr.mxu0 0.0
        %2954 = vmatpush1.msra.mxu0 0.0
        %2955 = vmatprep.subr.mxu0 0.0
        %2956 = vmatpush1.msra.mxu0 0.0
        %2957 = vmatprep.subr.mxu0 0.0
        %2958 = vmatpush1.msra.mxu0 0.0
        %2959 = vmatprep.subr.mxu0 0.0
        %2960 = vmatpush1.msra.mxu0 0.0
        %2961 = vmatprep.subr.mxu0 0.0
        %2962 = vmatpush1.msra.mxu0 0.0
        %2963 = vmatprep.subr.mxu0 0.0
        %2964 = vmatpush1.msra.mxu0 0.0
        %2965 = vmatprep.subr.mxu0 0.0
        %2966 = vmatpush1.msra.mxu0 0.0
        %2967 = vmatprep.subr.mxu0 0.0
        %2968 = vmatpush1.msra.mxu0 0.0
        %2969 = vmatprep.subr.mxu0 0.0
        %2970 = vmatpush1.msra.mxu0 0.0
        %2971 = vmatprep.subr.mxu0 0.0
        %2972 = vmatpush1.msra.mxu0 0.0
        %2973 = vmatprep.subr.mxu0 0.0
        %2974 = vmatpush1.msra.mxu0 0.0
        %2975 = vmatprep.subr.mxu0 0.0
        %2976 = vmatpush1.msra.mxu0 0.0
        %2977 = vmatprep.subr.mxu0 0.0
        %2978 = vmatpush1.msra.mxu0 0.0
        %2979 = vmatprep.subr.mxu0 0.0
        %2980 = vmatpush1.msra.mxu0 0.0
        %2981 = vmatprep.subr.mxu0 0.0
        %2982 = vmatpush1.msra.mxu0 0.0
        %2983 = vmatprep.mubr.f32.mxu0 0.0
        %2984 = vmatmul.mubr.f32.gmra.mrb[0].mxu0 %v2909
        %v2985 = vpop.f32.mrb[0].mxu0
        %v2986 = vadd.f32 0.0, %v2985
        %v2987 = vpop.f32.mrb[0].mxu0
        %v2988 = vadd.f32 0.0, %v2987
        %2989 = vmatprep.mubr.f32.mxu0 0.0
        %2990 = vmatmul.mubr.f32.gmra.mrb[0].mxu0 %v2912
        %v2991 = vpop.f32.mrb[0].mxu0
        %v2992 = vadd.f32 0.0, %v2991
        %v2993 = vpop.f32.mrb[0].mxu0
        %v2994 = vadd.f32 0.0, %v2993
        %2995 = vmatprep.mubr.f32.mxu0 0.0
        %2996 = vmatmul.mubr.f32.gmra.mrb[0].mxu0 %v2915
        %v2997 = vpop.f32.mrb[0].mxu0
        %v2998 = vadd.f32 0.0, %v2997
        %v2999 = vpop.f32.mrb[0].mxu0
        %v3000 = vadd.f32 0.0, %v2999
        %3001 = vdwg.mxu0
        %v3002 = vadd.f32 %v2891, %v2986
        %v3003 = vadd.f32 %v2892, %v2988
        %v3004 = vadd.f32 %v2893, %v2992
        %v3005 = vadd.f32 %v2894, %v2994
        %v3006 = vadd.f32 %v2895, %v2998
        %v3007 = vadd.f32 %v2896, %v3000
        %s3008 = scalar_lea.vmem %s3, 456
        %v3009 = vld [vmem:[%s3008] sm:$0xff]
        %v3010 = vld [vmem:[%s3008 + $0x8] sm:$0xff]
        %v3011 = vld [vmem:[%s3008 + $0x10] sm:$0xf]
        %3012 = vrot.lane.b32.xlu0 %v796, 32
        %v3013 = vpop.permute.xlu0 %3012
        %3014 = vrot.lane.b32.xlu0 %v800, 32
        %v3015 = vpop.permute.xlu0 %3014
        %v3016 = vsel %vm1893, %v1886, %v3013
        %v3017 = vsel %vm1893, %v1892, %v3015
        %v3020 = vsel %vm825, %v3009, 0
        %v3023 = vsel %vm825, %v3010, 0
        %v3026 = vsel %vm825, %v3011, 0
        %v3028 = vsel %vm365, %v3017, 0
        %3030 = vmatprep.subr.mxu0 %v3016
        %3031 = vmatpush1.msra.mxu0 %v1895
        %3032 = vmatprep.subr.mxu0 %v3028
        %3033 = vmatpush1.msra.mxu0 %v1911
        %3034 = vmatprep.subr.mxu0 0.0
        %3035 = vmatpush1.msra.mxu0 0.0
        %3036 = vmatprep.subr.mxu0 0.0
        %3037 = vmatpush1.msra.mxu0 0.0
        %3038 = vmatprep.subr.mxu0 0.0
        %3039 = vmatpush1.msra.mxu0 0.0
        %3040 = vmatprep.subr.mxu0 0.0
        %3041 = vmatpush1.msra.mxu0 0.0
        %3042 = vmatprep.subr.mxu0 0.0
        %3043 = vmatpush1.msra.mxu0 0.0
        %3044 = vmatprep.subr.mxu0 0.0
        %3045 = vmatpush1.msra.mxu0 0.0
        %3046 = vmatprep.subr.mxu0 0.0
        %3047 = vmatpush1.msra.mxu0 0.0
        %3048 = vmatprep.subr.mxu0 0.0
        %3049 = vmatpush1.msra.mxu0 0.0
        %3050 = vmatprep.subr.mxu0 0.0
        %3051 = vmatpush1.msra.mxu0 0.0
        %3052 = vmatprep.subr.mxu0 0.0
        %3053 = vmatpush1.msra.mxu0 0.0
        %3054 = vmatprep.subr.mxu0 0.0
        %3055 = vmatpush1.msra.mxu0 0.0
        %3056 = vmatprep.subr.mxu0 0.0
        %3057 = vmatpush1.msra.mxu0 0.0
        %3058 = vmatprep.subr.mxu0 0.0
        %3059 = vmatpush1.msra.mxu0 0.0
        %3060 = vmatprep.subr.mxu0 0.0
        %3061 = vmatpush1.msra.mxu0 0.0
        %3062 = vmatprep.subr.mxu0 0.0
        %3063 = vmatpush1.msra.mxu0 0.0
        %3064 = vmatprep.subr.mxu0 0.0
        %3065 = vmatpush1.msra.mxu0 0.0
        %3066 = vmatprep.subr.mxu0 0.0
        %3067 = vmatpush1.msra.mxu0 0.0
        %3068 = vmatprep.subr.mxu0 0.0
        %3069 = vmatpush1.msra.mxu0 0.0
        %3070 = vmatprep.subr.mxu0 0.0
        %3071 = vmatpush1.msra.mxu0 0.0
        %3072 = vmatprep.subr.mxu0 0.0
        %3073 = vmatpush1.msra.mxu0 0.0
        %3074 = vmatprep.subr.mxu0 0.0
        %3075 = vmatpush1.msra.mxu0 0.0
        %3076 = vmatprep.subr.mxu0 0.0
        %3077 = vmatpush1.msra.mxu0 0.0
        %3078 = vmatprep.subr.mxu0 0.0
        %3079 = vmatpush1.msra.mxu0 0.0
        %3080 = vmatprep.subr.mxu0 0.0
        %3081 = vmatpush1.msra.mxu0 0.0
        %3082 = vmatprep.subr.mxu0 0.0
        %3083 = vmatpush1.msra.mxu0 0.0
        %3084 = vmatprep.subr.mxu0 0.0
        %3085 = vmatpush1.msra.mxu0 0.0
        %3086 = vmatprep.subr.mxu0 0.0
        %3087 = vmatpush1.msra.mxu0 0.0
        %3088 = vmatprep.subr.mxu0 0.0
        %3089 = vmatpush1.msra.mxu0 0.0
        %3090 = vmatprep.subr.mxu0 0.0
        %3091 = vmatpush1.msra.mxu0 0.0
        %3092 = vmatprep.subr.mxu0 0.0
        %3093 = vmatpush1.msra.mxu0 0.0
        %3094 = vmatprep.mubr.f32.mxu0 0.0
        %3095 = vmatmul.mubr.f32.gmra.mrb[0].mxu0 %v3020
        %v3096 = vpop.f32.mrb[0].mxu0
        %v3097 = vadd.f32 0.0, %v3096
        %v3098 = vpop.f32.mrb[0].mxu0
        %v3099 = vadd.f32 0.0, %v3098
        %3100 = vmatprep.mubr.f32.mxu0 0.0
        %3101 = vmatmul.mubr.f32.gmra.mrb[0].mxu0 %v3023
        %v3102 = vpop.f32.mrb[0].mxu0
        %v3103 = vadd.f32 0.0, %v3102
        %v3104 = vpop.f32.mrb[0].mxu0
        %v3105 = vadd.f32 0.0, %v3104
        %3106 = vmatprep.mubr.f32.mxu0 0.0
        %3107 = vmatmul.mubr.f32.gmra.mrb[0].mxu0 %v3026
        %v3108 = vpop.f32.mrb[0].mxu0
        %v3109 = vadd.f32 0.0, %v3108
        %v3110 = vpop.f32.mrb[0].mxu0
        %v3111 = vadd.f32 0.0, %v3110
        %3112 = vdwg.mxu0
        %v3113 = vadd.f32 %v3002, %v3097
        %v3114 = vadd.f32 %v3003, %v3099
        %v3115 = vadd.f32 %v3004, %v3103
        %v3116 = vadd.f32 %v3005, %v3105
        %v3117 = vadd.f32 %v3006, %v3109
        %v3118 = vadd.f32 %v3007, %v3111
        %s3119 = scalar_lea.vmem %s3, 480
        %v3120 = vld [vmem:[%s3119] sm:$0xff]
        %v3121 = vld [vmem:[%s3119 + $0x8] sm:$0xff]
        %v3122 = vld [vmem:[%s3119 + $0x10] sm:$0xf]
        %v3124 = vsel %vm825, %v3120, 0
        %v3127 = vsel %vm825, %v3121, 0
        %v3130 = vsel %vm825, %v3122, 0
        %v3132 = vsel %vm365, %v800, 0
        %3134 = vmatprep.subr.mxu0 %v796
        %3135 = vmatpush1.msra.mxu0 %v795
        %3136 = vmatprep.subr.mxu0 %v3132
        %3137 = vmatpush1.msra.mxu0 %v2015
        %3138 = vmatprep.subr.mxu0 0.0
        %3139 = vmatpush1.msra.mxu0 0.0
        %3140 = vmatprep.subr.mxu0 0.0
        %3141 = vmatpush1.msra.mxu0 0.0
        %3142 = vmatprep.subr.mxu0 0.0
        %3143 = vmatpush1.msra.mxu0 0.0
        %3144 = vmatprep.subr.mxu0 0.0
        %3145 = vmatpush1.msra.mxu0 0.0
        %3146 = vmatprep.subr.mxu0 0.0
        %3147 = vmatpush1.msra.mxu0 0.0
        %3148 = vmatprep.subr.mxu0 0.0
        %3149 = vmatpush1.msra.mxu0 0.0
        %3150 = vmatprep.subr.mxu0 0.0
        %3151 = vmatpush1.msra.mxu0 0.0
        %3152 = vmatprep.subr.mxu0 0.0
        %3153 = vmatpush1.msra.mxu0 0.0
        %3154 = vmatprep.subr.mxu0 0.0
        %3155 = vmatpush1.msra.mxu0 0.0
        %3156 = vmatprep.subr.mxu0 0.0
        %3157 = vmatpush1.msra.mxu0 0.0
        %3158 = vmatprep.subr.mxu0 0.0
        %3159 = vmatpush1.msra.mxu0 0.0
        %3160 = vmatprep.subr.mxu0 0.0
        %3161 = vmatpush1.msra.mxu0 0.0
        %3162 = vmatprep.subr.mxu0 0.0
        %3163 = vmatpush1.msra.mxu0 0.0
        %3164 = vmatprep.subr.mxu0 0.0
        %3165 = vmatpush1.msra.mxu0 0.0
        %3166 = vmatprep.subr.mxu0 0.0
        %3167 = vmatpush1.msra.mxu0 0.0
        %3168 = vmatprep.subr.mxu0 0.0
        %3169 = vmatpush1.msra.mxu0 0.0
        %3170 = vmatprep.subr.mxu0 0.0
        %3171 = vmatpush1.msra.mxu0 0.0
        %3172 = vmatprep.subr.mxu0 0.0
        %3173 = vmatpush1.msra.mxu0 0.0
        %3174 = vmatprep.subr.mxu0 0.0
        %3175 = vmatpush1.msra.mxu0 0.0
        %3176 = vmatprep.subr.mxu0 0.0
        %3177 = vmatpush1.msra.mxu0 0.0
        %3178 = vmatprep.subr.mxu0 0.0
        %3179 = vmatpush1.msra.mxu0 0.0
        %3180 = vmatprep.subr.mxu0 0.0
        %3181 = vmatpush1.msra.mxu0 0.0
        %3182 = vmatprep.subr.mxu0 0.0
        %3183 = vmatpush1.msra.mxu0 0.0
        %3184 = vmatprep.subr.mxu0 0.0
        %3185 = vmatpush1.msra.mxu0 0.0
        %3186 = vmatprep.subr.mxu0 0.0
        %3187 = vmatpush1.msra.mxu0 0.0
        %3188 = vmatprep.subr.mxu0 0.0
        %3189 = vmatpush1.msra.mxu0 0.0
        %3190 = vmatprep.subr.mxu0 0.0
        %3191 = vmatpush1.msra.mxu0 0.0
        %3192 = vmatprep.subr.mxu0 0.0
        %3193 = vmatpush1.msra.mxu0 0.0
        %3194 = vmatprep.subr.mxu0 0.0
        %3195 = vmatpush1.msra.mxu0 0.0
        %3196 = vmatprep.subr.mxu0 0.0
        %3197 = vmatpush1.msra.mxu0 0.0
        %3198 = vmatprep.mubr.f32.mxu0 0.0
        %3199 = vmatmul.mubr.f32.gmra.mrb[0].mxu0 %v3124
        %v3200 = vpop.f32.mrb[0].mxu0
        %v3201 = vadd.f32 0.0, %v3200
        %v3202 = vpop.f32.mrb[0].mxu0
        %v3203 = vadd.f32 0.0, %v3202
        %3204 = vmatprep.mubr.f32.mxu0 0.0
        %3205 = vmatmul.mubr.f32.gmra.mrb[0].mxu0 %v3127
        %v3206 = vpop.f32.mrb[0].mxu0
        %v3207 = vadd.f32 0.0, %v3206
        %v3208 = vpop.f32.mrb[0].mxu0
        %v3209 = vadd.f32 0.0, %v3208
        %3210 = vmatprep.mubr.f32.mxu0 0.0
        %3211 = vmatmul.mubr.f32.gmra.mrb[0].mxu0 %v3130
        %v3212 = vpop.f32.mrb[0].mxu0
        %v3213 = vadd.f32 0.0, %v3212
        %v3214 = vpop.f32.mrb[0].mxu0
        %v3215 = vadd.f32 0.0, %v3214
        %3216 = vdwg.mxu0
        %v3217 = vadd.f32 %v3113, %v3201
        %v3218 = vadd.f32 %v3114, %v3203
        %v3219 = vadd.f32 %v3115, %v3207
        %v3220 = vadd.f32 %v3116, %v3209
        %v3221 = vadd.f32 %v3117, %v3213
        %v3222 = vadd.f32 %v3118, %v3215
        %s3223 = scalar_lea.vmem %s3, 504
        %v3224 = vld [vmem:[%s3223] sm:$0xff]
        %v3225 = vld [vmem:[%s3223 + $0x8] sm:$0xff]
        %v3226 = vld [vmem:[%s3223 + $0x10] sm:$0xf]
        %3227 = vrot.lane.b32.xlu0 %v796, 120
        %v3228 = vpop.permute.xlu0 %3227
        %3229 = vrot.lane.b32.xlu0 %v800, 120
        %v3230 = vpop.permute.xlu0 %3229
        %v3231 = vsel %vm820, %v2111, %v3228
        %v3232 = vsel %vm820, %v2113, %v3230
        %v3236 = vsel %vm825, %v3224, 0
        %v3239 = vsel %vm825, %v3225, 0
        %v3242 = vsel %vm825, %v3226, 0
        %v3244 = vsel %vm365, %v3232, 0
        %v3246 = vsel %vm365, %v3230, 0
        %3248 = vmatprep.subr.mxu0 %v3228
        %3249 = vmatpush1.msra.mxu0 %v3231
        %3250 = vmatprep.subr.mxu0 %v3246
        %3251 = vmatpush1.msra.mxu0 %v3244
        %3252 = vmatprep.subr.mxu0 0.0
        %3253 = vmatpush1.msra.mxu0 0.0
        %3254 = vmatprep.subr.mxu0 0.0
        %3255 = vmatpush1.msra.mxu0 0.0
        %3256 = vmatprep.subr.mxu0 0.0
        %3257 = vmatpush1.msra.mxu0 0.0
        %3258 = vmatprep.subr.mxu0 0.0
        %3259 = vmatpush1.msra.mxu0 0.0
        %3260 = vmatprep.subr.mxu0 0.0
        %3261 = vmatpush1.msra.mxu0 0.0
        %3262 = vmatprep.subr.mxu0 0.0
        %3263 = vmatpush1.msra.mxu0 0.0
        %3264 = vmatprep.subr.mxu0 0.0
        %3265 = vmatpush1.msra.mxu0 0.0
        %3266 = vmatprep.subr.mxu0 0.0
        %3267 = vmatpush1.msra.mxu0 0.0
        %3268 = vmatprep.subr.mxu0 0.0
        %3269 = vmatpush1.msra.mxu0 0.0
        %3270 = vmatprep.subr.mxu0 0.0
        %3271 = vmatpush1.msra.mxu0 0.0
        %3272 = vmatprep.subr.mxu0 0.0
        %3273 = vmatpush1.msra.mxu0 0.0
        %3274 = vmatprep.subr.mxu0 0.0
        %3275 = vmatpush1.msra.mxu0 0.0
        %3276 = vmatprep.subr.mxu0 0.0
        %3277 = vmatpush1.msra.mxu0 0.0
        %3278 = vmatprep.subr.mxu0 0.0
        %3279 = vmatpush1.msra.mxu0 0.0
        %3280 = vmatprep.subr.mxu0 0.0
        %3281 = vmatpush1.msra.mxu0 0.0
        %3282 = vmatprep.subr.mxu0 0.0
        %3283 = vmatpush1.msra.mxu0 0.0
        %3284 = vmatprep.subr.mxu0 0.0
        %3285 = vmatpush1.msra.mxu0 0.0
        %3286 = vmatprep.subr.mxu0 0.0
        %3287 = vmatpush1.msra.mxu0 0.0
        %3288 = vmatprep.subr.mxu0 0.0
        %3289 = vmatpush1.msra.mxu0 0.0
        %3290 = vmatprep.subr.mxu0 0.0
        %3291 = vmatpush1.msra.mxu0 0.0
        %3292 = vmatprep.subr.mxu0 0.0
        %3293 = vmatpush1.msra.mxu0 0.0
        %3294 = vmatprep.subr.mxu0 0.0
        %3295 = vmatpush1.msra.mxu0 0.0
        %3296 = vmatprep.subr.mxu0 0.0
        %3297 = vmatpush1.msra.mxu0 0.0
        %3298 = vmatprep.subr.mxu0 0.0
        %3299 = vmatpush1.msra.mxu0 0.0
        %3300 = vmatprep.subr.mxu0 0.0
        %3301 = vmatpush1.msra.mxu0 0.0
        %3302 = vmatprep.subr.mxu0 0.0
        %3303 = vmatpush1.msra.mxu0 0.0
        %3304 = vmatprep.subr.mxu0 0.0
        %3305 = vmatpush1.msra.mxu0 0.0
        %3306 = vmatprep.subr.mxu0 0.0
        %3307 = vmatpush1.msra.mxu0 0.0
        %3308 = vmatprep.subr.mxu0 0.0
        %3309 = vmatpush1.msra.mxu0 0.0
        %3310 = vmatprep.subr.mxu0 0.0
        %3311 = vmatpush1.msra.mxu0 0.0
        %3312 = vmatprep.mubr.f32.mxu0 0.0
        %3313 = vmatmul.mubr.f32.gmra.mrb[0].mxu0 %v3236
        %v3314 = vpop.f32.mrb[0].mxu0
        %v3315 = vadd.f32 0.0, %v3314
        %v3316 = vpop.f32.mrb[0].mxu0
        %v3317 = vadd.f32 0.0, %v3316
        %3318 = vmatprep.mubr.f32.mxu0 0.0
        %3319 = vmatmul.mubr.f32.gmra.mrb[0].mxu0 %v3239
        %v3320 = vpop.f32.mrb[0].mxu0
        %v3321 = vadd.f32 0.0, %v3320
        %v3322 = vpop.f32.mrb[0].mxu0
        %v3323 = vadd.f32 0.0, %v3322
        %3324 = vmatprep.mubr.f32.mxu0 0.0
        %3325 = vmatmul.mubr.f32.gmra.mrb[0].mxu0 %v3242
        %v3326 = vpop.f32.mrb[0].mxu0
        %v3327 = vadd.f32 0.0, %v3326
        %v3328 = vpop.f32.mrb[0].mxu0
        %v3329 = vadd.f32 0.0, %v3328
        %3330 = vdwg.mxu0
        %v3331 = vadd.f32 %v3217, %v3315
        %v3332 = vadd.f32 %v3218, %v3317
        %v3333 = vadd.f32 %v3219, %v3321
        %v3334 = vadd.f32 %v3220, %v3323
        %v3335 = vadd.f32 %v3221, %v3327
        %v3336 = vadd.f32 %v3222, %v3329
        %s3337 = scalar_lea.vmem %s3, 528
        %v3338 = vld [vmem:[%s3337] sm:$0xff]
        %v3339 = vld [vmem:[%s3337 + $0x8] sm:$0xff]
        %v3340 = vld [vmem:[%s3337 + $0x10] sm:$0xf]
        %3341 = vrot.lane.b32.xlu0 %v796, 112
        %v3342 = vpop.permute.xlu0 %3341
        %3343 = vrot.lane.b32.xlu0 %v800, 112
        %v3344 = vpop.permute.xlu0 %3343
        %v3345 = vsel %vm1030, %v2225, %v3342
        %v3346 = vsel %vm1030, %v2227, %v3344
        %v3350 = vsel %vm825, %v3338, 0
        %v3353 = vsel %vm825, %v3339, 0
        %v3356 = vsel %vm825, %v3340, 0
        %v3358 = vsel %vm365, %v3346, 0
        %v3360 = vsel %vm365, %v3344, 0
        %3362 = vmatprep.subr.mxu0 %v3342
        %3363 = vmatpush1.msra.mxu0 %v3345
        %3364 = vmatprep.subr.mxu0 %v3360
        %3365 = vmatpush1.msra.mxu0 %v3358
        %3366 = vmatprep.subr.mxu0 0.0
        %3367 = vmatpush1.msra.mxu0 0.0
        %3368 = vmatprep.subr.mxu0 0.0
        %3369 = vmatpush1.msra.mxu0 0.0
        %3370 = vmatprep.subr.mxu0 0.0
        %3371 = vmatpush1.msra.mxu0 0.0
        %3372 = vmatprep.subr.mxu0 0.0
        %3373 = vmatpush1.msra.mxu0 0.0
        %3374 = vmatprep.subr.mxu0 0.0
        %3375 = vmatpush1.msra.mxu0 0.0
        %3376 = vmatprep.subr.mxu0 0.0
        %3377 = vmatpush1.msra.mxu0 0.0
        %3378 = vmatprep.subr.mxu0 0.0
        %3379 = vmatpush1.msra.mxu0 0.0
        %3380 = vmatprep.subr.mxu0 0.0
        %3381 = vmatpush1.msra.mxu0 0.0
        %3382 = vmatprep.subr.mxu0 0.0
        %3383 = vmatpush1.msra.mxu0 0.0
        %3384 = vmatprep.subr.mxu0 0.0
        %3385 = vmatpush1.msra.mxu0 0.0
        %3386 = vmatprep.subr.mxu0 0.0
        %3387 = vmatpush1.msra.mxu0 0.0
        %3388 = vmatprep.subr.mxu0 0.0
        %3389 = vmatpush1.msra.mxu0 0.0
        %3390 = vmatprep.subr.mxu0 0.0
        %3391 = vmatpush1.msra.mxu0 0.0
        %3392 = vmatprep.subr.mxu0 0.0
        %3393 = vmatpush1.msra.mxu0 0.0
        %3394 = vmatprep.subr.mxu0 0.0
        %3395 = vmatpush1.msra.mxu0 0.0
        %3396 = vmatprep.subr.mxu0 0.0
        %3397 = vmatpush1.msra.mxu0 0.0
        %3398 = vmatprep.subr.mxu0 0.0
        %3399 = vmatpush1.msra.mxu0 0.0
        %3400 = vmatprep.subr.mxu0 0.0
        %3401 = vmatpush1.msra.mxu0 0.0
        %3402 = vmatprep.subr.mxu0 0.0
        %3403 = vmatpush1.msra.mxu0 0.0
        %3404 = vmatprep.subr.mxu0 0.0
        %3405 = vmatpush1.msra.mxu0 0.0
        %3406 = vmatprep.subr.mxu0 0.0
        %3407 = vmatpush1.msra.mxu0 0.0
        %3408 = vmatprep.subr.mxu0 0.0
        %3409 = vmatpush1.msra.mxu0 0.0
        %3410 = vmatprep.subr.mxu0 0.0
        %3411 = vmatpush1.msra.mxu0 0.0
        %3412 = vmatprep.subr.mxu0 0.0
        %3413 = vmatpush1.msra.mxu0 0.0
        %3414 = vmatprep.subr.mxu0 0.0
        %3415 = vmatpush1.msra.mxu0 0.0
        %3416 = vmatprep.subr.mxu0 0.0
        %3417 = vmatpush1.msra.mxu0 0.0
        %3418 = vmatprep.subr.mxu0 0.0
        %3419 = vmatpush1.msra.mxu0 0.0
        %3420 = vmatprep.subr.mxu0 0.0
        %3421 = vmatpush1.msra.mxu0 0.0
        %3422 = vmatprep.subr.mxu0 0.0
        %3423 = vmatpush1.msra.mxu0 0.0
        %3424 = vmatprep.subr.mxu0 0.0
        %3425 = vmatpush1.msra.mxu0 0.0
        %3426 = vmatprep.mubr.f32.mxu0 0.0
        %3427 = vmatmul.mubr.f32.gmra.mrb[0].mxu0 %v3350
        %v3428 = vpop.f32.mrb[0].mxu0
        %v3429 = vadd.f32 0.0, %v3428
        %v3430 = vpop.f32.mrb[0].mxu0
        %v3431 = vadd.f32 0.0, %v3430
        %3432 = vmatprep.mubr.f32.mxu0 0.0
        %3433 = vmatmul.mubr.f32.gmra.mrb[0].mxu0 %v3353
        %v3434 = vpop.f32.mrb[0].mxu0
        %v3435 = vadd.f32 0.0, %v3434
        %v3436 = vpop.f32.mrb[0].mxu0
        %v3437 = vadd.f32 0.0, %v3436
        %3438 = vmatprep.mubr.f32.mxu0 0.0
        %3439 = vmatmul.mubr.f32.gmra.mrb[0].mxu0 %v3356
        %v3440 = vpop.f32.mrb[0].mxu0
        %v3441 = vadd.f32 0.0, %v3440
        %v3442 = vpop.f32.mrb[0].mxu0
        %v3443 = vadd.f32 0.0, %v3442
        %3444 = vdwg.mxu0
        %v3445 = vadd.f32 %v3331, %v3429
        %v3446 = vadd.f32 %v3332, %v3431
        %v3447 = vadd.f32 %v3333, %v3435
        %v3448 = vadd.f32 %v3334, %v3437
        %v3449 = vadd.f32 %v3335, %v3441
        %v3450 = vadd.f32 %v3336, %v3443
        %s3451 = scalar_lea.vmem %s3, 552
        %v3452 = vld [vmem:[%s3451] sm:$0xff]
        %v3453 = vld [vmem:[%s3451 + $0x8] sm:$0xff]
        %v3454 = vld [vmem:[%s3451 + $0x10] sm:$0xf]
        %3455 = vrot.lane.b32.xlu0 %v796, 104
        %v3456 = vpop.permute.xlu0 %3455
        %3457 = vrot.lane.b32.xlu0 %v800, 104
        %v3458 = vpop.permute.xlu0 %3457
        %v3459 = vsel %vm1149, %v2339, %v3456
        %v3460 = vsel %vm1149, %v2341, %v3458
        %v3464 = vsel %vm825, %v3452, 0
        %v3467 = vsel %vm825, %v3453, 0
        %v3470 = vsel %vm825, %v3454, 0
        %v3472 = vsel %vm365, %v3460, 0
        %v3474 = vsel %vm365, %v3458, 0
        %3476 = vmatprep.subr.mxu0 %v3456
        %3477 = vmatpush1.msra.mxu0 %v3459
        %3478 = vmatprep.subr.mxu0 %v3474
        %3479 = vmatpush1.msra.mxu0 %v3472
        %3480 = vmatprep.subr.mxu0 0.0
        %3481 = vmatpush1.msra.mxu0 0.0
        %3482 = vmatprep.subr.mxu0 0.0
        %3483 = vmatpush1.msra.mxu0 0.0
        %3484 = vmatprep.subr.mxu0 0.0
        %3485 = vmatpush1.msra.mxu0 0.0
        %3486 = vmatprep.subr.mxu0 0.0
        %3487 = vmatpush1.msra.mxu0 0.0
        %3488 = vmatprep.subr.mxu0 0.0
        %3489 = vmatpush1.msra.mxu0 0.0
        %3490 = vmatprep.subr.mxu0 0.0
        %3491 = vmatpush1.msra.mxu0 0.0
        %3492 = vmatprep.subr.mxu0 0.0
        %3493 = vmatpush1.msra.mxu0 0.0
        %3494 = vmatprep.subr.mxu0 0.0
        %3495 = vmatpush1.msra.mxu0 0.0
        %3496 = vmatprep.subr.mxu0 0.0
        %3497 = vmatpush1.msra.mxu0 0.0
        %3498 = vmatprep.subr.mxu0 0.0
        %3499 = vmatpush1.msra.mxu0 0.0
        %3500 = vmatprep.subr.mxu0 0.0
        %3501 = vmatpush1.msra.mxu0 0.0
        %3502 = vmatprep.subr.mxu0 0.0
        %3503 = vmatpush1.msra.mxu0 0.0
        %3504 = vmatprep.subr.mxu0 0.0
        %3505 = vmatpush1.msra.mxu0 0.0
        %3506 = vmatprep.subr.mxu0 0.0
        %3507 = vmatpush1.msra.mxu0 0.0
        %3508 = vmatprep.subr.mxu0 0.0
        %3509 = vmatpush1.msra.mxu0 0.0
        %3510 = vmatprep.subr.mxu0 0.0
        %3511 = vmatpush1.msra.mxu0 0.0
        %3512 = vmatprep.subr.mxu0 0.0
        %3513 = vmatpush1.msra.mxu0 0.0
        %3514 = vmatprep.subr.mxu0 0.0
        %3515 = vmatpush1.msra.mxu0 0.0
        %3516 = vmatprep.subr.mxu0 0.0
        %3517 = vmatpush1.msra.mxu0 0.0
        %3518 = vmatprep.subr.mxu0 0.0
        %3519 = vmatpush1.msra.mxu0 0.0
        %3520 = vmatprep.subr.mxu0 0.0
        %3521 = vmatpush1.msra.mxu0 0.0
        %3522 = vmatprep.subr.mxu0 0.0
        %3523 = vmatpush1.msra.mxu0 0.0
        %3524 = vmatprep.subr.mxu0 0.0
        %3525 = vmatpush1.msra.mxu0 0.0
        %3526 = vmatprep.subr.mxu0 0.0
        %3527 = vmatpush1.msra.mxu0 0.0
        %3528 = vmatprep.subr.mxu0 0.0
        %3529 = vmatpush1.msra.mxu0 0.0
        %3530 = vmatprep.subr.mxu0 0.0
        %3531 = vmatpush1.msra.mxu0 0.0
        %3532 = vmatprep.subr.mxu0 0.0
        %3533 = vmatpush1.msra.mxu0 0.0
        %3534 = vmatprep.subr.mxu0 0.0
        %3535 = vmatpush1.msra.mxu0 0.0
        %3536 = vmatprep.subr.mxu0 0.0
        %3537 = vmatpush1.msra.mxu0 0.0
        %3538 = vmatprep.subr.mxu0 0.0
        %3539 = vmatpush1.msra.mxu0 0.0
        %3540 = vmatprep.mubr.f32.mxu0 0.0
        %3541 = vmatmul.mubr.f32.gmra.mrb[0].mxu0 %v3464
        %v3542 = vpop.f32.mrb[0].mxu0
        %v3543 = vadd.f32 0.0, %v3542
        %v3544 = vpop.f32.mrb[0].mxu0
        %v3545 = vadd.f32 0.0, %v3544
        %3546 = vmatprep.mubr.f32.mxu0 0.0
        %3547 = vmatmul.mubr.f32.gmra.mrb[0].mxu0 %v3467
        %v3548 = vpop.f32.mrb[0].mxu0
        %v3549 = vadd.f32 0.0, %v3548
        %v3550 = vpop.f32.mrb[0].mxu0
        %v3551 = vadd.f32 0.0, %v3550
        %3552 = vmatprep.mubr.f32.mxu0 0.0
        %3553 = vmatmul.mubr.f32.gmra.mrb[0].mxu0 %v3470
        %v3554 = vpop.f32.mrb[0].mxu0
        %v3555 = vadd.f32 0.0, %v3554
        %v3556 = vpop.f32.mrb[0].mxu0
        %v3557 = vadd.f32 0.0, %v3556
        %3558 = vdwg.mxu0
        %v3559 = vadd.f32 %v3445, %v3543
        %v3560 = vadd.f32 %v3446, %v3545
        %v3561 = vadd.f32 %v3447, %v3549
        %v3562 = vadd.f32 %v3448, %v3551
        %v3563 = vadd.f32 %v3449, %v3555
        %v3564 = vadd.f32 %v3450, %v3557
        %s3565 = scalar_lea.vmem %s3, 576
        %v3566 = vld [vmem:[%s3565] sm:$0xff]
        %v3567 = vld [vmem:[%s3565 + $0x8] sm:$0xff]
        %v3568 = vld [vmem:[%s3565 + $0x10] sm:$0xf]
        %3569 = vrot.lane.b32.xlu0 %v796, 96
        %v3570 = vpop.permute.xlu0 %3569
        %3571 = vrot.lane.b32.xlu0 %v800, 96
        %v3572 = vpop.permute.xlu0 %3571
        %v3573 = vsel %vm1268, %v2453, %v3570
        %v3574 = vsel %vm1268, %v2455, %v3572
        %v3578 = vsel %vm825, %v3566, 0
        %v3581 = vsel %vm825, %v3567, 0
        %v3584 = vsel %vm825, %v3568, 0
        %v3586 = vsel %vm365, %v3574, 0
        %v3588 = vsel %vm365, %v3572, 0
        %3590 = vmatprep.subr.mxu0 %v3570
        %3591 = vmatpush1.msra.mxu0 %v3573
        %3592 = vmatprep.subr.mxu0 %v3588
        %3593 = vmatpush1.msra.mxu0 %v3586
        %3594 = vmatprep.subr.mxu0 0.0
        %3595 = vmatpush1.msra.mxu0 0.0
        %3596 = vmatprep.subr.mxu0 0.0
        %3597 = vmatpush1.msra.mxu0 0.0
        %3598 = vmatprep.subr.mxu0 0.0
        %3599 = vmatpush1.msra.mxu0 0.0
        %3600 = vmatprep.subr.mxu0 0.0
        %3601 = vmatpush1.msra.mxu0 0.0
        %3602 = vmatprep.subr.mxu0 0.0
        %3603 = vmatpush1.msra.mxu0 0.0
        %3604 = vmatprep.subr.mxu0 0.0
        %3605 = vmatpush1.msra.mxu0 0.0
        %3606 = vmatprep.subr.mxu0 0.0
        %3607 = vmatpush1.msra.mxu0 0.0
        %3608 = vmatprep.subr.mxu0 0.0
        %3609 = vmatpush1.msra.mxu0 0.0
        %3610 = vmatprep.subr.mxu0 0.0
        %3611 = vmatpush1.msra.mxu0 0.0
        %3612 = vmatprep.subr.mxu0 0.0
        %3613 = vmatpush1.msra.mxu0 0.0
        %3614 = vmatprep.subr.mxu0 0.0
        %3615 = vmatpush1.msra.mxu0 0.0
        %3616 = vmatprep.subr.mxu0 0.0
        %3617 = vmatpush1.msra.mxu0 0.0
        %3618 = vmatprep.subr.mxu0 0.0
        %3619 = vmatpush1.msra.mxu0 0.0
        %3620 = vmatprep.subr.mxu0 0.0
        %3621 = vmatpush1.msra.mxu0 0.0
        %3622 = vmatprep.subr.mxu0 0.0
        %3623 = vmatpush1.msra.mxu0 0.0
        %3624 = vmatprep.subr.mxu0 0.0
        %3625 = vmatpush1.msra.mxu0 0.0
        %3626 = vmatprep.subr.mxu0 0.0
        %3627 = vmatpush1.msra.mxu0 0.0
        %3628 = vmatprep.subr.mxu0 0.0
        %3629 = vmatpush1.msra.mxu0 0.0
        %3630 = vmatprep.subr.mxu0 0.0
        %3631 = vmatpush1.msra.mxu0 0.0
        %3632 = vmatprep.subr.mxu0 0.0
        %3633 = vmatpush1.msra.mxu0 0.0
        %3634 = vmatprep.subr.mxu0 0.0
        %3635 = vmatpush1.msra.mxu0 0.0
        %3636 = vmatprep.subr.mxu0 0.0
        %3637 = vmatpush1.msra.mxu0 0.0
        %3638 = vmatprep.subr.mxu0 0.0
        %3639 = vmatpush1.msra.mxu0 0.0
        %3640 = vmatprep.subr.mxu0 0.0
        %3641 = vmatpush1.msra.mxu0 0.0
        %3642 = vmatprep.subr.mxu0 0.0
        %3643 = vmatpush1.msra.mxu0 0.0
        %3644 = vmatprep.subr.mxu0 0.0
        %3645 = vmatpush1.msra.mxu0 0.0
        %3646 = vmatprep.subr.mxu0 0.0
        %3647 = vmatpush1.msra.mxu0 0.0
        %3648 = vmatprep.subr.mxu0 0.0
        %3649 = vmatpush1.msra.mxu0 0.0
        %3650 = vmatprep.subr.mxu0 0.0
        %3651 = vmatpush1.msra.mxu0 0.0
        %3652 = vmatprep.subr.mxu0 0.0
        %3653 = vmatpush1.msra.mxu0 0.0
        %3654 = vmatprep.mubr.f32.mxu0 0.0
        %3655 = vmatmul.mubr.f32.gmra.mrb[0].mxu0 %v3578
        %v3656 = vpop.f32.mrb[0].mxu0
        %v3657 = vadd.f32 0.0, %v3656
        %v3658 = vpop.f32.mrb[0].mxu0
        %v3659 = vadd.f32 0.0, %v3658
        %3660 = vmatprep.mubr.f32.mxu0 0.0
        %3661 = vmatmul.mubr.f32.gmra.mrb[0].mxu0 %v3581
        %v3662 = vpop.f32.mrb[0].mxu0
        %v3663 = vadd.f32 0.0, %v3662
        %v3664 = vpop.f32.mrb[0].mxu0
        %v3665 = vadd.f32 0.0, %v3664
        %3666 = vmatprep.mubr.f32.mxu0 0.0
        %3667 = vmatmul.mubr.f32.gmra.mrb[0].mxu0 %v3584
        %v3668 = vpop.f32.mrb[0].mxu0
        %v3669 = vadd.f32 0.0, %v3668
        %v3670 = vpop.f32.mrb[0].mxu0
        %v3671 = vadd.f32 0.0, %v3670
        %3672 = vdwg.mxu0
        %v3673 = vadd.f32 %v3559, %v3657
        %v3674 = vadd.f32 %v3560, %v3659
        %v3675 = vadd.f32 %v3561, %v3663
        %v3676 = vadd.f32 %v3562, %v3665
        %v3677 = vadd.f32 %v3563, %v3669
        %v3678 = vadd.f32 %v3564, %v3671
        %v3679 = vld [vmem:[%s4] sm:$0xff]
        %v3680 = vld [vmem:[%s4 + $0x8] sm:$0xff]
        %v3681 = vld [vmem:[%s4 + $0x10] sm:$0xf]
        %3683 = vset.pattern.permute.xlu0 0
        %3684 = vperm.xlu0 %3683, %v3679
        %v3685 = vpop.permute.xlu0 %3684
        %3688 = vset.pattern.permute.xlu0 0
        %3689 = vperm.xlu0 %3688, %v3680
        %v3690 = vpop.permute.xlu0 %3689
        %3693 = vset.pattern.permute.xlu0 0
        %3694 = vperm.xlu0 %3693, %v3681
        %v3695 = vpop.permute.xlu0 %3694
        %v3697 = vadd.f32 %v3673, %v3685
        %v3698 = vadd.f32 %v3674, %v3685
        %v3699 = vadd.f32 %v3675, %v3690
        %v3700 = vadd.f32 %v3676, %v3690
        %v3701 = vadd.f32 %v3677, %v3695
        %v3702 = vadd.f32 %v3678, %v3695
        %v3703 = vmax.f32 %v3697, 0.0
        %v3704 = vmax.f32 %v3698, 0.0
        %v3705 = vmax.f32 %v3699, 0.0
        %v3706 = vmax.f32 %v3700, 0.0
        %v3707 = vmax.f32 %v3701, 0.0
        %v3708 = vmax.f32 %v3702, 0.0
        %v3709 = vld [vmem:[%s5] sm:$0xff]
        %v3710 = vld [vmem:[%s5 + $0x8] sm:$0xff]
        %v3711 = vld [vmem:[%s5 + $0x10] sm:$0xff]
        %v3712 = vld [vmem:[%s5 + $0x18] sm:$0xff]
        %s3713 = scalar_lea.vmem %s5, 32
        %v3714 = vld [vmem:[%s3713] sm:$0xff]
        %v3715 = vld [vmem:[%s3713 + $0x8] sm:$0xff]
        %v3716 = vld [vmem:[%s3713 + $0x10] sm:$0xff]
        %v3717 = vld [vmem:[%s3713 + $0x18] sm:$0xff]
        %3721 = vrot.lane.b32.xlu0 %v3703, 120
        %v3722 = vpop.permute.xlu0 %3721
        %3723 = vrot.lane.b32.xlu0 %v3705, 120
        %v3724 = vpop.permute.xlu0 %3723
        %3725 = vrot.lane.b32.xlu0 %v3707, 120
        %v3726 = vpop.permute.xlu0 %3725
        %vm3729 = vcmask 162816
        %v3731 = vsel %vm3729, %v3714, 0
        %v3734 = vsel %vm3729, %v3715, 0
        %v3737 = vsel %vm3729, %v3716, 0
        %v3740 = vsel %vm3729, %v3717, 0
        %v3742 = vsel %vm351, %v3726, 0
        %3744 = vmatprep.subr.mxu0 0.0
        %3745 = vmatpush1.msra.mxu0 %v3722
        %3746 = vmatprep.subr.mxu0 0.0
        %3747 = vmatpush1.msra.mxu0 %v3724
        %3748 = vmatprep.subr.mxu0 0.0
        %3749 = vmatpush1.msra.mxu0 %v3742
        %3750 = vmatprep.subr.mxu0 0.0
        %3751 = vmatpush1.msra.mxu0 0.0
        %3752 = vmatprep.subr.mxu0 0.0
        %3753 = vmatpush1.msra.mxu0 0.0
        %3754 = vmatprep.subr.mxu0 0.0
        %3755 = vmatpush1.msra.mxu0 0.0
        %3756 = vmatprep.subr.mxu0 0.0
        %3757 = vmatpush1.msra.mxu0 0.0
        %3758 = vmatprep.subr.mxu0 0.0
        %3759 = vmatpush1.msra.mxu0 0.0
        %3760 = vmatprep.subr.mxu0 0.0
        %3761 = vmatpush1.msra.mxu0 0.0
        %3762 = vmatprep.subr.mxu0 0.0
        %3763 = vmatpush1.msra.mxu0 0.0
        %3764 = vmatprep.subr.mxu0 0.0
        %3765 = vmatpush1.msra.mxu0 0.0
        %3766 = vmatprep.subr.mxu0 0.0
        %3767 = vmatpush1.msra.mxu0 0.0
        %3768 = vmatprep.subr.mxu0 0.0
        %3769 = vmatpush1.msra.mxu0 0.0
        %3770 = vmatprep.subr.mxu0 0.0
        %3771 = vmatpush1.msra.mxu0 0.0
        %3772 = vmatprep.subr.mxu0 0.0
        %3773 = vmatpush1.msra.mxu0 0.0
        %3774 = vmatprep.subr.mxu0 0.0
        %3775 = vmatpush1.msra.mxu0 0.0
        %3776 = vmatprep.subr.mxu0 0.0
        %3777 = vmatpush1.msra.mxu0 0.0
        %3778 = vmatprep.subr.mxu0 0.0
        %3779 = vmatpush1.msra.mxu0 0.0
        %3780 = vmatprep.subr.mxu0 0.0
        %3781 = vmatpush1.msra.mxu0 0.0
        %3782 = vmatprep.subr.mxu0 0.0
        %3783 = vmatpush1.msra.mxu0 0.0
        %3784 = vmatprep.subr.mxu0 0.0
        %3785 = vmatpush1.msra.mxu0 0.0
        %3786 = vmatprep.subr.mxu0 0.0
        %3787 = vmatpush1.msra.mxu0 0.0
        %3788 = vmatprep.subr.mxu0 0.0
        %3789 = vmatpush1.msra.mxu0 0.0
        %3790 = vmatprep.subr.mxu0 0.0
        %3791 = vmatpush1.msra.mxu0 0.0
        %3792 = vmatprep.subr.mxu0 0.0
        %3793 = vmatpush1.msra.mxu0 0.0
        %3794 = vmatprep.subr.mxu0 0.0
        %3795 = vmatpush1.msra.mxu0 0.0
        %3796 = vmatprep.subr.mxu0 0.0
        %3797 = vmatpush1.msra.mxu0 0.0
        %3798 = vmatprep.subr.mxu0 0.0
        %3799 = vmatpush1.msra.mxu0 0.0
        %3800 = vmatprep.subr.mxu0 0.0
        %3801 = vmatpush1.msra.mxu0 0.0
        %3802 = vmatprep.subr.mxu0 0.0
        %3803 = vmatpush1.msra.mxu0 0.0
        %3804 = vmatprep.subr.mxu0 0.0
        %3805 = vmatpush1.msra.mxu0 0.0
        %3806 = vmatprep.subr.mxu0 0.0
        %3807 = vmatpush1.msra.mxu0 0.0
        %3808 = vmatprep.mubr.f32.mxu0 0.0
        %3809 = vmatmul.mubr.f32.gmra.mrb[0].mxu0 %v3731
        %v3810 = vpop.f32.mrb[0].mxu0
        %v3811 = vadd.f32 0.0, %v3810
        %v3812 = vpop.f32.mrb[0].mxu0
        %3813 = vmatprep.mubr.f32.mxu0 0.0
        %3814 = vmatmul.mubr.f32.gmra.mrb[0].mxu0 %v3734
        %v3815 = vpop.f32.mrb[0].mxu0
        %v3816 = vadd.f32 0.0, %v3815
        %v3817 = vpop.f32.mrb[0].mxu0
        %3818 = vmatprep.mubr.f32.mxu0 0.0
        %3819 = vmatmul.mubr.f32.gmra.mrb[0].mxu0 %v3737
        %v3820 = vpop.f32.mrb[0].mxu0
        %v3821 = vadd.f32 0.0, %v3820
        %v3822 = vpop.f32.mrb[0].mxu0
        %3823 = vmatprep.mubr.f32.mxu0 0.0
        %3824 = vmatmul.mubr.f32.gmra.mrb[0].mxu0 %v3740
        %v3825 = vpop.f32.mrb[0].mxu0
        %v3826 = vadd.f32 0.0, %v3825
        %v3827 = vpop.f32.mrb[0].mxu0
        %3828 = vdwg.mxu0
        %v3830 = vsel %vm3729, %v3709, 0
        %v3833 = vsel %vm3729, %v3710, 0
        %v3836 = vsel %vm3729, %v3711, 0
        %v3839 = vsel %vm3729, %v3712, 0
        %v3841 = vsel %vm351, %v3707, 0
        %3843 = vmatprep.subr.mxu0 0.0
        %3844 = vmatpush1.msra.mxu0 %v3703
        %3845 = vmatprep.subr.mxu0 0.0
        %3846 = vmatpush1.msra.mxu0 %v3705
        %3847 = vmatprep.subr.mxu0 0.0
        %3848 = vmatpush1.msra.mxu0 %v3841
        %3849 = vmatprep.subr.mxu0 0.0
        %3850 = vmatpush1.msra.mxu0 0.0
        %3851 = vmatprep.subr.mxu0 0.0
        %3852 = vmatpush1.msra.mxu0 0.0
        %3853 = vmatprep.subr.mxu0 0.0
        %3854 = vmatpush1.msra.mxu0 0.0
        %3855 = vmatprep.subr.mxu0 0.0
        %3856 = vmatpush1.msra.mxu0 0.0
        %3857 = vmatprep.subr.mxu0 0.0
        %3858 = vmatpush1.msra.mxu0 0.0
        %3859 = vmatprep.subr.mxu0 0.0
        %3860 = vmatpush1.msra.mxu0 0.0
        %3861 = vmatprep.subr.mxu0 0.0
        %3862 = vmatpush1.msra.mxu0 0.0
        %3863 = vmatprep.subr.mxu0 0.0
        %3864 = vmatpush1.msra.mxu0 0.0
        %3865 = vmatprep.subr.mxu0 0.0
        %3866 = vmatpush1.msra.mxu0 0.0
        %3867 = vmatprep.subr.mxu0 0.0
        %3868 = vmatpush1.msra.mxu0 0.0
        %3869 = vmatprep.subr.mxu0 0.0
        %3870 = vmatpush1.msra.mxu0 0.0
        %3871 = vmatprep.subr.mxu0 0.0
        %3872 = vmatpush1.msra.mxu0 0.0
        %3873 = vmatprep.subr.mxu0 0.0
        %3874 = vmatpush1.msra.mxu0 0.0
        %3875 = vmatprep.subr.mxu0 0.0
        %3876 = vmatpush1.msra.mxu0 0.0
        %3877 = vmatprep.subr.mxu0 0.0
        %3878 = vmatpush1.msra.mxu0 0.0
        %3879 = vmatprep.subr.mxu0 0.0
        %3880 = vmatpush1.msra.mxu0 0.0
        %3881 = vmatprep.subr.mxu0 0.0
        %3882 = vmatpush1.msra.mxu0 0.0
        %3883 = vmatprep.subr.mxu0 0.0
        %3884 = vmatpush1.msra.mxu0 0.0
        %3885 = vmatprep.subr.mxu0 0.0
        %3886 = vmatpush1.msra.mxu0 0.0
        %3887 = vmatprep.subr.mxu0 0.0
        %3888 = vmatpush1.msra.mxu0 0.0
        %3889 = vmatprep.subr.mxu0 0.0
        %3890 = vmatpush1.msra.mxu0 0.0
        %3891 = vmatprep.subr.mxu0 0.0
        %3892 = vmatpush1.msra.mxu0 0.0
        %3893 = vmatprep.subr.mxu0 0.0
        %3894 = vmatpush1.msra.mxu0 0.0
        %3895 = vmatprep.subr.mxu0 0.0
        %3896 = vmatpush1.msra.mxu0 0.0
        %3897 = vmatprep.subr.mxu0 0.0
        %3898 = vmatpush1.msra.mxu0 0.0
        %3899 = vmatprep.subr.mxu0 0.0
        %3900 = vmatpush1.msra.mxu0 0.0
        %3901 = vmatprep.subr.mxu0 0.0
        %3902 = vmatpush1.msra.mxu0 0.0
        %3903 = vmatprep.subr.mxu0 0.0
        %3904 = vmatpush1.msra.mxu0 0.0
        %3905 = vmatprep.subr.mxu0 0.0
        %3906 = vmatpush1.msra.mxu0 0.0
        %3907 = vmatprep.mubr.f32.mxu0 0.0
        %3908 = vmatmul.mubr.f32.gmra.mrb[0].mxu0 %v3830
        %v3909 = vpop.f32.mrb[0].mxu0
        %v3910 = vadd.f32 %v3811, %v3909
        %v3911 = vpop.f32.mrb[0].mxu0
        %3912 = vmatprep.mubr.f32.mxu0 0.0
        %3913 = vmatmul.mubr.f32.gmra.mrb[0].mxu0 %v3833
        %v3914 = vpop.f32.mrb[0].mxu0
        %v3915 = vadd.f32 %v3816, %v3914
        %v3916 = vpop.f32.mrb[0].mxu0
        %3917 = vmatprep.mubr.f32.mxu0 0.0
        %3918 = vmatmul.mubr.f32.gmra.mrb[0].mxu0 %v3836
        %v3919 = vpop.f32.mrb[0].mxu0
        %v3920 = vadd.f32 %v3821, %v3919
        %v3921 = vpop.f32.mrb[0].mxu0
        %3922 = vmatprep.mubr.f32.mxu0 0.0
        %3923 = vmatmul.mubr.f32.gmra.mrb[0].mxu0 %v3839
        %v3924 = vpop.f32.mrb[0].mxu0
        %v3925 = vadd.f32 %v3826, %v3924
        %v3926 = vpop.f32.mrb[0].mxu0
        %3927 = vdwg.mxu0
        %s3928 = scalar_lea.vmem %s5, 64
        %v3929 = vld [vmem:[%s3928] sm:$0xff]
        %v3930 = vld [vmem:[%s3928 + $0x8] sm:$0xff]
        %v3931 = vld [vmem:[%s3928 + $0x10] sm:$0xff]
        %v3932 = vld [vmem:[%s3928 + $0x18] sm:$0xff]
        %3933 = vrot.lane.b32.xlu0 %v3703, 112
        %v3934 = vpop.permute.xlu0 %3933
        %3935 = vrot.lane.b32.xlu0 %v3705, 112
        %v3936 = vpop.permute.xlu0 %3935
        %3937 = vrot.lane.b32.xlu0 %v3707, 112
        %v3938 = vpop.permute.xlu0 %3937
        %v3942 = vsel %vm3729, %v3929, 0
        %v3945 = vsel %vm3729, %v3930, 0
        %v3948 = vsel %vm3729, %v3931, 0
        %v3951 = vsel %vm3729, %v3932, 0
        %v3953 = vsel %vm351, %v3938, 0
        %3955 = vmatprep.subr.mxu0 0.0
        %3956 = vmatpush1.msra.mxu0 %v3934
        %3957 = vmatprep.subr.mxu0 0.0
        %3958 = vmatpush1.msra.mxu0 %v3936
        %3959 = vmatprep.subr.mxu0 0.0
        %3960 = vmatpush1.msra.mxu0 %v3953
        %3961 = vmatprep.subr.mxu0 0.0
        %3962 = vmatpush1.msra.mxu0 0.0
        %3963 = vmatprep.subr.mxu0 0.0
        %3964 = vmatpush1.msra.mxu0 0.0
        %3965 = vmatprep.subr.mxu0 0.0
        %3966 = vmatpush1.msra.mxu0 0.0
        %3967 = vmatprep.subr.mxu0 0.0
        %3968 = vmatpush1.msra.mxu0 0.0
        %3969 = vmatprep.subr.mxu0 0.0
        %3970 = vmatpush1.msra.mxu0 0.0
        %3971 = vmatprep.subr.mxu0 0.0
        %3972 = vmatpush1.msra.mxu0 0.0
        %3973 = vmatprep.subr.mxu0 0.0
        %3974 = vmatpush1.msra.mxu0 0.0
        %3975 = vmatprep.subr.mxu0 0.0
        %3976 = vmatpush1.msra.mxu0 0.0
        %3977 = vmatprep.subr.mxu0 0.0
        %3978 = vmatpush1.msra.mxu0 0.0
        %3979 = vmatprep.subr.mxu0 0.0
        %3980 = vmatpush1.msra.mxu0 0.0
        %3981 = vmatprep.subr.mxu0 0.0
        %3982 = vmatpush1.msra.mxu0 0.0
        %3983 = vmatprep.subr.mxu0 0.0
        %3984 = vmatpush1.msra.mxu0 0.0
        %3985 = vmatprep.subr.mxu0 0.0
        %3986 = vmatpush1.msra.mxu0 0.0
        %3987 = vmatprep.subr.mxu0 0.0
        %3988 = vmatpush1.msra.mxu0 0.0
        %3989 = vmatprep.subr.mxu0 0.0
        %3990 = vmatpush1.msra.mxu0 0.0
        %3991 = vmatprep.subr.mxu0 0.0
        %3992 = vmatpush1.msra.mxu0 0.0
        %3993 = vmatprep.subr.mxu0 0.0
        %3994 = vmatpush1.msra.mxu0 0.0
        %3995 = vmatprep.subr.mxu0 0.0
        %3996 = vmatpush1.msra.mxu0 0.0
        %3997 = vmatprep.subr.mxu0 0.0
        %3998 = vmatpush1.msra.mxu0 0.0
        %3999 = vmatprep.subr.mxu0 0.0
        %4000 = vmatpush1.msra.mxu0 0.0
        %4001 = vmatprep.subr.mxu0 0.0
        %4002 = vmatpush1.msra.mxu0 0.0
        %4003 = vmatprep.subr.mxu0 0.0
        %4004 = vmatpush1.msra.mxu0 0.0
        %4005 = vmatprep.subr.mxu0 0.0
        %4006 = vmatpush1.msra.mxu0 0.0
        %4007 = vmatprep.subr.mxu0 0.0
        %4008 = vmatpush1.msra.mxu0 0.0
        %4009 = vmatprep.subr.mxu0 0.0
        %4010 = vmatpush1.msra.mxu0 0.0
        %4011 = vmatprep.subr.mxu0 0.0
        %4012 = vmatpush1.msra.mxu0 0.0
        %4013 = vmatprep.subr.mxu0 0.0
        %4014 = vmatpush1.msra.mxu0 0.0
        %4015 = vmatprep.subr.mxu0 0.0
        %4016 = vmatpush1.msra.mxu0 0.0
        %4017 = vmatprep.subr.mxu0 0.0
        %4018 = vmatpush1.msra.mxu0 0.0
        %4019 = vmatprep.mubr.f32.mxu0 0.0
        %4020 = vmatmul.mubr.f32.gmra.mrb[0].mxu0 %v3942
        %v4021 = vpop.f32.mrb[0].mxu0
        %v4022 = vadd.f32 0.0, %v4021
        %v4023 = vpop.f32.mrb[0].mxu0
        %4024 = vmatprep.mubr.f32.mxu0 0.0
        %4025 = vmatmul.mubr.f32.gmra.mrb[0].mxu0 %v3945
        %v4026 = vpop.f32.mrb[0].mxu0
        %v4027 = vadd.f32 0.0, %v4026
        %v4028 = vpop.f32.mrb[0].mxu0
        %4029 = vmatprep.mubr.f32.mxu0 0.0
        %4030 = vmatmul.mubr.f32.gmra.mrb[0].mxu0 %v3948
        %v4031 = vpop.f32.mrb[0].mxu0
        %v4032 = vadd.f32 0.0, %v4031
        %v4033 = vpop.f32.mrb[0].mxu0
        %4034 = vmatprep.mubr.f32.mxu0 0.0
        %4035 = vmatmul.mubr.f32.gmra.mrb[0].mxu0 %v3951
        %v4036 = vpop.f32.mrb[0].mxu0
        %v4037 = vadd.f32 0.0, %v4036
        %v4038 = vpop.f32.mrb[0].mxu0
        %4039 = vdwg.mxu0
        %v4040 = vadd.f32 %v3910, %v4022
        %v4041 = vadd.f32 %v3915, %v4027
        %v4042 = vadd.f32 %v3920, %v4032
        %v4043 = vadd.f32 %v3925, %v4037
        %s4044 = scalar_lea.vmem %s5, 96
        %v4045 = vld [vmem:[%s4044] sm:$0xff]
        %v4046 = vld [vmem:[%s4044 + $0x8] sm:$0xff]
        %v4047 = vld [vmem:[%s4044 + $0x10] sm:$0xff]
        %v4048 = vld [vmem:[%s4044 + $0x18] sm:$0xff]
        %4049 = vrot.lane.b32.xlu0 %v3703, 104
        %v4050 = vpop.permute.xlu0 %4049
        %4051 = vrot.lane.b32.xlu0 %v3705, 104
        %v4052 = vpop.permute.xlu0 %4051
        %4053 = vrot.lane.b32.xlu0 %v3707, 104
        %v4054 = vpop.permute.xlu0 %4053
        %v4058 = vsel %vm3729, %v4045, 0
        %v4061 = vsel %vm3729, %v4046, 0
        %v4064 = vsel %vm3729, %v4047, 0
        %v4067 = vsel %vm3729, %v4048, 0
        %v4069 = vsel %vm351, %v4054, 0
        %4071 = vmatprep.subr.mxu0 0.0
        %4072 = vmatpush1.msra.mxu0 %v4050
        %4073 = vmatprep.subr.mxu0 0.0
        %4074 = vmatpush1.msra.mxu0 %v4052
        %4075 = vmatprep.subr.mxu0 0.0
        %4076 = vmatpush1.msra.mxu0 %v4069
        %4077 = vmatprep.subr.mxu0 0.0
        %4078 = vmatpush1.msra.mxu0 0.0
        %4079 = vmatprep.subr.mxu0 0.0
        %4080 = vmatpush1.msra.mxu0 0.0
        %4081 = vmatprep.subr.mxu0 0.0
        %4082 = vmatpush1.msra.mxu0 0.0
        %4083 = vmatprep.subr.mxu0 0.0
        %4084 = vmatpush1.msra.mxu0 0.0
        %4085 = vmatprep.subr.mxu0 0.0
        %4086 = vmatpush1.msra.mxu0 0.0
        %4087 = vmatprep.subr.mxu0 0.0
        %4088 = vmatpush1.msra.mxu0 0.0
        %4089 = vmatprep.subr.mxu0 0.0
        %4090 = vmatpush1.msra.mxu0 0.0
        %4091 = vmatprep.subr.mxu0 0.0
        %4092 = vmatpush1.msra.mxu0 0.0
        %4093 = vmatprep.subr.mxu0 0.0
        %4094 = vmatpush1.msra.mxu0 0.0
        %4095 = vmatprep.subr.mxu0 0.0
        %4096 = vmatpush1.msra.mxu0 0.0
        %4097 = vmatprep.subr.mxu0 0.0
        %4098 = vmatpush1.msra.mxu0 0.0
        %4099 = vmatprep.subr.mxu0 0.0
        %4100 = vmatpush1.msra.mxu0 0.0
        %4101 = vmatprep.subr.mxu0 0.0
        %4102 = vmatpush1.msra.mxu0 0.0
        %4103 = vmatprep.subr.mxu0 0.0
        %4104 = vmatpush1.msra.mxu0 0.0
        %4105 = vmatprep.subr.mxu0 0.0
        %4106 = vmatpush1.msra.mxu0 0.0
        %4107 = vmatprep.subr.mxu0 0.0
        %4108 = vmatpush1.msra.mxu0 0.0
        %4109 = vmatprep.subr.mxu0 0.0
        %4110 = vmatpush1.msra.mxu0 0.0
        %4111 = vmatprep.subr.mxu0 0.0
        %4112 = vmatpush1.msra.mxu0 0.0
        %4113 = vmatprep.subr.mxu0 0.0
        %4114 = vmatpush1.msra.mxu0 0.0
        %4115 = vmatprep.subr.mxu0 0.0
        %4116 = vmatpush1.msra.mxu0 0.0
        %4117 = vmatprep.subr.mxu0 0.0
        %4118 = vmatpush1.msra.mxu0 0.0
        %4119 = vmatprep.subr.mxu0 0.0
        %4120 = vmatpush1.msra.mxu0 0.0
        %4121 = vmatprep.subr.mxu0 0.0
        %4122 = vmatpush1.msra.mxu0 0.0
        %4123 = vmatprep.subr.mxu0 0.0
        %4124 = vmatpush1.msra.mxu0 0.0
        %4125 = vmatprep.subr.mxu0 0.0
        %4126 = vmatpush1.msra.mxu0 0.0
        %4127 = vmatprep.subr.mxu0 0.0
        %4128 = vmatpush1.msra.mxu0 0.0
        %4129 = vmatprep.subr.mxu0 0.0
        %4130 = vmatpush1.msra.mxu0 0.0
        %4131 = vmatprep.subr.mxu0 0.0
        %4132 = vmatpush1.msra.mxu0 0.0
        %4133 = vmatprep.subr.mxu0 0.0
        %4134 = vmatpush1.msra.mxu0 0.0
        %4135 = vmatprep.mubr.f32.mxu0 0.0
        %4136 = vmatmul.mubr.f32.gmra.mrb[0].mxu0 %v4058
        %v4137 = vpop.f32.mrb[0].mxu0
        %v4138 = vadd.f32 0.0, %v4137
        %v4139 = vpop.f32.mrb[0].mxu0
        %4140 = vmatprep.mubr.f32.mxu0 0.0
        %4141 = vmatmul.mubr.f32.gmra.mrb[0].mxu0 %v4061
        %v4142 = vpop.f32.mrb[0].mxu0
        %v4143 = vadd.f32 0.0, %v4142
        %v4144 = vpop.f32.mrb[0].mxu0
        %4145 = vmatprep.mubr.f32.mxu0 0.0
        %4146 = vmatmul.mubr.f32.gmra.mrb[0].mxu0 %v4064
        %v4147 = vpop.f32.mrb[0].mxu0
        %v4148 = vadd.f32 0.0, %v4147
        %v4149 = vpop.f32.mrb[0].mxu0
        %4150 = vmatprep.mubr.f32.mxu0 0.0
        %4151 = vmatmul.mubr.f32.gmra.mrb[0].mxu0 %v4067
        %v4152 = vpop.f32.mrb[0].mxu0
        %v4153 = vadd.f32 0.0, %v4152
        %v4154 = vpop.f32.mrb[0].mxu0
        %4155 = vdwg.mxu0
        %v4156 = vadd.f32 %v4040, %v4138
        %v4157 = vadd.f32 %v4041, %v4143
        %v4158 = vadd.f32 %v4042, %v4148
        %v4159 = vadd.f32 %v4043, %v4153
        %s4160 = scalar_lea.vmem %s5, 128
        %v4161 = vld [vmem:[%s4160] sm:$0xff]
        %v4162 = vld [vmem:[%s4160 + $0x8] sm:$0xff]
        %v4163 = vld [vmem:[%s4160 + $0x10] sm:$0xff]
        %v4164 = vld [vmem:[%s4160 + $0x18] sm:$0xff]
        %4165 = vrot.lane.b32.xlu0 %v3703, 64
        %v4166 = vpop.permute.xlu0 %4165
        %4167 = vrot.lane.b32.xlu0 %v3705, 64
        %v4168 = vpop.permute.xlu0 %4167
        %4169 = vrot.lane.b32.xlu0 %v3707, 64
        %v4170 = vpop.permute.xlu0 %4169
        %v4174 = vsel %vm3729, %v4161, 0
        %v4177 = vsel %vm3729, %v4162, 0
        %v4180 = vsel %vm3729, %v4163, 0
        %v4183 = vsel %vm3729, %v4164, 0
        %v4185 = vsel %vm351, %v4170, 0
        %4187 = vmatprep.subr.mxu0 0.0
        %4188 = vmatpush1.msra.mxu0 %v4166
        %4189 = vmatprep.subr.mxu0 0.0
        %4190 = vmatpush1.msra.mxu0 %v4168
        %4191 = vmatprep.subr.mxu0 0.0
        %4192 = vmatpush1.msra.mxu0 %v4185
        %4193 = vmatprep.subr.mxu0 0.0
        %4194 = vmatpush1.msra.mxu0 0.0
        %4195 = vmatprep.subr.mxu0 0.0
        %4196 = vmatpush1.msra.mxu0 0.0
        %4197 = vmatprep.subr.mxu0 0.0
        %4198 = vmatpush1.msra.mxu0 0.0
        %4199 = vmatprep.subr.mxu0 0.0
        %4200 = vmatpush1.msra.mxu0 0.0
        %4201 = vmatprep.subr.mxu0 0.0
        %4202 = vmatpush1.msra.mxu0 0.0
        %4203 = vmatprep.subr.mxu0 0.0
        %4204 = vmatpush1.msra.mxu0 0.0
        %4205 = vmatprep.subr.mxu0 0.0
        %4206 = vmatpush1.msra.mxu0 0.0
        %4207 = vmatprep.subr.mxu0 0.0
        %4208 = vmatpush1.msra.mxu0 0.0
        %4209 = vmatprep.subr.mxu0 0.0
        %4210 = vmatpush1.msra.mxu0 0.0
        %4211 = vmatprep.subr.mxu0 0.0
        %4212 = vmatpush1.msra.mxu0 0.0
        %4213 = vmatprep.subr.mxu0 0.0
        %4214 = vmatpush1.msra.mxu0 0.0
        %4215 = vmatprep.subr.mxu0 0.0
        %4216 = vmatpush1.msra.mxu0 0.0
        %4217 = vmatprep.subr.mxu0 0.0
        %4218 = vmatpush1.msra.mxu0 0.0
        %4219 = vmatprep.subr.mxu0 0.0
        %4220 = vmatpush1.msra.mxu0 0.0
        %4221 = vmatprep.subr.mxu0 0.0
        %4222 = vmatpush1.msra.mxu0 0.0
        %4223 = vmatprep.subr.mxu0 0.0
        %4224 = vmatpush1.msra.mxu0 0.0
        %4225 = vmatprep.subr.mxu0 0.0
        %4226 = vmatpush1.msra.mxu0 0.0
        %4227 = vmatprep.subr.mxu0 0.0
        %4228 = vmatpush1.msra.mxu0 0.0
        %4229 = vmatprep.subr.mxu0 0.0
        %4230 = vmatpush1.msra.mxu0 0.0
        %4231 = vmatprep.subr.mxu0 0.0
        %4232 = vmatpush1.msra.mxu0 0.0
        %4233 = vmatprep.subr.mxu0 0.0
        %4234 = vmatpush1.msra.mxu0 0.0
        %4235 = vmatprep.subr.mxu0 0.0
        %4236 = vmatpush1.msra.mxu0 0.0
        %4237 = vmatprep.subr.mxu0 0.0
        %4238 = vmatpush1.msra.mxu0 0.0
        %4239 = vmatprep.subr.mxu0 0.0
        %4240 = vmatpush1.msra.mxu0 0.0
        %4241 = vmatprep.subr.mxu0 0.0
        %4242 = vmatpush1.msra.mxu0 0.0
        %4243 = vmatprep.subr.mxu0 0.0
        %4244 = vmatpush1.msra.mxu0 0.0
        %4245 = vmatprep.subr.mxu0 0.0
        %4246 = vmatpush1.msra.mxu0 0.0
        %4247 = vmatprep.subr.mxu0 0.0
        %4248 = vmatpush1.msra.mxu0 0.0
        %4249 = vmatprep.subr.mxu0 0.0
        %4250 = vmatpush1.msra.mxu0 0.0
        %4251 = vmatprep.mubr.f32.mxu0 0.0
        %4252 = vmatmul.mubr.f32.gmra.mrb[0].mxu0 %v4174
        %v4253 = vpop.f32.mrb[0].mxu0
        %v4254 = vadd.f32 0.0, %v4253
        %v4255 = vpop.f32.mrb[0].mxu0
        %4256 = vmatprep.mubr.f32.mxu0 0.0
        %4257 = vmatmul.mubr.f32.gmra.mrb[0].mxu0 %v4177
        %v4258 = vpop.f32.mrb[0].mxu0
        %v4259 = vadd.f32 0.0, %v4258
        %v4260 = vpop.f32.mrb[0].mxu0
        %4261 = vmatprep.mubr.f32.mxu0 0.0
        %4262 = vmatmul.mubr.f32.gmra.mrb[0].mxu0 %v4180
        %v4263 = vpop.f32.mrb[0].mxu0
        %v4264 = vadd.f32 0.0, %v4263
        %v4265 = vpop.f32.mrb[0].mxu0
        %4266 = vmatprep.mubr.f32.mxu0 0.0
        %4267 = vmatmul.mubr.f32.gmra.mrb[0].mxu0 %v4183
        %v4268 = vpop.f32.mrb[0].mxu0
        %v4269 = vadd.f32 0.0, %v4268
        %v4270 = vpop.f32.mrb[0].mxu0
        %4271 = vdwg.mxu0
        %v4272 = vadd.f32 %v4156, %v4254
        %v4273 = vadd.f32 %v4157, %v4259
        %v4274 = vadd.f32 %v4158, %v4264
        %v4275 = vadd.f32 %v4159, %v4269
        %s4276 = scalar_lea.vmem %s5, 160
        %v4277 = vld [vmem:[%s4276] sm:$0xff]
        %v4278 = vld [vmem:[%s4276 + $0x8] sm:$0xff]
        %v4279 = vld [vmem:[%s4276 + $0x10] sm:$0xff]
        %v4280 = vld [vmem:[%s4276 + $0x18] sm:$0xff]
        %4281 = vrot.lane.b32.xlu0 %v3703, 56
        %v4282 = vpop.permute.xlu0 %4281
        %4283 = vrot.lane.b32.xlu0 %v3705, 56
        %v4284 = vpop.permute.xlu0 %4283
        %4285 = vrot.lane.b32.xlu0 %v3707, 56
        %v4286 = vpop.permute.xlu0 %4285
        %v4290 = vsel %vm3729, %v4277, 0
        %v4293 = vsel %vm3729, %v4278, 0
        %v4296 = vsel %vm3729, %v4279, 0
        %v4299 = vsel %vm3729, %v4280, 0
        %v4301 = vsel %vm351, %v4286, 0
        %4303 = vmatprep.subr.mxu0 0.0
        %4304 = vmatpush1.msra.mxu0 %v4282
        %4305 = vmatprep.subr.mxu0 0.0
        %4306 = vmatpush1.msra.mxu0 %v4284
        %4307 = vmatprep.subr.mxu0 0.0
        %4308 = vmatpush1.msra.mxu0 %v4301
        %4309 = vmatprep.subr.mxu0 0.0
        %4310 = vmatpush1.msra.mxu0 0.0
        %4311 = vmatprep.subr.mxu0 0.0
        %4312 = vmatpush1.msra.mxu0 0.0
        %4313 = vmatprep.subr.mxu0 0.0
        %4314 = vmatpush1.msra.mxu0 0.0
        %4315 = vmatprep.subr.mxu0 0.0
        %4316 = vmatpush1.msra.mxu0 0.0
        %4317 = vmatprep.subr.mxu0 0.0
        %4318 = vmatpush1.msra.mxu0 0.0
        %4319 = vmatprep.subr.mxu0 0.0
        %4320 = vmatpush1.msra.mxu0 0.0
        %4321 = vmatprep.subr.mxu0 0.0
        %4322 = vmatpush1.msra.mxu0 0.0
        %4323 = vmatprep.subr.mxu0 0.0
        %4324 = vmatpush1.msra.mxu0 0.0
        %4325 = vmatprep.subr.mxu0 0.0
        %4326 = vmatpush1.msra.mxu0 0.0
        %4327 = vmatprep.subr.mxu0 0.0
        %4328 = vmatpush1.msra.mxu0 0.0
        %4329 = vmatprep.subr.mxu0 0.0
        %4330 = vmatpush1.msra.mxu0 0.0
        %4331 = vmatprep.subr.mxu0 0.0
        %4332 = vmatpush1.msra.mxu0 0.0
        %4333 = vmatprep.subr.mxu0 0.0
        %4334 = vmatpush1.msra.mxu0 0.0
        %4335 = vmatprep.subr.mxu0 0.0
        %4336 = vmatpush1.msra.mxu0 0.0
        %4337 = vmatprep.subr.mxu0 0.0
        %4338 = vmatpush1.msra.mxu0 0.0
        %4339 = vmatprep.subr.mxu0 0.0
        %4340 = vmatpush1.msra.mxu0 0.0
        %4341 = vmatprep.subr.mxu0 0.0
        %4342 = vmatpush1.msra.mxu0 0.0
        %4343 = vmatprep.subr.mxu0 0.0
        %4344 = vmatpush1.msra.mxu0 0.0
        %4345 = vmatprep.subr.mxu0 0.0
        %4346 = vmatpush1.msra.mxu0 0.0
        %4347 = vmatprep.subr.mxu0 0.0
        %4348 = vmatpush1.msra.mxu0 0.0
        %4349 = vmatprep.subr.mxu0 0.0
        %4350 = vmatpush1.msra.mxu0 0.0
        %4351 = vmatprep.subr.mxu0 0.0
        %4352 = vmatpush1.msra.mxu0 0.0
        %4353 = vmatprep.subr.mxu0 0.0
        %4354 = vmatpush1.msra.mxu0 0.0
        %4355 = vmatprep.subr.mxu0 0.0
        %4356 = vmatpush1.msra.mxu0 0.0
        %4357 = vmatprep.subr.mxu0 0.0
        %4358 = vmatpush1.msra.mxu0 0.0
        %4359 = vmatprep.subr.mxu0 0.0
        %4360 = vmatpush1.msra.mxu0 0.0
        %4361 = vmatprep.subr.mxu0 0.0
        %4362 = vmatpush1.msra.mxu0 0.0
        %4363 = vmatprep.subr.mxu0 0.0
        %4364 = vmatpush1.msra.mxu0 0.0
        %4365 = vmatprep.subr.mxu0 0.0
        %4366 = vmatpush1.msra.mxu0 0.0
        %4367 = vmatprep.mubr.f32.mxu0 0.0
        %4368 = vmatmul.mubr.f32.gmra.mrb[0].mxu0 %v4290
        %v4369 = vpop.f32.mrb[0].mxu0
        %v4370 = vadd.f32 0.0, %v4369
        %v4371 = vpop.f32.mrb[0].mxu0
        %4372 = vmatprep.mubr.f32.mxu0 0.0
        %4373 = vmatmul.mubr.f32.gmra.mrb[0].mxu0 %v4293
        %v4374 = vpop.f32.mrb[0].mxu0
        %v4375 = vadd.f32 0.0, %v4374
        %v4376 = vpop.f32.mrb[0].mxu0
        %4377 = vmatprep.mubr.f32.mxu0 0.0
        %4378 = vmatmul.mubr.f32.gmra.mrb[0].mxu0 %v4296
        %v4379 = vpop.f32.mrb[0].mxu0
        %v4380 = vadd.f32 0.0, %v4379
        %v4381 = vpop.f32.mrb[0].mxu0
        %4382 = vmatprep.mubr.f32.mxu0 0.0
        %4383 = vmatmul.mubr.f32.gmra.mrb[0].mxu0 %v4299
        %v4384 = vpop.f32.mrb[0].mxu0
        %v4385 = vadd.f32 0.0, %v4384
        %v4386 = vpop.f32.mrb[0].mxu0
        %4387 = vdwg.mxu0
        %v4388 = vadd.f32 %v4272, %v4370
        %v4389 = vadd.f32 %v4273, %v4375
        %v4390 = vadd.f32 %v4274, %v4380
        %v4391 = vadd.f32 %v4275, %v4385
        %s4392 = scalar_lea.vmem %s5, 192
        %v4393 = vld [vmem:[%s4392] sm:$0xff]
        %v4394 = vld [vmem:[%s4392 + $0x8] sm:$0xff]
        %v4395 = vld [vmem:[%s4392 + $0x10] sm:$0xff]
        %v4396 = vld [vmem:[%s4392 + $0x18] sm:$0xff]
        %4397 = vrot.lane.b32.xlu0 %v3703, 48
        %v4398 = vpop.permute.xlu0 %4397
        %4399 = vrot.lane.b32.xlu0 %v3705, 48
        %v4400 = vpop.permute.xlu0 %4399
        %4401 = vrot.lane.b32.xlu0 %v3707, 48
        %v4402 = vpop.permute.xlu0 %4401
        %v4406 = vsel %vm3729, %v4393, 0
        %v4409 = vsel %vm3729, %v4394, 0
        %v4412 = vsel %vm3729, %v4395, 0
        %v4415 = vsel %vm3729, %v4396, 0
        %v4417 = vsel %vm351, %v4402, 0
        %4419 = vmatprep.subr.mxu0 0.0
        %4420 = vmatpush1.msra.mxu0 %v4398
        %4421 = vmatprep.subr.mxu0 0.0
        %4422 = vmatpush1.msra.mxu0 %v4400
        %4423 = vmatprep.subr.mxu0 0.0
        %4424 = vmatpush1.msra.mxu0 %v4417
        %4425 = vmatprep.subr.mxu0 0.0
        %4426 = vmatpush1.msra.mxu0 0.0
        %4427 = vmatprep.subr.mxu0 0.0
        %4428 = vmatpush1.msra.mxu0 0.0
        %4429 = vmatprep.subr.mxu0 0.0
        %4430 = vmatpush1.msra.mxu0 0.0
        %4431 = vmatprep.subr.mxu0 0.0
        %4432 = vmatpush1.msra.mxu0 0.0
        %4433 = vmatprep.subr.mxu0 0.0
        %4434 = vmatpush1.msra.mxu0 0.0
        %4435 = vmatprep.subr.mxu0 0.0
        %4436 = vmatpush1.msra.mxu0 0.0
        %4437 = vmatprep.subr.mxu0 0.0
        %4438 = vmatpush1.msra.mxu0 0.0
        %4439 = vmatprep.subr.mxu0 0.0
        %4440 = vmatpush1.msra.mxu0 0.0
        %4441 = vmatprep.subr.mxu0 0.0
        %4442 = vmatpush1.msra.mxu0 0.0
        %4443 = vmatprep.subr.mxu0 0.0
        %4444 = vmatpush1.msra.mxu0 0.0
        %4445 = vmatprep.subr.mxu0 0.0
        %4446 = vmatpush1.msra.mxu0 0.0
        %4447 = vmatprep.subr.mxu0 0.0
        %4448 = vmatpush1.msra.mxu0 0.0
        %4449 = vmatprep.subr.mxu0 0.0
        %4450 = vmatpush1.msra.mxu0 0.0
        %4451 = vmatprep.subr.mxu0 0.0
        %4452 = vmatpush1.msra.mxu0 0.0
        %4453 = vmatprep.subr.mxu0 0.0
        %4454 = vmatpush1.msra.mxu0 0.0
        %4455 = vmatprep.subr.mxu0 0.0
        %4456 = vmatpush1.msra.mxu0 0.0
        %4457 = vmatprep.subr.mxu0 0.0
        %4458 = vmatpush1.msra.mxu0 0.0
        %4459 = vmatprep.subr.mxu0 0.0
        %4460 = vmatpush1.msra.mxu0 0.0
        %4461 = vmatprep.subr.mxu0 0.0
        %4462 = vmatpush1.msra.mxu0 0.0
        %4463 = vmatprep.subr.mxu0 0.0
        %4464 = vmatpush1.msra.mxu0 0.0
        %4465 = vmatprep.subr.mxu0 0.0
        %4466 = vmatpush1.msra.mxu0 0.0
        %4467 = vmatprep.subr.mxu0 0.0
        %4468 = vmatpush1.msra.mxu0 0.0
        %4469 = vmatprep.subr.mxu0 0.0
        %4470 = vmatpush1.msra.mxu0 0.0
        %4471 = vmatprep.subr.mxu0 0.0
        %4472 = vmatpush1.msra.mxu0 0.0
        %4473 = vmatprep.subr.mxu0 0.0
        %4474 = vmatpush1.msra.mxu0 0.0
        %4475 = vmatprep.subr.mxu0 0.0
        %4476 = vmatpush1.msra.mxu0 0.0
        %4477 = vmatprep.subr.mxu0 0.0
        %4478 = vmatpush1.msra.mxu0 0.0
        %4479 = vmatprep.subr.mxu0 0.0
        %4480 = vmatpush1.msra.mxu0 0.0
        %4481 = vmatprep.subr.mxu0 0.0
        %4482 = vmatpush1.msra.mxu0 0.0
        %4483 = vmatprep.mubr.f32.mxu0 0.0
        %4484 = vmatmul.mubr.f32.gmra.mrb[0].mxu0 %v4406
        %v4485 = vpop.f32.mrb[0].mxu0
        %v4486 = vadd.f32 0.0, %v4485
        %v4487 = vpop.f32.mrb[0].mxu0
        %4488 = vmatprep.mubr.f32.mxu0 0.0
        %4489 = vmatmul.mubr.f32.gmra.mrb[0].mxu0 %v4409
        %v4490 = vpop.f32.mrb[0].mxu0
        %v4491 = vadd.f32 0.0, %v4490
        %v4492 = vpop.f32.mrb[0].mxu0
        %4493 = vmatprep.mubr.f32.mxu0 0.0
        %4494 = vmatmul.mubr.f32.gmra.mrb[0].mxu0 %v4412
        %v4495 = vpop.f32.mrb[0].mxu0
        %v4496 = vadd.f32 0.0, %v4495
        %v4497 = vpop.f32.mrb[0].mxu0
        %4498 = vmatprep.mubr.f32.mxu0 0.0
        %4499 = vmatmul.mubr.f32.gmra.mrb[0].mxu0 %v4415
        %v4500 = vpop.f32.mrb[0].mxu0
        %v4501 = vadd.f32 0.0, %v4500
        %v4502 = vpop.f32.mrb[0].mxu0
        %4503 = vdwg.mxu0
        %v4504 = vadd.f32 %v4388, %v4486
        %v4505 = vadd.f32 %v4389, %v4491
        %v4506 = vadd.f32 %v4390, %v4496
        %v4507 = vadd.f32 %v4391, %v4501
        %s4508 = scalar_lea.vmem %s5, 224
        %v4509 = vld [vmem:[%s4508] sm:$0xff]
        %v4510 = vld [vmem:[%s4508 + $0x8] sm:$0xff]
        %v4511 = vld [vmem:[%s4508 + $0x10] sm:$0xff]
        %v4512 = vld [vmem:[%s4508 + $0x18] sm:$0xff]
        %4513 = vrot.lane.b32.xlu0 %v3703, 40
        %v4514 = vpop.permute.xlu0 %4513
        %4515 = vrot.lane.b32.xlu0 %v3705, 40
        %v4516 = vpop.permute.xlu0 %4515
        %4517 = vrot.lane.b32.xlu0 %v3707, 40
        %v4518 = vpop.permute.xlu0 %4517
        %v4522 = vsel %vm3729, %v4509, 0
        %v4525 = vsel %vm3729, %v4510, 0
        %v4528 = vsel %vm3729, %v4511, 0
        %v4531 = vsel %vm3729, %v4512, 0
        %v4533 = vsel %vm351, %v4518, 0
        %4535 = vmatprep.subr.mxu0 0.0
        %4536 = vmatpush1.msra.mxu0 %v4514
        %4537 = vmatprep.subr.mxu0 0.0
        %4538 = vmatpush1.msra.mxu0 %v4516
        %4539 = vmatprep.subr.mxu0 0.0
        %4540 = vmatpush1.msra.mxu0 %v4533
        %4541 = vmatprep.subr.mxu0 0.0
        %4542 = vmatpush1.msra.mxu0 0.0
        %4543 = vmatprep.subr.mxu0 0.0
        %4544 = vmatpush1.msra.mxu0 0.0
        %4545 = vmatprep.subr.mxu0 0.0
        %4546 = vmatpush1.msra.mxu0 0.0
        %4547 = vmatprep.subr.mxu0 0.0
        %4548 = vmatpush1.msra.mxu0 0.0
        %4549 = vmatprep.subr.mxu0 0.0
        %4550 = vmatpush1.msra.mxu0 0.0
        %4551 = vmatprep.subr.mxu0 0.0
        %4552 = vmatpush1.msra.mxu0 0.0
        %4553 = vmatprep.subr.mxu0 0.0
        %4554 = vmatpush1.msra.mxu0 0.0
        %4555 = vmatprep.subr.mxu0 0.0
        %4556 = vmatpush1.msra.mxu0 0.0
        %4557 = vmatprep.subr.mxu0 0.0
        %4558 = vmatpush1.msra.mxu0 0.0
        %4559 = vmatprep.subr.mxu0 0.0
        %4560 = vmatpush1.msra.mxu0 0.0
        %4561 = vmatprep.subr.mxu0 0.0
        %4562 = vmatpush1.msra.mxu0 0.0
        %4563 = vmatprep.subr.mxu0 0.0
        %4564 = vmatpush1.msra.mxu0 0.0
        %4565 = vmatprep.subr.mxu0 0.0
        %4566 = vmatpush1.msra.mxu0 0.0
        %4567 = vmatprep.subr.mxu0 0.0
        %4568 = vmatpush1.msra.mxu0 0.0
        %4569 = vmatprep.subr.mxu0 0.0
        %4570 = vmatpush1.msra.mxu0 0.0
        %4571 = vmatprep.subr.mxu0 0.0
        %4572 = vmatpush1.msra.mxu0 0.0
        %4573 = vmatprep.subr.mxu0 0.0
        %4574 = vmatpush1.msra.mxu0 0.0
        %4575 = vmatprep.subr.mxu0 0.0
        %4576 = vmatpush1.msra.mxu0 0.0
        %4577 = vmatprep.subr.mxu0 0.0
        %4578 = vmatpush1.msra.mxu0 0.0
        %4579 = vmatprep.subr.mxu0 0.0
        %4580 = vmatpush1.msra.mxu0 0.0
        %4581 = vmatprep.subr.mxu0 0.0
        %4582 = vmatpush1.msra.mxu0 0.0
        %4583 = vmatprep.subr.mxu0 0.0
        %4584 = vmatpush1.msra.mxu0 0.0
        %4585 = vmatprep.subr.mxu0 0.0
        %4586 = vmatpush1.msra.mxu0 0.0
        %4587 = vmatprep.subr.mxu0 0.0
        %4588 = vmatpush1.msra.mxu0 0.0
        %4589 = vmatprep.subr.mxu0 0.0
        %4590 = vmatpush1.msra.mxu0 0.0
        %4591 = vmatprep.subr.mxu0 0.0
        %4592 = vmatpush1.msra.mxu0 0.0
        %4593 = vmatprep.subr.mxu0 0.0
        %4594 = vmatpush1.msra.mxu0 0.0
        %4595 = vmatprep.subr.mxu0 0.0
        %4596 = vmatpush1.msra.mxu0 0.0
        %4597 = vmatprep.subr.mxu0 0.0
        %4598 = vmatpush1.msra.mxu0 0.0
        %4599 = vmatprep.mubr.f32.mxu0 0.0
        %4600 = vmatmul.mubr.f32.gmra.mrb[0].mxu0 %v4522
        %v4601 = vpop.f32.mrb[0].mxu0
        %v4602 = vadd.f32 0.0, %v4601
        %v4603 = vpop.f32.mrb[0].mxu0
        %4604 = vmatprep.mubr.f32.mxu0 0.0
        %4605 = vmatmul.mubr.f32.gmra.mrb[0].mxu0 %v4525
        %v4606 = vpop.f32.mrb[0].mxu0
        %v4607 = vadd.f32 0.0, %v4606
        %v4608 = vpop.f32.mrb[0].mxu0
        %4609 = vmatprep.mubr.f32.mxu0 0.0
        %4610 = vmatmul.mubr.f32.gmra.mrb[0].mxu0 %v4528
        %v4611 = vpop.f32.mrb[0].mxu0
        %v4612 = vadd.f32 0.0, %v4611
        %v4613 = vpop.f32.mrb[0].mxu0
        %4614 = vmatprep.mubr.f32.mxu0 0.0
        %4615 = vmatmul.mubr.f32.gmra.mrb[0].mxu0 %v4531
        %v4616 = vpop.f32.mrb[0].mxu0
        %v4617 = vadd.f32 0.0, %v4616
        %v4618 = vpop.f32.mrb[0].mxu0
        %4619 = vdwg.mxu0
        %v4620 = vadd.f32 %v4504, %v4602
        %v4621 = vadd.f32 %v4505, %v4607
        %v4622 = vadd.f32 %v4506, %v4612
        %v4623 = vadd.f32 %v4507, %v4617
        %s4624 = scalar_lea.vmem %s5, 256
        %v4625 = vld [vmem:[%s4624] sm:$0xff]
        %v4626 = vld [vmem:[%s4624 + $0x8] sm:$0xff]
        %v4627 = vld [vmem:[%s4624 + $0x10] sm:$0xff]
        %v4628 = vld [vmem:[%s4624 + $0x18] sm:$0xff]
        %v4630 = vsel %vm3729, %v4625, 0
        %v4633 = vsel %vm3729, %v4626, 0
        %v4636 = vsel %vm3729, %v4627, 0
        %v4639 = vsel %vm3729, %v4628, 0
        %v4642 = vsel %vm351, %v3708, 0
        %4644 = vmatprep.subr.mxu0 0.0
        %4645 = vmatpush1.msra.mxu0 %v3704
        %4646 = vmatprep.subr.mxu0 0.0
        %4647 = vmatpush1.msra.mxu0 %v3706
        %4648 = vmatprep.subr.mxu0 0.0
        %4649 = vmatpush1.msra.mxu0 %v4642
        %4650 = vmatprep.subr.mxu0 0.0
        %4651 = vmatpush1.msra.mxu0 0.0
        %4652 = vmatprep.subr.mxu0 0.0
        %4653 = vmatpush1.msra.mxu0 0.0
        %4654 = vmatprep.subr.mxu0 0.0
        %4655 = vmatpush1.msra.mxu0 0.0
        %4656 = vmatprep.subr.mxu0 0.0
        %4657 = vmatpush1.msra.mxu0 0.0
        %4658 = vmatprep.subr.mxu0 0.0
        %4659 = vmatpush1.msra.mxu0 0.0
        %4660 = vmatprep.subr.mxu0 0.0
        %4661 = vmatpush1.msra.mxu0 0.0
        %4662 = vmatprep.subr.mxu0 0.0
        %4663 = vmatpush1.msra.mxu0 0.0
        %4664 = vmatprep.subr.mxu0 0.0
        %4665 = vmatpush1.msra.mxu0 0.0
        %4666 = vmatprep.subr.mxu0 0.0
        %4667 = vmatpush1.msra.mxu0 0.0
        %4668 = vmatprep.subr.mxu0 0.0
        %4669 = vmatpush1.msra.mxu0 0.0
        %4670 = vmatprep.subr.mxu0 0.0
        %4671 = vmatpush1.msra.mxu0 0.0
        %4672 = vmatprep.subr.mxu0 0.0
        %4673 = vmatpush1.msra.mxu0 0.0
        %4674 = vmatprep.subr.mxu0 0.0
        %4675 = vmatpush1.msra.mxu0 0.0
        %4676 = vmatprep.subr.mxu0 0.0
        %4677 = vmatpush1.msra.mxu0 0.0
        %4678 = vmatprep.subr.mxu0 0.0
        %4679 = vmatpush1.msra.mxu0 0.0
        %4680 = vmatprep.subr.mxu0 0.0
        %4681 = vmatpush1.msra.mxu0 0.0
        %4682 = vmatprep.subr.mxu0 0.0
        %4683 = vmatpush1.msra.mxu0 0.0
        %4684 = vmatprep.subr.mxu0 0.0
        %4685 = vmatpush1.msra.mxu0 0.0
        %4686 = vmatprep.subr.mxu0 0.0
        %4687 = vmatpush1.msra.mxu0 0.0
        %4688 = vmatprep.subr.mxu0 0.0
        %4689 = vmatpush1.msra.mxu0 0.0
        %4690 = vmatprep.subr.mxu0 0.0
        %4691 = vmatpush1.msra.mxu0 0.0
        %4692 = vmatprep.subr.mxu0 0.0
        %4693 = vmatpush1.msra.mxu0 0.0
        %4694 = vmatprep.subr.mxu0 0.0
        %4695 = vmatpush1.msra.mxu0 0.0
        %4696 = vmatprep.subr.mxu0 0.0
        %4697 = vmatpush1.msra.mxu0 0.0
        %4698 = vmatprep.subr.mxu0 0.0
        %4699 = vmatpush1.msra.mxu0 0.0
        %4700 = vmatprep.subr.mxu0 0.0
        %4701 = vmatpush1.msra.mxu0 0.0
        %4702 = vmatprep.subr.mxu0 0.0
        %4703 = vmatpush1.msra.mxu0 0.0
        %4704 = vmatprep.subr.mxu0 0.0
        %4705 = vmatpush1.msra.mxu0 0.0
        %4706 = vmatprep.subr.mxu0 0.0
        %4707 = vmatpush1.msra.mxu0 0.0
        %4708 = vmatprep.mubr.f32.mxu0 0.0
        %4709 = vmatmul.mubr.f32.gmra.mrb[0].mxu0 %v4630
        %v4710 = vpop.f32.mrb[0].mxu0
        %v4711 = vadd.f32 0.0, %v4710
        %v4712 = vpop.f32.mrb[0].mxu0
        %4713 = vmatprep.mubr.f32.mxu0 0.0
        %4714 = vmatmul.mubr.f32.gmra.mrb[0].mxu0 %v4633
        %v4715 = vpop.f32.mrb[0].mxu0
        %v4716 = vadd.f32 0.0, %v4715
        %v4717 = vpop.f32.mrb[0].mxu0
        %4718 = vmatprep.mubr.f32.mxu0 0.0
        %4719 = vmatmul.mubr.f32.gmra.mrb[0].mxu0 %v4636
        %v4720 = vpop.f32.mrb[0].mxu0
        %v4721 = vadd.f32 0.0, %v4720
        %v4722 = vpop.f32.mrb[0].mxu0
        %4723 = vmatprep.mubr.f32.mxu0 0.0
        %4724 = vmatmul.mubr.f32.gmra.mrb[0].mxu0 %v4639
        %v4725 = vpop.f32.mrb[0].mxu0
        %v4726 = vadd.f32 0.0, %v4725
        %v4727 = vpop.f32.mrb[0].mxu0
        %4728 = vdwg.mxu0
        %v4729 = vadd.f32 %v4620, %v4711
        %v4730 = vadd.f32 %v4621, %v4716
        %v4731 = vadd.f32 %v4622, %v4721
        %v4732 = vadd.f32 %v4623, %v4726
        %s4733 = scalar_lea.vmem %s5, 288
        %v4734 = vld [vmem:[%s4733] sm:$0xff]
        %v4735 = vld [vmem:[%s4733 + $0x8] sm:$0xff]
        %v4736 = vld [vmem:[%s4733 + $0x10] sm:$0xff]
        %v4737 = vld [vmem:[%s4733 + $0x18] sm:$0xff]
        %4740 = vrot.lane.b32.xlu0 %v3704, 120
        %v4741 = vpop.permute.xlu0 %4740
        %4742 = vrot.lane.b32.xlu0 %v3706, 120
        %v4743 = vpop.permute.xlu0 %4742
        %4744 = vrot.lane.b32.xlu0 %v3708, 120
        %v4745 = vpop.permute.xlu0 %4744
        %v4749 = vsel %vm3729, %v4734, 0
        %v4752 = vsel %vm3729, %v4735, 0
        %v4755 = vsel %vm3729, %v4736, 0
        %v4758 = vsel %vm3729, %v4737, 0
        %v4760 = vsel %vm351, %v4745, 0
        %4762 = vmatprep.subr.mxu0 0.0
        %4763 = vmatpush1.msra.mxu0 %v4741
        %4764 = vmatprep.subr.mxu0 0.0
        %4765 = vmatpush1.msra.mxu0 %v4743
        %4766 = vmatprep.subr.mxu0 0.0
        %4767 = vmatpush1.msra.mxu0 %v4760
        %4768 = vmatprep.subr.mxu0 0.0
        %4769 = vmatpush1.msra.mxu0 0.0
        %4770 = vmatprep.subr.mxu0 0.0
        %4771 = vmatpush1.msra.mxu0 0.0
        %4772 = vmatprep.subr.mxu0 0.0
        %4773 = vmatpush1.msra.mxu0 0.0
        %4774 = vmatprep.subr.mxu0 0.0
        %4775 = vmatpush1.msra.mxu0 0.0
        %4776 = vmatprep.subr.mxu0 0.0
        %4777 = vmatpush1.msra.mxu0 0.0
        %4778 = vmatprep.subr.mxu0 0.0
        %4779 = vmatpush1.msra.mxu0 0.0
        %4780 = vmatprep.subr.mxu0 0.0
        %4781 = vmatpush1.msra.mxu0 0.0
        %4782 = vmatprep.subr.mxu0 0.0
        %4783 = vmatpush1.msra.mxu0 0.0
        %4784 = vmatprep.subr.mxu0 0.0
        %4785 = vmatpush1.msra.mxu0 0.0
        %4786 = vmatprep.subr.mxu0 0.0
        %4787 = vmatpush1.msra.mxu0 0.0
        %4788 = vmatprep.subr.mxu0 0.0
        %4789 = vmatpush1.msra.mxu0 0.0
        %4790 = vmatprep.subr.mxu0 0.0
        %4791 = vmatpush1.msra.mxu0 0.0
        %4792 = vmatprep.subr.mxu0 0.0
        %4793 = vmatpush1.msra.mxu0 0.0
        %4794 = vmatprep.subr.mxu0 0.0
        %4795 = vmatpush1.msra.mxu0 0.0
        %4796 = vmatprep.subr.mxu0 0.0
        %4797 = vmatpush1.msra.mxu0 0.0
        %4798 = vmatprep.subr.mxu0 0.0
        %4799 = vmatpush1.msra.mxu0 0.0
        %4800 = vmatprep.subr.mxu0 0.0
        %4801 = vmatpush1.msra.mxu0 0.0
        %4802 = vmatprep.subr.mxu0 0.0
        %4803 = vmatpush1.msra.mxu0 0.0
        %4804 = vmatprep.subr.mxu0 0.0
        %4805 = vmatpush1.msra.mxu0 0.0
        %4806 = vmatprep.subr.mxu0 0.0
        %4807 = vmatpush1.msra.mxu0 0.0
        %4808 = vmatprep.subr.mxu0 0.0
        %4809 = vmatpush1.msra.mxu0 0.0
        %4810 = vmatprep.subr.mxu0 0.0
        %4811 = vmatpush1.msra.mxu0 0.0
        %4812 = vmatprep.subr.mxu0 0.0
        %4813 = vmatpush1.msra.mxu0 0.0
        %4814 = vmatprep.subr.mxu0 0.0
        %4815 = vmatpush1.msra.mxu0 0.0
        %4816 = vmatprep.subr.mxu0 0.0
        %4817 = vmatpush1.msra.mxu0 0.0
        %4818 = vmatprep.subr.mxu0 0.0
        %4819 = vmatpush1.msra.mxu0 0.0
        %4820 = vmatprep.subr.mxu0 0.0
        %4821 = vmatpush1.msra.mxu0 0.0
        %4822 = vmatprep.subr.mxu0 0.0
        %4823 = vmatpush1.msra.mxu0 0.0
        %4824 = vmatprep.subr.mxu0 0.0
        %4825 = vmatpush1.msra.mxu0 0.0
        %4826 = vmatprep.mubr.f32.mxu0 0.0
        %4827 = vmatmul.mubr.f32.gmra.mrb[0].mxu0 %v4749
        %v4828 = vpop.f32.mrb[0].mxu0
        %v4829 = vadd.f32 0.0, %v4828
        %v4830 = vpop.f32.mrb[0].mxu0
        %4831 = vmatprep.mubr.f32.mxu0 0.0
        %4832 = vmatmul.mubr.f32.gmra.mrb[0].mxu0 %v4752
        %v4833 = vpop.f32.mrb[0].mxu0
        %v4834 = vadd.f32 0.0, %v4833
        %v4835 = vpop.f32.mrb[0].mxu0
        %4836 = vmatprep.mubr.f32.mxu0 0.0
        %4837 = vmatmul.mubr.f32.gmra.mrb[0].mxu0 %v4755
        %v4838 = vpop.f32.mrb[0].mxu0
        %v4839 = vadd.f32 0.0, %v4838
        %v4840 = vpop.f32.mrb[0].mxu0
        %4841 = vmatprep.mubr.f32.mxu0 0.0
        %4842 = vmatmul.mubr.f32.gmra.mrb[0].mxu0 %v4758
        %v4843 = vpop.f32.mrb[0].mxu0
        %v4844 = vadd.f32 0.0, %v4843
        %v4845 = vpop.f32.mrb[0].mxu0
        %4846 = vdwg.mxu0
        %v4847 = vadd.f32 %v4729, %v4829
        %v4848 = vadd.f32 %v4730, %v4834
        %v4849 = vadd.f32 %v4731, %v4839
        %v4850 = vadd.f32 %v4732, %v4844
        %s4851 = scalar_lea.vmem %s5, 320
        %v4852 = vld [vmem:[%s4851] sm:$0xff]
        %v4853 = vld [vmem:[%s4851 + $0x8] sm:$0xff]
        %v4854 = vld [vmem:[%s4851 + $0x10] sm:$0xff]
        %v4855 = vld [vmem:[%s4851 + $0x18] sm:$0xff]
        %4856 = vrot.lane.b32.xlu0 %v3704, 112
        %v4857 = vpop.permute.xlu0 %4856
        %4858 = vrot.lane.b32.xlu0 %v3706, 112
        %v4859 = vpop.permute.xlu0 %4858
        %4860 = vrot.lane.b32.xlu0 %v3708, 112
        %v4861 = vpop.permute.xlu0 %4860
        %v4865 = vsel %vm3729, %v4852, 0
        %v4868 = vsel %vm3729, %v4853, 0
        %v4871 = vsel %vm3729, %v4854, 0
        %v4874 = vsel %vm3729, %v4855, 0
        %v4876 = vsel %vm351, %v4861, 0
        %4878 = vmatprep.subr.mxu0 0.0
        %4879 = vmatpush1.msra.mxu0 %v4857
        %4880 = vmatprep.subr.mxu0 0.0
        %4881 = vmatpush1.msra.mxu0 %v4859
        %4882 = vmatprep.subr.mxu0 0.0
        %4883 = vmatpush1.msra.mxu0 %v4876
        %4884 = vmatprep.subr.mxu0 0.0
        %4885 = vmatpush1.msra.mxu0 0.0
        %4886 = vmatprep.subr.mxu0 0.0
        %4887 = vmatpush1.msra.mxu0 0.0
        %4888 = vmatprep.subr.mxu0 0.0
        %4889 = vmatpush1.msra.mxu0 0.0
        %4890 = vmatprep.subr.mxu0 0.0
        %4891 = vmatpush1.msra.mxu0 0.0
        %4892 = vmatprep.subr.mxu0 0.0
        %4893 = vmatpush1.msra.mxu0 0.0
        %4894 = vmatprep.subr.mxu0 0.0
        %4895 = vmatpush1.msra.mxu0 0.0
        %4896 = vmatprep.subr.mxu0 0.0
        %4897 = vmatpush1.msra.mxu0 0.0
        %4898 = vmatprep.subr.mxu0 0.0
        %4899 = vmatpush1.msra.mxu0 0.0
        %4900 = vmatprep.subr.mxu0 0.0
        %4901 = vmatpush1.msra.mxu0 0.0
        %4902 = vmatprep.subr.mxu0 0.0
        %4903 = vmatpush1.msra.mxu0 0.0
        %4904 = vmatprep.subr.mxu0 0.0
        %4905 = vmatpush1.msra.mxu0 0.0
        %4906 = vmatprep.subr.mxu0 0.0
        %4907 = vmatpush1.msra.mxu0 0.0
        %4908 = vmatprep.subr.mxu0 0.0
        %4909 = vmatpush1.msra.mxu0 0.0
        %4910 = vmatprep.subr.mxu0 0.0
        %4911 = vmatpush1.msra.mxu0 0.0
        %4912 = vmatprep.subr.mxu0 0.0
        %4913 = vmatpush1.msra.mxu0 0.0
        %4914 = vmatprep.subr.mxu0 0.0
        %4915 = vmatpush1.msra.mxu0 0.0
        %4916 = vmatprep.subr.mxu0 0.0
        %4917 = vmatpush1.msra.mxu0 0.0
        %4918 = vmatprep.subr.mxu0 0.0
        %4919 = vmatpush1.msra.mxu0 0.0
        %4920 = vmatprep.subr.mxu0 0.0
        %4921 = vmatpush1.msra.mxu0 0.0
        %4922 = vmatprep.subr.mxu0 0.0
        %4923 = vmatpush1.msra.mxu0 0.0
        %4924 = vmatprep.subr.mxu0 0.0
        %4925 = vmatpush1.msra.mxu0 0.0
        %4926 = vmatprep.subr.mxu0 0.0
        %4927 = vmatpush1.msra.mxu0 0.0
        %4928 = vmatprep.subr.mxu0 0.0
        %4929 = vmatpush1.msra.mxu0 0.0
        %4930 = vmatprep.subr.mxu0 0.0
        %4931 = vmatpush1.msra.mxu0 0.0
        %4932 = vmatprep.subr.mxu0 0.0
        %4933 = vmatpush1.msra.mxu0 0.0
        %4934 = vmatprep.subr.mxu0 0.0
        %4935 = vmatpush1.msra.mxu0 0.0
        %4936 = vmatprep.subr.mxu0 0.0
        %4937 = vmatpush1.msra.mxu0 0.0
        %4938 = vmatprep.subr.mxu0 0.0
        %4939 = vmatpush1.msra.mxu0 0.0
        %4940 = vmatprep.subr.mxu0 0.0
        %4941 = vmatpush1.msra.mxu0 0.0
        %4942 = vmatprep.mubr.f32.mxu0 0.0
        %4943 = vmatmul.mubr.f32.gmra.mrb[0].mxu0 %v4865
        %v4944 = vpop.f32.mrb[0].mxu0
        %v4945 = vadd.f32 0.0, %v4944
        %v4946 = vpop.f32.mrb[0].mxu0
        %4947 = vmatprep.mubr.f32.mxu0 0.0
        %4948 = vmatmul.mubr.f32.gmra.mrb[0].mxu0 %v4868
        %v4949 = vpop.f32.mrb[0].mxu0
        %v4950 = vadd.f32 0.0, %v4949
        %v4951 = vpop.f32.mrb[0].mxu0
        %4952 = vmatprep.mubr.f32.mxu0 0.0
        %4953 = vmatmul.mubr.f32.gmra.mrb[0].mxu0 %v4871
        %v4954 = vpop.f32.mrb[0].mxu0
        %v4955 = vadd.f32 0.0, %v4954
        %v4956 = vpop.f32.mrb[0].mxu0
        %4957 = vmatprep.mubr.f32.mxu0 0.0
        %4958 = vmatmul.mubr.f32.gmra.mrb[0].mxu0 %v4874
        %v4959 = vpop.f32.mrb[0].mxu0
        %v4960 = vadd.f32 0.0, %v4959
        %v4961 = vpop.f32.mrb[0].mxu0
        %4962 = vdwg.mxu0
        %v4963 = vadd.f32 %v4847, %v4945
        %v4964 = vadd.f32 %v4848, %v4950
        %v4965 = vadd.f32 %v4849, %v4955
        %v4966 = vadd.f32 %v4850, %v4960
        %s4967 = scalar_lea.vmem %s5, 352
        %v4968 = vld [vmem:[%s4967] sm:$0xff]
        %v4969 = vld [vmem:[%s4967 + $0x8] sm:$0xff]
        %v4970 = vld [vmem:[%s4967 + $0x10] sm:$0xff]
        %v4971 = vld [vmem:[%s4967 + $0x18] sm:$0xff]
        %4972 = vrot.lane.b32.xlu0 %v3704, 104
        %v4973 = vpop.permute.xlu0 %4972
        %4974 = vrot.lane.b32.xlu0 %v3706, 104
        %v4975 = vpop.permute.xlu0 %4974
        %4976 = vrot.lane.b32.xlu0 %v3708, 104
        %v4977 = vpop.permute.xlu0 %4976
        %v4981 = vsel %vm3729, %v4968, 0
        %v4984 = vsel %vm3729, %v4969, 0
        %v4987 = vsel %vm3729, %v4970, 0
        %v4990 = vsel %vm3729, %v4971, 0
        %v4992 = vsel %vm351, %v4977, 0
        %4994 = vmatprep.subr.mxu0 0.0
        %4995 = vmatpush1.msra.mxu0 %v4973
        %4996 = vmatprep.subr.mxu0 0.0
        %4997 = vmatpush1.msra.mxu0 %v4975
        %4998 = vmatprep.subr.mxu0 0.0
        %4999 = vmatpush1.msra.mxu0 %v4992
        %5000 = vmatprep.subr.mxu0 0.0
        %5001 = vmatpush1.msra.mxu0 0.0
        %5002 = vmatprep.subr.mxu0 0.0
        %5003 = vmatpush1.msra.mxu0 0.0
        %5004 = vmatprep.subr.mxu0 0.0
        %5005 = vmatpush1.msra.mxu0 0.0
        %5006 = vmatprep.subr.mxu0 0.0
        %5007 = vmatpush1.msra.mxu0 0.0
        %5008 = vmatprep.subr.mxu0 0.0
        %5009 = vmatpush1.msra.mxu0 0.0
        %5010 = vmatprep.subr.mxu0 0.0
        %5011 = vmatpush1.msra.mxu0 0.0
        %5012 = vmatprep.subr.mxu0 0.0
        %5013 = vmatpush1.msra.mxu0 0.0
        %5014 = vmatprep.subr.mxu0 0.0
        %5015 = vmatpush1.msra.mxu0 0.0
        %5016 = vmatprep.subr.mxu0 0.0
        %5017 = vmatpush1.msra.mxu0 0.0
        %5018 = vmatprep.subr.mxu0 0.0
        %5019 = vmatpush1.msra.mxu0 0.0
        %5020 = vmatprep.subr.mxu0 0.0
        %5021 = vmatpush1.msra.mxu0 0.0
        %5022 = vmatprep.subr.mxu0 0.0
        %5023 = vmatpush1.msra.mxu0 0.0
        %5024 = vmatprep.subr.mxu0 0.0
        %5025 = vmatpush1.msra.mxu0 0.0
        %5026 = vmatprep.subr.mxu0 0.0
        %5027 = vmatpush1.msra.mxu0 0.0
        %5028 = vmatprep.subr.mxu0 0.0
        %5029 = vmatpush1.msra.mxu0 0.0
        %5030 = vmatprep.subr.mxu0 0.0
        %5031 = vmatpush1.msra.mxu0 0.0
        %5032 = vmatprep.subr.mxu0 0.0
        %5033 = vmatpush1.msra.mxu0 0.0
        %5034 = vmatprep.subr.mxu0 0.0
        %5035 = vmatpush1.msra.mxu0 0.0
        %5036 = vmatprep.subr.mxu0 0.0
        %5037 = vmatpush1.msra.mxu0 0.0
        %5038 = vmatprep.subr.mxu0 0.0
        %5039 = vmatpush1.msra.mxu0 0.0
        %5040 = vmatprep.subr.mxu0 0.0
        %5041 = vmatpush1.msra.mxu0 0.0
        %5042 = vmatprep.subr.mxu0 0.0
        %5043 = vmatpush1.msra.mxu0 0.0
        %5044 = vmatprep.subr.mxu0 0.0
        %5045 = vmatpush1.msra.mxu0 0.0
        %5046 = vmatprep.subr.mxu0 0.0
        %5047 = vmatpush1.msra.mxu0 0.0
        %5048 = vmatprep.subr.mxu0 0.0
        %5049 = vmatpush1.msra.mxu0 0.0
        %5050 = vmatprep.subr.mxu0 0.0
        %5051 = vmatpush1.msra.mxu0 0.0
        %5052 = vmatprep.subr.mxu0 0.0
        %5053 = vmatpush1.msra.mxu0 0.0
        %5054 = vmatprep.subr.mxu0 0.0
        %5055 = vmatpush1.msra.mxu0 0.0
        %5056 = vmatprep.subr.mxu0 0.0
        %5057 = vmatpush1.msra.mxu0 0.0
        %5058 = vmatprep.mubr.f32.mxu0 0.0
        %5059 = vmatmul.mubr.f32.gmra.mrb[0].mxu0 %v4981
        %v5060 = vpop.f32.mrb[0].mxu0
        %v5061 = vadd.f32 0.0, %v5060
        %v5062 = vpop.f32.mrb[0].mxu0
        %5063 = vmatprep.mubr.f32.mxu0 0.0
        %5064 = vmatmul.mubr.f32.gmra.mrb[0].mxu0 %v4984
        %v5065 = vpop.f32.mrb[0].mxu0
        %v5066 = vadd.f32 0.0, %v5065
        %v5067 = vpop.f32.mrb[0].mxu0
        %5068 = vmatprep.mubr.f32.mxu0 0.0
        %5069 = vmatmul.mubr.f32.gmra.mrb[0].mxu0 %v4987
        %v5070 = vpop.f32.mrb[0].mxu0
        %v5071 = vadd.f32 0.0, %v5070
        %v5072 = vpop.f32.mrb[0].mxu0
        %5073 = vmatprep.mubr.f32.mxu0 0.0
        %5074 = vmatmul.mubr.f32.gmra.mrb[0].mxu0 %v4990
        %v5075 = vpop.f32.mrb[0].mxu0
        %v5076 = vadd.f32 0.0, %v5075
        %v5077 = vpop.f32.mrb[0].mxu0
        %5078 = vdwg.mxu0
        %v5079 = vadd.f32 %v4963, %v5061
        %v5080 = vadd.f32 %v4964, %v5066
        %v5081 = vadd.f32 %v4965, %v5071
        %v5082 = vadd.f32 %v4966, %v5076
        %s5083 = scalar_lea.vmem %s5, 384
        %v5084 = vld [vmem:[%s5083] sm:$0xff]
        %v5085 = vld [vmem:[%s5083 + $0x8] sm:$0xff]
        %v5086 = vld [vmem:[%s5083 + $0x10] sm:$0xff]
        %v5087 = vld [vmem:[%s5083 + $0x18] sm:$0xff]
        %5088 = vrot.lane.b32.xlu0 %v3704, 64
        %v5089 = vpop.permute.xlu0 %5088
        %5090 = vrot.lane.b32.xlu0 %v3706, 64
        %v5091 = vpop.permute.xlu0 %5090
        %5092 = vrot.lane.b32.xlu0 %v3708, 64
        %v5093 = vpop.permute.xlu0 %5092
        %v5097 = vsel %vm3729, %v5084, 0
        %v5100 = vsel %vm3729, %v5085, 0
        %v5103 = vsel %vm3729, %v5086, 0
        %v5106 = vsel %vm3729, %v5087, 0
        %v5108 = vsel %vm351, %v5093, 0
        %5110 = vmatprep.subr.mxu0 0.0
        %5111 = vmatpush1.msra.mxu0 %v5089
        %5112 = vmatprep.subr.mxu0 0.0
        %5113 = vmatpush1.msra.mxu0 %v5091
        %5114 = vmatprep.subr.mxu0 0.0
        %5115 = vmatpush1.msra.mxu0 %v5108
        %5116 = vmatprep.subr.mxu0 0.0
        %5117 = vmatpush1.msra.mxu0 0.0
        %5118 = vmatprep.subr.mxu0 0.0
        %5119 = vmatpush1.msra.mxu0 0.0
        %5120 = vmatprep.subr.mxu0 0.0
        %5121 = vmatpush1.msra.mxu0 0.0
        %5122 = vmatprep.subr.mxu0 0.0
        %5123 = vmatpush1.msra.mxu0 0.0
        %5124 = vmatprep.subr.mxu0 0.0
        %5125 = vmatpush1.msra.mxu0 0.0
        %5126 = vmatprep.subr.mxu0 0.0
        %5127 = vmatpush1.msra.mxu0 0.0
        %5128 = vmatprep.subr.mxu0 0.0
        %5129 = vmatpush1.msra.mxu0 0.0
        %5130 = vmatprep.subr.mxu0 0.0
        %5131 = vmatpush1.msra.mxu0 0.0
        %5132 = vmatprep.subr.mxu0 0.0
        %5133 = vmatpush1.msra.mxu0 0.0
        %5134 = vmatprep.subr.mxu0 0.0
        %5135 = vmatpush1.msra.mxu0 0.0
        %5136 = vmatprep.subr.mxu0 0.0
        %5137 = vmatpush1.msra.mxu0 0.0
        %5138 = vmatprep.subr.mxu0 0.0
        %5139 = vmatpush1.msra.mxu0 0.0
        %5140 = vmatprep.subr.mxu0 0.0
        %5141 = vmatpush1.msra.mxu0 0.0
        %5142 = vmatprep.subr.mxu0 0.0
        %5143 = vmatpush1.msra.mxu0 0.0
        %5144 = vmatprep.subr.mxu0 0.0
        %5145 = vmatpush1.msra.mxu0 0.0
        %5146 = vmatprep.subr.mxu0 0.0
        %5147 = vmatpush1.msra.mxu0 0.0
        %5148 = vmatprep.subr.mxu0 0.0
        %5149 = vmatpush1.msra.mxu0 0.0
        %5150 = vmatprep.subr.mxu0 0.0
        %5151 = vmatpush1.msra.mxu0 0.0
        %5152 = vmatprep.subr.mxu0 0.0
        %5153 = vmatpush1.msra.mxu0 0.0
        %5154 = vmatprep.subr.mxu0 0.0
        %5155 = vmatpush1.msra.mxu0 0.0
        %5156 = vmatprep.subr.mxu0 0.0
        %5157 = vmatpush1.msra.mxu0 0.0
        %5158 = vmatprep.subr.mxu0 0.0
        %5159 = vmatpush1.msra.mxu0 0.0
        %5160 = vmatprep.subr.mxu0 0.0
        %5161 = vmatpush1.msra.mxu0 0.0
        %5162 = vmatprep.subr.mxu0 0.0
        %5163 = vmatpush1.msra.mxu0 0.0
        %5164 = vmatprep.subr.mxu0 0.0
        %5165 = vmatpush1.msra.mxu0 0.0
        %5166 = vmatprep.subr.mxu0 0.0
        %5167 = vmatpush1.msra.mxu0 0.0
        %5168 = vmatprep.subr.mxu0 0.0
        %5169 = vmatpush1.msra.mxu0 0.0
        %5170 = vmatprep.subr.mxu0 0.0
        %5171 = vmatpush1.msra.mxu0 0.0
        %5172 = vmatprep.subr.mxu0 0.0
        %5173 = vmatpush1.msra.mxu0 0.0
        %5174 = vmatprep.mubr.f32.mxu0 0.0
        %5175 = vmatmul.mubr.f32.gmra.mrb[0].mxu0 %v5097
        %v5176 = vpop.f32.mrb[0].mxu0
        %v5177 = vadd.f32 0.0, %v5176
        %v5178 = vpop.f32.mrb[0].mxu0
        %5179 = vmatprep.mubr.f32.mxu0 0.0
        %5180 = vmatmul.mubr.f32.gmra.mrb[0].mxu0 %v5100
        %v5181 = vpop.f32.mrb[0].mxu0
        %v5182 = vadd.f32 0.0, %v5181
        %v5183 = vpop.f32.mrb[0].mxu0
        %5184 = vmatprep.mubr.f32.mxu0 0.0
        %5185 = vmatmul.mubr.f32.gmra.mrb[0].mxu0 %v5103
        %v5186 = vpop.f32.mrb[0].mxu0
        %v5187 = vadd.f32 0.0, %v5186
        %v5188 = vpop.f32.mrb[0].mxu0
        %5189 = vmatprep.mubr.f32.mxu0 0.0
        %5190 = vmatmul.mubr.f32.gmra.mrb[0].mxu0 %v5106
        %v5191 = vpop.f32.mrb[0].mxu0
        %v5192 = vadd.f32 0.0, %v5191
        %v5193 = vpop.f32.mrb[0].mxu0
        %5194 = vdwg.mxu0
        %v5195 = vadd.f32 %v5079, %v5177
        %v5196 = vadd.f32 %v5080, %v5182
        %v5197 = vadd.f32 %v5081, %v5187
        %v5198 = vadd.f32 %v5082, %v5192
        %s5199 = scalar_lea.vmem %s5, 416
        %v5200 = vld [vmem:[%s5199] sm:$0xff]
        %v5201 = vld [vmem:[%s5199 + $0x8] sm:$0xff]
        %v5202 = vld [vmem:[%s5199 + $0x10] sm:$0xff]
        %v5203 = vld [vmem:[%s5199 + $0x18] sm:$0xff]
        %5204 = vrot.lane.b32.xlu0 %v3704, 56
        %v5205 = vpop.permute.xlu0 %5204
        %5206 = vrot.lane.b32.xlu0 %v3706, 56
        %v5207 = vpop.permute.xlu0 %5206
        %5208 = vrot.lane.b32.xlu0 %v3708, 56
        %v5209 = vpop.permute.xlu0 %5208
        %v5213 = vsel %vm3729, %v5200, 0
        %v5216 = vsel %vm3729, %v5201, 0
        %v5219 = vsel %vm3729, %v5202, 0
        %v5222 = vsel %vm3729, %v5203, 0
        %v5224 = vsel %vm351, %v5209, 0
        %5226 = vmatprep.subr.mxu0 0.0
        %5227 = vmatpush1.msra.mxu0 %v5205
        %5228 = vmatprep.subr.mxu0 0.0
        %5229 = vmatpush1.msra.mxu0 %v5207
        %5230 = vmatprep.subr.mxu0 0.0
        %5231 = vmatpush1.msra.mxu0 %v5224
        %5232 = vmatprep.subr.mxu0 0.0
        %5233 = vmatpush1.msra.mxu0 0.0
        %5234 = vmatprep.subr.mxu0 0.0
        %5235 = vmatpush1.msra.mxu0 0.0
        %5236 = vmatprep.subr.mxu0 0.0
        %5237 = vmatpush1.msra.mxu0 0.0
        %5238 = vmatprep.subr.mxu0 0.0
        %5239 = vmatpush1.msra.mxu0 0.0
        %5240 = vmatprep.subr.mxu0 0.0
        %5241 = vmatpush1.msra.mxu0 0.0
        %5242 = vmatprep.subr.mxu0 0.0
        %5243 = vmatpush1.msra.mxu0 0.0
        %5244 = vmatprep.subr.mxu0 0.0
        %5245 = vmatpush1.msra.mxu0 0.0
        %5246 = vmatprep.subr.mxu0 0.0
        %5247 = vmatpush1.msra.mxu0 0.0
        %5248 = vmatprep.subr.mxu0 0.0
        %5249 = vmatpush1.msra.mxu0 0.0
        %5250 = vmatprep.subr.mxu0 0.0
        %5251 = vmatpush1.msra.mxu0 0.0
        %5252 = vmatprep.subr.mxu0 0.0
        %5253 = vmatpush1.msra.mxu0 0.0
        %5254 = vmatprep.subr.mxu0 0.0
        %5255 = vmatpush1.msra.mxu0 0.0
        %5256 = vmatprep.subr.mxu0 0.0
        %5257 = vmatpush1.msra.mxu0 0.0
        %5258 = vmatprep.subr.mxu0 0.0
        %5259 = vmatpush1.msra.mxu0 0.0
        %5260 = vmatprep.subr.mxu0 0.0
        %5261 = vmatpush1.msra.mxu0 0.0
        %5262 = vmatprep.subr.mxu0 0.0
        %5263 = vmatpush1.msra.mxu0 0.0
        %5264 = vmatprep.subr.mxu0 0.0
        %5265 = vmatpush1.msra.mxu0 0.0
        %5266 = vmatprep.subr.mxu0 0.0
        %5267 = vmatpush1.msra.mxu0 0.0
        %5268 = vmatprep.subr.mxu0 0.0
        %5269 = vmatpush1.msra.mxu0 0.0
        %5270 = vmatprep.subr.mxu0 0.0
        %5271 = vmatpush1.msra.mxu0 0.0
        %5272 = vmatprep.subr.mxu0 0.0
        %5273 = vmatpush1.msra.mxu0 0.0
        %5274 = vmatprep.subr.mxu0 0.0
        %5275 = vmatpush1.msra.mxu0 0.0
        %5276 = vmatprep.subr.mxu0 0.0
        %5277 = vmatpush1.msra.mxu0 0.0
        %5278 = vmatprep.subr.mxu0 0.0
        %5279 = vmatpush1.msra.mxu0 0.0
        %5280 = vmatprep.subr.mxu0 0.0
        %5281 = vmatpush1.msra.mxu0 0.0
        %5282 = vmatprep.subr.mxu0 0.0
        %5283 = vmatpush1.msra.mxu0 0.0
        %5284 = vmatprep.subr.mxu0 0.0
        %5285 = vmatpush1.msra.mxu0 0.0
        %5286 = vmatprep.subr.mxu0 0.0
        %5287 = vmatpush1.msra.mxu0 0.0
        %5288 = vmatprep.subr.mxu0 0.0
        %5289 = vmatpush1.msra.mxu0 0.0
        %5290 = vmatprep.mubr.f32.mxu0 0.0
        %5291 = vmatmul.mubr.f32.gmra.mrb[0].mxu0 %v5213
        %v5292 = vpop.f32.mrb[0].mxu0
        %v5293 = vadd.f32 0.0, %v5292
        %v5294 = vpop.f32.mrb[0].mxu0
        %5295 = vmatprep.mubr.f32.mxu0 0.0
        %5296 = vmatmul.mubr.f32.gmra.mrb[0].mxu0 %v5216
        %v5297 = vpop.f32.mrb[0].mxu0
        %v5298 = vadd.f32 0.0, %v5297
        %v5299 = vpop.f32.mrb[0].mxu0
        %5300 = vmatprep.mubr.f32.mxu0 0.0
        %5301 = vmatmul.mubr.f32.gmra.mrb[0].mxu0 %v5219
        %v5302 = vpop.f32.mrb[0].mxu0
        %v5303 = vadd.f32 0.0, %v5302
        %v5304 = vpop.f32.mrb[0].mxu0
        %5305 = vmatprep.mubr.f32.mxu0 0.0
        %5306 = vmatmul.mubr.f32.gmra.mrb[0].mxu0 %v5222
        %v5307 = vpop.f32.mrb[0].mxu0
        %v5308 = vadd.f32 0.0, %v5307
        %v5309 = vpop.f32.mrb[0].mxu0
        %5310 = vdwg.mxu0
        %v5311 = vadd.f32 %v5195, %v5293
        %v5312 = vadd.f32 %v5196, %v5298
        %v5313 = vadd.f32 %v5197, %v5303
        %v5314 = vadd.f32 %v5198, %v5308
        %s5315 = scalar_lea.vmem %s5, 448
        %v5316 = vld [vmem:[%s5315] sm:$0xff]
        %v5317 = vld [vmem:[%s5315 + $0x8] sm:$0xff]
        %v5318 = vld [vmem:[%s5315 + $0x10] sm:$0xff]
        %v5319 = vld [vmem:[%s5315 + $0x18] sm:$0xff]
        %5320 = vrot.lane.b32.xlu0 %v3704, 48
        %v5321 = vpop.permute.xlu0 %5320
        %5322 = vrot.lane.b32.xlu0 %v3706, 48
        %v5323 = vpop.permute.xlu0 %5322
        %5324 = vrot.lane.b32.xlu0 %v3708, 48
        %v5325 = vpop.permute.xlu0 %5324
        %v5329 = vsel %vm3729, %v5316, 0
        %v5332 = vsel %vm3729, %v5317, 0
        %v5335 = vsel %vm3729, %v5318, 0
        %v5338 = vsel %vm3729, %v5319, 0
        %v5340 = vsel %vm351, %v5325, 0
        %5342 = vmatprep.subr.mxu0 0.0
        %5343 = vmatpush1.msra.mxu0 %v5321
        %5344 = vmatprep.subr.mxu0 0.0
        %5345 = vmatpush1.msra.mxu0 %v5323
        %5346 = vmatprep.subr.mxu0 0.0
        %5347 = vmatpush1.msra.mxu0 %v5340
        %5348 = vmatprep.subr.mxu0 0.0
        %5349 = vmatpush1.msra.mxu0 0.0
        %5350 = vmatprep.subr.mxu0 0.0
        %5351 = vmatpush1.msra.mxu0 0.0
        %5352 = vmatprep.subr.mxu0 0.0
        %5353 = vmatpush1.msra.mxu0 0.0
        %5354 = vmatprep.subr.mxu0 0.0
        %5355 = vmatpush1.msra.mxu0 0.0
        %5356 = vmatprep.subr.mxu0 0.0
        %5357 = vmatpush1.msra.mxu0 0.0
        %5358 = vmatprep.subr.mxu0 0.0
        %5359 = vmatpush1.msra.mxu0 0.0
        %5360 = vmatprep.subr.mxu0 0.0
        %5361 = vmatpush1.msra.mxu0 0.0
        %5362 = vmatprep.subr.mxu0 0.0
        %5363 = vmatpush1.msra.mxu0 0.0
        %5364 = vmatprep.subr.mxu0 0.0
        %5365 = vmatpush1.msra.mxu0 0.0
        %5366 = vmatprep.subr.mxu0 0.0
        %5367 = vmatpush1.msra.mxu0 0.0
        %5368 = vmatprep.subr.mxu0 0.0
        %5369 = vmatpush1.msra.mxu0 0.0
        %5370 = vmatprep.subr.mxu0 0.0
        %5371 = vmatpush1.msra.mxu0 0.0
        %5372 = vmatprep.subr.mxu0 0.0
        %5373 = vmatpush1.msra.mxu0 0.0
        %5374 = vmatprep.subr.mxu0 0.0
        %5375 = vmatpush1.msra.mxu0 0.0
        %5376 = vmatprep.subr.mxu0 0.0
        %5377 = vmatpush1.msra.mxu0 0.0
        %5378 = vmatprep.subr.mxu0 0.0
        %5379 = vmatpush1.msra.mxu0 0.0
        %5380 = vmatprep.subr.mxu0 0.0
        %5381 = vmatpush1.msra.mxu0 0.0
        %5382 = vmatprep.subr.mxu0 0.0
        %5383 = vmatpush1.msra.mxu0 0.0
        %5384 = vmatprep.subr.mxu0 0.0
        %5385 = vmatpush1.msra.mxu0 0.0
        %5386 = vmatprep.subr.mxu0 0.0
        %5387 = vmatpush1.msra.mxu0 0.0
        %5388 = vmatprep.subr.mxu0 0.0
        %5389 = vmatpush1.msra.mxu0 0.0
        %5390 = vmatprep.subr.mxu0 0.0
        %5391 = vmatpush1.msra.mxu0 0.0
        %5392 = vmatprep.subr.mxu0 0.0
        %5393 = vmatpush1.msra.mxu0 0.0
        %5394 = vmatprep.subr.mxu0 0.0
        %5395 = vmatpush1.msra.mxu0 0.0
        %5396 = vmatprep.subr.mxu0 0.0
        %5397 = vmatpush1.msra.mxu0 0.0
        %5398 = vmatprep.subr.mxu0 0.0
        %5399 = vmatpush1.msra.mxu0 0.0
        %5400 = vmatprep.subr.mxu0 0.0
        %5401 = vmatpush1.msra.mxu0 0.0
        %5402 = vmatprep.subr.mxu0 0.0
        %5403 = vmatpush1.msra.mxu0 0.0
        %5404 = vmatprep.subr.mxu0 0.0
        %5405 = vmatpush1.msra.mxu0 0.0
        %5406 = vmatprep.mubr.f32.mxu0 0.0
        %5407 = vmatmul.mubr.f32.gmra.mrb[0].mxu0 %v5329
        %v5408 = vpop.f32.mrb[0].mxu0
        %v5409 = vadd.f32 0.0, %v5408
        %v5410 = vpop.f32.mrb[0].mxu0
        %5411 = vmatprep.mubr.f32.mxu0 0.0
        %5412 = vmatmul.mubr.f32.gmra.mrb[0].mxu0 %v5332
        %v5413 = vpop.f32.mrb[0].mxu0
        %v5414 = vadd.f32 0.0, %v5413
        %v5415 = vpop.f32.mrb[0].mxu0
        %5416 = vmatprep.mubr.f32.mxu0 0.0
        %5417 = vmatmul.mubr.f32.gmra.mrb[0].mxu0 %v5335
        %v5418 = vpop.f32.mrb[0].mxu0
        %v5419 = vadd.f32 0.0, %v5418
        %v5420 = vpop.f32.mrb[0].mxu0
        %5421 = vmatprep.mubr.f32.mxu0 0.0
        %5422 = vmatmul.mubr.f32.gmra.mrb[0].mxu0 %v5338
        %v5423 = vpop.f32.mrb[0].mxu0
        %v5424 = vadd.f32 0.0, %v5423
        %v5425 = vpop.f32.mrb[0].mxu0
        %5426 = vdwg.mxu0
        %v5427 = vadd.f32 %v5311, %v5409
        %v5428 = vadd.f32 %v5312, %v5414
        %v5429 = vadd.f32 %v5313, %v5419
        %v5430 = vadd.f32 %v5314, %v5424
        %s5431 = scalar_lea.vmem %s5, 480
        %v5432 = vld [vmem:[%s5431] sm:$0xff]
        %v5433 = vld [vmem:[%s5431 + $0x8] sm:$0xff]
        %v5434 = vld [vmem:[%s5431 + $0x10] sm:$0xff]
        %v5435 = vld [vmem:[%s5431 + $0x18] sm:$0xff]
        %5436 = vrot.lane.b32.xlu0 %v3704, 40
        %v5437 = vpop.permute.xlu0 %5436
        %5438 = vrot.lane.b32.xlu0 %v3706, 40
        %v5439 = vpop.permute.xlu0 %5438
        %5440 = vrot.lane.b32.xlu0 %v3708, 40
        %v5441 = vpop.permute.xlu0 %5440
        %v5445 = vsel %vm3729, %v5432, 0
        %v5448 = vsel %vm3729, %v5433, 0
        %v5451 = vsel %vm3729, %v5434, 0
        %v5454 = vsel %vm3729, %v5435, 0
        %v5456 = vsel %vm351, %v5441, 0
        %5458 = vmatprep.subr.mxu0 0.0
        %5459 = vmatpush1.msra.mxu0 %v5437
        %5460 = vmatprep.subr.mxu0 0.0
        %5461 = vmatpush1.msra.mxu0 %v5439
        %5462 = vmatprep.subr.mxu0 0.0
        %5463 = vmatpush1.msra.mxu0 %v5456
        %5464 = vmatprep.subr.mxu0 0.0
        %5465 = vmatpush1.msra.mxu0 0.0
        %5466 = vmatprep.subr.mxu0 0.0
        %5467 = vmatpush1.msra.mxu0 0.0
        %5468 = vmatprep.subr.mxu0 0.0
        %5469 = vmatpush1.msra.mxu0 0.0
        %5470 = vmatprep.subr.mxu0 0.0
        %5471 = vmatpush1.msra.mxu0 0.0
        %5472 = vmatprep.subr.mxu0 0.0
        %5473 = vmatpush1.msra.mxu0 0.0
        %5474 = vmatprep.subr.mxu0 0.0
        %5475 = vmatpush1.msra.mxu0 0.0
        %5476 = vmatprep.subr.mxu0 0.0
        %5477 = vmatpush1.msra.mxu0 0.0
        %5478 = vmatprep.subr.mxu0 0.0
        %5479 = vmatpush1.msra.mxu0 0.0
        %5480 = vmatprep.subr.mxu0 0.0
        %5481 = vmatpush1.msra.mxu0 0.0
        %5482 = vmatprep.subr.mxu0 0.0
        %5483 = vmatpush1.msra.mxu0 0.0
        %5484 = vmatprep.subr.mxu0 0.0
        %5485 = vmatpush1.msra.mxu0 0.0
        %5486 = vmatprep.subr.mxu0 0.0
        %5487 = vmatpush1.msra.mxu0 0.0
        %5488 = vmatprep.subr.mxu0 0.0
        %5489 = vmatpush1.msra.mxu0 0.0
        %5490 = vmatprep.subr.mxu0 0.0
        %5491 = vmatpush1.msra.mxu0 0.0
        %5492 = vmatprep.subr.mxu0 0.0
        %5493 = vmatpush1.msra.mxu0 0.0
        %5494 = vmatprep.subr.mxu0 0.0
        %5495 = vmatpush1.msra.mxu0 0.0
        %5496 = vmatprep.subr.mxu0 0.0
        %5497 = vmatpush1.msra.mxu0 0.0
        %5498 = vmatprep.subr.mxu0 0.0
        %5499 = vmatpush1.msra.mxu0 0.0
        %5500 = vmatprep.subr.mxu0 0.0
        %5501 = vmatpush1.msra.mxu0 0.0
        %5502 = vmatprep.subr.mxu0 0.0
        %5503 = vmatpush1.msra.mxu0 0.0
        %5504 = vmatprep.subr.mxu0 0.0
        %5505 = vmatpush1.msra.mxu0 0.0
        %5506 = vmatprep.subr.mxu0 0.0
        %5507 = vmatpush1.msra.mxu0 0.0
        %5508 = vmatprep.subr.mxu0 0.0
        %5509 = vmatpush1.msra.mxu0 0.0
        %5510 = vmatprep.subr.mxu0 0.0
        %5511 = vmatpush1.msra.mxu0 0.0
        %5512 = vmatprep.subr.mxu0 0.0
        %5513 = vmatpush1.msra.mxu0 0.0
        %5514 = vmatprep.subr.mxu0 0.0
        %5515 = vmatpush1.msra.mxu0 0.0
        %5516 = vmatprep.subr.mxu0 0.0
        %5517 = vmatpush1.msra.mxu0 0.0
        %5518 = vmatprep.subr.mxu0 0.0
        %5519 = vmatpush1.msra.mxu0 0.0
        %5520 = vmatprep.subr.mxu0 0.0
        %5521 = vmatpush1.msra.mxu0 0.0
        %5522 = vmatprep.mubr.f32.mxu0 0.0
        %5523 = vmatmul.mubr.f32.gmra.mrb[0].mxu0 %v5445
        %v5524 = vpop.f32.mrb[0].mxu0
        %v5525 = vadd.f32 0.0, %v5524
        %v5526 = vpop.f32.mrb[0].mxu0
        %5527 = vmatprep.mubr.f32.mxu0 0.0
        %5528 = vmatmul.mubr.f32.gmra.mrb[0].mxu0 %v5448
        %v5529 = vpop.f32.mrb[0].mxu0
        %v5530 = vadd.f32 0.0, %v5529
        %v5531 = vpop.f32.mrb[0].mxu0
        %5532 = vmatprep.mubr.f32.mxu0 0.0
        %5533 = vmatmul.mubr.f32.gmra.mrb[0].mxu0 %v5451
        %v5534 = vpop.f32.mrb[0].mxu0
        %v5535 = vadd.f32 0.0, %v5534
        %v5536 = vpop.f32.mrb[0].mxu0
        %5537 = vmatprep.mubr.f32.mxu0 0.0
        %5538 = vmatmul.mubr.f32.gmra.mrb[0].mxu0 %v5454
        %v5539 = vpop.f32.mrb[0].mxu0
        %v5540 = vadd.f32 0.0, %v5539
        %v5541 = vpop.f32.mrb[0].mxu0
        %5542 = vdwg.mxu0
        %v5543 = vadd.f32 %v5427, %v5525
        %v5544 = vadd.f32 %v5428, %v5530
        %v5545 = vadd.f32 %v5429, %v5535
        %v5546 = vadd.f32 %v5430, %v5540
        %v5547 = vld [vmem:[%s6] sm:$0xff]
        %v5548 = vld [vmem:[%s6 + $0x8] sm:$0xff]
        %v5549 = vld [vmem:[%s6 + $0x10] sm:$0xff]
        %v5550 = vld [vmem:[%s6 + $0x18] sm:$0xff]
        %5552 = vset.pattern.permute.xlu0 0
        %5553 = vperm.xlu0 %5552, %v5547
        %v5554 = vpop.permute.xlu0 %5553
        %5557 = vset.pattern.permute.xlu0 0
        %5558 = vperm.xlu0 %5557, %v5548
        %v5559 = vpop.permute.xlu0 %5558
        %5562 = vset.pattern.permute.xlu0 0
        %5563 = vperm.xlu0 %5562, %v5549
        %v5564 = vpop.permute.xlu0 %5563
        %5567 = vset.pattern.permute.xlu0 0
        %5568 = vperm.xlu0 %5567, %v5550
        %v5569 = vpop.permute.xlu0 %5568
        %v5571 = vadd.f32 %v5543, %v5554
        %v5572 = vadd.f32 %v5544, %v5559
        %v5573 = vadd.f32 %v5545, %v5564
        %v5574 = vadd.f32 %v5546, %v5569
        %v5575 = vmax.f32 %v5571, 0.0
        %v5576 = vmax.f32 %v5572, 0.0
        %v5577 = vmax.f32 %v5573, 0.0
        %v5578 = vmax.f32 %v5574, 0.0
        %v5579 = vld [vmem:[%s7] sm:$0xff]
        %v5580 = vld [vmem:[%s7 + $0x8] sm:$0xff]
        %v5581 = vld [vmem:[%s7 + $0x10] sm:$0xff]
        %v5582 = vld [vmem:[%s7 + $0x18] sm:$0xff]
        %v5583 = vld [vmem:[%s8] sm:$0x1]
        %v5585 = vlaneseq
        %v5586 = vshrl.u32 %v5585, 7
        %v5587 = vsub.s32 0, %v5586
        %v5588 = vrot.slane %v5583, %v5587
        %5590 = vxpose.xlu0.b32.start [1/16] %v5575, 128
        %5591 = vxpose.xlu0.b32.cont [2/16] %v5576, 128
        %5592 = vxpose.xlu0.b32.cont [3/16] %v5577, 128
        %5593 = vxpose.xlu0.b32.cont [4/16] %v5578, 128
        %5594 = vxpose.xlu0.b32.cont [5/16] 0.0, 128
        %5595 = vxpose.xlu0.b32.cont [6/16] 0.0, 128
        %5596 = vxpose.xlu0.b32.cont [7/16] 0.0, 128
        %5597 = vxpose.xlu0.b32.cont [8/16] 0.0, 128
        %5598 = vxpose.xlu0.b32.cont [9/16] 0.0, 128
        %5599 = vxpose.xlu0.b32.cont [10/16] 0.0, 128
        %5600 = vxpose.xlu0.b32.cont [11/16] 0.0, 128
        %5601 = vxpose.xlu0.b32.cont [12/16] 0.0, 128
        %5602 = vxpose.xlu0.b32.cont [13/16] 0.0, 128
        %5603 = vxpose.xlu0.b32.cont [14/16] 0.0, 128
        %5604 = vxpose.xlu0.b32.cont [15/16] 0.0, 128
        %5605 = vxpose.xlu0.b32.end [16/16] 0.0, 128
        %v5606 = vpop.trf.xlu0
        %v5607 = vpop.trf.xlu0
        %v5608 = vpop.trf.xlu0
        %v5609 = vpop.trf.xlu0
        %v5610 = vpop.trf.xlu0
        %v5611 = vpop.trf.xlu0
        %v5612 = vpop.trf.xlu0
        %v5613 = vpop.trf.xlu0
        %v5614 = vpop.trf.xlu0
        %v5615 = vpop.trf.xlu0
        %v5616 = vpop.trf.xlu0
        %v5617 = vpop.trf.xlu0
        %v5618 = vpop.trf.xlu0
        %v5619 = vpop.trf.xlu0
        %v5620 = vpop.trf.xlu0
        %v5621 = vpop.trf.xlu0
        %v5623 = vsel %vm1893, %v5606, 0
        %5625 = vmatprep.subr.mxu0 0.0
        %5626 = vmatpush1.msra.mxu0 %v5579
        %5627 = vmatprep.subr.mxu0 0.0
        %5628 = vmatpush1.msra.mxu0 %v5580
        %5629 = vmatprep.subr.mxu0 0.0
        %5630 = vmatpush1.msra.mxu0 %v5581
        %5631 = vmatprep.subr.mxu0 0.0
        %5632 = vmatpush1.msra.mxu0 %v5582
        %5633 = vmatprep.subr.mxu0 0.0
        %5634 = vmatpush1.msra.mxu0 0.0
        %5635 = vmatprep.subr.mxu0 0.0
        %5636 = vmatpush1.msra.mxu0 0.0
        %5637 = vmatprep.subr.mxu0 0.0
        %5638 = vmatpush1.msra.mxu0 0.0
        %5639 = vmatprep.subr.mxu0 0.0
        %5640 = vmatpush1.msra.mxu0 0.0
        %5641 = vmatprep.subr.mxu0 0.0
        %5642 = vmatpush1.msra.mxu0 0.0
        %5643 = vmatprep.subr.mxu0 0.0
        %5644 = vmatpush1.msra.mxu0 0.0
        %5645 = vmatprep.subr.mxu0 0.0
        %5646 = vmatpush1.msra.mxu0 0.0
        %5647 = vmatprep.subr.mxu0 0.0
        %5648 = vmatpush1.msra.mxu0 0.0
        %5649 = vmatprep.subr.mxu0 0.0
        %5650 = vmatpush1.msra.mxu0 0.0
        %5651 = vmatprep.subr.mxu0 0.0
        %5652 = vmatpush1.msra.mxu0 0.0
        %5653 = vmatprep.subr.mxu0 0.0
        %5654 = vmatpush1.msra.mxu0 0.0
        %5655 = vmatprep.subr.mxu0 0.0
        %5656 = vmatpush1.msra.mxu0 0.0
        %5657 = vmatprep.subr.mxu0 0.0
        %5658 = vmatpush1.msra.mxu0 0.0
        %5659 = vmatprep.subr.mxu0 0.0
        %5660 = vmatpush1.msra.mxu0 0.0
        %5661 = vmatprep.subr.mxu0 0.0
        %5662 = vmatpush1.msra.mxu0 0.0
        %5663 = vmatprep.subr.mxu0 0.0
        %5664 = vmatpush1.msra.mxu0 0.0
        %5665 = vmatprep.subr.mxu0 0.0
        %5666 = vmatpush1.msra.mxu0 0.0
        %5667 = vmatprep.subr.mxu0 0.0
        %5668 = vmatpush1.msra.mxu0 0.0
        %5669 = vmatprep.subr.mxu0 0.0
        %5670 = vmatpush1.msra.mxu0 0.0
        %5671 = vmatprep.subr.mxu0 0.0
        %5672 = vmatpush1.msra.mxu0 0.0
        %5673 = vmatprep.subr.mxu0 0.0
        %5674 = vmatpush1.msra.mxu0 0.0
        %5675 = vmatprep.subr.mxu0 0.0
        %5676 = vmatpush1.msra.mxu0 0.0
        %5677 = vmatprep.subr.mxu0 0.0
        %5678 = vmatpush1.msra.mxu0 0.0
        %5679 = vmatprep.subr.mxu0 0.0
        %5680 = vmatpush1.msra.mxu0 0.0
        %5681 = vmatprep.subr.mxu0 0.0
        %5682 = vmatpush1.msra.mxu0 0.0
        %5683 = vmatprep.subr.mxu0 0.0
        %5684 = vmatpush1.msra.mxu0 0.0
        %5685 = vmatprep.subr.mxu0 0.0
        %5686 = vmatpush1.msra.mxu0 0.0
        %5687 = vmatprep.subr.mxu0 0.0
        %5688 = vmatpush1.msra.mxu0 0.0
        %5689 = vmatprep.mubr.f32.mxu0 0.0
        %5690 = vmatmul.mubr.f32.gmra.mrb[0].mxu0 %v5623
        %v5691 = vpop.f32.mrb[0].mxu0
        %v5692 = vadd.f32 %v5588, %v5691
        %v5693 = vpop.f32.mrb[0].mxu0
        %5694 = vdwg.mxu0
        %5695 = vst.msk [vmem:[%s325] sm:$0xff] %vm825, %v5692
        %s5696 = sand.u32 %s225, 1
        %s5697 = scalar_lea.sflag [#allocation4], %s5696
        %s5698 = sand.u32 %s225, 1
        %s5699 = smul.addr %s5698, 8
        %s5700 = scalar_lea.vmem [#allocation3], %s5699
        // Predicated region
        $region57: #{cnn_forward.1} parent=55 // pred_check
          %p5701 = pneg %p235
        $region58: #{cnn_forward.1} parent=55 // pred_check_branch
          %5703 = sbr.rel (%p5701) target = $region60
        $region59: #{cnn_forward.1} parent=55 // pred_region
          %s5705 = ssub.s32 128, 128
          %5706 = vsyncadd %s5697, %s5705
          %s5707 = smul.addr %s23, 128
          %s5708 = scalar_lea.hbm %s9, %s5707
          %s5710 = sshll.u32 %s5700, 4
          %s5711 = int_to_ptr.vmem [resolvable:$true] %s5710
          %5713 = dma.vmem_to_hbm [thread:$0]  %s5711, 128, %s5708, %s5697
        $region60: #{cnn_forward.1} parent=55 // pred_fallthru
          _
      $region56: #{cnn_forward.1} parent=5 // pred_fallthru
        _
      %p5714 = scmp.le.s32.totalorder 2, %s18
      // Predicated region
      $region61: #{cnn_forward.1} parent=5 // pred_check
        %p5715 = pneg %p5714
      $region62: #{cnn_forward.1} parent=5 // pred_check_branch
        %5717 = sbr.rel (%p5715) target = $region64
      $region63: #{cnn_forward.1} parent=5 // pred_region
        %s5718 = ssub.s32 %s18, 2
        // Predicated region
        $region65: #{cnn_forward.1} parent=63 // pred_check
          %p5719 = pneg %p241
        $region66: #{cnn_forward.1} parent=63 // pred_check_branch
          %5721 = sbr.rel (%p5719) target = $region68
        $region67: #{cnn_forward.1} parent=63 // pred_region
          %s5722 = sand.u32 %s226, 1
          %s5723 = scalar_lea.sflag [#allocation4], %s5722
          %s5724 = sand.u32 %s226, 1
          %s5725 = smul.addr %s5724, 8
          %s5726 = scalar_lea.vmem [#allocation3], %s5725
          %5727 = dma.done %s5723, 128
        $region68: #{cnn_forward.1} parent=63 // pred_fallthru
          _
      $region64: #{cnn_forward.1} parent=5 // pred_fallthru
        _
    $region6: #{cnn_forward.1} parent=1 // loop_footer
      %s22 = sadd.s32 1, %s18
    $region7: #{cnn_forward.1} parent=1 // loop_footer_branch
      %17 = sbr.rel target = $region3
    $region8: #{cnn_forward.1} parent=1 // loop_exit
      _
    %5728 = vsyncpa [#allocation4], 1
    %s5729 = scalar_lea.sflag [#allocation4], 1
    %5730 = vsyncpa %s5729, 1

</llo_original>
